<compile_context>
chip_gen: v6e
topology: v6e:2x2x1
jax: 0.10.0
libtpu: 0.0.40
codegen_flags: <defaults>
</compile_context>

<pallas_src>
import numpy as np
import jax
import jax.numpy as jnp
from jax.experimental import pallas as pl
from jax.experimental.pallas import tpu as pltpu

_EPS = 1e-5
_OFF = 8                               # leading zero rows in the padded scratch

VGG_BLOCKS = [
    [(3, 64), (64, 64)],
    [(64, 128), (128, 128)],
    [(128, 256), (256, 256), (256, 256)],
    [(256, 512), (512, 512), (512, 512)],
    [(512, 512), (512, 512), (512, 512)],
]
BLOCK_C = [64, 128, 256, 512, 512]
SIDE_CIN = [64, 128, 256, 512, 512]
UPS_KS = [None, (4, 2), (8, 4), (16, 8), (32, 16)]     # (kernel, stride) per side


def _round_up(v, m):
    return ((v + m - 1) // m) * m


def _vmem_limit_bytes():
    cap = None
    try:
        cap = getattr(pltpu.get_tpu_info(), "vmem_capacity_bytes", None)
    except Exception:
        cap = None
    if not cap:
        cap = 64 * 1024 * 1024                         # conservative (v7x-sized)
    return int(min(cap * 3 // 4, 100 * 1024 * 1024))


_VMEM_LIMIT = _vmem_limit_bytes()
_CPARAMS = pltpu.CompilerParams(dimension_semantics=("parallel",),
                                vmem_limit_bytes=_VMEM_LIMIT)


def _block_geom(hb, wb):
    pitch = _round_up(wb + 2, 8)       # >= wb + 2 halo cols, sublane-aligned
    nrows = hb * pitch
    head = _OFF + pitch                # leading pad + top halo row (aligned)
    tot = _OFF + (hb + 2) * pitch + 8  # + bottom halo row + tail slack
    return pitch, nrows, head, tot


# ----------------------------------------------------------------------------
# Fused VGG-block kernel: [maxpool] -> (conv3x3+BN+ReLU)*n -> side head
# ----------------------------------------------------------------------------
def _make_block_kernel(hb, wb, c, cins, packed, pool, side_sigmoid):
    pitch, nrows, head, tot = _block_geom(hb, wb)
    nconv = len(cins)

    def kernel(*refs):
        x_ref = refs[0]
        conv_refs = refs[1:1 + 3 * nconv]
        sw_ref = refs[1 + 3 * nconv]
        sb_ref = refs[2 + 3 * nconv]
        feat_ref = refs[3 + 3 * nconv]
        side_ref = refs[4 + 3 * nconv]
        pbuf = refs[5 + 3 * nconv]

        # Zero only the halo frame (leading pad + top halo row, bottom halo row
        # + tail).  The interior rows (incl. their halo columns) are entirely
        # rewritten every step by the fill / masked writeback below, so no full
        # clear is needed and no state leaks across grid steps (megacore-safe).
        pbuf[pl.ds(0, head), :] = jnp.zeros((head, c), jnp.bfloat16)
        tail = tot - (head + nrows)
        pbuf[pl.ds(head + nrows, tail), :] = jnp.zeros((tail, c), jnp.bfloat16)

        cin0 = cins[0]
        # optional in-kernel 2x2 max-pool of the block input (bulk, no per-col loop)
        if pool:
            xv = x_ref[0]                                      # (2hb, 2wb, cin0)
            rmax = jnp.maximum(xv[0::2], xv[1::2])             # (hb, 2wb, cin0)
            rr = rmax.reshape(hb, wb, 2, cin0)
            cur = jnp.maximum(rr[:, :, 0, :], rr[:, :, 1, :])  # (hb, wb, cin0)
        else:
            cur = x_ref[0]                                     # (hb, wb, cin0)

        # Bulk interior fill: zero-pad each row to `pitch` columns, flatten,
        # ONE aligned slab store (head % 8 == 0).
        padded = jnp.concatenate(
            [cur, jnp.zeros((hb, pitch - wb, cin0), cur.dtype)], axis=1)
        pbuf[pl.ds(head, nrows), pl.ds(0, cin0)] = padded.reshape(nrows, cin0)

        # mask of valid (non-halo) columns in the flattened layout
        col = jax.lax.broadcasted_iota(jnp.int32, (nrows, 1), 0) % pitch
        valid = col < wb

        # chained 3x3 conv + folded-BN + ReLU
        y = None
        for j in range(nconv):
            w_ref = conv_refs[3 * j]
            s_ref = conv_refs[3 * j + 1]
            b_ref = conv_refs[3 * j + 2]
            cin = cins[j]
            acc = jnp.zeros((nrows, c), jnp.float32)
            if packed[j]:
                # Pack the 3 dx taps along K (K = 3*cin): 3 deep matmuls/layer.
                npk = nrows + 2 * pitch
                lhs = jnp.concatenate(
                    [pbuf[pl.ds(_OFF - 1 + dx, npk), pl.ds(0, cin)]
                     for dx in range(3)], axis=-1)             # (npk, 3*cin) bf16
                for dy in range(3):
                    acc = acc + jnp.dot(lhs[dy * pitch:dy * pitch + nrows, :],
                                        w_ref[dy],
                                        preferred_element_type=jnp.float32)
            else:
                # 9 shifted bf16 matmuls; K = cin already fills the MXU.
                for dy in range(3):
                    for dx in range(3):
                        lhs = pbuf[pl.ds(_OFF - 1 + dy * pitch + dx, nrows),
                                   pl.ds(0, cin)]
                        acc = acc + jnp.dot(lhs, w_ref[dy * 3 + dx],
                                            preferred_element_type=jnp.float32)
            y = jnp.maximum(acc * s_ref[...] + b_ref[...], 0.0)   # BN + ReLU (f32)
            if j < nconv - 1:
                # ONE aligned masked slab writeback (re-zeroes the halo cols).
                pbuf[pl.ds(head, nrows), :] = (
                    jnp.where(valid, y, 0.0).astype(jnp.bfloat16))

        # un-flatten the last conv output: one reshape + slice (bf16 features)
        y3 = y.astype(jnp.bfloat16).reshape(hb, pitch, c)
        feat = y3[:, :wb, :]
        feat_ref[0] = feat

        # side head: 1x1 conv (folded BN) + ReLU, lane-dense VPU reduction
        # computed from the in-register feature (no VMEM re-read).
        side = jnp.sum(feat * sw_ref[...], axis=-1) + sb_ref[0, 0]
        side = jnp.maximum(side, 0.0)
        if side_sigmoid:
            side = jax.nn.sigmoid(side)
        side_ref[0] = side

    return kernel


def _run_block(feat, conv_params, side_params, hb, wb, c, cins, pool, side_sigmoid):
    n = feat.shape[0]
    _, _, _, tot = _block_geom(hb, wb)
    packed = [cin <= 128 for cin in cins]
    kernel = _make_block_kernel(hb, wb, c, cins, packed, pool, side_sigmoid)

    in_specs = [pl.BlockSpec((1,) + feat.shape[1:], lambda b: (b, 0, 0, 0))]
    args = [feat]
    for j, layer in enumerate(conv_params):
        cin = cins[j]
        w = (layer["w"].reshape(3, 3 * cin, c) if packed[j]
             else layer["w"].reshape(9, cin, c))
        in_specs += [
            pl.BlockSpec(w.shape, lambda b: (0, 0, 0)),
            pl.BlockSpec(layer["scale"].shape, lambda b: (0, 0)),
            pl.BlockSpec(layer["bias"].shape, lambda b: (0, 0)),
        ]
        args += [w, layer["scale"], layer["bias"]]
    in_specs += [
        pl.BlockSpec(side_params["w"].shape, lambda b: (0, 0)),
        pl.BlockSpec(memory_space=pltpu.MemorySpace.SMEM),
    ]
    args += [side_params["w"], side_params["b"]]

    out_shape = (jax.ShapeDtypeStruct((n, hb, wb, c), jnp.bfloat16),
                 jax.ShapeDtypeStruct((n, hb, wb), jnp.float32))
    out_specs = (pl.BlockSpec((1, hb, wb, c), lambda b: (b, 0, 0, 0)),
                 pl.BlockSpec((1, hb, wb), lambda b: (b, 0, 0)))
    scratch = [pltpu.VMEM((tot, c), jnp.bfloat16)]

    return pl.pallas_call(
        kernel, grid=(n,), in_specs=in_specs, out_specs=out_specs,
        out_shape=out_shape, scratch_shapes=scratch, compiler_params=_CPARAMS,
    )(*args)


# ----------------------------------------------------------------------------
# Fused (ConvTranspose2d upsample + center crop + sigmoid) kernel
# ----------------------------------------------------------------------------
def _ups_kernel(s_ref, ur0_ref, ur1_ref, uc0_ref, uc1_ref, wm_ref, b_ref, o_ref):
    x = s_ref[0].astype(jnp.bfloat16)                         # (h, w)
    e0 = jnp.dot(ur0_ref[...], x,
                 preferred_element_type=jnp.float32).astype(jnp.bfloat16)
    e1 = jnp.dot(ur1_ref[...], x,
                 preferred_element_type=jnp.float32).astype(jnp.bfloat16)
    f00 = jnp.dot(e0, uc0_ref[...], preferred_element_type=jnp.float32)
    f01 = jnp.dot(e0, uc1_ref[...], preferred_element_type=jnp.float32)
    f10 = jnp.dot(e1, uc0_ref[...], preferred_element_type=jnp.float32)
    f11 = jnp.dot(e1, uc1_ref[...], preferred_element_type=jnp.float32)
    y = (f00 * wm_ref[0] + f01 * wm_ref[1] + f10 * wm_ref[2] +
         f11 * wm_ref[3] + b_ref[0, 0])
    o_ref[0] = jax.nn.sigmoid(y)


def _run_upsample(side_pre, up):
    n, h, w = side_pre.shape
    hout = up["ur0"].shape[0]
    in_specs = [
        pl.BlockSpec((1, h, w), lambda b: (b, 0, 0)),
        pl.BlockSpec(up["ur0"].shape, lambda b: (0, 0)),
        pl.BlockSpec(up["ur1"].shape, lambda b: (0, 0)),
        pl.BlockSpec(up["uc0"].shape, lambda b: (0, 0)),
        pl.BlockSpec(up["uc1"].shape, lambda b: (0, 0)),
        pl.BlockSpec(up["wm"].shape, lambda b: (0, 0, 0)),
        pl.BlockSpec(memory_space=pltpu.MemorySpace.SMEM),
    ]
    return pl.pallas_call(
        _ups_kernel, grid=(n,), in_specs=in_specs,
        out_specs=pl.BlockSpec((1, hout, hout), lambda b: (b, 0, 0)),
        out_shape=jax.ShapeDtypeStruct((n, hout, hout), jnp.float32),
        compiler_params=_CPARAMS,
    )(side_pre, up["ur0"], up["ur1"], up["uc0"], up["uc1"], up["wm"], up["b"])


# ----------------------------------------------------------------------------
# Fuse kernel: sigmoid(w0*s0 + ... + w4*s4 + b), pure elementwise
# ----------------------------------------------------------------------------
def _fuse_kernel(s1_ref, s2_ref, s3_ref, s4_ref, s5_ref, fw_ref, o_ref):
    y = (s1_ref[0] * fw_ref[0] + s2_ref[0] * fw_ref[1] + s3_ref[0] * fw_ref[2]
         + s4_ref[0] * fw_ref[3] + s5_ref[0] * fw_ref[4] + fw_ref[5])
    o_ref[0] = jax.nn.sigmoid(y)


def _run_fuse(sides, fuse_params):
    n, h, w = sides[0].shape
    in_specs = [pl.BlockSpec((1, h, w), lambda b: (b, 0, 0)) for _ in range(5)]
    in_specs.append(pl.BlockSpec(memory_space=pltpu.MemorySpace.SMEM))
    return pl.pallas_call(
        _fuse_kernel, grid=(n,), in_specs=in_specs,
        out_specs=pl.BlockSpec((1, h, w), lambda b: (b, 0, 0)),
        out_shape=jax.ShapeDtypeStruct((n, h, w), jnp.float32),
        compiler_params=_CPARAMS,
    )(*sides, fuse_params["fw"])


# ----------------------------------------------------------------------------
# Deterministic synthetic parameters (no checkpoint load)
# ----------------------------------------------------------------------------
def _fold_bn(key, cout, conv_bias):
    k1, k2, k3, k4 = jax.random.split(key, 4)
    gamma = 1.0 + 0.1 * jax.random.normal(k1, (cout,), jnp.float32)
    beta = 0.1 * jax.random.normal(k2, (cout,), jnp.float32)
    rmean = 0.1 * jax.random.normal(k3, (cout,), jnp.float32)
    rvar = jax.random.uniform(k4, (cout,), jnp.float32, 0.5, 1.5)
    scale = gamma / jnp.sqrt(rvar + _EPS)
    bias = beta + scale * (conv_bias - rmean)
    return scale, bias


def _conv3x3_params(key, cin, cout):
    kw, kb, kbn = jax.random.split(key, 3)
    w = jax.random.normal(kw, (3, 3, cin, cout), jnp.float32) * np.sqrt(2.0 / (9 * cin))
    b = 0.05 * jax.random.normal(kb, (cout,), jnp.float32)
    scale, bias = _fold_bn(kbn, cout, b)
    return {"w": w.astype(jnp.bfloat16),          # (3, 3, cin, cout)
            "scale": scale.reshape(1, cout),
            "bias": bias.reshape(1, cout)}


def _side_params(key, cin):
    kw, kb, kbn = jax.random.split(key, 3)
    w = jax.random.normal(kw, (cin,), jnp.float32) * np.sqrt(2.0 / cin)
    b = 0.05 * jax.random.normal(kb, (1,), jnp.float32)
    scale, bias = _fold_bn(kbn, 1, b)
    return {"w": (w * scale[0]).reshape(1, cin),
            "b": bias.reshape(1, 1).astype(jnp.float32)}


def _ups_params(key, k, s, h_in, hout):
    """ConvTranspose2d(1,1,k,stride=s) + center-crop, factored into two 0/1
    expansion matrices (row/col, exact in bf16) and 4 elementwise weight maps
    (k == 2*s)."""
    kw, kb = jax.random.split(key)
    w = np.asarray(jax.random.normal(kw, (k, k), jnp.float32)) * (1.0 / k)
    b = float(0.05 * jax.random.normal(kb, ()))
    off = (k - s) // 2
    yy = np.arange(hout)
    u = (yy + off) // s
    a = (yy + off) % s
    ur = np.zeros((2, hout, h_in), np.float32)
    for dy in range(2):
        idx = u - dy
        ok = (idx >= 0) & (idx < h_in)
        ur[dy, yy[ok], idx[ok]] = 1.0
    wm = np.zeros((4, hout, hout), np.float32)
    for dy in range(2):
        for dx in range(2):
            wm[dy * 2 + dx] = w[np.ix_(a + s * dy, a + s * dx)]
    return {"ur0": jnp.asarray(ur[0], jnp.bfloat16),
            "ur1": jnp.asarray(ur[1], jnp.bfloat16),
            "uc0": jnp.asarray(ur[0].T.copy(), jnp.bfloat16),
            "uc1": jnp.asarray(ur[1].T.copy(), jnp.bfloat16),
            "wm": jnp.asarray(wm),
            "b": jnp.full((1, 1), b, jnp.float32)}


def _fuse_params(key):
    kw, kb = jax.random.split(key)
    w = jax.random.normal(kw, (5,), jnp.float32) * np.sqrt(2.0 / 5)
    b = 0.05 * jax.random.normal(kb, (), jnp.float32)
    fw = jnp.zeros((8,), jnp.float32).at[0:5].set(w).at[5].set(b)
    return {"fw": fw}


def init_hed_params(key, h, w):
    assert h == w and h % 16 == 0, "demo assumes square input divisible by 16"
    keys = iter(jax.random.split(key, 32))
    blocks = [[_conv3x3_params(next(keys), cin, cout) for cin, cout in blk]
              for blk in VGG_BLOCKS]
    sides = [_side_params(next(keys), cin) for cin in SIDE_CIN]
    ups = [None]
    for i in range(1, 5):
        kk, ss = UPS_KS[i]
        ups.append(_ups_params(next(keys), kk, ss, h // (2 ** i), h))
    fuse = _fuse_params(next(keys))
    return {"blocks": blocks, "sides": sides, "ups": ups, "fuse": fuse}


# ----------------------------------------------------------------------------
# HED forward
# ----------------------------------------------------------------------------
def hed_forward(x_nchw, params):
    # NCHW -> NHWC; activations travel as bf16 between blocks (MXU operands).
    x = jnp.transpose(x_nchw, (0, 2, 3, 1)).astype(jnp.bfloat16)
    n, h, w, _ = x.shape

    feat = x
    side_maps = []
    for i in range(5):
        hb, wb, c = h >> i, w >> i, BLOCK_C[i]
        cins = [cin for cin, _ in VGG_BLOCKS[i]]
        feat, side = _run_block(feat, params["blocks"][i], params["sides"][i],
                                hb, wb, c, cins, pool=(i > 0),
                                side_sigmoid=(i == 0))
        side_maps.append(side)

    # side 1 is already sigmoid'ed at full resolution; sides 2-5 go through the
    # fused (transposed-conv upsample + center crop + sigmoid) kernel.
    outputs = [side_maps[0]]
    for i in range(1, 5):
        outputs.append(_run_upsample(side_maps[i], params["ups"][i]))

    yfuse = _run_fuse(outputs, params["fuse"])
    outputs.append(yfuse)
    return [o[:, None, :, :] for o in outputs]                    # (N, 1, H, W)


if __name__ == "__main__":
    key = jax.random.PRNGKey(0)
    kp, kx = jax.random.split(key)
    H = W = 16
    params = init_hed_params(kp, H, W)
    x = jax.random.normal(kx, (2, 3, H, W), jnp.float32)

    outs = hed_forward(x, params)
    for o in outs:
        jax.block_until_ready(o)

    assert len(outs) == 6
    assert all(o.shape == (2, 1, H, W) for o in outs)
    assert all(bool(jnp.all(jnp.isfinite(o))) for o in outs)
    print("KERNEL_OK")
</pallas_src>

<mosaic_0001>
module attributes {stable_mosaic.version = 11 : i64} {
  func.func @kernel(%arg0: i32, %arg1: memref<1x16x16x3xbf16, #tpu.memory_space<vmem>>, %arg2: memref<3x9x64xbf16, #tpu.memory_space<vmem>>, %arg3: memref<1x64xf32, #tpu.memory_space<vmem>>, %arg4: memref<1x64xf32, #tpu.memory_space<vmem>>, %arg5: memref<3x192x64xbf16, #tpu.memory_space<vmem>>, %arg6: memref<1x64xf32, #tpu.memory_space<vmem>>, %arg7: memref<1x64xf32, #tpu.memory_space<vmem>>, %arg8: memref<1x64xf32, #tpu.memory_space<vmem>>, %arg9: memref<1x1xf32, #tpu.memory_space<smem>>, %arg10: memref<1x16x16x64xbf16, #tpu.memory_space<vmem>>, %arg11: memref<1x16x16xf32, #tpu.memory_space<vmem>>, %arg12: memref<448x64xbf16, #tpu.memory_space<vmem>>) attributes {dimension_semantics = [#tpu.dimension_semantics<parallel>], iteration_bounds = array<i64: 2>, scalar_prefetch = 0 : i64, scratch_operands = 1 : i64, tpu.core_type = #tpu.core_type<tc>, window_params = [{transform_indices = @transform_0, window_bounds = array<i64: 1, 16, 16, 3>}, {pipeline_mode = #tpu.pipeline_mode<synchronous>, transform_indices = @transform_1, window_bounds = array<i64: 3, 9, 64>}, {pipeline_mode = #tpu.pipeline_mode<synchronous>, transform_indices = @transform_2, window_bounds = array<i64: 1, 64>}, {pipeline_mode = #tpu.pipeline_mode<synchronous>, transform_indices = @transform_3, window_bounds = array<i64: 1, 64>}, {pipeline_mode = #tpu.pipeline_mode<synchronous>, transform_indices = @transform_4, window_bounds = array<i64: 3, 192, 64>}, {pipeline_mode = #tpu.pipeline_mode<synchronous>, transform_indices = @transform_5, window_bounds = array<i64: 1, 64>}, {pipeline_mode = #tpu.pipeline_mode<synchronous>, transform_indices = @transform_6, window_bounds = array<i64: 1, 64>}, {pipeline_mode = #tpu.pipeline_mode<synchronous>, transform_indices = @transform_7, window_bounds = array<i64: 1, 64>}, {transform_indices = @transform_8, window_bounds = array<i64: 1, 1>}, {transform_indices = @transform_9, window_bounds = array<i64: 1, 16, 16, 64>}, {transform_indices = @transform_10, window_bounds = array<i64: 1, 16, 16>}]} {
    %cst = arith.constant 0.000000e+00 : bf16
    %0 = vector.broadcast %cst : bf16 to vector<32x64xbf16>
    %c0 = arith.constant 0 : index
    %c0_0 = arith.constant 0 : index
    %1 = vector.load %arg12[%c0, %c0_0] : memref<448x64xbf16, #tpu.memory_space<vmem>>, vector<32x64xbf16>
    tpu.vector_store %arg12[%c0, %c0_0], %0 {strides = array<i32>} : memref<448x64xbf16, #tpu.memory_space<vmem>>, vector<32x64xbf16>,
    %cst_1 = arith.constant 0.000000e+00 : bf16
    %2 = vector.broadcast %cst_1 : bf16 to vector<32x64xbf16>
    %c416 = arith.constant 416 : index
    %c0_2 = arith.constant 0 : index
    %3 = vector.load %arg12[%c416, %c0_2] : memref<448x64xbf16, #tpu.memory_space<vmem>>, vector<32x64xbf16>
    tpu.vector_store %arg12[%c416, %c0_2], %2 {strides = array<i32>} : memref<448x64xbf16, #tpu.memory_space<vmem>>, vector<32x64xbf16>,
    %c0_3 = arith.constant 0 : index
    %c0_4 = arith.constant 0 : index
    %c0_5 = arith.constant 0 : index
    %c0_6 = arith.constant 0 : index
    %4 = vector.load %arg1[%c0_3, %c0_4, %c0_5, %c0_6] : memref<1x16x16x3xbf16, #tpu.memory_space<vmem>>, vector<1x16x16x3xbf16>
    %5 = vector.shape_cast %4 : vector<1x16x16x3xbf16> to vector<16x16x3xbf16>
    %cst_7 = arith.constant 0.000000e+00 : bf16
    %6 = vector.broadcast %cst_7 : bf16 to vector<16x8x3xbf16>
    %7 = tpu.concatenate %5, %6 in 1 : vector<16x16x3xbf16>, vector<16x8x3xbf16> -> vector<16x24x3xbf16>
    %8 = vector.shape_cast %7 : vector<16x24x3xbf16> to vector<384x3xbf16>
    %c32 = arith.constant 32 : index
    %c0_8 = arith.constant 0 : index
    %9 = vector.load %arg12[%c32, %c0_8] : memref<448x64xbf16, #tpu.memory_space<vmem>>, vector<384x3xbf16>
    tpu.vector_store %arg12[%c32, %c0_8], %8 {strides = array<i32>} : memref<448x64xbf16, #tpu.memory_space<vmem>>, vector<384x3xbf16>,
    %10 = tpu.iota {dimensions = array<i32: 0>} : vector<384x1xi32>
    %c24_i32 = arith.constant 24 : i32
    %c0_i32 = arith.constant 0 : i32
    %11 = arith.cmpi eq, %c24_i32, %c0_i32 : i32
    %c1_i32 = arith.constant 1 : i32
    %12 = arith.select %11, %c1_i32, %c24_i32 : i32
    %13 = vector.broadcast %12 : i32 to vector<384x1xi32>
    %14 = arith.remsi %10, %13 : vector<384x1xi32>
    %c0_i32_9 = arith.constant 0 : i32
    %15 = vector.broadcast %c0_i32_9 : i32 to vector<384x1xi32>
    %16 = arith.cmpi ne, %14, %15 : vector<384x1xi32>
    %c0_i32_10 = arith.constant 0 : i32
    %17 = vector.broadcast %c0_i32_10 : i32 to vector<384x1xi32>
    %18 = arith.cmpi slt, %14, %17 : vector<384x1xi32>
    %c0_i32_11 = arith.constant 0 : i32
    %19 = arith.cmpi slt, %12, %c0_i32_11 : i32
    %20 = vector.broadcast %19 : i1 to vector<384x1xi1>
    %21 = vector.broadcast %20 : vector<384x1xi1> to vector<384x1xi1>
    %22 = arith.xori %18, %21 : vector<384x1xi1>
    %23 = arith.andi %22, %16 : vector<384x1xi1>
    %24 = vector.broadcast %12 : i32 to vector<384x1xi32>
    %25 = arith.addi %14, %24 : vector<384x1xi32>
    %26 = arith.select %23, %25, %14 : vector<384x1xi1>, vector<384x1xi32>
    %c16_i32 = arith.constant 16 : i32
    %27 = vector.broadcast %c16_i32 : i32 to vector<384x1xi32>
    %28 = arith.cmpi slt, %26, %27 : vector<384x1xi32>
    %cst_12 = arith.constant 0.000000e+00 : f32
    %29 = vector.broadcast %cst_12 : f32 to vector<384x64xf32>
    %c7 = arith.constant 7 : index
    %c0_13 = arith.constant 0 : index
    %30 = vector.load %arg12[%c7, %c0_13] : memref<448x64xbf16, #tpu.memory_space<vmem>>, vector<432x3xbf16>
    %c8 = arith.constant 8 : index
    %c0_14 = arith.constant 0 : index
    %31 = vector.load %arg12[%c8, %c0_14] : memref<448x64xbf16, #tpu.memory_space<vmem>>, vector<432x3xbf16>
    %c9 = arith.constant 9 : index
    %c0_15 = arith.constant 0 : index
    %32 = vector.load %arg12[%c9, %c0_15] : memref<448x64xbf16, #tpu.memory_space<vmem>>, vector<432x3xbf16>
    %33 = tpu.concatenate %30, %31, %32 in 1 : vector<432x3xbf16>, vector<432x3xbf16>, vector<432x3xbf16> -> vector<432x9xbf16>
    %34 = vector.extract_strided_slice %33 {offsets = [0, 0], sizes = [384, 9], strides = [1, 1]} : vector<432x9xbf16> to vector<384x9xbf16>
    %c0_16 = arith.constant 0 : index
    %c0_17 = arith.constant 0 : index
    %c0_18 = arith.constant 0 : index
    %35 = vector.load %arg2[%c0_16, %c0_17, %c0_18] : memref<3x9x64xbf16, #tpu.memory_space<vmem>>, vector<1x9x64xbf16>
    %36 = vector.shape_cast %35 : vector<1x9x64xbf16> to vector<9x64xbf16>
    %cst_19 = arith.constant dense<0.000000e+00> : vector<384x64xf32>
    %37 = tpu.matmul %34, %36, %cst_19 {dimension_numbers = #tpu.dot_dimension_numbers<[1], [0], [0], [1], [0, 0, 1, 1], [], []>} : vector<384x9xbf16>, vector<9x64xbf16>, vector<384x64xf32> -> vector<384x64xf32>
    %38 = arith.addf %29, %37 : vector<384x64xf32>
    %39 = vector.extract_strided_slice %33 {offsets = [24, 0], sizes = [384, 9], strides = [1, 1]} : vector<432x9xbf16> to vector<384x9xbf16>
    %c1 = arith.constant 1 : index
    %c0_20 = arith.constant 0 : index
    %c0_21 = arith.constant 0 : index
    %40 = vector.load %arg2[%c1, %c0_20, %c0_21] : memref<3x9x64xbf16, #tpu.memory_space<vmem>>, vector<1x9x64xbf16>
    %41 = vector.shape_cast %40 : vector<1x9x64xbf16> to vector<9x64xbf16>
    %cst_22 = arith.constant dense<0.000000e+00> : vector<384x64xf32>
    %42 = tpu.matmul %39, %41, %cst_22 {dimension_numbers = #tpu.dot_dimension_numbers<[1], [0], [0], [1], [0, 0, 1, 1], [], []>} : vector<384x9xbf16>, vector<9x64xbf16>, vector<384x64xf32> -> vector<384x64xf32>
    %43 = arith.addf %38, %42 : vector<384x64xf32>
    %44 = vector.extract_strided_slice %33 {offsets = [48, 0], sizes = [384, 9], strides = [1, 1]} : vector<432x9xbf16> to vector<384x9xbf16>
    %c2 = arith.constant 2 : index
    %c0_23 = arith.constant 0 : index
    %c0_24 = arith.constant 0 : index
    %45 = vector.load %arg2[%c2, %c0_23, %c0_24] : memref<3x9x64xbf16, #tpu.memory_space<vmem>>, vector<1x9x64xbf16>
    %46 = vector.shape_cast %45 : vector<1x9x64xbf16> to vector<9x64xbf16>
    %cst_25 = arith.constant dense<0.000000e+00> : vector<384x64xf32>
    %47 = tpu.matmul %44, %46, %cst_25 {dimension_numbers = #tpu.dot_dimension_numbers<[1], [0], [0], [1], [0, 0, 1, 1], [], []>} : vector<384x9xbf16>, vector<9x64xbf16>, vector<384x64xf32> -> vector<384x64xf32>
    %48 = arith.addf %43, %47 : vector<384x64xf32>
    %c0_26 = arith.constant 0 : index
    %c0_27 = arith.constant 0 : index
    %49 = vector.load %arg3[%c0_26, %c0_27] : memref<1x64xf32, #tpu.memory_space<vmem>>, vector<1x64xf32>
    %50 = vector.broadcast %49 : vector<1x64xf32> to vector<384x64xf32>
    %51 = arith.mulf %48, %50 : vector<384x64xf32>
    %c0_28 = arith.constant 0 : index
    %c0_29 = arith.constant 0 : index
    %52 = vector.load %arg4[%c0_28, %c0_29] : memref<1x64xf32, #tpu.memory_space<vmem>>, vector<1x64xf32>
    %53 = vector.broadcast %52 : vector<1x64xf32> to vector<384x64xf32>
    %54 = arith.addf %51, %53 : vector<384x64xf32>
    %cst_30 = arith.constant 0.000000e+00 : f32
    %55 = vector.broadcast %cst_30 : f32 to vector<384x64xf32>
    %56 = arith.maximumf %54, %55 : vector<384x64xf32>
    %cst_31 = arith.constant 0.000000e+00 : f32
    %57 = vector.shape_cast %28 : vector<384x1xi1> to vector<384x1xi1>
    %58 = vector.broadcast %57 : vector<384x1xi1> to vector<384x64xi1>
    %59 = vector.broadcast %cst_31 : f32 to vector<384x64xf32>
    %60 = arith.select %58, %56, %59 : vector<384x64xi1>, vector<384x64xf32>
    %61 = arith.truncf %60 : vector<384x64xf32> to vector<384x64xbf16>
    %c32_32 = arith.constant 32 : index
    %c0_33 = arith.constant 0 : index
    %62 = vector.load %arg12[%c32_32, %c0_33] : memref<448x64xbf16, #tpu.memory_space<vmem>>, vector<384x64xbf16>
    tpu.vector_store %arg12[%c32_32, %c0_33], %61 {strides = array<i32>} : memref<448x64xbf16, #tpu.memory_space<vmem>>, vector<384x64xbf16>,
    %cst_34 = arith.constant 0.000000e+00 : f32
    %63 = vector.broadcast %cst_34 : f32 to vector<384x64xf32>
    %c7_35 = arith.constant 7 : index
    %c0_36 = arith.constant 0 : index
    %64 = vector.load %arg12[%c7_35, %c0_36] : memref<448x64xbf16, #tpu.memory_space<vmem>>, vector<432x64xbf16>
    %c8_37 = arith.constant 8 : index
    %c0_38 = arith.constant 0 : index
    %65 = vector.load %arg12[%c8_37, %c0_38] : memref<448x64xbf16, #tpu.memory_space<vmem>>, vector<432x64xbf16>
    %c9_39 = arith.constant 9 : index
    %c0_40 = arith.constant 0 : index
    %66 = vector.load %arg12[%c9_39, %c0_40] : memref<448x64xbf16, #tpu.memory_space<vmem>>, vector<432x64xbf16>
    %67 = tpu.concatenate %64, %65, %66 in 1 : vector<432x64xbf16>, vector<432x64xbf16>, vector<432x64xbf16> -> vector<432x192xbf16>
    %68 = vector.extract_strided_slice %67 {offsets = [0, 0], sizes = [384, 192], strides = [1, 1]} : vector<432x192xbf16> to vector<384x192xbf16>
    %c0_41 = arith.constant 0 : index
    %c0_42 = arith.constant 0 : index
    %c0_43 = arith.constant 0 : index
    %69 = vector.load %arg5[%c0_41, %c0_42, %c0_43] : memref<3x192x64xbf16, #tpu.memory_space<vmem>>, vector<1x192x64xbf16>
    %70 = vector.shape_cast %69 : vector<1x192x64xbf16> to vector<192x64xbf16>
    %cst_44 = arith.constant dense<0.000000e+00> : vector<384x64xf32>
    %71 = tpu.matmul %68, %70, %cst_44 {dimension_numbers = #tpu.dot_dimension_numbers<[1], [0], [0], [1], [0, 0, 1, 1], [], []>} : vector<384x192xbf16>, vector<192x64xbf16>, vector<384x64xf32> -> vector<384x64xf32>
    %72 = arith.addf %63, %71 : vector<384x64xf32>
    %73 = vector.extract_strided_slice %67 {offsets = [24, 0], sizes = [384, 192], strides = [1, 1]} : vector<432x192xbf16> to vector<384x192xbf16>
    %c1_45 = arith.constant 1 : index
    %c0_46 = arith.constant 0 : index
    %c0_47 = arith.constant 0 : index
    %74 = vector.load %arg5[%c1_45, %c0_46, %c0_47] : memref<3x192x64xbf16, #tpu.memory_space<vmem>>, vector<1x192x64xbf16>
    %75 = vector.shape_cast %74 : vector<1x192x64xbf16> to vector<192x64xbf16>
    %cst_48 = arith.constant dense<0.000000e+00> : vector<384x64xf32>
    %76 = tpu.matmul %73, %75, %cst_48 {dimension_numbers = #tpu.dot_dimension_numbers<[1], [0], [0], [1], [0, 0, 1, 1], [], []>} : vector<384x192xbf16>, vector<192x64xbf16>, vector<384x64xf32> -> vector<384x64xf32>
    %77 = arith.addf %72, %76 : vector<384x64xf32>
    %78 = vector.extract_strided_slice %67 {offsets = [48, 0], sizes = [384, 192], strides = [1, 1]} : vector<432x192xbf16> to vector<384x192xbf16>
    %c2_49 = arith.constant 2 : index
    %c0_50 = arith.constant 0 : index
    %c0_51 = arith.constant 0 : index
    %79 = vector.load %arg5[%c2_49, %c0_50, %c0_51] : memref<3x192x64xbf16, #tpu.memory_space<vmem>>, vector<1x192x64xbf16>
    %80 = vector.shape_cast %79 : vector<1x192x64xbf16> to vector<192x64xbf16>
    %cst_52 = arith.constant dense<0.000000e+00> : vector<384x64xf32>
    %81 = tpu.matmul %78, %80, %cst_52 {dimension_numbers = #tpu.dot_dimension_numbers<[1], [0], [0], [1], [0, 0, 1, 1], [], []>} : vector<384x192xbf16>, vector<192x64xbf16>, vector<384x64xf32> -> vector<384x64xf32>
    %82 = arith.addf %77, %81 : vector<384x64xf32>
    %c0_53 = arith.constant 0 : index
    %c0_54 = arith.constant 0 : index
    %83 = vector.load %arg6[%c0_53, %c0_54] : memref<1x64xf32, #tpu.memory_space<vmem>>, vector<1x64xf32>
    %84 = vector.broadcast %83 : vector<1x64xf32> to vector<384x64xf32>
    %85 = arith.mulf %82, %84 : vector<384x64xf32>
    %c0_55 = arith.constant 0 : index
    %c0_56 = arith.constant 0 : index
    %86 = vector.load %arg7[%c0_55, %c0_56] : memref<1x64xf32, #tpu.memory_space<vmem>>, vector<1x64xf32>
    %87 = vector.broadcast %86 : vector<1x64xf32> to vector<384x64xf32>
    %88 = arith.addf %85, %87 : vector<384x64xf32>
    %cst_57 = arith.constant 0.000000e+00 : f32
    %89 = vector.broadcast %cst_57 : f32 to vector<384x64xf32>
    %90 = arith.maximumf %88, %89 : vector<384x64xf32>
    %91 = arith.truncf %90 : vector<384x64xf32> to vector<384x64xbf16>
    %92 = vector.shape_cast %91 : vector<384x64xbf16> to vector<16x24x64xbf16>
    %93 = vector.extract_strided_slice %92 {offsets = [0, 0, 0], sizes = [16, 16, 64], strides = [1, 1, 1]} : vector<16x24x64xbf16> to vector<16x16x64xbf16>
    %c0_58 = arith.constant 0 : index
    %c0_59 = arith.constant 0 : index
    %c0_60 = arith.constant 0 : index
    %c0_61 = arith.constant 0 : index
    %94 = vector.load %arg10[%c0_58, %c0_59, %c0_60, %c0_61] : memref<1x16x16x64xbf16, #tpu.memory_space<vmem>>, vector<1x16x16x64xbf16>
    %95 = vector.shape_cast %94 : vector<1x16x16x64xbf16> to vector<16x16x64xbf16>
    %96 = vector.shape_cast %93 : vector<16x16x64xbf16> to vector<1x16x16x64xbf16>
    tpu.vector_store %arg10[%c0_58, %c0_59, %c0_60, %c0_61], %96 {strides = array<i32>} : memref<1x16x16x64xbf16, #tpu.memory_space<vmem>>, vector<1x16x16x64xbf16>,
    %c0_62 = arith.constant 0 : index
    %c0_63 = arith.constant 0 : index
    %97 = vector.load %arg8[%c0_62, %c0_63] : memref<1x64xf32, #tpu.memory_space<vmem>>, vector<1x64xf32>
    %98 = arith.extf %93 : vector<16x16x64xbf16> to vector<16x16x64xf32>
    %99 = vector.shape_cast %97 : vector<1x64xf32> to vector<1x1x64xf32>
    %100 = vector.broadcast %99 : vector<1x1x64xf32> to vector<16x16x64xf32>
    %101 = arith.mulf %98, %100 : vector<16x16x64xf32>
    %cst_64 = arith.constant dense<0.000000e+00> : vector<16x16xf32>
    %102 = vector.multi_reduction <add>, %101, %cst_64 [2] : vector<16x16x64xf32> to vector<16x16xf32>
    %c0_65 = arith.constant 0 : index
    %c0_66 = arith.constant 0 : index
    %103 = memref.load %arg9[%c0_65, %c0_66] : memref<1x1xf32, #tpu.memory_space<smem>>
    %104 = vector.broadcast %103 : f32 to vector<16x16xf32>
    %105 = arith.addf %102, %104 : vector<16x16xf32>
    %cst_67 = arith.constant 0.000000e+00 : f32
    %106 = vector.broadcast %cst_67 : f32 to vector<16x16xf32>
    %107 = arith.maximumf %105, %106 : vector<16x16xf32>
    %108 = arith.negf %107 : vector<16x16xf32>
    %109 = math.exp %108 : vector<16x16xf32>
    %cst_68 = arith.constant 1.000000e+00 : f32
    %110 = vector.broadcast %cst_68 : f32 to vector<16x16xf32>
    %111 = arith.addf %110, %109 : vector<16x16xf32>
    %112 = arith.divf %110, %111 : vector<16x16xf32>
    %c0_69 = arith.constant 0 : index
    %c0_70 = arith.constant 0 : index
    %c0_71 = arith.constant 0 : index
    %113 = vector.load %arg11[%c0_69, %c0_70, %c0_71] : memref<1x16x16xf32, #tpu.memory_space<vmem>>, vector<1x16x16xf32>
    %114 = vector.shape_cast %113 : vector<1x16x16xf32> to vector<16x16xf32>
    %115 = vector.shape_cast %112 : vector<16x16xf32> to vector<1x16x16xf32>
    tpu.vector_store %arg11[%c0_69, %c0_70, %c0_71], %115 {strides = array<i32>} : memref<1x16x16xf32, #tpu.memory_space<vmem>>, vector<1x16x16xf32>,
    return
  }
  func.func @transform_0(%arg0: i32) -> (i32, i32, i32, i32) {
    %c0_i32 = arith.constant 0 : i32
    %c0_i32_0 = arith.constant 0 : i32
    %c0_i32_1 = arith.constant 0 : i32
    %c0_i32_2 = arith.constant 0 : i32
    return %arg0, %c0_i32, %c0_i32_0, %c0_i32_1 : i32, i32, i32, i32
  }
  func.func @transform_1(%arg0: i32) -> (i32, i32, i32) {
    %c0_i32 = arith.constant 0 : i32
    %c0_i32_0 = arith.constant 0 : i32
    %c0_i32_1 = arith.constant 0 : i32
    %c0_i32_2 = arith.constant 0 : i32
    return %c0_i32, %c0_i32_0, %c0_i32_1 : i32, i32, i32
  }
  func.func @transform_2(%arg0: i32) -> (i32, i32) {
    %c0_i32 = arith.constant 0 : i32
    %c0_i32_0 = arith.constant 0 : i32
    %c0_i32_1 = arith.constant 0 : i32
    return %c0_i32, %c0_i32_0 : i32, i32
  }
  func.func @transform_3(%arg0: i32) -> (i32, i32) {
    %c0_i32 = arith.constant 0 : i32
    %c0_i32_0 = arith.constant 0 : i32
    %c0_i32_1 = arith.constant 0 : i32
    return %c0_i32, %c0_i32_0 : i32, i32
  }
  func.func @transform_4(%arg0: i32) -> (i32, i32, i32) {
    %c0_i32 = arith.constant 0 : i32
    %c0_i32_0 = arith.constant 0 : i32
    %c0_i32_1 = arith.constant 0 : i32
    %c0_i32_2 = arith.constant 0 : i32
    return %c0_i32, %c0_i32_0, %c0_i32_1 : i32, i32, i32
  }
  func.func @transform_5(%arg0: i32) -> (i32, i32) {
    %c0_i32 = arith.constant 0 : i32
    %c0_i32_0 = arith.constant 0 : i32
    %c0_i32_1 = arith.constant 0 : i32
    return %c0_i32, %c0_i32_0 : i32, i32
  }
  func.func @transform_6(%arg0: i32) -> (i32, i32) {
    %c0_i32 = arith.constant 0 : i32
    %c0_i32_0 = arith.constant 0 : i32
    %c0_i32_1 = arith.constant 0 : i32
    return %c0_i32, %c0_i32_0 : i32, i32
  }
  func.func @transform_7(%arg0: i32) -> (i32, i32) {
    %c0_i32 = arith.constant 0 : i32
    %c0_i32_0 = arith.constant 0 : i32
    %c0_i32_1 = arith.constant 0 : i32
    return %c0_i32, %c0_i32_0 : i32, i32
  }
  func.func @transform_8(%arg0: i32) -> (i32, i32) {
    %c0_i32 = arith.constant 0 : i32
    %c0_i32_0 = arith.constant 0 : i32
    %c0_i32_1 = arith.constant 0 : i32
    return %c0_i32, %c0_i32_0 : i32, i32
  }
  func.func @transform_9(%arg0: i32) -> (i32, i32, i32, i32) {
    %c0_i32 = arith.constant 0 : i32
    %c0_i32_0 = arith.constant 0 : i32
    %c0_i32_1 = arith.constant 0 : i32
    %c0_i32_2 = arith.constant 0 : i32
    return %arg0, %c0_i32, %c0_i32_0, %c0_i32_1 : i32, i32, i32, i32
  }
  func.func @transform_10(%arg0: i32) -> (i32, i32, i32) {
    %c0_i32 = arith.constant 0 : i32
    %c0_i32_0 = arith.constant 0 : i32
    %c0_i32_1 = arith.constant 0 : i32
    return %arg0, %c0_i32, %c0_i32_0 : i32, i32, i32
  }
}

</mosaic_0001>

<llo_original>
// kernel: tpu_custom_call.1
$region0: #{tpu_custom_call.1}
  #allocation0 [shape = 'u32[]', space=smem, size = 0x4, offset = 0x4, fixed_abs, tag = 'smem constant byte address 0x4 - core index']
  #allocation1 [shape = 'u32[144,128]{1,0:T(1,128)}', space=vmem, size = 0x12000, scoped, tag = 'internal scratch']
  #allocation2 [shape = 'bf16[448,64]{1,0:T(8,128)(2,1)}', space=vmem, size = 0x1c000, scoped, tag = 'scratch operand']
  #allocation3 [shape = 'f32[1,1]{1,0:T(1,128)S(6)}', space=smem, size = 0x200, scoped, tag = 'scoped memory for tpu_custom_call.1']
  %s0 = inlined_call_operand.vmem [shape: bf16[2,16,16,3], index: 0, kind: input, shape index: {}]
  %s1 = inlined_call_operand.vmem [shape: bf16[3,9,64], index: 1, kind: input, shape index: {}]
  %s2 = inlined_call_operand.vmem [shape: f32[1,64], index: 2, kind: input, shape index: {}]
  %s3 = inlined_call_operand.vmem [shape: f32[1,64], index: 3, kind: input, shape index: {}]
  %s4 = inlined_call_operand.vmem [shape: bf16[3,192,64], index: 4, kind: input, shape index: {}]
  %s5 = inlined_call_operand.vmem [shape: f32[1,64], index: 5, kind: input, shape index: {}]
  %s6 = inlined_call_operand.vmem [shape: f32[1,64], index: 6, kind: input, shape index: {}]
  %s7 = inlined_call_operand.vmem [shape: f32[1,64], index: 7, kind: input, shape index: {}]
  %s8 = inlined_call_operand.<no memory space> [shape: f32[1,1], index: 8, kind: input, shape index: {}]
  %s9 = inlined_call_operand.hbm [shape: bf16[2,16,16,64], index: 9, kind: output, shape index: {0}]
  %s10 = inlined_call_operand.hbm [shape: f32[2,16,16], index: 10, kind: output, shape index: {1}]
  %11 = xla_tuple %s9, %s10
  %s12 = sld [smem:[#allocation0]]
  $region77: #{tpu_custom_call.1} parent=0
    _
  %s14 = ssub.s32 1, %s12
  %s15 = scalar_select 0, %s14, %s12
  %16 = sst [smem:[#allocation3]] %s8
  $region1: #{tpu_custom_call.1} parent=0
    #allocation4 [shape = 'u8[131072]{0}', space=vmem, size = 0x20000, scoped, tag = 'output window, operand 0']
    #allocation5 [shape = 's32[2]{0}', space=sflag, size = 0x8, scoped, tag = 'scoped memory for tpu_custom_call.1']
    #allocation6 [shape = 'u8[16384]{0}', space=vmem, size = 0x4000, scoped, tag = 'output window, operand 1']
    #allocation7 [shape = 's32[2]{0}', space=sflag, size = 0x8, scoped, tag = 'scoped memory for tpu_custom_call.1']
    %17 = vsyncpa [#allocation5], 0
    %s18 = scalar_lea.sflag [#allocation5], 1
    %19 = vsyncpa %s18, 0
    %20 = vsyncpa [#allocation7], 0
    %s21 = scalar_lea.sflag [#allocation7], 1
    %22 = vsyncpa %s21, 0
    loop: start=0, step=1, limit=4
    $region2: #{tpu_custom_call.1} parent=1 // loop_pre_header
      _
    $region3: #{tpu_custom_call.1} parent=1 // loop_header
      %s24 = sphi 0, %s28
      %p25 = scmp.ge.s32.totalorder %s24, 4
      %s34 = sphi 0, %s36
      %s37 = sphi 0, %s34
      %s38 = sphi 0, %s37
      %s54 = sphi 0, %s38
      %s58 = sphi 0, %s58
      %s60 = sphi 0, %s58
      %s61 = sphi 0, %s60
      %s75 = sphi 0, %s61
      %s79 = sphi 0, %s79
      %s81 = sphi 0, %s79
      %s82 = sphi 0, %s81
      %s96 = sphi 0, %s82
      %s100 = sphi 0, %s100
      %s102 = sphi 0, %s100
      %s103 = sphi 0, %s102
      %s117 = sphi 0, %s103
      %s121 = sphi 0, %s121
      %s123 = sphi 0, %s121
      %s124 = sphi 0, %s123
      %s138 = sphi 0, %s124
      %s142 = sphi 0, %s142
      %s144 = sphi 0, %s142
      %s145 = sphi 0, %s144
      %s159 = sphi 0, %s145
      %s163 = sphi 0, %s163
      %s165 = sphi 0, %s163
      %s166 = sphi 0, %s165
      %s180 = sphi 0, %s166
      %s184 = sphi 0, %s184
      %s186 = sphi 0, %s184
      %s187 = sphi 0, %s186
      %s201 = sphi 0, %s187
      %s205 = sphi 0, %s205
      %s207 = sphi 0, %s205
      %s208 = sphi 0, %s207
      %s222 = sphi 0, %s208
      %s228 = sphi 0, %s230
      %s231 = sphi 0, %s228
      %s232 = sphi 0, %s231
      %s248 = sphi 0, %s232
      %s254 = sphi 0, %s256
      %s257 = sphi 0, %s254
      %s258 = sphi 0, %s257
      %s274 = sphi 0, %s258
    $region4: #{tpu_custom_call.1} parent=1 // loop_header_branch
      %27 = sbr.rel (%p25) target = $region8
    $region5: #{tpu_custom_call.1} parent=1 // loop_body
      %s29 = ssub.s32 %s24, 1
      %s30 = ssub.s32 %s24, 2
      %s31 = sadd.s32 %s24, 1
      %s32 = ssub.s32 %s24, %s31
      %p33 = scmp.eq.s32.totalorder %s32, 0
      %s35 = sadd.s32 %s34, 1
      %s36 = scalar_select %p33, %s34, %s35
      %p39 = pneg %p33
      %p40 = scmp.eq.s32.totalorder %s24, 1
      %p41 = por %p39, %p40
      %p42 = scmp.ne.s32.totalorder %s34, %s37
      %p43 = scmp.eq.s32.totalorder %s24, 0
      %p44 = por %p42, %p43
      %p45 = scmp.ne.s32.totalorder %s34, %s37
      %p46 = scmp.eq.s32.totalorder %s29, 1
      %p47 = por %p45, %p46
      %p48 = scmp.ne.s32.totalorder %s37, %s38
      %p49 = scmp.eq.s32.totalorder %s29, 0
      %p50 = por %p48, %p49
      %p51 = scmp.ne.s32.totalorder %s37, %s38
      %p52 = scmp.eq.s32.totalorder %s30, 1
      %p53 = por %p51, %p52
      %p55 = scmp.ne.s32.totalorder %s38, %s54
      %p56 = scmp.eq.s32.totalorder %s30, 0
      %p57 = por %p55, %p56
      %s59 = sadd.s32 %s58, 1
      %p62 = scmp.eq.s32.totalorder %s24, 1
      %p63 = scmp.ne.s32.totalorder %s58, %s60
      %p64 = scmp.eq.s32.totalorder %s24, 0
      %p65 = por %p63, %p64
      %p66 = scmp.ne.s32.totalorder %s58, %s60
      %p67 = scmp.eq.s32.totalorder %s29, 1
      %p68 = por %p66, %p67
      %p69 = scmp.ne.s32.totalorder %s60, %s61
      %p70 = scmp.eq.s32.totalorder %s29, 0
      %p71 = por %p69, %p70
      %p72 = scmp.ne.s32.totalorder %s60, %s61
      %p73 = scmp.eq.s32.totalorder %s30, 1
      %p74 = por %p72, %p73
      %p76 = scmp.ne.s32.totalorder %s61, %s75
      %p77 = scmp.eq.s32.totalorder %s30, 0
      %p78 = por %p76, %p77
      %s80 = sadd.s32 %s79, 1
      %p83 = scmp.eq.s32.totalorder %s24, 1
      %p84 = scmp.ne.s32.totalorder %s79, %s81
      %p85 = scmp.eq.s32.totalorder %s24, 0
      %p86 = por %p84, %p85
      %p87 = scmp.ne.s32.totalorder %s79, %s81
      %p88 = scmp.eq.s32.totalorder %s29, 1
      %p89 = por %p87, %p88
      %p90 = scmp.ne.s32.totalorder %s81, %s82
      %p91 = scmp.eq.s32.totalorder %s29, 0
      %p92 = por %p90, %p91
      %p93 = scmp.ne.s32.totalorder %s81, %s82
      %p94 = scmp.eq.s32.totalorder %s30, 1
      %p95 = por %p93, %p94
      %p97 = scmp.ne.s32.totalorder %s82, %s96
      %p98 = scmp.eq.s32.totalorder %s30, 0
      %p99 = por %p97, %p98
      %s101 = sadd.s32 %s100, 1
      %p104 = scmp.eq.s32.totalorder %s24, 1
      %p105 = scmp.ne.s32.totalorder %s100, %s102
      %p106 = scmp.eq.s32.totalorder %s24, 0
      %p107 = por %p105, %p106
      %p108 = scmp.ne.s32.totalorder %s100, %s102
      %p109 = scmp.eq.s32.totalorder %s29, 1
      %p110 = por %p108, %p109
      %p111 = scmp.ne.s32.totalorder %s102, %s103
      %p112 = scmp.eq.s32.totalorder %s29, 0
      %p113 = por %p111, %p112
      %p114 = scmp.ne.s32.totalorder %s102, %s103
      %p115 = scmp.eq.s32.totalorder %s30, 1
      %p116 = por %p114, %p115
      %p118 = scmp.ne.s32.totalorder %s103, %s117
      %p119 = scmp.eq.s32.totalorder %s30, 0
      %p120 = por %p118, %p119
      %s122 = sadd.s32 %s121, 1
      %p125 = scmp.eq.s32.totalorder %s24, 1
      %p126 = scmp.ne.s32.totalorder %s121, %s123
      %p127 = scmp.eq.s32.totalorder %s24, 0
      %p128 = por %p126, %p127
      %p129 = scmp.ne.s32.totalorder %s121, %s123
      %p130 = scmp.eq.s32.totalorder %s29, 1
      %p131 = por %p129, %p130
      %p132 = scmp.ne.s32.totalorder %s123, %s124
      %p133 = scmp.eq.s32.totalorder %s29, 0
      %p134 = por %p132, %p133
      %p135 = scmp.ne.s32.totalorder %s123, %s124
      %p136 = scmp.eq.s32.totalorder %s30, 1
      %p137 = por %p135, %p136
      %p139 = scmp.ne.s32.totalorder %s124, %s138
      %p140 = scmp.eq.s32.totalorder %s30, 0
      %p141 = por %p139, %p140
      %s143 = sadd.s32 %s142, 1
      %p146 = scmp.eq.s32.totalorder %s24, 1
      %p147 = scmp.ne.s32.totalorder %s142, %s144
      %p148 = scmp.eq.s32.totalorder %s24, 0
      %p149 = por %p147, %p148
      %p150 = scmp.ne.s32.totalorder %s142, %s144
      %p151 = scmp.eq.s32.totalorder %s29, 1
      %p152 = por %p150, %p151
      %p153 = scmp.ne.s32.totalorder %s144, %s145
      %p154 = scmp.eq.s32.totalorder %s29, 0
      %p155 = por %p153, %p154
      %p156 = scmp.ne.s32.totalorder %s144, %s145
      %p157 = scmp.eq.s32.totalorder %s30, 1
      %p158 = por %p156, %p157
      %p160 = scmp.ne.s32.totalorder %s145, %s159
      %p161 = scmp.eq.s32.totalorder %s30, 0
      %p162 = por %p160, %p161
      %s164 = sadd.s32 %s163, 1
      %p167 = scmp.eq.s32.totalorder %s24, 1
      %p168 = scmp.ne.s32.totalorder %s163, %s165
      %p169 = scmp.eq.s32.totalorder %s24, 0
      %p170 = por %p168, %p169
      %p171 = scmp.ne.s32.totalorder %s163, %s165
      %p172 = scmp.eq.s32.totalorder %s29, 1
      %p173 = por %p171, %p172
      %p174 = scmp.ne.s32.totalorder %s165, %s166
      %p175 = scmp.eq.s32.totalorder %s29, 0
      %p176 = por %p174, %p175
      %p177 = scmp.ne.s32.totalorder %s165, %s166
      %p178 = scmp.eq.s32.totalorder %s30, 1
      %p179 = por %p177, %p178
      %p181 = scmp.ne.s32.totalorder %s166, %s180
      %p182 = scmp.eq.s32.totalorder %s30, 0
      %p183 = por %p181, %p182
      %s185 = sadd.s32 %s184, 1
      %p188 = scmp.eq.s32.totalorder %s24, 1
      %p189 = scmp.ne.s32.totalorder %s184, %s186
      %p190 = scmp.eq.s32.totalorder %s24, 0
      %p191 = por %p189, %p190
      %p192 = scmp.ne.s32.totalorder %s184, %s186
      %p193 = scmp.eq.s32.totalorder %s29, 1
      %p194 = por %p192, %p193
      %p195 = scmp.ne.s32.totalorder %s186, %s187
      %p196 = scmp.eq.s32.totalorder %s29, 0
      %p197 = por %p195, %p196
      %p198 = scmp.ne.s32.totalorder %s186, %s187
      %p199 = scmp.eq.s32.totalorder %s30, 1
      %p200 = por %p198, %p199
      %p202 = scmp.ne.s32.totalorder %s187, %s201
      %p203 = scmp.eq.s32.totalorder %s30, 0
      %p204 = por %p202, %p203
      %s206 = sadd.s32 %s205, 1
      %p209 = scmp.eq.s32.totalorder %s24, 1
      %p210 = scmp.ne.s32.totalorder %s205, %s207
      %p211 = scmp.eq.s32.totalorder %s24, 0
      %p212 = por %p210, %p211
      %p213 = scmp.ne.s32.totalorder %s205, %s207
      %p214 = scmp.eq.s32.totalorder %s29, 1
      %p215 = por %p213, %p214
      %p216 = scmp.ne.s32.totalorder %s207, %s208
      %p217 = scmp.eq.s32.totalorder %s29, 0
      %p218 = por %p216, %p217
      %p219 = scmp.ne.s32.totalorder %s207, %s208
      %p220 = scmp.eq.s32.totalorder %s30, 1
      %p221 = por %p219, %p220
      %p223 = scmp.ne.s32.totalorder %s208, %s222
      %p224 = scmp.eq.s32.totalorder %s30, 0
      %p225 = por %p223, %p224
      %s226 = ssub.s32 %s24, %s31
      %p227 = scmp.eq.s32.totalorder %s226, 0
      %s229 = sadd.s32 %s228, 1
      %s230 = scalar_select %p227, %s228, %s229
      %p233 = pneg %p227
      %p234 = scmp.eq.s32.totalorder %s24, 1
      %p235 = por %p233, %p234
      %p236 = scmp.ne.s32.totalorder %s228, %s231
      %p237 = scmp.eq.s32.totalorder %s24, 0
      %p238 = por %p236, %p237
      %p239 = scmp.ne.s32.totalorder %s228, %s231
      %p240 = scmp.eq.s32.totalorder %s29, 1
      %p241 = por %p239, %p240
      %p242 = scmp.ne.s32.totalorder %s231, %s232
      %p243 = scmp.eq.s32.totalorder %s29, 0
      %p244 = por %p242, %p243
      %p245 = scmp.ne.s32.totalorder %s231, %s232
      %p246 = scmp.eq.s32.totalorder %s30, 1
      %p247 = por %p245, %p246
      %p249 = scmp.ne.s32.totalorder %s232, %s248
      %p250 = scmp.eq.s32.totalorder %s30, 0
      %p251 = por %p249, %p250
      %s252 = ssub.s32 %s24, %s31
      %p253 = scmp.eq.s32.totalorder %s252, 0
      %s255 = sadd.s32 %s254, 1
      %s256 = scalar_select %p253, %s254, %s255
      %p259 = pneg %p253
      %p260 = scmp.eq.s32.totalorder %s24, 1
      %p261 = por %p259, %p260
      %p262 = scmp.ne.s32.totalorder %s254, %s257
      %p263 = scmp.eq.s32.totalorder %s24, 0
      %p264 = por %p262, %p263
      %p265 = scmp.ne.s32.totalorder %s254, %s257
      %p266 = scmp.eq.s32.totalorder %s29, 1
      %p267 = por %p265, %p266
      %p268 = scmp.ne.s32.totalorder %s257, %s258
      %p269 = scmp.eq.s32.totalorder %s29, 0
      %p270 = por %p268, %p269
      %p271 = scmp.ne.s32.totalorder %s257, %s258
      %p272 = scmp.eq.s32.totalorder %s30, 1
      %p273 = por %p271, %p272
      %p275 = scmp.ne.s32.totalorder %s258, %s274
      %p276 = scmp.eq.s32.totalorder %s30, 0
      %p277 = por %p275, %p276
      %p278 = scmp.le.s32.totalorder 1, %s24
      %p279 = scmp.lt.s32.totalorder %s24, 3
      %p280 = pnand %p278, %p279
      %p281 = pneg %p280
      // Predicated region
      $region9: #{tpu_custom_call.1} parent=5 // pred_check
        _
      $region10: #{tpu_custom_call.1} parent=5 // pred_check_branch
        %283 = sbr.rel (%p280) target = $region12
      $region11: #{tpu_custom_call.1} parent=5 // pred_region
        %s284 = ssub.s32 %s24, 1
        // Predicated region
        $region13: #{tpu_custom_call.1} parent=11 // pred_check
          %p285 = pneg %p71
        $region14: #{tpu_custom_call.1} parent=11 // pred_check_branch
          %287 = sbr.rel (%p285) target = $region16
        $region15: #{tpu_custom_call.1} parent=11 // pred_region
          _
        $region16: #{tpu_custom_call.1} parent=11 // pred_fallthru
          _
        // Predicated region
        $region17: #{tpu_custom_call.1} parent=11 // pred_check
          %p288 = pneg %p92
        $region18: #{tpu_custom_call.1} parent=11 // pred_check_branch
          %290 = sbr.rel (%p288) target = $region20
        $region19: #{tpu_custom_call.1} parent=11 // pred_region
          _
        $region20: #{tpu_custom_call.1} parent=11 // pred_fallthru
          _
        // Predicated region
        $region21: #{tpu_custom_call.1} parent=11 // pred_check
          %p291 = pneg %p113
        $region22: #{tpu_custom_call.1} parent=11 // pred_check_branch
          %293 = sbr.rel (%p291) target = $region24
        $region23: #{tpu_custom_call.1} parent=11 // pred_region
          _
        $region24: #{tpu_custom_call.1} parent=11 // pred_fallthru
          _
        // Predicated region
        $region25: #{tpu_custom_call.1} parent=11 // pred_check
          %p294 = pneg %p134
        $region26: #{tpu_custom_call.1} parent=11 // pred_check_branch
          %296 = sbr.rel (%p294) target = $region28
        $region27: #{tpu_custom_call.1} parent=11 // pred_region
          _
        $region28: #{tpu_custom_call.1} parent=11 // pred_fallthru
          _
        // Predicated region
        $region29: #{tpu_custom_call.1} parent=11 // pred_check
          %p297 = pneg %p155
        $region30: #{tpu_custom_call.1} parent=11 // pred_check_branch
          %299 = sbr.rel (%p297) target = $region32
        $region31: #{tpu_custom_call.1} parent=11 // pred_region
          _
        $region32: #{tpu_custom_call.1} parent=11 // pred_fallthru
          _
        // Predicated region
        $region33: #{tpu_custom_call.1} parent=11 // pred_check
          %p300 = pneg %p176
        $region34: #{tpu_custom_call.1} parent=11 // pred_check_branch
          %302 = sbr.rel (%p300) target = $region36
        $region35: #{tpu_custom_call.1} parent=11 // pred_region
          _
        $region36: #{tpu_custom_call.1} parent=11 // pred_fallthru
          _
        // Predicated region
        $region37: #{tpu_custom_call.1} parent=11 // pred_check
          %p303 = pneg %p197
        $region38: #{tpu_custom_call.1} parent=11 // pred_check_branch
          %305 = sbr.rel (%p303) target = $region40
        $region39: #{tpu_custom_call.1} parent=11 // pred_region
          _
        $region40: #{tpu_custom_call.1} parent=11 // pred_fallthru
          _
        // Predicated region
        $region41: #{tpu_custom_call.1} parent=11 // pred_check
          %p306 = pneg %p218
        $region42: #{tpu_custom_call.1} parent=11 // pred_check_branch
          %308 = sbr.rel (%p306) target = $region44
        $region43: #{tpu_custom_call.1} parent=11 // pred_region
          _
        $region44: #{tpu_custom_call.1} parent=11 // pred_fallthru
          _
      $region12: #{tpu_custom_call.1} parent=5 // pred_fallthru
        _
      %p309 = scmp.lt.s32.totalorder %s24, 2
      // Predicated region
      $region45: #{tpu_custom_call.1} parent=5 // pred_check
        %p310 = pneg %p309
      $region46: #{tpu_custom_call.1} parent=5 // pred_check_branch
        %312 = sbr.rel (%p310) target = $region48
      $region47: #{tpu_custom_call.1} parent=5 // pred_region
        // Predicated region
        $region49: #{tpu_custom_call.1} parent=47 // pred_check
          %p313 = pneg %p44
        $region50: #{tpu_custom_call.1} parent=47 // pred_check_branch
          %315 = sbr.rel (%p313) target = $region52
        $region51: #{tpu_custom_call.1} parent=47 // pred_region
          %p316 = scmp.lt.s32.totalorder %s24, 1
          %s317 = scalar_select %p316, %s24, 1
          %s318 = smul.addr %s317, 32
          %s319 = smul.addr %s318, 4
          %s320 = scalar_lea.vmem %s0, %s319
        $region52: #{tpu_custom_call.1} parent=47 // pred_fallthru
          _
      $region48: #{tpu_custom_call.1} parent=5 // pred_fallthru
        _
      %p321 = scmp.le.s32.totalorder 1, %s24
      %p322 = scmp.lt.s32.totalorder %s24, 3
      %p323 = pnand %p321, %p322
      %p324 = pneg %p323
      // Predicated region
      $region53: #{tpu_custom_call.1} parent=5 // pred_check
        _
      $region54: #{tpu_custom_call.1} parent=5 // pred_check_branch
        %326 = sbr.rel (%p323) target = $region56
      $region55: #{tpu_custom_call.1} parent=5 // pred_region
        %s327 = ssub.s32 %s24, 1
        %p328 = scmp.lt.s32.totalorder %s29, 1
        %s329 = scalar_select %p328, %s29, 1
        %s330 = smul.addr %s329, 32
        %s331 = smul.addr %s330, 4
        %s332 = scalar_lea.vmem %s0, %s331
        %p333 = pneg %p50
        %p334 = pneg %p47
        %p335 = pneg %p71
        %p336 = pneg %p68
        %p337 = pneg %p92
        %p338 = pneg %p89
        %p339 = pneg %p113
        %p340 = pneg %p110
        %p341 = pneg %p134
        %p342 = pneg %p131
        %p343 = pneg %p155
        %p344 = pneg %p152
        %p345 = pneg %p176
        %p346 = pneg %p173
        %p347 = pneg %p197
        %p348 = pneg %p194
        %p349 = pneg %p218
        %p350 = pneg %p215
        %p351 = pneg %p244
        %p352 = pneg %p241
        %s353 = sand.u32 %s231, 1
        %s354 = scalar_lea.sflag [#allocation5], %s353
        %s355 = sand.u32 %s231, 1
        %s356 = smul.addr %s355, 128
        %s357 = scalar_lea.vmem [#allocation4], %s356
        %p358 = pneg %p270
        %p359 = pneg %p267
        %s360 = sand.u32 %s257, 1
        %s361 = scalar_lea.sflag [#allocation7], %s360
        %s362 = sand.u32 %s257, 1
        %s363 = smul.addr %s362, 16
        %s364 = scalar_lea.vmem [#allocation6], %s363
        %p365 = scmp.lt.s32.totalorder %s29, 1
        %s366 = scalar_select %p365, %s29, 1
        %s367 = smul.addr %s366, 32
        %s368 = smul.addr %s367, 4
        %s369 = scalar_lea.vmem %s0, %s368
        %vm371 = vcmask 519168
        %372 = vst.msk [vmem:[#allocation2] sm:$0xf] %vm371, 0
        %373 = vst.msk [vmem:[#allocation2 + $0x4] sm:$0xf] %vm371, 0
        %374 = vst.msk [vmem:[#allocation2 + $0x8] sm:$0xf] %vm371, 0
        %375 = vst.msk [vmem:[#allocation2 + $0xc] sm:$0xf] %vm371, 0
        %376 = vst.msk [vmem:[#allocation2 + $0xd0] sm:$0xf] %vm371, 0
        %377 = vst.msk [vmem:[#allocation2 + $0xd4] sm:$0xf] %vm371, 0
        %378 = vst.msk [vmem:[#allocation2 + $0xd8] sm:$0xf] %vm371, 0
        %379 = vst.msk [vmem:[#allocation2 + $0xdc] sm:$0xf] %vm371, 0
        %v380 = vld [vmem:[%s369] sm:$0xf]
        %v381 = vld [vmem:[%s369 + $0x4] sm:$0xf]
        %v382 = vld [vmem:[%s369 + $0x8] sm:$0xf]
        %v383 = vld [vmem:[%s369 + $0xc] sm:$0xf]
        %v384 = vld [vmem:[%s369 + $0x10] sm:$0xf]
        %v385 = vld [vmem:[%s369 + $0x14] sm:$0xf]
        %v386 = vld [vmem:[%s369 + $0x18] sm:$0xf]
        %v387 = vld [vmem:[%s369 + $0x1c] sm:$0xf]
        %v388 = vld [vmem:[%s369 + $0x20] sm:$0xf]
        %v389 = vld [vmem:[%s369 + $0x24] sm:$0xf]
        %v390 = vld [vmem:[%s369 + $0x28] sm:$0xf]
        %v391 = vld [vmem:[%s369 + $0x2c] sm:$0xf]
        %v392 = vld [vmem:[%s369 + $0x30] sm:$0xf]
        %v393 = vld [vmem:[%s369 + $0x34] sm:$0xf]
        %v394 = vld [vmem:[%s369 + $0x38] sm:$0xf]
        %v395 = vld [vmem:[%s369 + $0x3c] sm:$0xf]
        %v396 = vld [vmem:[%s369 + $0x40] sm:$0xf]
        %v397 = vld [vmem:[%s369 + $0x44] sm:$0xf]
        %v398 = vld [vmem:[%s369 + $0x48] sm:$0xf]
        %v399 = vld [vmem:[%s369 + $0x4c] sm:$0xf]
        %v400 = vld [vmem:[%s369 + $0x50] sm:$0xf]
        %v401 = vld [vmem:[%s369 + $0x54] sm:$0xf]
        %v402 = vld [vmem:[%s369 + $0x58] sm:$0xf]
        %v403 = vld [vmem:[%s369 + $0x5c] sm:$0xf]
        %v404 = vld [vmem:[%s369 + $0x60] sm:$0xf]
        %v405 = vld [vmem:[%s369 + $0x64] sm:$0xf]
        %v406 = vld [vmem:[%s369 + $0x68] sm:$0xf]
        %v407 = vld [vmem:[%s369 + $0x6c] sm:$0xf]
        %v408 = vld [vmem:[%s369 + $0x70] sm:$0xf]
        %v409 = vld [vmem:[%s369 + $0x74] sm:$0xf]
        %v410 = vld [vmem:[%s369 + $0x78] sm:$0xf]
        %v411 = vld [vmem:[%s369 + $0x7c] sm:$0xf]
        %v444 = vunpack.c.l.b16 %v380
        %v445 = vunpack.c.l.b16 %v381
        %v446 = vunpack.c.l.b16 %v382
        %v447 = vunpack.c.l.b16 %v383
        %v448 = vunpack.c.l.b16 %v384
        %v449 = vunpack.c.l.b16 %v385
        %v450 = vunpack.c.l.b16 %v386
        %v451 = vunpack.c.l.b16 %v387
        %v452 = vunpack.c.l.b16 %v388
        %v453 = vunpack.c.l.b16 %v389
        %v454 = vunpack.c.l.b16 %v390
        %v455 = vunpack.c.l.b16 %v391
        %v456 = vunpack.c.l.b16 %v392
        %v457 = vunpack.c.l.b16 %v393
        %v458 = vunpack.c.l.b16 %v394
        %v459 = vunpack.c.l.b16 %v395
        %v460 = vunpack.c.l.b16 %v396
        %v461 = vunpack.c.l.b16 %v397
        %v462 = vunpack.c.l.b16 %v398
        %v463 = vunpack.c.l.b16 %v399
        %v464 = vunpack.c.l.b16 %v400
        %v465 = vunpack.c.l.b16 %v401
        %v466 = vunpack.c.l.b16 %v402
        %v467 = vunpack.c.l.b16 %v403
        %v468 = vunpack.c.l.b16 %v404
        %v469 = vunpack.c.l.b16 %v405
        %v470 = vunpack.c.l.b16 %v406
        %v471 = vunpack.c.l.b16 %v407
        %v472 = vunpack.c.l.b16 %v408
        %v473 = vunpack.c.l.b16 %v409
        %v474 = vunpack.c.l.b16 %v410
        %v475 = vunpack.c.l.b16 %v411
        %v477 = vunpack.c.l.b16 0
        %v478 = vpack.c.b16 %v444, %v444
        %v479 = vpack.c.b16 %v445, %v445
        %v480 = vpack.c.b16 %v477, %v477
        %v481 = vpack.c.b16 %v446, %v446
        %v482 = vpack.c.b16 %v447, %v447
        %v483 = vpack.c.b16 %v448, %v448
        %v484 = vpack.c.b16 %v449, %v449
        %v485 = vpack.c.b16 %v450, %v450
        %v486 = vpack.c.b16 %v451, %v451
        %v487 = vpack.c.b16 %v452, %v452
        %v488 = vpack.c.b16 %v453, %v453
        %v489 = vpack.c.b16 %v454, %v454
        %v490 = vpack.c.b16 %v455, %v455
        %v491 = vpack.c.b16 %v456, %v456
        %v492 = vpack.c.b16 %v457, %v457
        %v493 = vpack.c.b16 %v458, %v458
        %v494 = vpack.c.b16 %v459, %v459
        %v495 = vpack.c.b16 %v460, %v460
        %v496 = vpack.c.b16 %v461, %v461
        %v497 = vpack.c.b16 %v462, %v462
        %v498 = vpack.c.b16 %v463, %v463
        %v499 = vpack.c.b16 %v464, %v464
        %v500 = vpack.c.b16 %v465, %v465
        %v501 = vpack.c.b16 %v466, %v466
        %v502 = vpack.c.b16 %v467, %v467
        %v503 = vpack.c.b16 %v468, %v468
        %v504 = vpack.c.b16 %v469, %v469
        %v505 = vpack.c.b16 %v470, %v470
        %v506 = vpack.c.b16 %v471, %v471
        %v507 = vpack.c.b16 %v472, %v472
        %v508 = vpack.c.b16 %v473, %v473
        %v509 = vpack.c.b16 %v474, %v474
        %v510 = vpack.c.b16 %v475, %v475
        %vm544 = vcmask 19456
        %545 = vst.msk [vmem:[#allocation2 + $0x10] sm:$0xf] %vm544, %v478
        %546 = vst.msk [vmem:[#allocation2 + $0x14] sm:$0xf] %vm544, %v479
        %547 = vst.msk [vmem:[#allocation2 + $0x18] sm:$0xf] %vm544, %v480
        %548 = vst.msk [vmem:[#allocation2 + $0x1c] sm:$0xf] %vm544, %v481
        %549 = vst.msk [vmem:[#allocation2 + $0x20] sm:$0xf] %vm544, %v482
        %550 = vst.msk [vmem:[#allocation2 + $0x24] sm:$0xf] %vm544, %v480
        %551 = vst.msk [vmem:[#allocation2 + $0x28] sm:$0xf] %vm544, %v483
        %552 = vst.msk [vmem:[#allocation2 + $0x2c] sm:$0xf] %vm544, %v484
        %553 = vst.msk [vmem:[#allocation2 + $0x30] sm:$0xf] %vm544, %v480
        %554 = vst.msk [vmem:[#allocation2 + $0x34] sm:$0xf] %vm544, %v485
        %555 = vst.msk [vmem:[#allocation2 + $0x38] sm:$0xf] %vm544, %v486
        %556 = vst.msk [vmem:[#allocation2 + $0x3c] sm:$0xf] %vm544, %v480
        %557 = vst.msk [vmem:[#allocation2 + $0x40] sm:$0xf] %vm544, %v487
        %558 = vst.msk [vmem:[#allocation2 + $0x44] sm:$0xf] %vm544, %v488
        %559 = vst.msk [vmem:[#allocation2 + $0x48] sm:$0xf] %vm544, %v480
        %560 = vst.msk [vmem:[#allocation2 + $0x4c] sm:$0xf] %vm544, %v489
        %561 = vst.msk [vmem:[#allocation2 + $0x50] sm:$0xf] %vm544, %v490
        %562 = vst.msk [vmem:[#allocation2 + $0x54] sm:$0xf] %vm544, %v480
        %563 = vst.msk [vmem:[#allocation2 + $0x58] sm:$0xf] %vm544, %v491
        %564 = vst.msk [vmem:[#allocation2 + $0x5c] sm:$0xf] %vm544, %v492
        %565 = vst.msk [vmem:[#allocation2 + $0x60] sm:$0xf] %vm544, %v480
        %566 = vst.msk [vmem:[#allocation2 + $0x64] sm:$0xf] %vm544, %v493
        %567 = vst.msk [vmem:[#allocation2 + $0x68] sm:$0xf] %vm544, %v494
        %568 = vst.msk [vmem:[#allocation2 + $0x6c] sm:$0xf] %vm544, %v480
        %569 = vst.msk [vmem:[#allocation2 + $0x70] sm:$0xf] %vm544, %v495
        %570 = vst.msk [vmem:[#allocation2 + $0x74] sm:$0xf] %vm544, %v496
        %571 = vst.msk [vmem:[#allocation2 + $0x78] sm:$0xf] %vm544, %v480
        %572 = vst.msk [vmem:[#allocation2 + $0x7c] sm:$0xf] %vm544, %v497
        %573 = vst.msk [vmem:[#allocation2 + $0x80] sm:$0xf] %vm544, %v498
        %574 = vst.msk [vmem:[#allocation2 + $0x84] sm:$0xf] %vm544, %v480
        %575 = vst.msk [vmem:[#allocation2 + $0x88] sm:$0xf] %vm544, %v499
        %576 = vst.msk [vmem:[#allocation2 + $0x8c] sm:$0xf] %vm544, %v500
        %577 = vst.msk [vmem:[#allocation2 + $0x90] sm:$0xf] %vm544, %v480
        %578 = vst.msk [vmem:[#allocation2 + $0x94] sm:$0xf] %vm544, %v501
        %579 = vst.msk [vmem:[#allocation2 + $0x98] sm:$0xf] %vm544, %v502
        %580 = vst.msk [vmem:[#allocation2 + $0x9c] sm:$0xf] %vm544, %v480
        %581 = vst.msk [vmem:[#allocation2 + $0xa0] sm:$0xf] %vm544, %v503
        %582 = vst.msk [vmem:[#allocation2 + $0xa4] sm:$0xf] %vm544, %v504
        %583 = vst.msk [vmem:[#allocation2 + $0xa8] sm:$0xf] %vm544, %v480
        %584 = vst.msk [vmem:[#allocation2 + $0xac] sm:$0xf] %vm544, %v505
        %585 = vst.msk [vmem:[#allocation2 + $0xb0] sm:$0xf] %vm544, %v506
        %586 = vst.msk [vmem:[#allocation2 + $0xb4] sm:$0xf] %vm544, %v480
        %587 = vst.msk [vmem:[#allocation2 + $0xb8] sm:$0xf] %vm544, %v507
        %588 = vst.msk [vmem:[#allocation2 + $0xbc] sm:$0xf] %vm544, %v508
        %589 = vst.msk [vmem:[#allocation2 + $0xc0] sm:$0xf] %vm544, %v480
        %590 = vst.msk [vmem:[#allocation2 + $0xc4] sm:$0xf] %vm544, %v509
        %591 = vst.msk [vmem:[#allocation2 + $0xc8] sm:$0xf] %vm544, %v510
        %592 = vst.msk [vmem:[#allocation2 + $0xcc] sm:$0xf] %vm544, %v480
        %v593 = vlaneseq
        %v594 = vshrl.u32 %v593, 7
        %v595 = vadd.s32 %v594, 8
        %v596 = vadd.s32 %v594, 16
        %v597 = vadd.s32 %v594, 24
        %v598 = vadd.s32 %v594, 32
        %v599 = vadd.s32 %v594, 40
        %v600 = vadd.s32 %v594, 48
        %v601 = vadd.s32 %v594, 56
        %v602 = vadd.s32 %v594, 64
        %v603 = vadd.s32 %v594, 72
        %v604 = vadd.s32 %v594, 80
        %v605 = vadd.s32 %v594, 88
        %v606 = vadd.s32 %v594, 96
        %v607 = vadd.s32 %v594, 104
        %v608 = vadd.s32 %v594, 112
        %v609 = vadd.s32 %v594, 120
        %v610 = vadd.s32 %v594, 128
        %v611 = vadd.s32 %v594, 136
        %v612 = vadd.s32 %v594, 144
        %v613 = vadd.s32 %v594, 152
        %v614 = vadd.s32 %v594, 160
        %v615 = vadd.s32 %v594, 168
        %v616 = vadd.s32 %v594, 176
        %v617 = vadd.s32 %v594, 184
        %v618 = vadd.s32 %v594, 192
        %v619 = vadd.s32 %v594, 200
        %v620 = vadd.s32 %v594, 208
        %v621 = vadd.s32 %v594, 216
        %v622 = vadd.s32 %v594, 224
        %v623 = vadd.s32 %v594, 232
        %v624 = vadd.s32 %v594, 240
        %v625 = vadd.s32 %v594, 248
        %v626 = vadd.s32 %v594, 256
        %v627 = vadd.s32 %v594, 264
        %v628 = vadd.s32 %v594, 272
        %v629 = vadd.s32 %v594, 280
        %v630 = vadd.s32 %v594, 288
        %v631 = vadd.s32 %v594, 296
        %v632 = vadd.s32 %v594, 304
        %v633 = vadd.s32 %v594, 312
        %v634 = vadd.s32 %v594, 320
        %v635 = vadd.s32 %v594, 328
        %v636 = vadd.s32 %v594, 336
        %v637 = vadd.s32 %v594, 344
        %v638 = vadd.s32 %v594, 352
        %v639 = vadd.s32 %v594, 360
        %v640 = vadd.s32 %v594, 368
        %v641 = vadd.s32 %v594, 376
        %vm642 = vcmp.lt.s32.totalorder %v594, 0
        %v643 = vsub.s32 0, %v594
        %v644 = vsel %vm642, %v643, %v594
        %v645 = vmul.u32.u64.compose %v644, 2863311531
        %v646 = vextract.low.u32 %v645
        %v647 = vextract.high.u32 %v645
        %v648 = vshrl.u32 %v647, 4
        %v649 = vmul.u32 %v648, 24
        %v650 = vsub.s32 %v644, %v649
        %v651 = vsub.s32 0, %v650
        %v652 = vsel %vm642, %v651, %v650
        %vm653 = vcmp.lt.s32.totalorder %v595, 0
        %v654 = vsub.s32 0, %v595
        %v655 = vsel %vm653, %v654, %v595
        %v656 = vmul.u32.u64.compose %v655, 2863311531
        %v657 = vextract.low.u32 %v656
        %v658 = vextract.high.u32 %v656
        %v659 = vshrl.u32 %v658, 4
        %v660 = vmul.u32 %v659, 24
        %v661 = vsub.s32 %v655, %v660
        %v662 = vsub.s32 0, %v661
        %v663 = vsel %vm653, %v662, %v661
        %vm664 = vcmp.lt.s32.totalorder %v596, 0
        %v665 = vsub.s32 0, %v596
        %v666 = vsel %vm664, %v665, %v596
        %v667 = vmul.u32.u64.compose %v666, 2863311531
        %v668 = vextract.low.u32 %v667
        %v669 = vextract.high.u32 %v667
        %v670 = vshrl.u32 %v669, 4
        %v671 = vmul.u32 %v670, 24
        %v672 = vsub.s32 %v666, %v671
        %v673 = vsub.s32 0, %v672
        %v674 = vsel %vm664, %v673, %v672
        %vm675 = vcmp.lt.s32.totalorder %v597, 0
        %v676 = vsub.s32 0, %v597
        %v677 = vsel %vm675, %v676, %v597
        %v678 = vmul.u32.u64.compose %v677, 2863311531
        %v679 = vextract.low.u32 %v678
        %v680 = vextract.high.u32 %v678
        %v681 = vshrl.u32 %v680, 4
        %v682 = vmul.u32 %v681, 24
        %v683 = vsub.s32 %v677, %v682
        %v684 = vsub.s32 0, %v683
        %v685 = vsel %vm675, %v684, %v683
        %vm686 = vcmp.lt.s32.totalorder %v598, 0
        %v687 = vsub.s32 0, %v598
        %v688 = vsel %vm686, %v687, %v598
        %v689 = vmul.u32.u64.compose %v688, 2863311531
        %v690 = vextract.low.u32 %v689
        %v691 = vextract.high.u32 %v689
        %v692 = vshrl.u32 %v691, 4
        %v693 = vmul.u32 %v692, 24
        %v694 = vsub.s32 %v688, %v693
        %v695 = vsub.s32 0, %v694
        %v696 = vsel %vm686, %v695, %v694
        %vm697 = vcmp.lt.s32.totalorder %v599, 0
        %v698 = vsub.s32 0, %v599
        %v699 = vsel %vm697, %v698, %v599
        %v700 = vmul.u32.u64.compose %v699, 2863311531
        %v701 = vextract.low.u32 %v700
        %v702 = vextract.high.u32 %v700
        %v703 = vshrl.u32 %v702, 4
        %v704 = vmul.u32 %v703, 24
        %v705 = vsub.s32 %v699, %v704
        %v706 = vsub.s32 0, %v705
        %v707 = vsel %vm697, %v706, %v705
        %vm708 = vcmp.lt.s32.totalorder %v600, 0
        %v709 = vsub.s32 0, %v600
        %v710 = vsel %vm708, %v709, %v600
        %v711 = vmul.u32.u64.compose %v710, 2863311531
        %v712 = vextract.low.u32 %v711
        %v713 = vextract.high.u32 %v711
        %v714 = vshrl.u32 %v713, 4
        %v715 = vmul.u32 %v714, 24
        %v716 = vsub.s32 %v710, %v715
        %v717 = vsub.s32 0, %v716
        %v718 = vsel %vm708, %v717, %v716
        %vm719 = vcmp.lt.s32.totalorder %v601, 0
        %v720 = vsub.s32 0, %v601
        %v721 = vsel %vm719, %v720, %v601
        %v722 = vmul.u32.u64.compose %v721, 2863311531
        %v723 = vextract.low.u32 %v722
        %v724 = vextract.high.u32 %v722
        %v725 = vshrl.u32 %v724, 4
        %v726 = vmul.u32 %v725, 24
        %v727 = vsub.s32 %v721, %v726
        %v728 = vsub.s32 0, %v727
        %v729 = vsel %vm719, %v728, %v727
        %vm730 = vcmp.lt.s32.totalorder %v602, 0
        %v731 = vsub.s32 0, %v602
        %v732 = vsel %vm730, %v731, %v602
        %v733 = vmul.u32.u64.compose %v732, 2863311531
        %v734 = vextract.low.u32 %v733
        %v735 = vextract.high.u32 %v733
        %v736 = vshrl.u32 %v735, 4
        %v737 = vmul.u32 %v736, 24
        %v738 = vsub.s32 %v732, %v737
        %v739 = vsub.s32 0, %v738
        %v740 = vsel %vm730, %v739, %v738
        %vm741 = vcmp.lt.s32.totalorder %v603, 0
        %v742 = vsub.s32 0, %v603
        %v743 = vsel %vm741, %v742, %v603
        %v744 = vmul.u32.u64.compose %v743, 2863311531
        %v745 = vextract.low.u32 %v744
        %v746 = vextract.high.u32 %v744
        %v747 = vshrl.u32 %v746, 4
        %v748 = vmul.u32 %v747, 24
        %v749 = vsub.s32 %v743, %v748
        %v750 = vsub.s32 0, %v749
        %v751 = vsel %vm741, %v750, %v749
        %vm752 = vcmp.lt.s32.totalorder %v604, 0
        %v753 = vsub.s32 0, %v604
        %v754 = vsel %vm752, %v753, %v604
        %v755 = vmul.u32.u64.compose %v754, 2863311531
        %v756 = vextract.low.u32 %v755
        %v757 = vextract.high.u32 %v755
        %v758 = vshrl.u32 %v757, 4
        %v759 = vmul.u32 %v758, 24
        %v760 = vsub.s32 %v754, %v759
        %v761 = vsub.s32 0, %v760
        %v762 = vsel %vm752, %v761, %v760
        %vm763 = vcmp.lt.s32.totalorder %v605, 0
        %v764 = vsub.s32 0, %v605
        %v765 = vsel %vm763, %v764, %v605
        %v766 = vmul.u32.u64.compose %v765, 2863311531
        %v767 = vextract.low.u32 %v766
        %v768 = vextract.high.u32 %v766
        %v769 = vshrl.u32 %v768, 4
        %v770 = vmul.u32 %v769, 24
        %v771 = vsub.s32 %v765, %v770
        %v772 = vsub.s32 0, %v771
        %v773 = vsel %vm763, %v772, %v771
        %vm774 = vcmp.lt.s32.totalorder %v606, 0
        %v775 = vsub.s32 0, %v606
        %v776 = vsel %vm774, %v775, %v606
        %v777 = vmul.u32.u64.compose %v776, 2863311531
        %v778 = vextract.low.u32 %v777
        %v779 = vextract.high.u32 %v777
        %v780 = vshrl.u32 %v779, 4
        %v781 = vmul.u32 %v780, 24
        %v782 = vsub.s32 %v776, %v781
        %v783 = vsub.s32 0, %v782
        %v784 = vsel %vm774, %v783, %v782
        %vm785 = vcmp.lt.s32.totalorder %v607, 0
        %v786 = vsub.s32 0, %v607
        %v787 = vsel %vm785, %v786, %v607
        %v788 = vmul.u32.u64.compose %v787, 2863311531
        %v789 = vextract.low.u32 %v788
        %v790 = vextract.high.u32 %v788
        %v791 = vshrl.u32 %v790, 4
        %v792 = vmul.u32 %v791, 24
        %v793 = vsub.s32 %v787, %v792
        %v794 = vsub.s32 0, %v793
        %v795 = vsel %vm785, %v794, %v793
        %vm796 = vcmp.lt.s32.totalorder %v608, 0
        %v797 = vsub.s32 0, %v608
        %v798 = vsel %vm796, %v797, %v608
        %v799 = vmul.u32.u64.compose %v798, 2863311531
        %v800 = vextract.low.u32 %v799
        %v801 = vextract.high.u32 %v799
        %v802 = vshrl.u32 %v801, 4
        %v803 = vmul.u32 %v802, 24
        %v804 = vsub.s32 %v798, %v803
        %v805 = vsub.s32 0, %v804
        %v806 = vsel %vm796, %v805, %v804
        %vm807 = vcmp.lt.s32.totalorder %v609, 0
        %v808 = vsub.s32 0, %v609
        %v809 = vsel %vm807, %v808, %v609
        %v810 = vmul.u32.u64.compose %v809, 2863311531
        %v811 = vextract.low.u32 %v810
        %v812 = vextract.high.u32 %v810
        %v813 = vshrl.u32 %v812, 4
        %v814 = vmul.u32 %v813, 24
        %v815 = vsub.s32 %v809, %v814
        %v816 = vsub.s32 0, %v815
        %v817 = vsel %vm807, %v816, %v815
        %vm818 = vcmp.lt.s32.totalorder %v610, 0
        %v819 = vsub.s32 0, %v610
        %v820 = vsel %vm818, %v819, %v610
        %v821 = vmul.u32.u64.compose %v820, 2863311531
        %v822 = vextract.low.u32 %v821
        %v823 = vextract.high.u32 %v821
        %v824 = vshrl.u32 %v823, 4
        %v825 = vmul.u32 %v824, 24
        %v826 = vsub.s32 %v820, %v825
        %v827 = vsub.s32 0, %v826
        %v828 = vsel %vm818, %v827, %v826
        %vm829 = vcmp.lt.s32.totalorder %v611, 0
        %v830 = vsub.s32 0, %v611
        %v831 = vsel %vm829, %v830, %v611
        %v832 = vmul.u32.u64.compose %v831, 2863311531
        %v833 = vextract.low.u32 %v832
        %v834 = vextract.high.u32 %v832
        %v835 = vshrl.u32 %v834, 4
        %v836 = vmul.u32 %v835, 24
        %v837 = vsub.s32 %v831, %v836
        %v838 = vsub.s32 0, %v837
        %v839 = vsel %vm829, %v838, %v837
        %vm840 = vcmp.lt.s32.totalorder %v612, 0
        %v841 = vsub.s32 0, %v612
        %v842 = vsel %vm840, %v841, %v612
        %v843 = vmul.u32.u64.compose %v842, 2863311531
        %v844 = vextract.low.u32 %v843
        %v845 = vextract.high.u32 %v843
        %v846 = vshrl.u32 %v845, 4
        %v847 = vmul.u32 %v846, 24
        %v848 = vsub.s32 %v842, %v847
        %v849 = vsub.s32 0, %v848
        %v850 = vsel %vm840, %v849, %v848
        %vm851 = vcmp.lt.s32.totalorder %v613, 0
        %v852 = vsub.s32 0, %v613
        %v853 = vsel %vm851, %v852, %v613
        %v854 = vmul.u32.u64.compose %v853, 2863311531
        %v855 = vextract.low.u32 %v854
        %v856 = vextract.high.u32 %v854
        %v857 = vshrl.u32 %v856, 4
        %v858 = vmul.u32 %v857, 24
        %v859 = vsub.s32 %v853, %v858
        %v860 = vsub.s32 0, %v859
        %v861 = vsel %vm851, %v860, %v859
        %vm862 = vcmp.lt.s32.totalorder %v614, 0
        %v863 = vsub.s32 0, %v614
        %v864 = vsel %vm862, %v863, %v614
        %v865 = vmul.u32.u64.compose %v864, 2863311531
        %v866 = vextract.low.u32 %v865
        %v867 = vextract.high.u32 %v865
        %v868 = vshrl.u32 %v867, 4
        %v869 = vmul.u32 %v868, 24
        %v870 = vsub.s32 %v864, %v869
        %v871 = vsub.s32 0, %v870
        %v872 = vsel %vm862, %v871, %v870
        %vm873 = vcmp.lt.s32.totalorder %v615, 0
        %v874 = vsub.s32 0, %v615
        %v875 = vsel %vm873, %v874, %v615
        %v876 = vmul.u32.u64.compose %v875, 2863311531
        %v877 = vextract.low.u32 %v876
        %v878 = vextract.high.u32 %v876
        %v879 = vshrl.u32 %v878, 4
        %v880 = vmul.u32 %v879, 24
        %v881 = vsub.s32 %v875, %v880
        %v882 = vsub.s32 0, %v881
        %v883 = vsel %vm873, %v882, %v881
        %vm884 = vcmp.lt.s32.totalorder %v616, 0
        %v885 = vsub.s32 0, %v616
        %v886 = vsel %vm884, %v885, %v616
        %v887 = vmul.u32.u64.compose %v886, 2863311531
        %v888 = vextract.low.u32 %v887
        %v889 = vextract.high.u32 %v887
        %v890 = vshrl.u32 %v889, 4
        %v891 = vmul.u32 %v890, 24
        %v892 = vsub.s32 %v886, %v891
        %v893 = vsub.s32 0, %v892
        %v894 = vsel %vm884, %v893, %v892
        %vm895 = vcmp.lt.s32.totalorder %v617, 0
        %v896 = vsub.s32 0, %v617
        %v897 = vsel %vm895, %v896, %v617
        %v898 = vmul.u32.u64.compose %v897, 2863311531
        %v899 = vextract.low.u32 %v898
        %v900 = vextract.high.u32 %v898
        %v901 = vshrl.u32 %v900, 4
        %v902 = vmul.u32 %v901, 24
        %v903 = vsub.s32 %v897, %v902
        %v904 = vsub.s32 0, %v903
        %v905 = vsel %vm895, %v904, %v903
        %vm906 = vcmp.lt.s32.totalorder %v618, 0
        %v907 = vsub.s32 0, %v618
        %v908 = vsel %vm906, %v907, %v618
        %v909 = vmul.u32.u64.compose %v908, 2863311531
        %v910 = vextract.low.u32 %v909
        %v911 = vextract.high.u32 %v909
        %v912 = vshrl.u32 %v911, 4
        %v913 = vmul.u32 %v912, 24
        %v914 = vsub.s32 %v908, %v913
        %v915 = vsub.s32 0, %v914
        %v916 = vsel %vm906, %v915, %v914
        %vm917 = vcmp.lt.s32.totalorder %v619, 0
        %v918 = vsub.s32 0, %v619
        %v919 = vsel %vm917, %v918, %v619
        %v920 = vmul.u32.u64.compose %v919, 2863311531
        %v921 = vextract.low.u32 %v920
        %v922 = vextract.high.u32 %v920
        %v923 = vshrl.u32 %v922, 4
        %v924 = vmul.u32 %v923, 24
        %v925 = vsub.s32 %v919, %v924
        %v926 = vsub.s32 0, %v925
        %v927 = vsel %vm917, %v926, %v925
        %vm928 = vcmp.lt.s32.totalorder %v620, 0
        %v929 = vsub.s32 0, %v620
        %v930 = vsel %vm928, %v929, %v620
        %v931 = vmul.u32.u64.compose %v930, 2863311531
        %v932 = vextract.low.u32 %v931
        %v933 = vextract.high.u32 %v931
        %v934 = vshrl.u32 %v933, 4
        %v935 = vmul.u32 %v934, 24
        %v936 = vsub.s32 %v930, %v935
        %v937 = vsub.s32 0, %v936
        %v938 = vsel %vm928, %v937, %v936
        %vm939 = vcmp.lt.s32.totalorder %v621, 0
        %v940 = vsub.s32 0, %v621
        %v941 = vsel %vm939, %v940, %v621
        %v942 = vmul.u32.u64.compose %v941, 2863311531
        %v943 = vextract.low.u32 %v942
        %v944 = vextract.high.u32 %v942
        %v945 = vshrl.u32 %v944, 4
        %v946 = vmul.u32 %v945, 24
        %v947 = vsub.s32 %v941, %v946
        %v948 = vsub.s32 0, %v947
        %v949 = vsel %vm939, %v948, %v947
        %vm950 = vcmp.lt.s32.totalorder %v622, 0
        %v951 = vsub.s32 0, %v622
        %v952 = vsel %vm950, %v951, %v622
        %v953 = vmul.u32.u64.compose %v952, 2863311531
        %v954 = vextract.low.u32 %v953
        %v955 = vextract.high.u32 %v953
        %v956 = vshrl.u32 %v955, 4
        %v957 = vmul.u32 %v956, 24
        %v958 = vsub.s32 %v952, %v957
        %v959 = vsub.s32 0, %v958
        %v960 = vsel %vm950, %v959, %v958
        %vm961 = vcmp.lt.s32.totalorder %v623, 0
        %v962 = vsub.s32 0, %v623
        %v963 = vsel %vm961, %v962, %v623
        %v964 = vmul.u32.u64.compose %v963, 2863311531
        %v965 = vextract.low.u32 %v964
        %v966 = vextract.high.u32 %v964
        %v967 = vshrl.u32 %v966, 4
        %v968 = vmul.u32 %v967, 24
        %v969 = vsub.s32 %v963, %v968
        %v970 = vsub.s32 0, %v969
        %v971 = vsel %vm961, %v970, %v969
        %vm972 = vcmp.lt.s32.totalorder %v624, 0
        %v973 = vsub.s32 0, %v624
        %v974 = vsel %vm972, %v973, %v624
        %v975 = vmul.u32.u64.compose %v974, 2863311531
        %v976 = vextract.low.u32 %v975
        %v977 = vextract.high.u32 %v975
        %v978 = vshrl.u32 %v977, 4
        %v979 = vmul.u32 %v978, 24
        %v980 = vsub.s32 %v974, %v979
        %v981 = vsub.s32 0, %v980
        %v982 = vsel %vm972, %v981, %v980
        %vm983 = vcmp.lt.s32.totalorder %v625, 0
        %v984 = vsub.s32 0, %v625
        %v985 = vsel %vm983, %v984, %v625
        %v986 = vmul.u32.u64.compose %v985, 2863311531
        %v987 = vextract.low.u32 %v986
        %v988 = vextract.high.u32 %v986
        %v989 = vshrl.u32 %v988, 4
        %v990 = vmul.u32 %v989, 24
        %v991 = vsub.s32 %v985, %v990
        %v992 = vsub.s32 0, %v991
        %v993 = vsel %vm983, %v992, %v991
        %vm994 = vcmp.lt.s32.totalorder %v626, 0
        %v995 = vsub.s32 0, %v626
        %v996 = vsel %vm994, %v995, %v626
        %v997 = vmul.u32.u64.compose %v996, 2863311531
        %v998 = vextract.low.u32 %v997
        %v999 = vextract.high.u32 %v997
        %v1000 = vshrl.u32 %v999, 4
        %v1001 = vmul.u32 %v1000, 24
        %v1002 = vsub.s32 %v996, %v1001
        %v1003 = vsub.s32 0, %v1002
        %v1004 = vsel %vm994, %v1003, %v1002
        %vm1005 = vcmp.lt.s32.totalorder %v627, 0
        %v1006 = vsub.s32 0, %v627
        %v1007 = vsel %vm1005, %v1006, %v627
        %v1008 = vmul.u32.u64.compose %v1007, 2863311531
        %v1009 = vextract.low.u32 %v1008
        %v1010 = vextract.high.u32 %v1008
        %v1011 = vshrl.u32 %v1010, 4
        %v1012 = vmul.u32 %v1011, 24
        %v1013 = vsub.s32 %v1007, %v1012
        %v1014 = vsub.s32 0, %v1013
        %v1015 = vsel %vm1005, %v1014, %v1013
        %vm1016 = vcmp.lt.s32.totalorder %v628, 0
        %v1017 = vsub.s32 0, %v628
        %v1018 = vsel %vm1016, %v1017, %v628
        %v1019 = vmul.u32.u64.compose %v1018, 2863311531
        %v1020 = vextract.low.u32 %v1019
        %v1021 = vextract.high.u32 %v1019
        %v1022 = vshrl.u32 %v1021, 4
        %v1023 = vmul.u32 %v1022, 24
        %v1024 = vsub.s32 %v1018, %v1023
        %v1025 = vsub.s32 0, %v1024
        %v1026 = vsel %vm1016, %v1025, %v1024
        %vm1027 = vcmp.lt.s32.totalorder %v629, 0
        %v1028 = vsub.s32 0, %v629
        %v1029 = vsel %vm1027, %v1028, %v629
        %v1030 = vmul.u32.u64.compose %v1029, 2863311531
        %v1031 = vextract.low.u32 %v1030
        %v1032 = vextract.high.u32 %v1030
        %v1033 = vshrl.u32 %v1032, 4
        %v1034 = vmul.u32 %v1033, 24
        %v1035 = vsub.s32 %v1029, %v1034
        %v1036 = vsub.s32 0, %v1035
        %v1037 = vsel %vm1027, %v1036, %v1035
        %vm1038 = vcmp.lt.s32.totalorder %v630, 0
        %v1039 = vsub.s32 0, %v630
        %v1040 = vsel %vm1038, %v1039, %v630
        %v1041 = vmul.u32.u64.compose %v1040, 2863311531
        %v1042 = vextract.low.u32 %v1041
        %v1043 = vextract.high.u32 %v1041
        %v1044 = vshrl.u32 %v1043, 4
        %v1045 = vmul.u32 %v1044, 24
        %v1046 = vsub.s32 %v1040, %v1045
        %v1047 = vsub.s32 0, %v1046
        %v1048 = vsel %vm1038, %v1047, %v1046
        %vm1049 = vcmp.lt.s32.totalorder %v631, 0
        %v1050 = vsub.s32 0, %v631
        %v1051 = vsel %vm1049, %v1050, %v631
        %v1052 = vmul.u32.u64.compose %v1051, 2863311531
        %v1053 = vextract.low.u32 %v1052
        %v1054 = vextract.high.u32 %v1052
        %v1055 = vshrl.u32 %v1054, 4
        %v1056 = vmul.u32 %v1055, 24
        %v1057 = vsub.s32 %v1051, %v1056
        %v1058 = vsub.s32 0, %v1057
        %v1059 = vsel %vm1049, %v1058, %v1057
        %vm1060 = vcmp.lt.s32.totalorder %v632, 0
        %v1061 = vsub.s32 0, %v632
        %v1062 = vsel %vm1060, %v1061, %v632
        %v1063 = vmul.u32.u64.compose %v1062, 2863311531
        %v1064 = vextract.low.u32 %v1063
        %v1065 = vextract.high.u32 %v1063
        %v1066 = vshrl.u32 %v1065, 4
        %v1067 = vmul.u32 %v1066, 24
        %v1068 = vsub.s32 %v1062, %v1067
        %v1069 = vsub.s32 0, %v1068
        %v1070 = vsel %vm1060, %v1069, %v1068
        %vm1071 = vcmp.lt.s32.totalorder %v633, 0
        %v1072 = vsub.s32 0, %v633
        %v1073 = vsel %vm1071, %v1072, %v633
        %v1074 = vmul.u32.u64.compose %v1073, 2863311531
        %v1075 = vextract.low.u32 %v1074
        %v1076 = vextract.high.u32 %v1074
        %v1077 = vshrl.u32 %v1076, 4
        %v1078 = vmul.u32 %v1077, 24
        %v1079 = vsub.s32 %v1073, %v1078
        %v1080 = vsub.s32 0, %v1079
        %v1081 = vsel %vm1071, %v1080, %v1079
        %vm1082 = vcmp.lt.s32.totalorder %v634, 0
        %v1083 = vsub.s32 0, %v634
        %v1084 = vsel %vm1082, %v1083, %v634
        %v1085 = vmul.u32.u64.compose %v1084, 2863311531
        %v1086 = vextract.low.u32 %v1085
        %v1087 = vextract.high.u32 %v1085
        %v1088 = vshrl.u32 %v1087, 4
        %v1089 = vmul.u32 %v1088, 24
        %v1090 = vsub.s32 %v1084, %v1089
        %v1091 = vsub.s32 0, %v1090
        %v1092 = vsel %vm1082, %v1091, %v1090
        %vm1093 = vcmp.lt.s32.totalorder %v635, 0
        %v1094 = vsub.s32 0, %v635
        %v1095 = vsel %vm1093, %v1094, %v635
        %v1096 = vmul.u32.u64.compose %v1095, 2863311531
        %v1097 = vextract.low.u32 %v1096
        %v1098 = vextract.high.u32 %v1096
        %v1099 = vshrl.u32 %v1098, 4
        %v1100 = vmul.u32 %v1099, 24
        %v1101 = vsub.s32 %v1095, %v1100
        %v1102 = vsub.s32 0, %v1101
        %v1103 = vsel %vm1093, %v1102, %v1101
        %vm1104 = vcmp.lt.s32.totalorder %v636, 0
        %v1105 = vsub.s32 0, %v636
        %v1106 = vsel %vm1104, %v1105, %v636
        %v1107 = vmul.u32.u64.compose %v1106, 2863311531
        %v1108 = vextract.low.u32 %v1107
        %v1109 = vextract.high.u32 %v1107
        %v1110 = vshrl.u32 %v1109, 4
        %v1111 = vmul.u32 %v1110, 24
        %v1112 = vsub.s32 %v1106, %v1111
        %v1113 = vsub.s32 0, %v1112
        %v1114 = vsel %vm1104, %v1113, %v1112
        %vm1115 = vcmp.lt.s32.totalorder %v637, 0
        %v1116 = vsub.s32 0, %v637
        %v1117 = vsel %vm1115, %v1116, %v637
        %v1118 = vmul.u32.u64.compose %v1117, 2863311531
        %v1119 = vextract.low.u32 %v1118
        %v1120 = vextract.high.u32 %v1118
        %v1121 = vshrl.u32 %v1120, 4
        %v1122 = vmul.u32 %v1121, 24
        %v1123 = vsub.s32 %v1117, %v1122
        %v1124 = vsub.s32 0, %v1123
        %v1125 = vsel %vm1115, %v1124, %v1123
        %vm1126 = vcmp.lt.s32.totalorder %v638, 0
        %v1127 = vsub.s32 0, %v638
        %v1128 = vsel %vm1126, %v1127, %v638
        %v1129 = vmul.u32.u64.compose %v1128, 2863311531
        %v1130 = vextract.low.u32 %v1129
        %v1131 = vextract.high.u32 %v1129
        %v1132 = vshrl.u32 %v1131, 4
        %v1133 = vmul.u32 %v1132, 24
        %v1134 = vsub.s32 %v1128, %v1133
        %v1135 = vsub.s32 0, %v1134
        %v1136 = vsel %vm1126, %v1135, %v1134
        %vm1137 = vcmp.lt.s32.totalorder %v639, 0
        %v1138 = vsub.s32 0, %v639
        %v1139 = vsel %vm1137, %v1138, %v639
        %v1140 = vmul.u32.u64.compose %v1139, 2863311531
        %v1141 = vextract.low.u32 %v1140
        %v1142 = vextract.high.u32 %v1140
        %v1143 = vshrl.u32 %v1142, 4
        %v1144 = vmul.u32 %v1143, 24
        %v1145 = vsub.s32 %v1139, %v1144
        %v1146 = vsub.s32 0, %v1145
        %v1147 = vsel %vm1137, %v1146, %v1145
        %vm1148 = vcmp.lt.s32.totalorder %v640, 0
        %v1149 = vsub.s32 0, %v640
        %v1150 = vsel %vm1148, %v1149, %v640
        %v1151 = vmul.u32.u64.compose %v1150, 2863311531
        %v1152 = vextract.low.u32 %v1151
        %v1153 = vextract.high.u32 %v1151
        %v1154 = vshrl.u32 %v1153, 4
        %v1155 = vmul.u32 %v1154, 24
        %v1156 = vsub.s32 %v1150, %v1155
        %v1157 = vsub.s32 0, %v1156
        %v1158 = vsel %vm1148, %v1157, %v1156
        %vm1159 = vcmp.lt.s32.totalorder %v641, 0
        %v1160 = vsub.s32 0, %v641
        %v1161 = vsel %vm1159, %v1160, %v641
        %v1162 = vmul.u32.u64.compose %v1161, 2863311531
        %v1163 = vextract.low.u32 %v1162
        %v1164 = vextract.high.u32 %v1162
        %v1165 = vshrl.u32 %v1164, 4
        %v1166 = vmul.u32 %v1165, 24
        %v1167 = vsub.s32 %v1161, %v1166
        %v1168 = vsub.s32 0, %v1167
        %v1169 = vsel %vm1159, %v1168, %v1167
        %vm1170 = vcmp.ne.s32.totalorder %v652, 0
        %vm1171 = vcmp.ne.s32.totalorder %v663, 0
        %vm1172 = vcmp.ne.s32.totalorder %v674, 0
        %vm1173 = vcmp.ne.s32.totalorder %v685, 0
        %vm1174 = vcmp.ne.s32.totalorder %v696, 0
        %vm1175 = vcmp.ne.s32.totalorder %v707, 0
        %vm1176 = vcmp.ne.s32.totalorder %v718, 0
        %vm1177 = vcmp.ne.s32.totalorder %v729, 0
        %vm1178 = vcmp.ne.s32.totalorder %v740, 0
        %vm1179 = vcmp.ne.s32.totalorder %v751, 0
        %vm1180 = vcmp.ne.s32.totalorder %v762, 0
        %vm1181 = vcmp.ne.s32.totalorder %v773, 0
        %vm1182 = vcmp.ne.s32.totalorder %v784, 0
        %vm1183 = vcmp.ne.s32.totalorder %v795, 0
        %vm1184 = vcmp.ne.s32.totalorder %v806, 0
        %vm1185 = vcmp.ne.s32.totalorder %v817, 0
        %vm1186 = vcmp.ne.s32.totalorder %v828, 0
        %vm1187 = vcmp.ne.s32.totalorder %v839, 0
        %vm1188 = vcmp.ne.s32.totalorder %v850, 0
        %vm1189 = vcmp.ne.s32.totalorder %v861, 0
        %vm1190 = vcmp.ne.s32.totalorder %v872, 0
        %vm1191 = vcmp.ne.s32.totalorder %v883, 0
        %vm1192 = vcmp.ne.s32.totalorder %v894, 0
        %vm1193 = vcmp.ne.s32.totalorder %v905, 0
        %vm1194 = vcmp.ne.s32.totalorder %v916, 0
        %vm1195 = vcmp.ne.s32.totalorder %v927, 0
        %vm1196 = vcmp.ne.s32.totalorder %v938, 0
        %vm1197 = vcmp.ne.s32.totalorder %v949, 0
        %vm1198 = vcmp.ne.s32.totalorder %v960, 0
        %vm1199 = vcmp.ne.s32.totalorder %v971, 0
        %vm1200 = vcmp.ne.s32.totalorder %v982, 0
        %vm1201 = vcmp.ne.s32.totalorder %v993, 0
        %vm1202 = vcmp.ne.s32.totalorder %v1004, 0
        %vm1203 = vcmp.ne.s32.totalorder %v1015, 0
        %vm1204 = vcmp.ne.s32.totalorder %v1026, 0
        %vm1205 = vcmp.ne.s32.totalorder %v1037, 0
        %vm1206 = vcmp.ne.s32.totalorder %v1048, 0
        %vm1207 = vcmp.ne.s32.totalorder %v1059, 0
        %vm1208 = vcmp.ne.s32.totalorder %v1070, 0
        %vm1209 = vcmp.ne.s32.totalorder %v1081, 0
        %vm1210 = vcmp.ne.s32.totalorder %v1092, 0
        %vm1211 = vcmp.ne.s32.totalorder %v1103, 0
        %vm1212 = vcmp.ne.s32.totalorder %v1114, 0
        %vm1213 = vcmp.ne.s32.totalorder %v1125, 0
        %vm1214 = vcmp.ne.s32.totalorder %v1136, 0
        %vm1215 = vcmp.ne.s32.totalorder %v1147, 0
        %vm1216 = vcmp.ne.s32.totalorder %v1158, 0
        %vm1217 = vcmp.ne.s32.totalorder %v1169, 0
        %vm1218 = vcmp.lt.s32.totalorder %v652, 0
        %vm1219 = vcmp.lt.s32.totalorder %v663, 0
        %vm1220 = vcmp.lt.s32.totalorder %v674, 0
        %vm1221 = vcmp.lt.s32.totalorder %v685, 0
        %vm1222 = vcmp.lt.s32.totalorder %v696, 0
        %vm1223 = vcmp.lt.s32.totalorder %v707, 0
        %vm1224 = vcmp.lt.s32.totalorder %v718, 0
        %vm1225 = vcmp.lt.s32.totalorder %v729, 0
        %vm1226 = vcmp.lt.s32.totalorder %v740, 0
        %vm1227 = vcmp.lt.s32.totalorder %v751, 0
        %vm1228 = vcmp.lt.s32.totalorder %v762, 0
        %vm1229 = vcmp.lt.s32.totalorder %v773, 0
        %vm1230 = vcmp.lt.s32.totalorder %v784, 0
        %vm1231 = vcmp.lt.s32.totalorder %v795, 0
        %vm1232 = vcmp.lt.s32.totalorder %v806, 0
        %vm1233 = vcmp.lt.s32.totalorder %v817, 0
        %vm1234 = vcmp.lt.s32.totalorder %v828, 0
        %vm1235 = vcmp.lt.s32.totalorder %v839, 0
        %vm1236 = vcmp.lt.s32.totalorder %v850, 0
        %vm1237 = vcmp.lt.s32.totalorder %v861, 0
        %vm1238 = vcmp.lt.s32.totalorder %v872, 0
        %vm1239 = vcmp.lt.s32.totalorder %v883, 0
        %vm1240 = vcmp.lt.s32.totalorder %v894, 0
        %vm1241 = vcmp.lt.s32.totalorder %v905, 0
        %vm1242 = vcmp.lt.s32.totalorder %v916, 0
        %vm1243 = vcmp.lt.s32.totalorder %v927, 0
        %vm1244 = vcmp.lt.s32.totalorder %v938, 0
        %vm1245 = vcmp.lt.s32.totalorder %v949, 0
        %vm1246 = vcmp.lt.s32.totalorder %v960, 0
        %vm1247 = vcmp.lt.s32.totalorder %v971, 0
        %vm1248 = vcmp.lt.s32.totalorder %v982, 0
        %vm1249 = vcmp.lt.s32.totalorder %v993, 0
        %vm1250 = vcmp.lt.s32.totalorder %v1004, 0
        %vm1251 = vcmp.lt.s32.totalorder %v1015, 0
        %vm1252 = vcmp.lt.s32.totalorder %v1026, 0
        %vm1253 = vcmp.lt.s32.totalorder %v1037, 0
        %vm1254 = vcmp.lt.s32.totalorder %v1048, 0
        %vm1255 = vcmp.lt.s32.totalorder %v1059, 0
        %vm1256 = vcmp.lt.s32.totalorder %v1070, 0
        %vm1257 = vcmp.lt.s32.totalorder %v1081, 0
        %vm1258 = vcmp.lt.s32.totalorder %v1092, 0
        %vm1259 = vcmp.lt.s32.totalorder %v1103, 0
        %vm1260 = vcmp.lt.s32.totalorder %v1114, 0
        %vm1261 = vcmp.lt.s32.totalorder %v1125, 0
        %vm1262 = vcmp.lt.s32.totalorder %v1136, 0
        %vm1263 = vcmp.lt.s32.totalorder %v1147, 0
        %vm1264 = vcmp.lt.s32.totalorder %v1158, 0
        %vm1265 = vcmp.lt.s32.totalorder %v1169, 0
        %vm1266 = vmand %vm1218, %vm1170
        %vm1267 = vmand %vm1219, %vm1171
        %vm1268 = vmand %vm1220, %vm1172
        %vm1269 = vmand %vm1221, %vm1173
        %vm1270 = vmand %vm1222, %vm1174
        %vm1271 = vmand %vm1223, %vm1175
        %vm1272 = vmand %vm1224, %vm1176
        %vm1273 = vmand %vm1225, %vm1177
        %vm1274 = vmand %vm1226, %vm1178
        %vm1275 = vmand %vm1227, %vm1179
        %vm1276 = vmand %vm1228, %vm1180
        %vm1277 = vmand %vm1229, %vm1181
        %vm1278 = vmand %vm1230, %vm1182
        %vm1279 = vmand %vm1231, %vm1183
        %vm1280 = vmand %vm1232, %vm1184
        %vm1281 = vmand %vm1233, %vm1185
        %vm1282 = vmand %vm1234, %vm1186
        %vm1283 = vmand %vm1235, %vm1187
        %vm1284 = vmand %vm1236, %vm1188
        %vm1285 = vmand %vm1237, %vm1189
        %vm1286 = vmand %vm1238, %vm1190
        %vm1287 = vmand %vm1239, %vm1191
        %vm1288 = vmand %vm1240, %vm1192
        %vm1289 = vmand %vm1241, %vm1193
        %vm1290 = vmand %vm1242, %vm1194
        %vm1291 = vmand %vm1243, %vm1195
        %vm1292 = vmand %vm1244, %vm1196
        %vm1293 = vmand %vm1245, %vm1197
        %vm1294 = vmand %vm1246, %vm1198
        %vm1295 = vmand %vm1247, %vm1199
        %vm1296 = vmand %vm1248, %vm1200
        %vm1297 = vmand %vm1249, %vm1201
        %vm1298 = vmand %vm1250, %vm1202
        %vm1299 = vmand %vm1251, %vm1203
        %vm1300 = vmand %vm1252, %vm1204
        %vm1301 = vmand %vm1253, %vm1205
        %vm1302 = vmand %vm1254, %vm1206
        %vm1303 = vmand %vm1255, %vm1207
        %vm1304 = vmand %vm1256, %vm1208
        %vm1305 = vmand %vm1257, %vm1209
        %vm1306 = vmand %vm1258, %vm1210
        %vm1307 = vmand %vm1259, %vm1211
        %vm1308 = vmand %vm1260, %vm1212
        %vm1309 = vmand %vm1261, %vm1213
        %vm1310 = vmand %vm1262, %vm1214
        %vm1311 = vmand %vm1263, %vm1215
        %vm1312 = vmand %vm1264, %vm1216
        %vm1313 = vmand %vm1265, %vm1217
        %v1314 = vadd.s32 %v652, 24
        %v1315 = vadd.s32 %v663, 24
        %v1316 = vadd.s32 %v674, 24
        %v1317 = vadd.s32 %v685, 24
        %v1318 = vadd.s32 %v696, 24
        %v1319 = vadd.s32 %v707, 24
        %v1320 = vadd.s32 %v718, 24
        %v1321 = vadd.s32 %v729, 24
        %v1322 = vadd.s32 %v740, 24
        %v1323 = vadd.s32 %v751, 24
        %v1324 = vadd.s32 %v762, 24
        %v1325 = vadd.s32 %v773, 24
        %v1326 = vadd.s32 %v784, 24
        %v1327 = vadd.s32 %v795, 24
        %v1328 = vadd.s32 %v806, 24
        %v1329 = vadd.s32 %v817, 24
        %v1330 = vadd.s32 %v828, 24
        %v1331 = vadd.s32 %v839, 24
        %v1332 = vadd.s32 %v850, 24
        %v1333 = vadd.s32 %v861, 24
        %v1334 = vadd.s32 %v872, 24
        %v1335 = vadd.s32 %v883, 24
        %v1336 = vadd.s32 %v894, 24
        %v1337 = vadd.s32 %v905, 24
        %v1338 = vadd.s32 %v916, 24
        %v1339 = vadd.s32 %v927, 24
        %v1340 = vadd.s32 %v938, 24
        %v1341 = vadd.s32 %v949, 24
        %v1342 = vadd.s32 %v960, 24
        %v1343 = vadd.s32 %v971, 24
        %v1344 = vadd.s32 %v982, 24
        %v1345 = vadd.s32 %v993, 24
        %v1346 = vadd.s32 %v1004, 24
        %v1347 = vadd.s32 %v1015, 24
        %v1348 = vadd.s32 %v1026, 24
        %v1349 = vadd.s32 %v1037, 24
        %v1350 = vadd.s32 %v1048, 24
        %v1351 = vadd.s32 %v1059, 24
        %v1352 = vadd.s32 %v1070, 24
        %v1353 = vadd.s32 %v1081, 24
        %v1354 = vadd.s32 %v1092, 24
        %v1355 = vadd.s32 %v1103, 24
        %v1356 = vadd.s32 %v1114, 24
        %v1357 = vadd.s32 %v1125, 24
        %v1358 = vadd.s32 %v1136, 24
        %v1359 = vadd.s32 %v1147, 24
        %v1360 = vadd.s32 %v1158, 24
        %v1361 = vadd.s32 %v1169, 24
        %v1362 = vsel %vm1266, %v1314, %v652
        %v1363 = vsel %vm1267, %v1315, %v663
        %v1364 = vsel %vm1268, %v1316, %v674
        %v1365 = vsel %vm1269, %v1317, %v685
        %v1366 = vsel %vm1270, %v1318, %v696
        %v1367 = vsel %vm1271, %v1319, %v707
        %v1368 = vsel %vm1272, %v1320, %v718
        %v1369 = vsel %vm1273, %v1321, %v729
        %v1370 = vsel %vm1274, %v1322, %v740
        %v1371 = vsel %vm1275, %v1323, %v751
        %v1372 = vsel %vm1276, %v1324, %v762
        %v1373 = vsel %vm1277, %v1325, %v773
        %v1374 = vsel %vm1278, %v1326, %v784
        %v1375 = vsel %vm1279, %v1327, %v795
        %v1376 = vsel %vm1280, %v1328, %v806
        %v1377 = vsel %vm1281, %v1329, %v817
        %v1378 = vsel %vm1282, %v1330, %v828
        %v1379 = vsel %vm1283, %v1331, %v839
        %v1380 = vsel %vm1284, %v1332, %v850
        %v1381 = vsel %vm1285, %v1333, %v861
        %v1382 = vsel %vm1286, %v1334, %v872
        %v1383 = vsel %vm1287, %v1335, %v883
        %v1384 = vsel %vm1288, %v1336, %v894
        %v1385 = vsel %vm1289, %v1337, %v905
        %v1386 = vsel %vm1290, %v1338, %v916
        %v1387 = vsel %vm1291, %v1339, %v927
        %v1388 = vsel %vm1292, %v1340, %v938
        %v1389 = vsel %vm1293, %v1341, %v949
        %v1390 = vsel %vm1294, %v1342, %v960
        %v1391 = vsel %vm1295, %v1343, %v971
        %v1392 = vsel %vm1296, %v1344, %v982
        %v1393 = vsel %vm1297, %v1345, %v993
        %v1394 = vsel %vm1298, %v1346, %v1004
        %v1395 = vsel %vm1299, %v1347, %v1015
        %v1396 = vsel %vm1300, %v1348, %v1026
        %v1397 = vsel %vm1301, %v1349, %v1037
        %v1398 = vsel %vm1302, %v1350, %v1048
        %v1399 = vsel %vm1303, %v1351, %v1059
        %v1400 = vsel %vm1304, %v1352, %v1070
        %v1401 = vsel %vm1305, %v1353, %v1081
        %v1402 = vsel %vm1306, %v1354, %v1092
        %v1403 = vsel %vm1307, %v1355, %v1103
        %v1404 = vsel %vm1308, %v1356, %v1114
        %v1405 = vsel %vm1309, %v1357, %v1125
        %v1406 = vsel %vm1310, %v1358, %v1136
        %v1407 = vsel %vm1311, %v1359, %v1147
        %v1408 = vsel %vm1312, %v1360, %v1158
        %v1409 = vsel %vm1313, %v1361, %v1169
        %vm1410 = vcmp.lt.s32.totalorder %v1362, 16
        %vm1411 = vcmp.lt.s32.totalorder %v1363, 16
        %vm1412 = vcmp.lt.s32.totalorder %v1364, 16
        %vm1413 = vcmp.lt.s32.totalorder %v1365, 16
        %vm1414 = vcmp.lt.s32.totalorder %v1366, 16
        %vm1415 = vcmp.lt.s32.totalorder %v1367, 16
        %vm1416 = vcmp.lt.s32.totalorder %v1368, 16
        %vm1417 = vcmp.lt.s32.totalorder %v1369, 16
        %vm1418 = vcmp.lt.s32.totalorder %v1370, 16
        %vm1419 = vcmp.lt.s32.totalorder %v1371, 16
        %vm1420 = vcmp.lt.s32.totalorder %v1372, 16
        %vm1421 = vcmp.lt.s32.totalorder %v1373, 16
        %vm1422 = vcmp.lt.s32.totalorder %v1374, 16
        %vm1423 = vcmp.lt.s32.totalorder %v1375, 16
        %vm1424 = vcmp.lt.s32.totalorder %v1376, 16
        %vm1425 = vcmp.lt.s32.totalorder %v1377, 16
        %vm1426 = vcmp.lt.s32.totalorder %v1378, 16
        %vm1427 = vcmp.lt.s32.totalorder %v1379, 16
        %vm1428 = vcmp.lt.s32.totalorder %v1380, 16
        %vm1429 = vcmp.lt.s32.totalorder %v1381, 16
        %vm1430 = vcmp.lt.s32.totalorder %v1382, 16
        %vm1431 = vcmp.lt.s32.totalorder %v1383, 16
        %vm1432 = vcmp.lt.s32.totalorder %v1384, 16
        %vm1433 = vcmp.lt.s32.totalorder %v1385, 16
        %vm1434 = vcmp.lt.s32.totalorder %v1386, 16
        %vm1435 = vcmp.lt.s32.totalorder %v1387, 16
        %vm1436 = vcmp.lt.s32.totalorder %v1388, 16
        %vm1437 = vcmp.lt.s32.totalorder %v1389, 16
        %vm1438 = vcmp.lt.s32.totalorder %v1390, 16
        %vm1439 = vcmp.lt.s32.totalorder %v1391, 16
        %vm1440 = vcmp.lt.s32.totalorder %v1392, 16
        %vm1441 = vcmp.lt.s32.totalorder %v1393, 16
        %vm1442 = vcmp.lt.s32.totalorder %v1394, 16
        %vm1443 = vcmp.lt.s32.totalorder %v1395, 16
        %vm1444 = vcmp.lt.s32.totalorder %v1396, 16
        %vm1445 = vcmp.lt.s32.totalorder %v1397, 16
        %vm1446 = vcmp.lt.s32.totalorder %v1398, 16
        %vm1447 = vcmp.lt.s32.totalorder %v1399, 16
        %vm1448 = vcmp.lt.s32.totalorder %v1400, 16
        %vm1449 = vcmp.lt.s32.totalorder %v1401, 16
        %vm1450 = vcmp.lt.s32.totalorder %v1402, 16
        %vm1451 = vcmp.lt.s32.totalorder %v1403, 16
        %vm1452 = vcmp.lt.s32.totalorder %v1404, 16
        %vm1453 = vcmp.lt.s32.totalorder %v1405, 16
        %vm1454 = vcmp.lt.s32.totalorder %v1406, 16
        %vm1455 = vcmp.lt.s32.totalorder %v1407, 16
        %vm1456 = vcmp.lt.s32.totalorder %v1408, 16
        %vm1457 = vcmp.lt.s32.totalorder %v1409, 16
        %v1458 = vld [vmem:[#allocation2] sm:$0x8]
        %v1459 = vld [vmem:[#allocation2 + $0x4] sm:$0xf]
        %v1460 = vld [vmem:[#allocation2 + $0x8] sm:$0xf]
        %v1461 = vld [vmem:[#allocation2 + $0xc] sm:$0xf]
        %v1462 = vld [vmem:[#allocation2 + $0x10] sm:$0xf]
        %v1463 = vld [vmem:[#allocation2 + $0x14] sm:$0xf]
        %v1464 = vld [vmem:[#allocation2 + $0x18] sm:$0xf]
        %v1465 = vld [vmem:[#allocation2 + $0x1c] sm:$0xf]
        %v1466 = vld [vmem:[#allocation2 + $0x20] sm:$0xf]
        %v1467 = vld [vmem:[#allocation2 + $0x24] sm:$0xf]
        %v1468 = vld [vmem:[#allocation2 + $0x28] sm:$0xf]
        %v1469 = vld [vmem:[#allocation2 + $0x2c] sm:$0xf]
        %v1470 = vld [vmem:[#allocation2 + $0x30] sm:$0xf]
        %v1471 = vld [vmem:[#allocation2 + $0x34] sm:$0xf]
        %v1472 = vld [vmem:[#allocation2 + $0x38] sm:$0xf]
        %v1473 = vld [vmem:[#allocation2 + $0x3c] sm:$0xf]
        %v1474 = vld [vmem:[#allocation2 + $0x40] sm:$0xf]
        %v1475 = vld [vmem:[#allocation2 + $0x44] sm:$0xf]
        %v1476 = vld [vmem:[#allocation2 + $0x48] sm:$0xf]
        %v1477 = vld [vmem:[#allocation2 + $0x4c] sm:$0xf]
        %v1478 = vld [vmem:[#allocation2 + $0x50] sm:$0xf]
        %v1479 = vld [vmem:[#allocation2 + $0x54] sm:$0xf]
        %v1480 = vld [vmem:[#allocation2 + $0x58] sm:$0xf]
        %v1481 = vld [vmem:[#allocation2 + $0x5c] sm:$0xf]
        %v1482 = vld [vmem:[#allocation2 + $0x60] sm:$0xf]
        %v1483 = vld [vmem:[#allocation2 + $0x64] sm:$0xf]
        %v1484 = vld [vmem:[#allocation2 + $0x68] sm:$0xf]
        %v1485 = vld [vmem:[#allocation2 + $0x6c] sm:$0xf]
        %v1486 = vld [vmem:[#allocation2 + $0x70] sm:$0xf]
        %v1487 = vld [vmem:[#allocation2 + $0x74] sm:$0xf]
        %v1488 = vld [vmem:[#allocation2 + $0x78] sm:$0xf]
        %v1489 = vld [vmem:[#allocation2 + $0x7c] sm:$0xf]
        %v1490 = vld [vmem:[#allocation2 + $0x80] sm:$0xf]
        %v1491 = vld [vmem:[#allocation2 + $0x84] sm:$0xf]
        %v1492 = vld [vmem:[#allocation2 + $0x88] sm:$0xf]
        %v1493 = vld [vmem:[#allocation2 + $0x8c] sm:$0xf]
        %v1494 = vld [vmem:[#allocation2 + $0x90] sm:$0xf]
        %v1495 = vld [vmem:[#allocation2 + $0x94] sm:$0xf]
        %v1496 = vld [vmem:[#allocation2 + $0x98] sm:$0xf]
        %v1497 = vld [vmem:[#allocation2 + $0x9c] sm:$0xf]
        %v1498 = vld [vmem:[#allocation2 + $0xa0] sm:$0xf]
        %v1499 = vld [vmem:[#allocation2 + $0xa4] sm:$0xf]
        %v1500 = vld [vmem:[#allocation2 + $0xa8] sm:$0xf]
        %v1501 = vld [vmem:[#allocation2 + $0xac] sm:$0xf]
        %v1502 = vld [vmem:[#allocation2 + $0xb0] sm:$0xf]
        %v1503 = vld [vmem:[#allocation2 + $0xb4] sm:$0xf]
        %v1504 = vld [vmem:[#allocation2 + $0xb8] sm:$0xf]
        %v1505 = vld [vmem:[#allocation2 + $0xbc] sm:$0xf]
        %v1506 = vld [vmem:[#allocation2 + $0xc0] sm:$0xf]
        %v1507 = vld [vmem:[#allocation2 + $0xc4] sm:$0xf]
        %v1508 = vld [vmem:[#allocation2 + $0xc8] sm:$0xf]
        %v1509 = vld [vmem:[#allocation2 + $0xcc] sm:$0xf]
        %v1510 = vld [vmem:[#allocation2 + $0xd0] sm:$0xf]
        %v1511 = vld [vmem:[#allocation2 + $0xd4] sm:$0xf]
        %v1512 = vld [vmem:[#allocation2 + $0xd8] sm:$0xf]
        %v1513 = vld [vmem:[#allocation2 + $0xdc] sm:$0x1]
        %v1569 = vunpack.c.l.b16 %v1458
        %v1570 = vunpack.c.l.b16 %v1459
        %v1571 = vunpack.c.l.b16 %v1460
        %v1572 = vunpack.c.l.b16 %v1461
        %v1573 = vunpack.c.l.b16 %v1462
        %v1574 = vunpack.c.l.b16 %v1463
        %v1575 = vunpack.c.l.b16 %v1464
        %v1576 = vunpack.c.l.b16 %v1465
        %v1577 = vunpack.c.l.b16 %v1466
        %v1578 = vunpack.c.l.b16 %v1467
        %v1579 = vunpack.c.l.b16 %v1468
        %v1580 = vunpack.c.l.b16 %v1469
        %v1581 = vunpack.c.l.b16 %v1470
        %v1582 = vunpack.c.l.b16 %v1471
        %v1583 = vunpack.c.l.b16 %v1472
        %v1584 = vunpack.c.l.b16 %v1473
        %v1585 = vunpack.c.l.b16 %v1474
        %v1586 = vunpack.c.l.b16 %v1475
        %v1587 = vunpack.c.l.b16 %v1476
        %v1588 = vunpack.c.l.b16 %v1477
        %v1589 = vunpack.c.l.b16 %v1478
        %v1590 = vunpack.c.l.b16 %v1479
        %v1591 = vunpack.c.l.b16 %v1480
        %v1592 = vunpack.c.l.b16 %v1481
        %v1593 = vunpack.c.l.b16 %v1482
        %v1594 = vunpack.c.l.b16 %v1483
        %v1595 = vunpack.c.l.b16 %v1484
        %v1596 = vunpack.c.l.b16 %v1485
        %v1597 = vunpack.c.l.b16 %v1486
        %v1598 = vunpack.c.l.b16 %v1487
        %v1599 = vunpack.c.l.b16 %v1488
        %v1600 = vunpack.c.l.b16 %v1489
        %v1601 = vunpack.c.l.b16 %v1490
        %v1602 = vunpack.c.l.b16 %v1491
        %v1603 = vunpack.c.l.b16 %v1492
        %v1604 = vunpack.c.l.b16 %v1493
        %v1605 = vunpack.c.l.b16 %v1494
        %v1606 = vunpack.c.l.b16 %v1495
        %v1607 = vunpack.c.l.b16 %v1496
        %v1608 = vunpack.c.l.b16 %v1497
        %v1609 = vunpack.c.l.b16 %v1498
        %v1610 = vunpack.c.l.b16 %v1499
        %v1611 = vunpack.c.l.b16 %v1500
        %v1612 = vunpack.c.l.b16 %v1501
        %v1613 = vunpack.c.l.b16 %v1502
        %v1614 = vunpack.c.l.b16 %v1503
        %v1615 = vunpack.c.l.b16 %v1504
        %v1616 = vunpack.c.l.b16 %v1505
        %v1617 = vunpack.c.l.b16 %v1506
        %v1618 = vunpack.c.l.b16 %v1507
        %v1619 = vunpack.c.l.b16 %v1508
        %v1620 = vunpack.c.l.b16 %v1509
        %v1621 = vunpack.c.l.b16 %v1510
        %v1622 = vunpack.c.l.b16 %v1511
        %v1623 = vunpack.c.l.b16 %v1512
        %v1624 = vpack.c.b16 %v1570, %v1569
        %v1625 = vpack.c.b16 %v1572, %v1571
        %v1626 = vpack.c.b16 %v1574, %v1573
        %v1627 = vpack.c.b16 %v1576, %v1575
        %v1628 = vpack.c.b16 %v1578, %v1577
        %v1629 = vpack.c.b16 %v1580, %v1579
        %v1630 = vpack.c.b16 %v1582, %v1581
        %v1631 = vpack.c.b16 %v1584, %v1583
        %v1632 = vpack.c.b16 %v1586, %v1585
        %v1633 = vpack.c.b16 %v1588, %v1587
        %v1634 = vpack.c.b16 %v1590, %v1589
        %v1635 = vpack.c.b16 %v1592, %v1591
        %v1636 = vpack.c.b16 %v1594, %v1593
        %v1637 = vpack.c.b16 %v1596, %v1595
        %v1638 = vpack.c.b16 %v1598, %v1597
        %v1639 = vpack.c.b16 %v1600, %v1599
        %v1640 = vpack.c.b16 %v1602, %v1601
        %v1641 = vpack.c.b16 %v1604, %v1603
        %v1642 = vpack.c.b16 %v1606, %v1605
        %v1643 = vpack.c.b16 %v1608, %v1607
        %v1644 = vpack.c.b16 %v1610, %v1609
        %v1645 = vpack.c.b16 %v1612, %v1611
        %v1646 = vpack.c.b16 %v1614, %v1613
        %v1647 = vpack.c.b16 %v1616, %v1615
        %v1648 = vpack.c.b16 %v1618, %v1617
        %v1649 = vpack.c.b16 %v1620, %v1619
        %v1650 = vpack.c.b16 %v1622, %v1621
        %v1651 = vpack.c.b16 %v1623, %v1623
        %v1652 = vpack.c.b16 %v1571, %v1570
        %v1653 = vpack.c.b16 %v1573, %v1572
        %v1654 = vpack.c.b16 %v1575, %v1574
        %v1655 = vpack.c.b16 %v1577, %v1576
        %v1656 = vpack.c.b16 %v1579, %v1578
        %v1657 = vpack.c.b16 %v1581, %v1580
        %v1658 = vpack.c.b16 %v1583, %v1582
        %v1659 = vpack.c.b16 %v1585, %v1584
        %v1660 = vpack.c.b16 %v1587, %v1586
        %v1661 = vpack.c.b16 %v1589, %v1588
        %v1662 = vpack.c.b16 %v1591, %v1590
        %v1663 = vpack.c.b16 %v1593, %v1592
        %v1664 = vpack.c.b16 %v1595, %v1594
        %v1665 = vpack.c.b16 %v1597, %v1596
        %v1666 = vpack.c.b16 %v1599, %v1598
        %v1667 = vpack.c.b16 %v1601, %v1600
        %v1668 = vpack.c.b16 %v1603, %v1602
        %v1669 = vpack.c.b16 %v1605, %v1604
        %v1670 = vpack.c.b16 %v1607, %v1606
        %v1671 = vpack.c.b16 %v1609, %v1608
        %v1672 = vpack.c.b16 %v1611, %v1610
        %v1673 = vpack.c.b16 %v1613, %v1612
        %v1674 = vpack.c.b16 %v1615, %v1614
        %v1675 = vpack.c.b16 %v1617, %v1616
        %v1676 = vpack.c.b16 %v1619, %v1618
        %v1677 = vpack.c.b16 %v1621, %v1620
        %v1678 = vpack.c.b16 %v1623, %v1622
        %vm1679 = vsmask.f32 3328
        %v1681 = vshrl.u32 %v1652, 16
        %v1683 = vrot.slane %v1681, 4
        %v1684 = vshll.u32 %v1652, 16
        %v1686 = vrot.slane %v1684, 5
        %v1687 = vor.u32 %v1683, %v1686
        %v1689 = vshrl.u32 %v1653, 16
        %v1691 = vrot.slane %v1689, 4
        %v1692 = vshll.u32 %v1653, 16
        %v1694 = vrot.slane %v1692, 5
        %v1695 = vor.u32 %v1691, %v1694
        %v1696 = vsel %vm1679, %v1687, %v1695
        %v1698 = vshrl.u32 %v1654, 16
        %v1700 = vrot.slane %v1698, 4
        %v1701 = vshll.u32 %v1654, 16
        %v1703 = vrot.slane %v1701, 5
        %v1704 = vor.u32 %v1700, %v1703
        %v1705 = vsel %vm1679, %v1695, %v1704
        %v1707 = vshrl.u32 %v1655, 16
        %v1709 = vrot.slane %v1707, 4
        %v1710 = vshll.u32 %v1655, 16
        %v1712 = vrot.slane %v1710, 5
        %v1713 = vor.u32 %v1709, %v1712
        %v1714 = vsel %vm1679, %v1704, %v1713
        %v1716 = vshrl.u32 %v1656, 16
        %v1718 = vrot.slane %v1716, 4
        %v1719 = vshll.u32 %v1656, 16
        %v1721 = vrot.slane %v1719, 5
        %v1722 = vor.u32 %v1718, %v1721
        %v1723 = vsel %vm1679, %v1713, %v1722
        %v1725 = vshrl.u32 %v1657, 16
        %v1727 = vrot.slane %v1725, 4
        %v1728 = vshll.u32 %v1657, 16
        %v1730 = vrot.slane %v1728, 5
        %v1731 = vor.u32 %v1727, %v1730
        %v1732 = vsel %vm1679, %v1722, %v1731
        %v1734 = vshrl.u32 %v1658, 16
        %v1736 = vrot.slane %v1734, 4
        %v1737 = vshll.u32 %v1658, 16
        %v1739 = vrot.slane %v1737, 5
        %v1740 = vor.u32 %v1736, %v1739
        %v1741 = vsel %vm1679, %v1731, %v1740
        %v1743 = vshrl.u32 %v1659, 16
        %v1745 = vrot.slane %v1743, 4
        %v1746 = vshll.u32 %v1659, 16
        %v1748 = vrot.slane %v1746, 5
        %v1749 = vor.u32 %v1745, %v1748
        %v1750 = vsel %vm1679, %v1740, %v1749
        %v1752 = vshrl.u32 %v1660, 16
        %v1754 = vrot.slane %v1752, 4
        %v1755 = vshll.u32 %v1660, 16
        %v1757 = vrot.slane %v1755, 5
        %v1758 = vor.u32 %v1754, %v1757
        %v1759 = vsel %vm1679, %v1749, %v1758
        %v1761 = vshrl.u32 %v1661, 16
        %v1763 = vrot.slane %v1761, 4
        %v1764 = vshll.u32 %v1661, 16
        %v1766 = vrot.slane %v1764, 5
        %v1767 = vor.u32 %v1763, %v1766
        %v1768 = vsel %vm1679, %v1758, %v1767
        %v1770 = vshrl.u32 %v1662, 16
        %v1772 = vrot.slane %v1770, 4
        %v1773 = vshll.u32 %v1662, 16
        %v1775 = vrot.slane %v1773, 5
        %v1776 = vor.u32 %v1772, %v1775
        %v1777 = vsel %vm1679, %v1767, %v1776
        %v1779 = vshrl.u32 %v1663, 16
        %v1781 = vrot.slane %v1779, 4
        %v1782 = vshll.u32 %v1663, 16
        %v1784 = vrot.slane %v1782, 5
        %v1785 = vor.u32 %v1781, %v1784
        %v1786 = vsel %vm1679, %v1776, %v1785
        %v1788 = vshrl.u32 %v1664, 16
        %v1790 = vrot.slane %v1788, 4
        %v1791 = vshll.u32 %v1664, 16
        %v1793 = vrot.slane %v1791, 5
        %v1794 = vor.u32 %v1790, %v1793
        %v1795 = vsel %vm1679, %v1785, %v1794
        %v1797 = vshrl.u32 %v1665, 16
        %v1799 = vrot.slane %v1797, 4
        %v1800 = vshll.u32 %v1665, 16
        %v1802 = vrot.slane %v1800, 5
        %v1803 = vor.u32 %v1799, %v1802
        %v1804 = vsel %vm1679, %v1794, %v1803
        %v1806 = vshrl.u32 %v1666, 16
        %v1808 = vrot.slane %v1806, 4
        %v1809 = vshll.u32 %v1666, 16
        %v1811 = vrot.slane %v1809, 5
        %v1812 = vor.u32 %v1808, %v1811
        %v1813 = vsel %vm1679, %v1803, %v1812
        %v1815 = vshrl.u32 %v1667, 16
        %v1817 = vrot.slane %v1815, 4
        %v1818 = vshll.u32 %v1667, 16
        %v1820 = vrot.slane %v1818, 5
        %v1821 = vor.u32 %v1817, %v1820
        %v1822 = vsel %vm1679, %v1812, %v1821
        %v1824 = vshrl.u32 %v1668, 16
        %v1826 = vrot.slane %v1824, 4
        %v1827 = vshll.u32 %v1668, 16
        %v1829 = vrot.slane %v1827, 5
        %v1830 = vor.u32 %v1826, %v1829
        %v1831 = vsel %vm1679, %v1821, %v1830
        %v1833 = vshrl.u32 %v1669, 16
        %v1835 = vrot.slane %v1833, 4
        %v1836 = vshll.u32 %v1669, 16
        %v1838 = vrot.slane %v1836, 5
        %v1839 = vor.u32 %v1835, %v1838
        %v1840 = vsel %vm1679, %v1830, %v1839
        %v1842 = vshrl.u32 %v1670, 16
        %v1844 = vrot.slane %v1842, 4
        %v1845 = vshll.u32 %v1670, 16
        %v1847 = vrot.slane %v1845, 5
        %v1848 = vor.u32 %v1844, %v1847
        %v1849 = vsel %vm1679, %v1839, %v1848
        %v1851 = vshrl.u32 %v1671, 16
        %v1853 = vrot.slane %v1851, 4
        %v1854 = vshll.u32 %v1671, 16
        %v1856 = vrot.slane %v1854, 5
        %v1857 = vor.u32 %v1853, %v1856
        %v1858 = vsel %vm1679, %v1848, %v1857
        %v1860 = vshrl.u32 %v1672, 16
        %v1862 = vrot.slane %v1860, 4
        %v1863 = vshll.u32 %v1672, 16
        %v1865 = vrot.slane %v1863, 5
        %v1866 = vor.u32 %v1862, %v1865
        %v1867 = vsel %vm1679, %v1857, %v1866
        %v1869 = vshrl.u32 %v1673, 16
        %v1871 = vrot.slane %v1869, 4
        %v1872 = vshll.u32 %v1673, 16
        %v1874 = vrot.slane %v1872, 5
        %v1875 = vor.u32 %v1871, %v1874
        %v1876 = vsel %vm1679, %v1866, %v1875
        %v1878 = vshrl.u32 %v1674, 16
        %v1880 = vrot.slane %v1878, 4
        %v1881 = vshll.u32 %v1674, 16
        %v1883 = vrot.slane %v1881, 5
        %v1884 = vor.u32 %v1880, %v1883
        %v1885 = vsel %vm1679, %v1875, %v1884
        %v1887 = vshrl.u32 %v1675, 16
        %v1889 = vrot.slane %v1887, 4
        %v1890 = vshll.u32 %v1675, 16
        %v1892 = vrot.slane %v1890, 5
        %v1893 = vor.u32 %v1889, %v1892
        %v1894 = vsel %vm1679, %v1884, %v1893
        %v1896 = vshrl.u32 %v1676, 16
        %v1898 = vrot.slane %v1896, 4
        %v1899 = vshll.u32 %v1676, 16
        %v1901 = vrot.slane %v1899, 5
        %v1902 = vor.u32 %v1898, %v1901
        %v1903 = vsel %vm1679, %v1893, %v1902
        %v1905 = vshrl.u32 %v1677, 16
        %v1907 = vrot.slane %v1905, 4
        %v1908 = vshll.u32 %v1677, 16
        %v1910 = vrot.slane %v1908, 5
        %v1911 = vor.u32 %v1907, %v1910
        %v1912 = vsel %vm1679, %v1902, %v1911
        %v1914 = vshrl.u32 %v1678, 16
        %v1916 = vrot.slane %v1914, 4
        %v1917 = vshll.u32 %v1678, 16
        %v1919 = vrot.slane %v1917, 5
        %v1920 = vor.u32 %v1916, %v1919
        %v1921 = vsel %vm1679, %v1911, %v1920
        %1922 = vrot.lane.b32.xlu0 %v1687, 3
        %v1923 = vpop.permute.xlu0 %1922
        %1924 = vrot.lane.b32.xlu0 %v1696, 3
        %v1925 = vpop.permute.xlu0 %1924
        %1926 = vrot.lane.b32.xlu0 %v1705, 3
        %v1927 = vpop.permute.xlu0 %1926
        %1928 = vrot.lane.b32.xlu0 %v1714, 3
        %v1929 = vpop.permute.xlu0 %1928
        %1930 = vrot.lane.b32.xlu0 %v1723, 3
        %v1931 = vpop.permute.xlu0 %1930
        %1932 = vrot.lane.b32.xlu0 %v1732, 3
        %v1933 = vpop.permute.xlu0 %1932
        %1934 = vrot.lane.b32.xlu0 %v1741, 3
        %v1935 = vpop.permute.xlu0 %1934
        %1936 = vrot.lane.b32.xlu0 %v1750, 3
        %v1937 = vpop.permute.xlu0 %1936
        %1938 = vrot.lane.b32.xlu0 %v1759, 3
        %v1939 = vpop.permute.xlu0 %1938
        %1940 = vrot.lane.b32.xlu0 %v1768, 3
        %v1941 = vpop.permute.xlu0 %1940
        %1942 = vrot.lane.b32.xlu0 %v1777, 3
        %v1943 = vpop.permute.xlu0 %1942
        %1944 = vrot.lane.b32.xlu0 %v1786, 3
        %v1945 = vpop.permute.xlu0 %1944
        %1946 = vrot.lane.b32.xlu0 %v1795, 3
        %v1947 = vpop.permute.xlu0 %1946
        %1948 = vrot.lane.b32.xlu0 %v1804, 3
        %v1949 = vpop.permute.xlu0 %1948
        %1950 = vrot.lane.b32.xlu0 %v1813, 3
        %v1951 = vpop.permute.xlu0 %1950
        %1952 = vrot.lane.b32.xlu0 %v1822, 3
        %v1953 = vpop.permute.xlu0 %1952
        %1954 = vrot.lane.b32.xlu0 %v1831, 3
        %v1955 = vpop.permute.xlu0 %1954
        %1956 = vrot.lane.b32.xlu0 %v1840, 3
        %v1957 = vpop.permute.xlu0 %1956
        %1958 = vrot.lane.b32.xlu0 %v1849, 3
        %v1959 = vpop.permute.xlu0 %1958
        %1960 = vrot.lane.b32.xlu0 %v1858, 3
        %v1961 = vpop.permute.xlu0 %1960
        %1962 = vrot.lane.b32.xlu0 %v1867, 3
        %v1963 = vpop.permute.xlu0 %1962
        %1964 = vrot.lane.b32.xlu0 %v1876, 3
        %v1965 = vpop.permute.xlu0 %1964
        %1966 = vrot.lane.b32.xlu0 %v1885, 3
        %v1967 = vpop.permute.xlu0 %1966
        %1968 = vrot.lane.b32.xlu0 %v1894, 3
        %v1969 = vpop.permute.xlu0 %1968
        %1970 = vrot.lane.b32.xlu0 %v1903, 3
        %v1971 = vpop.permute.xlu0 %1970
        %1972 = vrot.lane.b32.xlu0 %v1912, 3
        %v1973 = vpop.permute.xlu0 %1972
        %1974 = vrot.lane.b32.xlu0 %v1921, 3
        %v1975 = vpop.permute.xlu0 %1974
        %1976 = vrot.lane.b32.xlu0 %v1920, 3
        %v1977 = vpop.permute.xlu0 %1976
        %v1979 = vunpack.c.l.b16 %v1513
        %v1980 = vpack.c.b16 %v1979, %v1979
        %vm1981 = vcmask 1042432
        %v1982 = vrot.slane %v1652, 5
        %v1983 = vrot.slane %v1653, 5
        %v1984 = vsel %vm1981, %v1982, %v1983
        %v1985 = vrot.slane %v1654, 5
        %v1986 = vsel %vm1981, %v1983, %v1985
        %v1987 = vrot.slane %v1655, 5
        %v1988 = vsel %vm1981, %v1985, %v1987
        %v1989 = vrot.slane %v1656, 5
        %v1990 = vsel %vm1981, %v1987, %v1989
        %v1991 = vrot.slane %v1657, 5
        %v1992 = vsel %vm1981, %v1989, %v1991
        %v1993 = vrot.slane %v1658, 5
        %v1994 = vsel %vm1981, %v1991, %v1993
        %v1995 = vrot.slane %v1659, 5
        %v1996 = vsel %vm1981, %v1993, %v1995
        %v1997 = vrot.slane %v1660, 5
        %v1998 = vsel %vm1981, %v1995, %v1997
        %v1999 = vrot.slane %v1661, 5
        %v2000 = vsel %vm1981, %v1997, %v1999
        %v2001 = vrot.slane %v1662, 5
        %v2002 = vsel %vm1981, %v1999, %v2001
        %v2003 = vrot.slane %v1663, 5
        %v2004 = vsel %vm1981, %v2001, %v2003
        %v2005 = vrot.slane %v1664, 5
        %v2006 = vsel %vm1981, %v2003, %v2005
        %v2007 = vrot.slane %v1665, 5
        %v2008 = vsel %vm1981, %v2005, %v2007
        %v2009 = vrot.slane %v1666, 5
        %v2010 = vsel %vm1981, %v2007, %v2009
        %v2011 = vrot.slane %v1667, 5
        %v2012 = vsel %vm1981, %v2009, %v2011
        %v2013 = vrot.slane %v1668, 5
        %v2014 = vsel %vm1981, %v2011, %v2013
        %v2015 = vrot.slane %v1669, 5
        %v2016 = vsel %vm1981, %v2013, %v2015
        %v2017 = vrot.slane %v1670, 5
        %v2018 = vsel %vm1981, %v2015, %v2017
        %v2019 = vrot.slane %v1671, 5
        %v2020 = vsel %vm1981, %v2017, %v2019
        %v2021 = vrot.slane %v1672, 5
        %v2022 = vsel %vm1981, %v2019, %v2021
        %v2023 = vrot.slane %v1673, 5
        %v2024 = vsel %vm1981, %v2021, %v2023
        %v2025 = vrot.slane %v1674, 5
        %v2026 = vsel %vm1981, %v2023, %v2025
        %v2027 = vrot.slane %v1675, 5
        %v2028 = vsel %vm1981, %v2025, %v2027
        %v2029 = vrot.slane %v1676, 5
        %v2030 = vsel %vm1981, %v2027, %v2029
        %v2031 = vrot.slane %v1677, 5
        %v2032 = vsel %vm1981, %v2029, %v2031
        %v2033 = vrot.slane %v1678, 5
        %v2034 = vsel %vm1981, %v2031, %v2033
        %v2035 = vrot.slane %v1980, 5
        %v2036 = vsel %vm1981, %v2033, %v2035
        %2037 = vrot.lane.b32.xlu0 %v1982, 6
        %v2038 = vpop.permute.xlu0 %2037
        %2039 = vrot.lane.b32.xlu0 %v1984, 6
        %v2040 = vpop.permute.xlu0 %2039
        %2041 = vrot.lane.b32.xlu0 %v1986, 6
        %v2042 = vpop.permute.xlu0 %2041
        %2043 = vrot.lane.b32.xlu0 %v1988, 6
        %v2044 = vpop.permute.xlu0 %2043
        %2045 = vrot.lane.b32.xlu0 %v1990, 6
        %v2046 = vpop.permute.xlu0 %2045
        %2047 = vrot.lane.b32.xlu0 %v1992, 6
        %v2048 = vpop.permute.xlu0 %2047
        %2049 = vrot.lane.b32.xlu0 %v1994, 6
        %v2050 = vpop.permute.xlu0 %2049
        %2051 = vrot.lane.b32.xlu0 %v1996, 6
        %v2052 = vpop.permute.xlu0 %2051
        %2053 = vrot.lane.b32.xlu0 %v1998, 6
        %v2054 = vpop.permute.xlu0 %2053
        %2055 = vrot.lane.b32.xlu0 %v2000, 6
        %v2056 = vpop.permute.xlu0 %2055
        %2057 = vrot.lane.b32.xlu0 %v2002, 6
        %v2058 = vpop.permute.xlu0 %2057
        %2059 = vrot.lane.b32.xlu0 %v2004, 6
        %v2060 = vpop.permute.xlu0 %2059
        %2061 = vrot.lane.b32.xlu0 %v2006, 6
        %v2062 = vpop.permute.xlu0 %2061
        %2063 = vrot.lane.b32.xlu0 %v2008, 6
        %v2064 = vpop.permute.xlu0 %2063
        %2065 = vrot.lane.b32.xlu0 %v2010, 6
        %v2066 = vpop.permute.xlu0 %2065
        %2067 = vrot.lane.b32.xlu0 %v2012, 6
        %v2068 = vpop.permute.xlu0 %2067
        %2069 = vrot.lane.b32.xlu0 %v2014, 6
        %v2070 = vpop.permute.xlu0 %2069
        %2071 = vrot.lane.b32.xlu0 %v2016, 6
        %v2072 = vpop.permute.xlu0 %2071
        %2073 = vrot.lane.b32.xlu0 %v2018, 6
        %v2074 = vpop.permute.xlu0 %2073
        %2075 = vrot.lane.b32.xlu0 %v2020, 6
        %v2076 = vpop.permute.xlu0 %2075
        %2077 = vrot.lane.b32.xlu0 %v2022, 6
        %v2078 = vpop.permute.xlu0 %2077
        %2079 = vrot.lane.b32.xlu0 %v2024, 6
        %v2080 = vpop.permute.xlu0 %2079
        %2081 = vrot.lane.b32.xlu0 %v2026, 6
        %v2082 = vpop.permute.xlu0 %2081
        %2083 = vrot.lane.b32.xlu0 %v2028, 6
        %v2084 = vpop.permute.xlu0 %2083
        %2085 = vrot.lane.b32.xlu0 %v2030, 6
        %v2086 = vpop.permute.xlu0 %2085
        %2087 = vrot.lane.b32.xlu0 %v2032, 6
        %v2088 = vpop.permute.xlu0 %2087
        %2089 = vrot.lane.b32.xlu0 %v2034, 6
        %v2090 = vpop.permute.xlu0 %2089
        %2091 = vrot.lane.b32.xlu0 %v2036, 6
        %v2092 = vpop.permute.xlu0 %2091
        %vm2093 = vcmask 23552
        %v2096 = vsel %vm2093, %v1624, %v1923
        %v2099 = vsel %vm2093, %v1625, %v1925
        %v2102 = vsel %vm2093, %v1626, %v1927
        %v2105 = vsel %vm2093, %v1627, %v1929
        %v2108 = vsel %vm2093, %v1628, %v1931
        %v2111 = vsel %vm2093, %v1629, %v1933
        %v2114 = vsel %vm2093, %v1630, %v1935
        %v2117 = vsel %vm2093, %v1631, %v1937
        %v2120 = vsel %vm2093, %v1632, %v1939
        %v2123 = vsel %vm2093, %v1633, %v1941
        %v2126 = vsel %vm2093, %v1634, %v1943
        %v2129 = vsel %vm2093, %v1635, %v1945
        %v2132 = vsel %vm2093, %v1636, %v1947
        %v2135 = vsel %vm2093, %v1637, %v1949
        %v2138 = vsel %vm2093, %v1638, %v1951
        %v2141 = vsel %vm2093, %v1639, %v1953
        %v2144 = vsel %vm2093, %v1640, %v1955
        %v2147 = vsel %vm2093, %v1641, %v1957
        %v2150 = vsel %vm2093, %v1642, %v1959
        %v2153 = vsel %vm2093, %v1643, %v1961
        %v2156 = vsel %vm2093, %v1644, %v1963
        %v2159 = vsel %vm2093, %v1645, %v1965
        %v2162 = vsel %vm2093, %v1646, %v1967
        %v2165 = vsel %vm2093, %v1647, %v1969
        %v2168 = vsel %vm2093, %v1648, %v1971
        %v2171 = vsel %vm2093, %v1649, %v1973
        %v2174 = vsel %vm2093, %v1650, %v1975
        %v2177 = vsel %vm2093, %v1651, %v1977
        %vm2178 = vcmask 48128
        %v2180 = vsel %vm2178, %v2096, %v2038
        %v2182 = vsel %vm2178, %v2099, %v2040
        %v2184 = vsel %vm2178, %v2102, %v2042
        %v2186 = vsel %vm2178, %v2105, %v2044
        %v2188 = vsel %vm2178, %v2108, %v2046
        %v2190 = vsel %vm2178, %v2111, %v2048
        %v2192 = vsel %vm2178, %v2114, %v2050
        %v2194 = vsel %vm2178, %v2117, %v2052
        %v2196 = vsel %vm2178, %v2120, %v2054
        %v2198 = vsel %vm2178, %v2123, %v2056
        %v2200 = vsel %vm2178, %v2126, %v2058
        %v2202 = vsel %vm2178, %v2129, %v2060
        %v2204 = vsel %vm2178, %v2132, %v2062
        %v2206 = vsel %vm2178, %v2135, %v2064
        %v2208 = vsel %vm2178, %v2138, %v2066
        %v2210 = vsel %vm2178, %v2141, %v2068
        %v2212 = vsel %vm2178, %v2144, %v2070
        %v2214 = vsel %vm2178, %v2147, %v2072
        %v2216 = vsel %vm2178, %v2150, %v2074
        %v2218 = vsel %vm2178, %v2153, %v2076
        %v2220 = vsel %vm2178, %v2156, %v2078
        %v2222 = vsel %vm2178, %v2159, %v2080
        %v2224 = vsel %vm2178, %v2162, %v2082
        %v2226 = vsel %vm2178, %v2165, %v2084
        %v2228 = vsel %vm2178, %v2168, %v2086
        %v2230 = vsel %vm2178, %v2171, %v2088
        %v2232 = vsel %vm2178, %v2174, %v2090
        %v2234 = vsel %vm2178, %v2177, %v2092
        %v2235 = vld [vmem:[%s1] sm:$0xf]
        %v2236 = vld [vmem:[%s1 + $0x4] sm:$0x1]
        %s2237 = scalar_lea.vmem %s1, 8
        %v2238 = vld [vmem:[%s2237] sm:$0xf]
        %v2239 = vld [vmem:[%s2237 + $0x4] sm:$0x1]
        %vm2240 = vsmask.f32 256
        %v2241 = vshrl.u32 %v2182, 16
        %v2243 = vrot.slane %v2241, 7
        %v2244 = vshrl.u32 %v2184, 16
        %v2246 = vrot.slane %v2244, 7
        %v2247 = vshll.u32 %v2184, 16
        %v2249 = vor.u32 %v2246, %v2247
        %v2250 = vsel %vm2240, %v2243, %v2249
        %v2251 = vshrl.u32 %v2186, 16
        %v2253 = vrot.slane %v2251, 7
        %v2254 = vshll.u32 %v2186, 16
        %v2256 = vor.u32 %v2253, %v2254
        %v2257 = vsel %vm2240, %v2246, %v2256
        %v2258 = vshrl.u32 %v2188, 16
        %v2260 = vrot.slane %v2258, 7
        %v2261 = vshll.u32 %v2188, 16
        %v2263 = vor.u32 %v2260, %v2261
        %v2264 = vsel %vm2240, %v2253, %v2263
        %v2265 = vshrl.u32 %v2190, 16
        %v2267 = vrot.slane %v2265, 7
        %v2268 = vshll.u32 %v2190, 16
        %v2270 = vor.u32 %v2267, %v2268
        %v2271 = vsel %vm2240, %v2260, %v2270
        %v2272 = vshrl.u32 %v2192, 16
        %v2274 = vrot.slane %v2272, 7
        %v2275 = vshll.u32 %v2192, 16
        %v2277 = vor.u32 %v2274, %v2275
        %v2278 = vsel %vm2240, %v2267, %v2277
        %v2279 = vshrl.u32 %v2194, 16
        %v2281 = vrot.slane %v2279, 7
        %v2282 = vshll.u32 %v2194, 16
        %v2284 = vor.u32 %v2281, %v2282
        %v2285 = vsel %vm2240, %v2274, %v2284
        %v2286 = vshrl.u32 %v2196, 16
        %v2288 = vrot.slane %v2286, 7
        %v2289 = vshll.u32 %v2196, 16
        %v2291 = vor.u32 %v2288, %v2289
        %v2292 = vsel %vm2240, %v2281, %v2291
        %v2293 = vshrl.u32 %v2198, 16
        %v2295 = vrot.slane %v2293, 7
        %v2296 = vshll.u32 %v2198, 16
        %v2298 = vor.u32 %v2295, %v2296
        %v2299 = vsel %vm2240, %v2288, %v2298
        %v2300 = vshrl.u32 %v2200, 16
        %v2302 = vrot.slane %v2300, 7
        %v2303 = vshll.u32 %v2200, 16
        %v2305 = vor.u32 %v2302, %v2303
        %v2306 = vsel %vm2240, %v2295, %v2305
        %v2307 = vshrl.u32 %v2202, 16
        %v2309 = vrot.slane %v2307, 7
        %v2310 = vshll.u32 %v2202, 16
        %v2312 = vor.u32 %v2309, %v2310
        %v2313 = vsel %vm2240, %v2302, %v2312
        %v2314 = vshrl.u32 %v2204, 16
        %v2316 = vrot.slane %v2314, 7
        %v2317 = vshll.u32 %v2204, 16
        %v2319 = vor.u32 %v2316, %v2317
        %v2320 = vsel %vm2240, %v2309, %v2319
        %v2321 = vshrl.u32 %v2206, 16
        %v2323 = vrot.slane %v2321, 7
        %v2324 = vshll.u32 %v2206, 16
        %v2326 = vor.u32 %v2323, %v2324
        %v2327 = vsel %vm2240, %v2316, %v2326
        %v2328 = vshrl.u32 %v2208, 16
        %v2330 = vrot.slane %v2328, 7
        %v2331 = vshll.u32 %v2208, 16
        %v2333 = vor.u32 %v2330, %v2331
        %v2334 = vsel %vm2240, %v2323, %v2333
        %v2335 = vshrl.u32 %v2210, 16
        %v2337 = vrot.slane %v2335, 7
        %v2338 = vshll.u32 %v2210, 16
        %v2340 = vor.u32 %v2337, %v2338
        %v2341 = vsel %vm2240, %v2330, %v2340
        %v2342 = vshrl.u32 %v2212, 16
        %v2344 = vrot.slane %v2342, 7
        %v2345 = vshll.u32 %v2212, 16
        %v2347 = vor.u32 %v2344, %v2345
        %v2348 = vsel %vm2240, %v2337, %v2347
        %v2349 = vshrl.u32 %v2214, 16
        %v2351 = vrot.slane %v2349, 7
        %v2352 = vshll.u32 %v2214, 16
        %v2354 = vor.u32 %v2351, %v2352
        %v2355 = vsel %vm2240, %v2344, %v2354
        %v2356 = vshrl.u32 %v2216, 16
        %v2358 = vrot.slane %v2356, 7
        %v2359 = vshll.u32 %v2216, 16
        %v2361 = vor.u32 %v2358, %v2359
        %v2362 = vsel %vm2240, %v2351, %v2361
        %v2363 = vshrl.u32 %v2218, 16
        %v2365 = vrot.slane %v2363, 7
        %v2366 = vshll.u32 %v2218, 16
        %v2368 = vor.u32 %v2365, %v2366
        %v2369 = vsel %vm2240, %v2358, %v2368
        %v2370 = vshrl.u32 %v2220, 16
        %v2372 = vrot.slane %v2370, 7
        %v2373 = vshll.u32 %v2220, 16
        %v2375 = vor.u32 %v2372, %v2373
        %v2376 = vsel %vm2240, %v2365, %v2375
        %v2377 = vshrl.u32 %v2222, 16
        %v2379 = vrot.slane %v2377, 7
        %v2380 = vshll.u32 %v2222, 16
        %v2382 = vor.u32 %v2379, %v2380
        %v2383 = vsel %vm2240, %v2372, %v2382
        %v2384 = vshrl.u32 %v2224, 16
        %v2386 = vrot.slane %v2384, 7
        %v2387 = vshll.u32 %v2224, 16
        %v2389 = vor.u32 %v2386, %v2387
        %v2390 = vsel %vm2240, %v2379, %v2389
        %v2391 = vshrl.u32 %v2226, 16
        %v2393 = vrot.slane %v2391, 7
        %v2394 = vshll.u32 %v2226, 16
        %v2396 = vor.u32 %v2393, %v2394
        %v2397 = vsel %vm2240, %v2386, %v2396
        %v2398 = vshrl.u32 %v2228, 16
        %v2400 = vrot.slane %v2398, 7
        %v2401 = vshll.u32 %v2228, 16
        %v2403 = vor.u32 %v2400, %v2401
        %v2404 = vsel %vm2240, %v2393, %v2403
        %v2405 = vshrl.u32 %v2230, 16
        %v2407 = vrot.slane %v2405, 7
        %v2408 = vshll.u32 %v2230, 16
        %v2410 = vor.u32 %v2407, %v2408
        %v2411 = vsel %vm2240, %v2400, %v2410
        %v2414 = vunpack.c.l.b16 %v2238
        %v2415 = vunpack.c.l.b16 %v2239
        %v2416 = vpack.c.b16 %v2415, %v2414
        %vm2417 = vcmask 72704
        %v2419 = vsel %vm2417, %v2250, 0
        %v2422 = vsel %vm2417, %v2257, 0
        %v2425 = vsel %vm2417, %v2264, 0
        %v2428 = vsel %vm2417, %v2271, 0
        %v2431 = vsel %vm2417, %v2278, 0
        %v2434 = vsel %vm2417, %v2285, 0
        %v2437 = vsel %vm2417, %v2292, 0
        %v2440 = vsel %vm2417, %v2299, 0
        %v2443 = vsel %vm2417, %v2306, 0
        %v2446 = vsel %vm2417, %v2313, 0
        %v2449 = vsel %vm2417, %v2320, 0
        %v2452 = vsel %vm2417, %v2327, 0
        %v2455 = vsel %vm2417, %v2334, 0
        %v2458 = vsel %vm2417, %v2341, 0
        %v2461 = vsel %vm2417, %v2348, 0
        %v2464 = vsel %vm2417, %v2355, 0
        %v2467 = vsel %vm2417, %v2362, 0
        %v2470 = vsel %vm2417, %v2369, 0
        %v2473 = vsel %vm2417, %v2376, 0
        %v2476 = vsel %vm2417, %v2383, 0
        %v2479 = vsel %vm2417, %v2390, 0
        %v2482 = vsel %vm2417, %v2397, 0
        %v2485 = vsel %vm2417, %v2404, 0
        %v2488 = vsel %vm2417, %v2411, 0
        %vm2490 = vcmask 1043456
        %vm2491 = vcmask 1044480
        %v2492 = vsel %vm2490, 4294967295, 65535
        %v2493 = vsel %vm2491, %v2492, 0
        %v2495 = vand.u32 %v2416, %v2493
        %2497 = vmatprep.subr.bf16.mxu0 0
        %2498 = vmatpush1.bf16.msra.mxu0 0
        %2499 = vmatprep.subr.bf16.mxu0 0
        %2500 = vmatpush1.bf16.msra.mxu0 0
        %2501 = vmatprep.subr.bf16.mxu0 0
        %2502 = vmatpush1.bf16.msra.mxu0 0
        %2503 = vmatprep.subr.bf16.mxu0 0
        %2504 = vmatpush1.bf16.msra.mxu0 0
        %2505 = vmatprep.subr.bf16.mxu0 0
        %2506 = vmatpush1.bf16.msra.mxu0 0
        %2507 = vmatprep.subr.bf16.mxu0 0
        %2508 = vmatpush1.bf16.msra.mxu0 0
        %2509 = vmatprep.subr.bf16.mxu0 0
        %2510 = vmatpush1.bf16.msra.mxu0 0
        %2511 = vmatprep.subr.bf16.mxu0 0
        %2512 = vmatpush1.bf16.msra.mxu0 %v2495
        %2513 = vmatprep.subr.bf16.mxu0 0
        %2514 = vmatpush2.bf16.msra.mxu0 0
        %2515 = vmatprep.subr.bf16.mxu0 0
        %2516 = vmatpush2.bf16.msra.mxu0 0
        %2517 = vmatprep.subr.bf16.mxu0 0
        %2518 = vmatpush2.bf16.msra.mxu0 0
        %2519 = vmatprep.subr.bf16.mxu0 0
        %2520 = vmatpush2.bf16.msra.mxu0 0
        %2521 = vmatprep.subr.bf16.mxu0 0
        %2522 = vmatpush2.bf16.msra.mxu0 0
        %2523 = vmatprep.subr.bf16.mxu0 0
        %2524 = vmatpush2.bf16.msra.mxu0 0
        %2525 = vmatprep.subr.bf16.mxu0 0
        %2526 = vmatpush2.bf16.msra.mxu0 0
        %2527 = vmatprep.subr.bf16.mxu0 0
        %2528 = vmatpush2.bf16.msra.mxu0 0
        %2529 = vmatprep.mubr.bf16.mxu0 0
        %2530 = vmatmul.mubr.bf16.gmra.mxu0 %v2419
        %v2531 = vpop.f32.mrf.mxu0
        %v2532 = vadd.f32 0.0, %v2531
        %v2533 = vpop.f32.mrf.mxu0
        %v2534 = vpop.f32.mrf.mxu0
        %v2535 = vadd.f32 0.0, %v2534
        %v2536 = vpop.f32.mrf.mxu0
        %2537 = vmatprep.mubr.bf16.mxu0 0
        %2538 = vmatmul.mubr.bf16.gmra.mxu0 %v2422
        %v2539 = vpop.f32.mrf.mxu0
        %v2540 = vadd.f32 0.0, %v2539
        %v2541 = vpop.f32.mrf.mxu0
        %v2542 = vpop.f32.mrf.mxu0
        %v2543 = vadd.f32 0.0, %v2542
        %v2544 = vpop.f32.mrf.mxu0
        %2545 = vmatprep.mubr.bf16.mxu0 0
        %2546 = vmatmul.mubr.bf16.gmra.mxu0 %v2425
        %v2547 = vpop.f32.mrf.mxu0
        %v2548 = vadd.f32 0.0, %v2547
        %v2549 = vpop.f32.mrf.mxu0
        %v2550 = vpop.f32.mrf.mxu0
        %v2551 = vadd.f32 0.0, %v2550
        %v2552 = vpop.f32.mrf.mxu0
        %2553 = vmatprep.mubr.bf16.mxu0 0
        %2554 = vmatmul.mubr.bf16.gmra.mxu0 %v2428
        %v2555 = vpop.f32.mrf.mxu0
        %v2556 = vadd.f32 0.0, %v2555
        %v2557 = vpop.f32.mrf.mxu0
        %v2558 = vpop.f32.mrf.mxu0
        %v2559 = vadd.f32 0.0, %v2558
        %v2560 = vpop.f32.mrf.mxu0
        %2561 = vmatprep.mubr.bf16.mxu0 0
        %2562 = vmatmul.mubr.bf16.gmra.mxu0 %v2431
        %v2563 = vpop.f32.mrf.mxu0
        %v2564 = vadd.f32 0.0, %v2563
        %v2565 = vpop.f32.mrf.mxu0
        %v2566 = vpop.f32.mrf.mxu0
        %v2567 = vadd.f32 0.0, %v2566
        %v2568 = vpop.f32.mrf.mxu0
        %2569 = vmatprep.mubr.bf16.mxu0 0
        %2570 = vmatmul.mubr.bf16.gmra.mxu0 %v2434
        %v2571 = vpop.f32.mrf.mxu0
        %v2572 = vadd.f32 0.0, %v2571
        %v2573 = vpop.f32.mrf.mxu0
        %v2574 = vpop.f32.mrf.mxu0
        %v2575 = vadd.f32 0.0, %v2574
        %v2576 = vpop.f32.mrf.mxu0
        %2577 = vmatprep.mubr.bf16.mxu0 0
        %2578 = vmatmul.mubr.bf16.gmra.mxu0 %v2437
        %v2579 = vpop.f32.mrf.mxu0
        %v2580 = vadd.f32 0.0, %v2579
        %v2581 = vpop.f32.mrf.mxu0
        %v2582 = vpop.f32.mrf.mxu0
        %v2583 = vadd.f32 0.0, %v2582
        %v2584 = vpop.f32.mrf.mxu0
        %2585 = vmatprep.mubr.bf16.mxu0 0
        %2586 = vmatmul.mubr.bf16.gmra.mxu0 %v2440
        %v2587 = vpop.f32.mrf.mxu0
        %v2588 = vadd.f32 0.0, %v2587
        %v2589 = vpop.f32.mrf.mxu0
        %v2590 = vpop.f32.mrf.mxu0
        %v2591 = vadd.f32 0.0, %v2590
        %v2592 = vpop.f32.mrf.mxu0
        %2593 = vmatprep.mubr.bf16.mxu0 0
        %2594 = vmatmul.mubr.bf16.gmra.mxu0 %v2443
        %v2595 = vpop.f32.mrf.mxu0
        %v2596 = vadd.f32 0.0, %v2595
        %v2597 = vpop.f32.mrf.mxu0
        %v2598 = vpop.f32.mrf.mxu0
        %v2599 = vadd.f32 0.0, %v2598
        %v2600 = vpop.f32.mrf.mxu0
        %2601 = vmatprep.mubr.bf16.mxu0 0
        %2602 = vmatmul.mubr.bf16.gmra.mxu0 %v2446
        %v2603 = vpop.f32.mrf.mxu0
        %v2604 = vadd.f32 0.0, %v2603
        %v2605 = vpop.f32.mrf.mxu0
        %v2606 = vpop.f32.mrf.mxu0
        %v2607 = vadd.f32 0.0, %v2606
        %v2608 = vpop.f32.mrf.mxu0
        %2609 = vmatprep.mubr.bf16.mxu0 0
        %2610 = vmatmul.mubr.bf16.gmra.mxu0 %v2449
        %v2611 = vpop.f32.mrf.mxu0
        %v2612 = vadd.f32 0.0, %v2611
        %v2613 = vpop.f32.mrf.mxu0
        %v2614 = vpop.f32.mrf.mxu0
        %v2615 = vadd.f32 0.0, %v2614
        %v2616 = vpop.f32.mrf.mxu0
        %2617 = vmatprep.mubr.bf16.mxu0 0
        %2618 = vmatmul.mubr.bf16.gmra.mxu0 %v2452
        %v2619 = vpop.f32.mrf.mxu0
        %v2620 = vadd.f32 0.0, %v2619
        %v2621 = vpop.f32.mrf.mxu0
        %v2622 = vpop.f32.mrf.mxu0
        %v2623 = vadd.f32 0.0, %v2622
        %v2624 = vpop.f32.mrf.mxu0
        %2625 = vmatprep.mubr.bf16.mxu0 0
        %2626 = vmatmul.mubr.bf16.gmra.mxu0 %v2455
        %v2627 = vpop.f32.mrf.mxu0
        %v2628 = vadd.f32 0.0, %v2627
        %v2629 = vpop.f32.mrf.mxu0
        %v2630 = vpop.f32.mrf.mxu0
        %v2631 = vadd.f32 0.0, %v2630
        %v2632 = vpop.f32.mrf.mxu0
        %2633 = vmatprep.mubr.bf16.mxu0 0
        %2634 = vmatmul.mubr.bf16.gmra.mxu0 %v2458
        %v2635 = vpop.f32.mrf.mxu0
        %v2636 = vadd.f32 0.0, %v2635
        %v2637 = vpop.f32.mrf.mxu0
        %v2638 = vpop.f32.mrf.mxu0
        %v2639 = vadd.f32 0.0, %v2638
        %v2640 = vpop.f32.mrf.mxu0
        %2641 = vmatprep.mubr.bf16.mxu0 0
        %2642 = vmatmul.mubr.bf16.gmra.mxu0 %v2461
        %v2643 = vpop.f32.mrf.mxu0
        %v2644 = vadd.f32 0.0, %v2643
        %v2645 = vpop.f32.mrf.mxu0
        %v2646 = vpop.f32.mrf.mxu0
        %v2647 = vadd.f32 0.0, %v2646
        %v2648 = vpop.f32.mrf.mxu0
        %2649 = vmatprep.mubr.bf16.mxu0 0
        %2650 = vmatmul.mubr.bf16.gmra.mxu0 %v2464
        %v2651 = vpop.f32.mrf.mxu0
        %v2652 = vadd.f32 0.0, %v2651
        %v2653 = vpop.f32.mrf.mxu0
        %v2654 = vpop.f32.mrf.mxu0
        %v2655 = vadd.f32 0.0, %v2654
        %v2656 = vpop.f32.mrf.mxu0
        %2657 = vmatprep.mubr.bf16.mxu0 0
        %2658 = vmatmul.mubr.bf16.gmra.mxu0 %v2467
        %v2659 = vpop.f32.mrf.mxu0
        %v2660 = vadd.f32 0.0, %v2659
        %v2661 = vpop.f32.mrf.mxu0
        %v2662 = vpop.f32.mrf.mxu0
        %v2663 = vadd.f32 0.0, %v2662
        %v2664 = vpop.f32.mrf.mxu0
        %2665 = vmatprep.mubr.bf16.mxu0 0
        %2666 = vmatmul.mubr.bf16.gmra.mxu0 %v2470
        %v2667 = vpop.f32.mrf.mxu0
        %v2668 = vadd.f32 0.0, %v2667
        %v2669 = vpop.f32.mrf.mxu0
        %v2670 = vpop.f32.mrf.mxu0
        %v2671 = vadd.f32 0.0, %v2670
        %v2672 = vpop.f32.mrf.mxu0
        %2673 = vmatprep.mubr.bf16.mxu0 0
        %2674 = vmatmul.mubr.bf16.gmra.mxu0 %v2473
        %v2675 = vpop.f32.mrf.mxu0
        %v2676 = vadd.f32 0.0, %v2675
        %v2677 = vpop.f32.mrf.mxu0
        %v2678 = vpop.f32.mrf.mxu0
        %v2679 = vadd.f32 0.0, %v2678
        %v2680 = vpop.f32.mrf.mxu0
        %2681 = vmatprep.mubr.bf16.mxu0 0
        %2682 = vmatmul.mubr.bf16.gmra.mxu0 %v2476
        %v2683 = vpop.f32.mrf.mxu0
        %v2684 = vadd.f32 0.0, %v2683
        %v2685 = vpop.f32.mrf.mxu0
        %v2686 = vpop.f32.mrf.mxu0
        %v2687 = vadd.f32 0.0, %v2686
        %v2688 = vpop.f32.mrf.mxu0
        %2689 = vmatprep.mubr.bf16.mxu0 0
        %2690 = vmatmul.mubr.bf16.gmra.mxu0 %v2479
        %v2691 = vpop.f32.mrf.mxu0
        %v2692 = vadd.f32 0.0, %v2691
        %v2693 = vpop.f32.mrf.mxu0
        %v2694 = vpop.f32.mrf.mxu0
        %v2695 = vadd.f32 0.0, %v2694
        %v2696 = vpop.f32.mrf.mxu0
        %2697 = vmatprep.mubr.bf16.mxu0 0
        %2698 = vmatmul.mubr.bf16.gmra.mxu0 %v2482
        %v2699 = vpop.f32.mrf.mxu0
        %v2700 = vadd.f32 0.0, %v2699
        %v2701 = vpop.f32.mrf.mxu0
        %v2702 = vpop.f32.mrf.mxu0
        %v2703 = vadd.f32 0.0, %v2702
        %v2704 = vpop.f32.mrf.mxu0
        %2705 = vmatprep.mubr.bf16.mxu0 0
        %2706 = vmatmul.mubr.bf16.gmra.mxu0 %v2485
        %v2707 = vpop.f32.mrf.mxu0
        %v2708 = vadd.f32 0.0, %v2707
        %v2709 = vpop.f32.mrf.mxu0
        %v2710 = vpop.f32.mrf.mxu0
        %v2711 = vadd.f32 0.0, %v2710
        %v2712 = vpop.f32.mrf.mxu0
        %2713 = vmatprep.mubr.bf16.mxu0 0
        %2714 = vmatmul.mubr.bf16.gmra.mxu0 %v2488
        %v2715 = vpop.f32.mrf.mxu0
        %v2716 = vadd.f32 0.0, %v2715
        %v2717 = vpop.f32.mrf.mxu0
        %v2718 = vpop.f32.mrf.mxu0
        %v2719 = vadd.f32 0.0, %v2718
        %v2720 = vpop.f32.mrf.mxu0
        %2721 = vdwg.mxu0
        %vm2722 = vsmask.f32 4352
        %v2723 = vshrl.u32 %v2180, 16
        %v2725 = vrot.slane %v2723, 3
        %v2726 = vshll.u32 %v2180, 16
        %v2728 = vrot.slane %v2726, 4
        %v2729 = vor.u32 %v2725, %v2728
        %v2730 = vrot.slane %v2241, 3
        %v2731 = vshll.u32 %v2182, 16
        %v2733 = vrot.slane %v2731, 4
        %v2734 = vor.u32 %v2730, %v2733
        %v2735 = vsel %vm2722, %v2729, %v2734
        %v2736 = vrot.slane %v2244, 3
        %v2737 = vrot.slane %v2247, 4
        %v2738 = vor.u32 %v2736, %v2737
        %v2739 = vsel %vm2722, %v2734, %v2738
        %v2740 = vrot.slane %v2251, 3
        %v2741 = vrot.slane %v2254, 4
        %v2742 = vor.u32 %v2740, %v2741
        %v2743 = vsel %vm2722, %v2738, %v2742
        %v2744 = vrot.slane %v2258, 3
        %v2745 = vrot.slane %v2261, 4
        %v2746 = vor.u32 %v2744, %v2745
        %v2747 = vsel %vm2722, %v2742, %v2746
        %v2748 = vrot.slane %v2265, 3
        %v2749 = vrot.slane %v2268, 4
        %v2750 = vor.u32 %v2748, %v2749
        %v2751 = vsel %vm2722, %v2746, %v2750
        %v2752 = vrot.slane %v2272, 3
        %v2753 = vrot.slane %v2275, 4
        %v2754 = vor.u32 %v2752, %v2753
        %v2755 = vsel %vm2722, %v2750, %v2754
        %v2756 = vrot.slane %v2279, 3
        %v2757 = vrot.slane %v2282, 4
        %v2758 = vor.u32 %v2756, %v2757
        %v2759 = vsel %vm2722, %v2754, %v2758
        %v2760 = vrot.slane %v2286, 3
        %v2761 = vrot.slane %v2289, 4
        %v2762 = vor.u32 %v2760, %v2761
        %v2763 = vsel %vm2722, %v2758, %v2762
        %v2764 = vrot.slane %v2293, 3
        %v2765 = vrot.slane %v2296, 4
        %v2766 = vor.u32 %v2764, %v2765
        %v2767 = vsel %vm2722, %v2762, %v2766
        %v2768 = vrot.slane %v2300, 3
        %v2769 = vrot.slane %v2303, 4
        %v2770 = vor.u32 %v2768, %v2769
        %v2771 = vsel %vm2722, %v2766, %v2770
        %v2772 = vrot.slane %v2307, 3
        %v2773 = vrot.slane %v2310, 4
        %v2774 = vor.u32 %v2772, %v2773
        %v2775 = vsel %vm2722, %v2770, %v2774
        %v2776 = vrot.slane %v2314, 3
        %v2777 = vrot.slane %v2317, 4
        %v2778 = vor.u32 %v2776, %v2777
        %v2779 = vsel %vm2722, %v2774, %v2778
        %v2780 = vrot.slane %v2321, 3
        %v2781 = vrot.slane %v2324, 4
        %v2782 = vor.u32 %v2780, %v2781
        %v2783 = vsel %vm2722, %v2778, %v2782
        %v2784 = vrot.slane %v2328, 3
        %v2785 = vrot.slane %v2331, 4
        %v2786 = vor.u32 %v2784, %v2785
        %v2787 = vsel %vm2722, %v2782, %v2786
        %v2788 = vrot.slane %v2335, 3
        %v2789 = vrot.slane %v2338, 4
        %v2790 = vor.u32 %v2788, %v2789
        %v2791 = vsel %vm2722, %v2786, %v2790
        %v2792 = vrot.slane %v2342, 3
        %v2793 = vrot.slane %v2345, 4
        %v2794 = vor.u32 %v2792, %v2793
        %v2795 = vsel %vm2722, %v2790, %v2794
        %v2796 = vrot.slane %v2349, 3
        %v2797 = vrot.slane %v2352, 4
        %v2798 = vor.u32 %v2796, %v2797
        %v2799 = vsel %vm2722, %v2794, %v2798
        %v2800 = vrot.slane %v2356, 3
        %v2801 = vrot.slane %v2359, 4
        %v2802 = vor.u32 %v2800, %v2801
        %v2803 = vsel %vm2722, %v2798, %v2802
        %v2804 = vrot.slane %v2363, 3
        %v2805 = vrot.slane %v2366, 4
        %v2806 = vor.u32 %v2804, %v2805
        %v2807 = vsel %vm2722, %v2802, %v2806
        %v2808 = vrot.slane %v2370, 3
        %v2809 = vrot.slane %v2373, 4
        %v2810 = vor.u32 %v2808, %v2809
        %v2811 = vsel %vm2722, %v2806, %v2810
        %v2812 = vrot.slane %v2377, 3
        %v2813 = vrot.slane %v2380, 4
        %v2814 = vor.u32 %v2812, %v2813
        %v2815 = vsel %vm2722, %v2810, %v2814
        %v2816 = vrot.slane %v2384, 3
        %v2817 = vrot.slane %v2387, 4
        %v2818 = vor.u32 %v2816, %v2817
        %v2819 = vsel %vm2722, %v2814, %v2818
        %v2820 = vrot.slane %v2391, 3
        %v2821 = vrot.slane %v2394, 4
        %v2822 = vor.u32 %v2820, %v2821
        %v2823 = vsel %vm2722, %v2818, %v2822
        %v2824 = vrot.slane %v2398, 3
        %v2825 = vrot.slane %v2401, 4
        %v2826 = vor.u32 %v2824, %v2825
        %v2827 = vsel %vm2722, %v2822, %v2826
        %v2830 = vunpack.c.l.b16 %v2235
        %v2831 = vunpack.c.l.b16 %v2236
        %v2832 = vpack.c.b16 %v2831, %v2830
        %v2834 = vsel %vm2417, %v2735, 0
        %v2837 = vsel %vm2417, %v2739, 0
        %v2840 = vsel %vm2417, %v2743, 0
        %v2843 = vsel %vm2417, %v2747, 0
        %v2846 = vsel %vm2417, %v2751, 0
        %v2849 = vsel %vm2417, %v2755, 0
        %v2852 = vsel %vm2417, %v2759, 0
        %v2855 = vsel %vm2417, %v2763, 0
        %v2858 = vsel %vm2417, %v2767, 0
        %v2861 = vsel %vm2417, %v2771, 0
        %v2864 = vsel %vm2417, %v2775, 0
        %v2867 = vsel %vm2417, %v2779, 0
        %v2870 = vsel %vm2417, %v2783, 0
        %v2873 = vsel %vm2417, %v2787, 0
        %v2876 = vsel %vm2417, %v2791, 0
        %v2879 = vsel %vm2417, %v2795, 0
        %v2882 = vsel %vm2417, %v2799, 0
        %v2885 = vsel %vm2417, %v2803, 0
        %v2888 = vsel %vm2417, %v2807, 0
        %v2891 = vsel %vm2417, %v2811, 0
        %v2894 = vsel %vm2417, %v2815, 0
        %v2897 = vsel %vm2417, %v2819, 0
        %v2900 = vsel %vm2417, %v2823, 0
        %v2903 = vsel %vm2417, %v2827, 0
        %v2906 = vand.u32 %v2832, %v2493
        %2908 = vmatprep.subr.bf16.mxu0 0
        %2909 = vmatpush1.bf16.msra.mxu0 0
        %2910 = vmatprep.subr.bf16.mxu0 0
        %2911 = vmatpush1.bf16.msra.mxu0 0
        %2912 = vmatprep.subr.bf16.mxu0 0
        %2913 = vmatpush1.bf16.msra.mxu0 0
        %2914 = vmatprep.subr.bf16.mxu0 0
        %2915 = vmatpush1.bf16.msra.mxu0 0
        %2916 = vmatprep.subr.bf16.mxu0 0
        %2917 = vmatpush1.bf16.msra.mxu0 0
        %2918 = vmatprep.subr.bf16.mxu0 0
        %2919 = vmatpush1.bf16.msra.mxu0 0
        %2920 = vmatprep.subr.bf16.mxu0 0
        %2921 = vmatpush1.bf16.msra.mxu0 0
        %2922 = vmatprep.subr.bf16.mxu0 0
        %2923 = vmatpush1.bf16.msra.mxu0 %v2906
        %2924 = vmatprep.subr.bf16.mxu0 0
        %2925 = vmatpush2.bf16.msra.mxu0 0
        %2926 = vmatprep.subr.bf16.mxu0 0
        %2927 = vmatpush2.bf16.msra.mxu0 0
        %2928 = vmatprep.subr.bf16.mxu0 0
        %2929 = vmatpush2.bf16.msra.mxu0 0
        %2930 = vmatprep.subr.bf16.mxu0 0
        %2931 = vmatpush2.bf16.msra.mxu0 0
        %2932 = vmatprep.subr.bf16.mxu0 0
        %2933 = vmatpush2.bf16.msra.mxu0 0
        %2934 = vmatprep.subr.bf16.mxu0 0
        %2935 = vmatpush2.bf16.msra.mxu0 0
        %2936 = vmatprep.subr.bf16.mxu0 0
        %2937 = vmatpush2.bf16.msra.mxu0 0
        %2938 = vmatprep.subr.bf16.mxu0 0
        %2939 = vmatpush2.bf16.msra.mxu0 0
        %2940 = vmatprep.mubr.bf16.mxu0 0
        %2941 = vmatmul.mubr.bf16.gmra.mxu0 %v2834
        %v2942 = vpop.f32.mrf.mxu0
        %v2943 = vadd.f32 %v2532, %v2942
        %v2944 = vpop.f32.mrf.mxu0
        %v2945 = vpop.f32.mrf.mxu0
        %v2946 = vadd.f32 %v2535, %v2945
        %v2947 = vpop.f32.mrf.mxu0
        %2948 = vmatprep.mubr.bf16.mxu0 0
        %2949 = vmatmul.mubr.bf16.gmra.mxu0 %v2837
        %v2950 = vpop.f32.mrf.mxu0
        %v2951 = vadd.f32 %v2540, %v2950
        %v2952 = vpop.f32.mrf.mxu0
        %v2953 = vpop.f32.mrf.mxu0
        %v2954 = vadd.f32 %v2543, %v2953
        %v2955 = vpop.f32.mrf.mxu0
        %2956 = vmatprep.mubr.bf16.mxu0 0
        %2957 = vmatmul.mubr.bf16.gmra.mxu0 %v2840
        %v2958 = vpop.f32.mrf.mxu0
        %v2959 = vadd.f32 %v2548, %v2958
        %v2960 = vpop.f32.mrf.mxu0
        %v2961 = vpop.f32.mrf.mxu0
        %v2962 = vadd.f32 %v2551, %v2961
        %v2963 = vpop.f32.mrf.mxu0
        %2964 = vmatprep.mubr.bf16.mxu0 0
        %2965 = vmatmul.mubr.bf16.gmra.mxu0 %v2843
        %v2966 = vpop.f32.mrf.mxu0
        %v2967 = vadd.f32 %v2556, %v2966
        %v2968 = vpop.f32.mrf.mxu0
        %v2969 = vpop.f32.mrf.mxu0
        %v2970 = vadd.f32 %v2559, %v2969
        %v2971 = vpop.f32.mrf.mxu0
        %2972 = vmatprep.mubr.bf16.mxu0 0
        %2973 = vmatmul.mubr.bf16.gmra.mxu0 %v2846
        %v2974 = vpop.f32.mrf.mxu0
        %v2975 = vadd.f32 %v2564, %v2974
        %v2976 = vpop.f32.mrf.mxu0
        %v2977 = vpop.f32.mrf.mxu0
        %v2978 = vadd.f32 %v2567, %v2977
        %v2979 = vpop.f32.mrf.mxu0
        %2980 = vmatprep.mubr.bf16.mxu0 0
        %2981 = vmatmul.mubr.bf16.gmra.mxu0 %v2849
        %v2982 = vpop.f32.mrf.mxu0
        %v2983 = vadd.f32 %v2572, %v2982
        %v2984 = vpop.f32.mrf.mxu0
        %v2985 = vpop.f32.mrf.mxu0
        %v2986 = vadd.f32 %v2575, %v2985
        %v2987 = vpop.f32.mrf.mxu0
        %2988 = vmatprep.mubr.bf16.mxu0 0
        %2989 = vmatmul.mubr.bf16.gmra.mxu0 %v2852
        %v2990 = vpop.f32.mrf.mxu0
        %v2991 = vadd.f32 %v2580, %v2990
        %v2992 = vpop.f32.mrf.mxu0
        %v2993 = vpop.f32.mrf.mxu0
        %v2994 = vadd.f32 %v2583, %v2993
        %v2995 = vpop.f32.mrf.mxu0
        %2996 = vmatprep.mubr.bf16.mxu0 0
        %2997 = vmatmul.mubr.bf16.gmra.mxu0 %v2855
        %v2998 = vpop.f32.mrf.mxu0
        %v2999 = vadd.f32 %v2588, %v2998
        %v3000 = vpop.f32.mrf.mxu0
        %v3001 = vpop.f32.mrf.mxu0
        %v3002 = vadd.f32 %v2591, %v3001
        %v3003 = vpop.f32.mrf.mxu0
        %3004 = vmatprep.mubr.bf16.mxu0 0
        %3005 = vmatmul.mubr.bf16.gmra.mxu0 %v2858
        %v3006 = vpop.f32.mrf.mxu0
        %v3007 = vadd.f32 %v2596, %v3006
        %v3008 = vpop.f32.mrf.mxu0
        %v3009 = vpop.f32.mrf.mxu0
        %v3010 = vadd.f32 %v2599, %v3009
        %v3011 = vpop.f32.mrf.mxu0
        %3012 = vmatprep.mubr.bf16.mxu0 0
        %3013 = vmatmul.mubr.bf16.gmra.mxu0 %v2861
        %v3014 = vpop.f32.mrf.mxu0
        %v3015 = vadd.f32 %v2604, %v3014
        %v3016 = vpop.f32.mrf.mxu0
        %v3017 = vpop.f32.mrf.mxu0
        %v3018 = vadd.f32 %v2607, %v3017
        %v3019 = vpop.f32.mrf.mxu0
        %3020 = vmatprep.mubr.bf16.mxu0 0
        %3021 = vmatmul.mubr.bf16.gmra.mxu0 %v2864
        %v3022 = vpop.f32.mrf.mxu0
        %v3023 = vadd.f32 %v2612, %v3022
        %v3024 = vpop.f32.mrf.mxu0
        %v3025 = vpop.f32.mrf.mxu0
        %v3026 = vadd.f32 %v2615, %v3025
        %v3027 = vpop.f32.mrf.mxu0
        %3028 = vmatprep.mubr.bf16.mxu0 0
        %3029 = vmatmul.mubr.bf16.gmra.mxu0 %v2867
        %v3030 = vpop.f32.mrf.mxu0
        %v3031 = vadd.f32 %v2620, %v3030
        %v3032 = vpop.f32.mrf.mxu0
        %v3033 = vpop.f32.mrf.mxu0
        %v3034 = vadd.f32 %v2623, %v3033
        %v3035 = vpop.f32.mrf.mxu0
        %3036 = vmatprep.mubr.bf16.mxu0 0
        %3037 = vmatmul.mubr.bf16.gmra.mxu0 %v2870
        %v3038 = vpop.f32.mrf.mxu0
        %v3039 = vadd.f32 %v2628, %v3038
        %v3040 = vpop.f32.mrf.mxu0
        %v3041 = vpop.f32.mrf.mxu0
        %v3042 = vadd.f32 %v2631, %v3041
        %v3043 = vpop.f32.mrf.mxu0
        %3044 = vmatprep.mubr.bf16.mxu0 0
        %3045 = vmatmul.mubr.bf16.gmra.mxu0 %v2873
        %v3046 = vpop.f32.mrf.mxu0
        %v3047 = vadd.f32 %v2636, %v3046
        %v3048 = vpop.f32.mrf.mxu0
        %v3049 = vpop.f32.mrf.mxu0
        %v3050 = vadd.f32 %v2639, %v3049
        %v3051 = vpop.f32.mrf.mxu0
        %3052 = vmatprep.mubr.bf16.mxu0 0
        %3053 = vmatmul.mubr.bf16.gmra.mxu0 %v2876
        %v3054 = vpop.f32.mrf.mxu0
        %v3055 = vadd.f32 %v2644, %v3054
        %v3056 = vpop.f32.mrf.mxu0
        %v3057 = vpop.f32.mrf.mxu0
        %v3058 = vadd.f32 %v2647, %v3057
        %v3059 = vpop.f32.mrf.mxu0
        %3060 = vmatprep.mubr.bf16.mxu0 0
        %3061 = vmatmul.mubr.bf16.gmra.mxu0 %v2879
        %v3062 = vpop.f32.mrf.mxu0
        %v3063 = vadd.f32 %v2652, %v3062
        %v3064 = vpop.f32.mrf.mxu0
        %v3065 = vpop.f32.mrf.mxu0
        %v3066 = vadd.f32 %v2655, %v3065
        %v3067 = vpop.f32.mrf.mxu0
        %3068 = vmatprep.mubr.bf16.mxu0 0
        %3069 = vmatmul.mubr.bf16.gmra.mxu0 %v2882
        %v3070 = vpop.f32.mrf.mxu0
        %v3071 = vadd.f32 %v2660, %v3070
        %v3072 = vpop.f32.mrf.mxu0
        %v3073 = vpop.f32.mrf.mxu0
        %v3074 = vadd.f32 %v2663, %v3073
        %v3075 = vpop.f32.mrf.mxu0
        %3076 = vmatprep.mubr.bf16.mxu0 0
        %3077 = vmatmul.mubr.bf16.gmra.mxu0 %v2885
        %v3078 = vpop.f32.mrf.mxu0
        %v3079 = vadd.f32 %v2668, %v3078
        %v3080 = vpop.f32.mrf.mxu0
        %v3081 = vpop.f32.mrf.mxu0
        %v3082 = vadd.f32 %v2671, %v3081
        %v3083 = vpop.f32.mrf.mxu0
        %3084 = vmatprep.mubr.bf16.mxu0 0
        %3085 = vmatmul.mubr.bf16.gmra.mxu0 %v2888
        %v3086 = vpop.f32.mrf.mxu0
        %v3087 = vadd.f32 %v2676, %v3086
        %v3088 = vpop.f32.mrf.mxu0
        %v3089 = vpop.f32.mrf.mxu0
        %v3090 = vadd.f32 %v2679, %v3089
        %v3091 = vpop.f32.mrf.mxu0
        %3092 = vmatprep.mubr.bf16.mxu0 0
        %3093 = vmatmul.mubr.bf16.gmra.mxu0 %v2891
        %v3094 = vpop.f32.mrf.mxu0
        %v3095 = vadd.f32 %v2684, %v3094
        %v3096 = vpop.f32.mrf.mxu0
        %v3097 = vpop.f32.mrf.mxu0
        %v3098 = vadd.f32 %v2687, %v3097
        %v3099 = vpop.f32.mrf.mxu0
        %3100 = vmatprep.mubr.bf16.mxu0 0
        %3101 = vmatmul.mubr.bf16.gmra.mxu0 %v2894
        %v3102 = vpop.f32.mrf.mxu0
        %v3103 = vadd.f32 %v2692, %v3102
        %v3104 = vpop.f32.mrf.mxu0
        %v3105 = vpop.f32.mrf.mxu0
        %v3106 = vadd.f32 %v2695, %v3105
        %v3107 = vpop.f32.mrf.mxu0
        %3108 = vmatprep.mubr.bf16.mxu0 0
        %3109 = vmatmul.mubr.bf16.gmra.mxu0 %v2897
        %v3110 = vpop.f32.mrf.mxu0
        %v3111 = vadd.f32 %v2700, %v3110
        %v3112 = vpop.f32.mrf.mxu0
        %v3113 = vpop.f32.mrf.mxu0
        %v3114 = vadd.f32 %v2703, %v3113
        %v3115 = vpop.f32.mrf.mxu0
        %3116 = vmatprep.mubr.bf16.mxu0 0
        %3117 = vmatmul.mubr.bf16.gmra.mxu0 %v2900
        %v3118 = vpop.f32.mrf.mxu0
        %v3119 = vadd.f32 %v2708, %v3118
        %v3120 = vpop.f32.mrf.mxu0
        %v3121 = vpop.f32.mrf.mxu0
        %v3122 = vadd.f32 %v2711, %v3121
        %v3123 = vpop.f32.mrf.mxu0
        %3124 = vmatprep.mubr.bf16.mxu0 0
        %3125 = vmatmul.mubr.bf16.gmra.mxu0 %v2903
        %v3126 = vpop.f32.mrf.mxu0
        %v3127 = vadd.f32 %v2716, %v3126
        %v3128 = vpop.f32.mrf.mxu0
        %v3129 = vpop.f32.mrf.mxu0
        %v3130 = vadd.f32 %v2719, %v3129
        %v3131 = vpop.f32.mrf.mxu0
        %3132 = vdwg.mxu0
        %s3133 = scalar_lea.vmem %s1, 16
        %v3134 = vld [vmem:[%s3133] sm:$0xf]
        %v3135 = vld [vmem:[%s3133 + $0x4] sm:$0x1]
        %v3136 = vrot.slane %v2405, 3
        %v3137 = vrot.slane %v2408, 4
        %v3138 = vor.u32 %v3136, %v3137
        %v3139 = vsel %vm2722, %v2826, %v3138
        %v3140 = vshrl.u32 %v2232, 16
        %v3142 = vrot.slane %v3140, 3
        %v3143 = vshll.u32 %v2232, 16
        %v3145 = vrot.slane %v3143, 4
        %v3146 = vor.u32 %v3142, %v3145
        %v3147 = vsel %vm2722, %v3138, %v3146
        %v3148 = vshrl.u32 %v2234, 16
        %v3150 = vrot.slane %v3148, 3
        %v3151 = vshll.u32 %v2234, 16
        %v3153 = vrot.slane %v3151, 4
        %v3154 = vor.u32 %v3150, %v3153
        %v3155 = vsel %vm2722, %v3146, %v3154
        %v3158 = vunpack.c.l.b16 %v3134
        %v3159 = vunpack.c.l.b16 %v3135
        %v3160 = vpack.c.b16 %v3159, %v3158
        %v3162 = vsel %vm2417, %v3139, 0
        %v3165 = vsel %vm2417, %v3147, 0
        %v3168 = vsel %vm2417, %v3155, 0
        %v3171 = vand.u32 %v3160, %v2493
        %3173 = vmatprep.subr.bf16.mxu0 0
        %3174 = vmatpush1.bf16.msra.mxu0 0
        %3175 = vmatprep.subr.bf16.mxu0 0
        %3176 = vmatpush1.bf16.msra.mxu0 0
        %3177 = vmatprep.subr.bf16.mxu0 0
        %3178 = vmatpush1.bf16.msra.mxu0 0
        %3179 = vmatprep.subr.bf16.mxu0 0
        %3180 = vmatpush1.bf16.msra.mxu0 0
        %3181 = vmatprep.subr.bf16.mxu0 0
        %3182 = vmatpush1.bf16.msra.mxu0 0
        %3183 = vmatprep.subr.bf16.mxu0 0
        %3184 = vmatpush1.bf16.msra.mxu0 0
        %3185 = vmatprep.subr.bf16.mxu0 0
        %3186 = vmatpush1.bf16.msra.mxu0 0
        %3187 = vmatprep.subr.bf16.mxu0 0
        %3188 = vmatpush1.bf16.msra.mxu0 %v3171
        %3189 = vmatprep.subr.bf16.mxu0 0
        %3190 = vmatpush2.bf16.msra.mxu0 0
        %3191 = vmatprep.subr.bf16.mxu0 0
        %3192 = vmatpush2.bf16.msra.mxu0 0
        %3193 = vmatprep.subr.bf16.mxu0 0
        %3194 = vmatpush2.bf16.msra.mxu0 0
        %3195 = vmatprep.subr.bf16.mxu0 0
        %3196 = vmatpush2.bf16.msra.mxu0 0
        %3197 = vmatprep.subr.bf16.mxu0 0
        %3198 = vmatpush2.bf16.msra.mxu0 0
        %3199 = vmatprep.subr.bf16.mxu0 0
        %3200 = vmatpush2.bf16.msra.mxu0 0
        %3201 = vmatprep.subr.bf16.mxu0 0
        %3202 = vmatpush2.bf16.msra.mxu0 0
        %3203 = vmatprep.subr.bf16.mxu0 0
        %3204 = vmatpush2.bf16.msra.mxu0 0
        %3205 = vmatprep.mubr.bf16.mxu0 0
        %3206 = vmatmul.mubr.bf16.gmra.mxu0 %v2843
        %v3207 = vpop.f32.mrf.mxu0
        %v3208 = vadd.f32 0.0, %v3207
        %v3209 = vpop.f32.mrf.mxu0
        %v3210 = vpop.f32.mrf.mxu0
        %v3211 = vadd.f32 0.0, %v3210
        %v3212 = vpop.f32.mrf.mxu0
        %3213 = vmatprep.mubr.bf16.mxu0 0
        %3214 = vmatmul.mubr.bf16.gmra.mxu0 %v2846
        %v3215 = vpop.f32.mrf.mxu0
        %v3216 = vadd.f32 0.0, %v3215
        %v3217 = vpop.f32.mrf.mxu0
        %v3218 = vpop.f32.mrf.mxu0
        %v3219 = vadd.f32 0.0, %v3218
        %v3220 = vpop.f32.mrf.mxu0
        %3221 = vmatprep.mubr.bf16.mxu0 0
        %3222 = vmatmul.mubr.bf16.gmra.mxu0 %v2849
        %v3223 = vpop.f32.mrf.mxu0
        %v3224 = vadd.f32 0.0, %v3223
        %v3225 = vpop.f32.mrf.mxu0
        %v3226 = vpop.f32.mrf.mxu0
        %v3227 = vadd.f32 0.0, %v3226
        %v3228 = vpop.f32.mrf.mxu0
        %3229 = vmatprep.mubr.bf16.mxu0 0
        %3230 = vmatmul.mubr.bf16.gmra.mxu0 %v2852
        %v3231 = vpop.f32.mrf.mxu0
        %v3232 = vadd.f32 0.0, %v3231
        %v3233 = vpop.f32.mrf.mxu0
        %v3234 = vpop.f32.mrf.mxu0
        %v3235 = vadd.f32 0.0, %v3234
        %v3236 = vpop.f32.mrf.mxu0
        %3237 = vmatprep.mubr.bf16.mxu0 0
        %3238 = vmatmul.mubr.bf16.gmra.mxu0 %v2855
        %v3239 = vpop.f32.mrf.mxu0
        %v3240 = vadd.f32 0.0, %v3239
        %v3241 = vpop.f32.mrf.mxu0
        %v3242 = vpop.f32.mrf.mxu0
        %v3243 = vadd.f32 0.0, %v3242
        %v3244 = vpop.f32.mrf.mxu0
        %3245 = vmatprep.mubr.bf16.mxu0 0
        %3246 = vmatmul.mubr.bf16.gmra.mxu0 %v2858
        %v3247 = vpop.f32.mrf.mxu0
        %v3248 = vadd.f32 0.0, %v3247
        %v3249 = vpop.f32.mrf.mxu0
        %v3250 = vpop.f32.mrf.mxu0
        %v3251 = vadd.f32 0.0, %v3250
        %v3252 = vpop.f32.mrf.mxu0
        %3253 = vmatprep.mubr.bf16.mxu0 0
        %3254 = vmatmul.mubr.bf16.gmra.mxu0 %v2861
        %v3255 = vpop.f32.mrf.mxu0
        %v3256 = vadd.f32 0.0, %v3255
        %v3257 = vpop.f32.mrf.mxu0
        %v3258 = vpop.f32.mrf.mxu0
        %v3259 = vadd.f32 0.0, %v3258
        %v3260 = vpop.f32.mrf.mxu0
        %3261 = vmatprep.mubr.bf16.mxu0 0
        %3262 = vmatmul.mubr.bf16.gmra.mxu0 %v2864
        %v3263 = vpop.f32.mrf.mxu0
        %v3264 = vadd.f32 0.0, %v3263
        %v3265 = vpop.f32.mrf.mxu0
        %v3266 = vpop.f32.mrf.mxu0
        %v3267 = vadd.f32 0.0, %v3266
        %v3268 = vpop.f32.mrf.mxu0
        %3269 = vmatprep.mubr.bf16.mxu0 0
        %3270 = vmatmul.mubr.bf16.gmra.mxu0 %v2867
        %v3271 = vpop.f32.mrf.mxu0
        %v3272 = vadd.f32 0.0, %v3271
        %v3273 = vpop.f32.mrf.mxu0
        %v3274 = vpop.f32.mrf.mxu0
        %v3275 = vadd.f32 0.0, %v3274
        %v3276 = vpop.f32.mrf.mxu0
        %3277 = vmatprep.mubr.bf16.mxu0 0
        %3278 = vmatmul.mubr.bf16.gmra.mxu0 %v2870
        %v3279 = vpop.f32.mrf.mxu0
        %v3280 = vadd.f32 0.0, %v3279
        %v3281 = vpop.f32.mrf.mxu0
        %v3282 = vpop.f32.mrf.mxu0
        %v3283 = vadd.f32 0.0, %v3282
        %v3284 = vpop.f32.mrf.mxu0
        %3285 = vmatprep.mubr.bf16.mxu0 0
        %3286 = vmatmul.mubr.bf16.gmra.mxu0 %v2873
        %v3287 = vpop.f32.mrf.mxu0
        %v3288 = vadd.f32 0.0, %v3287
        %v3289 = vpop.f32.mrf.mxu0
        %v3290 = vpop.f32.mrf.mxu0
        %v3291 = vadd.f32 0.0, %v3290
        %v3292 = vpop.f32.mrf.mxu0
        %3293 = vmatprep.mubr.bf16.mxu0 0
        %3294 = vmatmul.mubr.bf16.gmra.mxu0 %v2876
        %v3295 = vpop.f32.mrf.mxu0
        %v3296 = vadd.f32 0.0, %v3295
        %v3297 = vpop.f32.mrf.mxu0
        %v3298 = vpop.f32.mrf.mxu0
        %v3299 = vadd.f32 0.0, %v3298
        %v3300 = vpop.f32.mrf.mxu0
        %3301 = vmatprep.mubr.bf16.mxu0 0
        %3302 = vmatmul.mubr.bf16.gmra.mxu0 %v2879
        %v3303 = vpop.f32.mrf.mxu0
        %v3304 = vadd.f32 0.0, %v3303
        %v3305 = vpop.f32.mrf.mxu0
        %v3306 = vpop.f32.mrf.mxu0
        %v3307 = vadd.f32 0.0, %v3306
        %v3308 = vpop.f32.mrf.mxu0
        %3309 = vmatprep.mubr.bf16.mxu0 0
        %3310 = vmatmul.mubr.bf16.gmra.mxu0 %v2882
        %v3311 = vpop.f32.mrf.mxu0
        %v3312 = vadd.f32 0.0, %v3311
        %v3313 = vpop.f32.mrf.mxu0
        %v3314 = vpop.f32.mrf.mxu0
        %v3315 = vadd.f32 0.0, %v3314
        %v3316 = vpop.f32.mrf.mxu0
        %3317 = vmatprep.mubr.bf16.mxu0 0
        %3318 = vmatmul.mubr.bf16.gmra.mxu0 %v2885
        %v3319 = vpop.f32.mrf.mxu0
        %v3320 = vadd.f32 0.0, %v3319
        %v3321 = vpop.f32.mrf.mxu0
        %v3322 = vpop.f32.mrf.mxu0
        %v3323 = vadd.f32 0.0, %v3322
        %v3324 = vpop.f32.mrf.mxu0
        %3325 = vmatprep.mubr.bf16.mxu0 0
        %3326 = vmatmul.mubr.bf16.gmra.mxu0 %v2888
        %v3327 = vpop.f32.mrf.mxu0
        %v3328 = vadd.f32 0.0, %v3327
        %v3329 = vpop.f32.mrf.mxu0
        %v3330 = vpop.f32.mrf.mxu0
        %v3331 = vadd.f32 0.0, %v3330
        %v3332 = vpop.f32.mrf.mxu0
        %3333 = vmatprep.mubr.bf16.mxu0 0
        %3334 = vmatmul.mubr.bf16.gmra.mxu0 %v2891
        %v3335 = vpop.f32.mrf.mxu0
        %v3336 = vadd.f32 0.0, %v3335
        %v3337 = vpop.f32.mrf.mxu0
        %v3338 = vpop.f32.mrf.mxu0
        %v3339 = vadd.f32 0.0, %v3338
        %v3340 = vpop.f32.mrf.mxu0
        %3341 = vmatprep.mubr.bf16.mxu0 0
        %3342 = vmatmul.mubr.bf16.gmra.mxu0 %v2894
        %v3343 = vpop.f32.mrf.mxu0
        %v3344 = vadd.f32 0.0, %v3343
        %v3345 = vpop.f32.mrf.mxu0
        %v3346 = vpop.f32.mrf.mxu0
        %v3347 = vadd.f32 0.0, %v3346
        %v3348 = vpop.f32.mrf.mxu0
        %3349 = vmatprep.mubr.bf16.mxu0 0
        %3350 = vmatmul.mubr.bf16.gmra.mxu0 %v2897
        %v3351 = vpop.f32.mrf.mxu0
        %v3352 = vadd.f32 0.0, %v3351
        %v3353 = vpop.f32.mrf.mxu0
        %v3354 = vpop.f32.mrf.mxu0
        %v3355 = vadd.f32 0.0, %v3354
        %v3356 = vpop.f32.mrf.mxu0
        %3357 = vmatprep.mubr.bf16.mxu0 0
        %3358 = vmatmul.mubr.bf16.gmra.mxu0 %v2900
        %v3359 = vpop.f32.mrf.mxu0
        %v3360 = vadd.f32 0.0, %v3359
        %v3361 = vpop.f32.mrf.mxu0
        %v3362 = vpop.f32.mrf.mxu0
        %v3363 = vadd.f32 0.0, %v3362
        %v3364 = vpop.f32.mrf.mxu0
        %3365 = vmatprep.mubr.bf16.mxu0 0
        %3366 = vmatmul.mubr.bf16.gmra.mxu0 %v2903
        %v3367 = vpop.f32.mrf.mxu0
        %v3368 = vadd.f32 0.0, %v3367
        %v3369 = vpop.f32.mrf.mxu0
        %v3370 = vpop.f32.mrf.mxu0
        %v3371 = vadd.f32 0.0, %v3370
        %v3372 = vpop.f32.mrf.mxu0
        %3373 = vmatprep.mubr.bf16.mxu0 0
        %3374 = vmatmul.mubr.bf16.gmra.mxu0 %v3162
        %v3375 = vpop.f32.mrf.mxu0
        %v3376 = vadd.f32 0.0, %v3375
        %v3377 = vpop.f32.mrf.mxu0
        %v3378 = vpop.f32.mrf.mxu0
        %v3379 = vadd.f32 0.0, %v3378
        %v3380 = vpop.f32.mrf.mxu0
        %3381 = vmatprep.mubr.bf16.mxu0 0
        %3382 = vmatmul.mubr.bf16.gmra.mxu0 %v3165
        %v3383 = vpop.f32.mrf.mxu0
        %v3384 = vadd.f32 0.0, %v3383
        %v3385 = vpop.f32.mrf.mxu0
        %v3386 = vpop.f32.mrf.mxu0
        %v3387 = vadd.f32 0.0, %v3386
        %v3388 = vpop.f32.mrf.mxu0
        %3389 = vmatprep.mubr.bf16.mxu0 0
        %3390 = vmatmul.mubr.bf16.gmra.mxu0 %v3168
        %v3391 = vpop.f32.mrf.mxu0
        %v3392 = vadd.f32 0.0, %v3391
        %v3393 = vpop.f32.mrf.mxu0
        %v3394 = vpop.f32.mrf.mxu0
        %v3395 = vadd.f32 0.0, %v3394
        %v3396 = vpop.f32.mrf.mxu0
        %3397 = vdwg.mxu0
        %v3398 = vadd.f32 %v2943, %v3208
        %v3399 = vadd.f32 %v2946, %v3211
        %v3400 = vadd.f32 %v2951, %v3216
        %v3401 = vadd.f32 %v2954, %v3219
        %v3402 = vadd.f32 %v2959, %v3224
        %v3403 = vadd.f32 %v2962, %v3227
        %v3404 = vadd.f32 %v2967, %v3232
        %v3405 = vadd.f32 %v2970, %v3235
        %v3406 = vadd.f32 %v2975, %v3240
        %v3407 = vadd.f32 %v2978, %v3243
        %v3408 = vadd.f32 %v2983, %v3248
        %v3409 = vadd.f32 %v2986, %v3251
        %v3410 = vadd.f32 %v2991, %v3256
        %v3411 = vadd.f32 %v2994, %v3259
        %v3412 = vadd.f32 %v2999, %v3264
        %v3413 = vadd.f32 %v3002, %v3267
        %v3414 = vadd.f32 %v3007, %v3272
        %v3415 = vadd.f32 %v3010, %v3275
        %v3416 = vadd.f32 %v3015, %v3280
        %v3417 = vadd.f32 %v3018, %v3283
        %v3418 = vadd.f32 %v3023, %v3288
        %v3419 = vadd.f32 %v3026, %v3291
        %v3420 = vadd.f32 %v3031, %v3296
        %v3421 = vadd.f32 %v3034, %v3299
        %v3422 = vadd.f32 %v3039, %v3304
        %v3423 = vadd.f32 %v3042, %v3307
        %v3424 = vadd.f32 %v3047, %v3312
        %v3425 = vadd.f32 %v3050, %v3315
        %v3426 = vadd.f32 %v3055, %v3320
        %v3427 = vadd.f32 %v3058, %v3323
        %v3428 = vadd.f32 %v3063, %v3328
        %v3429 = vadd.f32 %v3066, %v3331
        %v3430 = vadd.f32 %v3071, %v3336
        %v3431 = vadd.f32 %v3074, %v3339
        %v3432 = vadd.f32 %v3079, %v3344
        %v3433 = vadd.f32 %v3082, %v3347
        %v3434 = vadd.f32 %v3087, %v3352
        %v3435 = vadd.f32 %v3090, %v3355
        %v3436 = vadd.f32 %v3095, %v3360
        %v3437 = vadd.f32 %v3098, %v3363
        %v3438 = vadd.f32 %v3103, %v3368
        %v3439 = vadd.f32 %v3106, %v3371
        %v3440 = vadd.f32 %v3111, %v3376
        %v3441 = vadd.f32 %v3114, %v3379
        %v3442 = vadd.f32 %v3119, %v3384
        %v3443 = vadd.f32 %v3122, %v3387
        %v3444 = vadd.f32 %v3127, %v3392
        %v3445 = vadd.f32 %v3130, %v3395
        %v3446 = vld [vmem:[%s2] sm:$0x1]
        %v3448 = vlaneseq
        %v3449 = vshrl.u32 %v3448, 7
        %v3450 = vsub.s32 0, %v3449
        %v3451 = vrot.slane %v3446, %v3450
        %v3453 = vmul.f32 %v3398, %v3451
        %v3454 = vmul.f32 %v3399, %v3451
        %v3455 = vmul.f32 %v3400, %v3451
        %v3456 = vmul.f32 %v3401, %v3451
        %v3457 = vmul.f32 %v3402, %v3451
        %v3458 = vmul.f32 %v3403, %v3451
        %v3459 = vmul.f32 %v3404, %v3451
        %v3460 = vmul.f32 %v3405, %v3451
        %v3461 = vmul.f32 %v3406, %v3451
        %v3462 = vmul.f32 %v3407, %v3451
        %v3463 = vmul.f32 %v3408, %v3451
        %v3464 = vmul.f32 %v3409, %v3451
        %v3465 = vmul.f32 %v3410, %v3451
        %v3466 = vmul.f32 %v3411, %v3451
        %v3467 = vmul.f32 %v3412, %v3451
        %v3468 = vmul.f32 %v3413, %v3451
        %v3469 = vmul.f32 %v3414, %v3451
        %v3470 = vmul.f32 %v3415, %v3451
        %v3471 = vmul.f32 %v3416, %v3451
        %v3472 = vmul.f32 %v3417, %v3451
        %v3473 = vmul.f32 %v3418, %v3451
        %v3474 = vmul.f32 %v3419, %v3451
        %v3475 = vmul.f32 %v3420, %v3451
        %v3476 = vmul.f32 %v3421, %v3451
        %v3477 = vmul.f32 %v3422, %v3451
        %v3478 = vmul.f32 %v3423, %v3451
        %v3479 = vmul.f32 %v3424, %v3451
        %v3480 = vmul.f32 %v3425, %v3451
        %v3481 = vmul.f32 %v3426, %v3451
        %v3482 = vmul.f32 %v3427, %v3451
        %v3483 = vmul.f32 %v3428, %v3451
        %v3484 = vmul.f32 %v3429, %v3451
        %v3485 = vmul.f32 %v3430, %v3451
        %v3486 = vmul.f32 %v3431, %v3451
        %v3487 = vmul.f32 %v3432, %v3451
        %v3488 = vmul.f32 %v3433, %v3451
        %v3489 = vmul.f32 %v3434, %v3451
        %v3490 = vmul.f32 %v3435, %v3451
        %v3491 = vmul.f32 %v3436, %v3451
        %v3492 = vmul.f32 %v3437, %v3451
        %v3493 = vmul.f32 %v3438, %v3451
        %v3494 = vmul.f32 %v3439, %v3451
        %v3495 = vmul.f32 %v3440, %v3451
        %v3496 = vmul.f32 %v3441, %v3451
        %v3497 = vmul.f32 %v3442, %v3451
        %v3498 = vmul.f32 %v3443, %v3451
        %v3499 = vmul.f32 %v3444, %v3451
        %v3500 = vmul.f32 %v3445, %v3451
        %v3501 = vld [vmem:[%s3] sm:$0x1]
        %v3503 = vlaneseq
        %v3504 = vshrl.u32 %v3503, 7
        %v3505 = vsub.s32 0, %v3504
        %v3506 = vrot.slane %v3501, %v3505
        %v3508 = vadd.f32 %v3453, %v3506
        %v3509 = vadd.f32 %v3454, %v3506
        %v3510 = vadd.f32 %v3455, %v3506
        %v3511 = vadd.f32 %v3456, %v3506
        %v3512 = vadd.f32 %v3457, %v3506
        %v3513 = vadd.f32 %v3458, %v3506
        %v3514 = vadd.f32 %v3459, %v3506
        %v3515 = vadd.f32 %v3460, %v3506
        %v3516 = vadd.f32 %v3461, %v3506
        %v3517 = vadd.f32 %v3462, %v3506
        %v3518 = vadd.f32 %v3463, %v3506
        %v3519 = vadd.f32 %v3464, %v3506
        %v3520 = vadd.f32 %v3465, %v3506
        %v3521 = vadd.f32 %v3466, %v3506
        %v3522 = vadd.f32 %v3467, %v3506
        %v3523 = vadd.f32 %v3468, %v3506
        %v3524 = vadd.f32 %v3469, %v3506
        %v3525 = vadd.f32 %v3470, %v3506
        %v3526 = vadd.f32 %v3471, %v3506
        %v3527 = vadd.f32 %v3472, %v3506
        %v3528 = vadd.f32 %v3473, %v3506
        %v3529 = vadd.f32 %v3474, %v3506
        %v3530 = vadd.f32 %v3475, %v3506
        %v3531 = vadd.f32 %v3476, %v3506
        %v3532 = vadd.f32 %v3477, %v3506
        %v3533 = vadd.f32 %v3478, %v3506
        %v3534 = vadd.f32 %v3479, %v3506
        %v3535 = vadd.f32 %v3480, %v3506
        %v3536 = vadd.f32 %v3481, %v3506
        %v3537 = vadd.f32 %v3482, %v3506
        %v3538 = vadd.f32 %v3483, %v3506
        %v3539 = vadd.f32 %v3484, %v3506
        %v3540 = vadd.f32 %v3485, %v3506
        %v3541 = vadd.f32 %v3486, %v3506
        %v3542 = vadd.f32 %v3487, %v3506
        %v3543 = vadd.f32 %v3488, %v3506
        %v3544 = vadd.f32 %v3489, %v3506
        %v3545 = vadd.f32 %v3490, %v3506
        %v3546 = vadd.f32 %v3491, %v3506
        %v3547 = vadd.f32 %v3492, %v3506
        %v3548 = vadd.f32 %v3493, %v3506
        %v3549 = vadd.f32 %v3494, %v3506
        %v3550 = vadd.f32 %v3495, %v3506
        %v3551 = vadd.f32 %v3496, %v3506
        %v3552 = vadd.f32 %v3497, %v3506
        %v3553 = vadd.f32 %v3498, %v3506
        %v3554 = vadd.f32 %v3499, %v3506
        %v3555 = vadd.f32 %v3500, %v3506
        %v3556 = vmax.f32 %v3508, 0.0
        %v3557 = vmax.f32 %v3509, 0.0
        %v3558 = vmax.f32 %v3510, 0.0
        %v3559 = vmax.f32 %v3511, 0.0
        %v3560 = vmax.f32 %v3512, 0.0
        %v3561 = vmax.f32 %v3513, 0.0
        %v3562 = vmax.f32 %v3514, 0.0
        %v3563 = vmax.f32 %v3515, 0.0
        %v3564 = vmax.f32 %v3516, 0.0
        %v3565 = vmax.f32 %v3517, 0.0
        %v3566 = vmax.f32 %v3518, 0.0
        %v3567 = vmax.f32 %v3519, 0.0
        %v3568 = vmax.f32 %v3520, 0.0
        %v3569 = vmax.f32 %v3521, 0.0
        %v3570 = vmax.f32 %v3522, 0.0
        %v3571 = vmax.f32 %v3523, 0.0
        %v3572 = vmax.f32 %v3524, 0.0
        %v3573 = vmax.f32 %v3525, 0.0
        %v3574 = vmax.f32 %v3526, 0.0
        %v3575 = vmax.f32 %v3527, 0.0
        %v3576 = vmax.f32 %v3528, 0.0
        %v3577 = vmax.f32 %v3529, 0.0
        %v3578 = vmax.f32 %v3530, 0.0
        %v3579 = vmax.f32 %v3531, 0.0
        %v3580 = vmax.f32 %v3532, 0.0
        %v3581 = vmax.f32 %v3533, 0.0
        %v3582 = vmax.f32 %v3534, 0.0
        %v3583 = vmax.f32 %v3535, 0.0
        %v3584 = vmax.f32 %v3536, 0.0
        %v3585 = vmax.f32 %v3537, 0.0
        %v3586 = vmax.f32 %v3538, 0.0
        %v3587 = vmax.f32 %v3539, 0.0
        %v3588 = vmax.f32 %v3540, 0.0
        %v3589 = vmax.f32 %v3541, 0.0
        %v3590 = vmax.f32 %v3542, 0.0
        %v3591 = vmax.f32 %v3543, 0.0
        %v3592 = vmax.f32 %v3544, 0.0
        %v3593 = vmax.f32 %v3545, 0.0
        %v3594 = vmax.f32 %v3546, 0.0
        %v3595 = vmax.f32 %v3547, 0.0
        %v3596 = vmax.f32 %v3548, 0.0
        %v3597 = vmax.f32 %v3549, 0.0
        %v3598 = vmax.f32 %v3550, 0.0
        %v3599 = vmax.f32 %v3551, 0.0
        %v3600 = vmax.f32 %v3552, 0.0
        %v3601 = vmax.f32 %v3553, 0.0
        %v3602 = vmax.f32 %v3554, 0.0
        %v3603 = vmax.f32 %v3555, 0.0
        %v3604 = vsel %vm1410, 1, 0
        %v3605 = vsel %vm1411, 1, 0
        %v3606 = vsel %vm1412, 1, 0
        %v3607 = vsel %vm1413, 1, 0
        %v3608 = vsel %vm1414, 1, 0
        %v3609 = vsel %vm1415, 1, 0
        %v3610 = vsel %vm1416, 1, 0
        %v3611 = vsel %vm1417, 1, 0
        %v3612 = vsel %vm1418, 1, 0
        %v3613 = vsel %vm1419, 1, 0
        %v3614 = vsel %vm1420, 1, 0
        %v3615 = vsel %vm1421, 1, 0
        %v3616 = vsel %vm1422, 1, 0
        %v3617 = vsel %vm1423, 1, 0
        %v3618 = vsel %vm1424, 1, 0
        %v3619 = vsel %vm1425, 1, 0
        %v3620 = vsel %vm1426, 1, 0
        %v3621 = vsel %vm1427, 1, 0
        %v3622 = vsel %vm1428, 1, 0
        %v3623 = vsel %vm1429, 1, 0
        %v3624 = vsel %vm1430, 1, 0
        %v3625 = vsel %vm1431, 1, 0
        %v3626 = vsel %vm1432, 1, 0
        %v3627 = vsel %vm1433, 1, 0
        %v3628 = vsel %vm1434, 1, 0
        %v3629 = vsel %vm1435, 1, 0
        %v3630 = vsel %vm1436, 1, 0
        %v3631 = vsel %vm1437, 1, 0
        %v3632 = vsel %vm1438, 1, 0
        %v3633 = vsel %vm1439, 1, 0
        %v3634 = vsel %vm1440, 1, 0
        %v3635 = vsel %vm1441, 1, 0
        %v3636 = vsel %vm1442, 1, 0
        %v3637 = vsel %vm1443, 1, 0
        %v3638 = vsel %vm1444, 1, 0
        %v3639 = vsel %vm1445, 1, 0
        %v3640 = vsel %vm1446, 1, 0
        %v3641 = vsel %vm1447, 1, 0
        %v3642 = vsel %vm1448, 1, 0
        %v3643 = vsel %vm1449, 1, 0
        %v3644 = vsel %vm1450, 1, 0
        %v3645 = vsel %vm1451, 1, 0
        %v3646 = vsel %vm1452, 1, 0
        %v3647 = vsel %vm1453, 1, 0
        %v3648 = vsel %vm1454, 1, 0
        %v3649 = vsel %vm1455, 1, 0
        %v3650 = vsel %vm1456, 1, 0
        %v3651 = vsel %vm1457, 1, 0
        %vm3652 = vcmp.eq.s32.totalorder %v3604, 1
        %vm3653 = vcmp.eq.s32.totalorder %v3605, 1
        %vm3654 = vcmp.eq.s32.totalorder %v3606, 1
        %vm3655 = vcmp.eq.s32.totalorder %v3607, 1
        %vm3656 = vcmp.eq.s32.totalorder %v3608, 1
        %vm3657 = vcmp.eq.s32.totalorder %v3609, 1
        %vm3658 = vcmp.eq.s32.totalorder %v3610, 1
        %vm3659 = vcmp.eq.s32.totalorder %v3611, 1
        %vm3660 = vcmp.eq.s32.totalorder %v3612, 1
        %vm3661 = vcmp.eq.s32.totalorder %v3613, 1
        %vm3662 = vcmp.eq.s32.totalorder %v3614, 1
        %vm3663 = vcmp.eq.s32.totalorder %v3615, 1
        %vm3664 = vcmp.eq.s32.totalorder %v3616, 1
        %vm3665 = vcmp.eq.s32.totalorder %v3617, 1
        %vm3666 = vcmp.eq.s32.totalorder %v3618, 1
        %vm3667 = vcmp.eq.s32.totalorder %v3619, 1
        %vm3668 = vcmp.eq.s32.totalorder %v3620, 1
        %vm3669 = vcmp.eq.s32.totalorder %v3621, 1
        %vm3670 = vcmp.eq.s32.totalorder %v3622, 1
        %vm3671 = vcmp.eq.s32.totalorder %v3623, 1
        %vm3672 = vcmp.eq.s32.totalorder %v3624, 1
        %vm3673 = vcmp.eq.s32.totalorder %v3625, 1
        %vm3674 = vcmp.eq.s32.totalorder %v3626, 1
        %vm3675 = vcmp.eq.s32.totalorder %v3627, 1
        %vm3676 = vcmp.eq.s32.totalorder %v3628, 1
        %vm3677 = vcmp.eq.s32.totalorder %v3629, 1
        %vm3678 = vcmp.eq.s32.totalorder %v3630, 1
        %vm3679 = vcmp.eq.s32.totalorder %v3631, 1
        %vm3680 = vcmp.eq.s32.totalorder %v3632, 1
        %vm3681 = vcmp.eq.s32.totalorder %v3633, 1
        %vm3682 = vcmp.eq.s32.totalorder %v3634, 1
        %vm3683 = vcmp.eq.s32.totalorder %v3635, 1
        %vm3684 = vcmp.eq.s32.totalorder %v3636, 1
        %vm3685 = vcmp.eq.s32.totalorder %v3637, 1
        %vm3686 = vcmp.eq.s32.totalorder %v3638, 1
        %vm3687 = vcmp.eq.s32.totalorder %v3639, 1
        %vm3688 = vcmp.eq.s32.totalorder %v3640, 1
        %vm3689 = vcmp.eq.s32.totalorder %v3641, 1
        %vm3690 = vcmp.eq.s32.totalorder %v3642, 1
        %vm3691 = vcmp.eq.s32.totalorder %v3643, 1
        %vm3692 = vcmp.eq.s32.totalorder %v3644, 1
        %vm3693 = vcmp.eq.s32.totalorder %v3645, 1
        %vm3694 = vcmp.eq.s32.totalorder %v3646, 1
        %vm3695 = vcmp.eq.s32.totalorder %v3647, 1
        %vm3696 = vcmp.eq.s32.totalorder %v3648, 1
        %vm3697 = vcmp.eq.s32.totalorder %v3649, 1
        %vm3698 = vcmp.eq.s32.totalorder %v3650, 1
        %vm3699 = vcmp.eq.s32.totalorder %v3651, 1
        %v3700 = vsel %vm3652, %v3556, 0.0
        %v3701 = vsel %vm3653, %v3557, 0.0
        %v3702 = vsel %vm3654, %v3558, 0.0
        %v3703 = vsel %vm3655, %v3559, 0.0
        %v3704 = vsel %vm3656, %v3560, 0.0
        %v3705 = vsel %vm3657, %v3561, 0.0
        %v3706 = vsel %vm3658, %v3562, 0.0
        %v3707 = vsel %vm3659, %v3563, 0.0
        %v3708 = vsel %vm3660, %v3564, 0.0
        %v3709 = vsel %vm3661, %v3565, 0.0
        %v3710 = vsel %vm3662, %v3566, 0.0
        %v3711 = vsel %vm3663, %v3567, 0.0
        %v3712 = vsel %vm3664, %v3568, 0.0
        %v3713 = vsel %vm3665, %v3569, 0.0
        %v3714 = vsel %vm3666, %v3570, 0.0
        %v3715 = vsel %vm3667, %v3571, 0.0
        %v3716 = vsel %vm3668, %v3572, 0.0
        %v3717 = vsel %vm3669, %v3573, 0.0
        %v3718 = vsel %vm3670, %v3574, 0.0
        %v3719 = vsel %vm3671, %v3575, 0.0
        %v3720 = vsel %vm3672, %v3576, 0.0
        %v3721 = vsel %vm3673, %v3577, 0.0
        %v3722 = vsel %vm3674, %v3578, 0.0
        %v3723 = vsel %vm3675, %v3579, 0.0
        %v3724 = vsel %vm3676, %v3580, 0.0
        %v3725 = vsel %vm3677, %v3581, 0.0
        %v3726 = vsel %vm3678, %v3582, 0.0
        %v3727 = vsel %vm3679, %v3583, 0.0
        %v3728 = vsel %vm3680, %v3584, 0.0
        %v3729 = vsel %vm3681, %v3585, 0.0
        %v3730 = vsel %vm3682, %v3586, 0.0
        %v3731 = vsel %vm3683, %v3587, 0.0
        %v3732 = vsel %vm3684, %v3588, 0.0
        %v3733 = vsel %vm3685, %v3589, 0.0
        %v3734 = vsel %vm3686, %v3590, 0.0
        %v3735 = vsel %vm3687, %v3591, 0.0
        %v3736 = vsel %vm3688, %v3592, 0.0
        %v3737 = vsel %vm3689, %v3593, 0.0
        %v3738 = vsel %vm3690, %v3594, 0.0
        %v3739 = vsel %vm3691, %v3595, 0.0
        %v3740 = vsel %vm3692, %v3596, 0.0
        %v3741 = vsel %vm3693, %v3597, 0.0
        %v3742 = vsel %vm3694, %v3598, 0.0
        %v3743 = vsel %vm3695, %v3599, 0.0
        %v3744 = vsel %vm3696, %v3600, 0.0
        %v3745 = vsel %vm3697, %v3601, 0.0
        %v3746 = vsel %vm3698, %v3602, 0.0
        %v3747 = vsel %vm3699, %v3603, 0.0
        %v3748 = vpack.c.bf16 %v3701, %v3700
        %v3749 = vpack.c.bf16 %v3703, %v3702
        %v3750 = vpack.c.bf16 %v3705, %v3704
        %v3751 = vpack.c.bf16 %v3707, %v3706
        %v3752 = vpack.c.bf16 %v3709, %v3708
        %v3753 = vpack.c.bf16 %v3711, %v3710
        %v3754 = vpack.c.bf16 %v3713, %v3712
        %v3755 = vpack.c.bf16 %v3715, %v3714
        %v3756 = vpack.c.bf16 %v3717, %v3716
        %v3757 = vpack.c.bf16 %v3719, %v3718
        %v3758 = vpack.c.bf16 %v3721, %v3720
        %v3759 = vpack.c.bf16 %v3723, %v3722
        %v3760 = vpack.c.bf16 %v3725, %v3724
        %v3761 = vpack.c.bf16 %v3727, %v3726
        %v3762 = vpack.c.bf16 %v3729, %v3728
        %v3763 = vpack.c.bf16 %v3731, %v3730
        %v3764 = vpack.c.bf16 %v3733, %v3732
        %v3765 = vpack.c.bf16 %v3735, %v3734
        %v3766 = vpack.c.bf16 %v3737, %v3736
        %v3767 = vpack.c.bf16 %v3739, %v3738
        %v3768 = vpack.c.bf16 %v3741, %v3740
        %v3769 = vpack.c.bf16 %v3743, %v3742
        %v3770 = vpack.c.bf16 %v3745, %v3744
        %v3771 = vpack.c.bf16 %v3747, %v3746
        %v3796 = vunpack.c.l.b16 %v3748
        %v3797 = vunpack.c.h.b16 %v3748
        %v3798 = vunpack.c.l.b16 %v3749
        %v3799 = vunpack.c.h.b16 %v3749
        %v3800 = vunpack.c.l.b16 %v3750
        %v3801 = vunpack.c.h.b16 %v3750
        %v3802 = vunpack.c.l.b16 %v3751
        %v3803 = vunpack.c.h.b16 %v3751
        %v3804 = vunpack.c.l.b16 %v3752
        %v3805 = vunpack.c.h.b16 %v3752
        %v3806 = vunpack.c.l.b16 %v3753
        %v3807 = vunpack.c.h.b16 %v3753
        %v3808 = vunpack.c.l.b16 %v3754
        %v3809 = vunpack.c.h.b16 %v3754
        %v3810 = vunpack.c.l.b16 %v3755
        %v3811 = vunpack.c.h.b16 %v3755
        %v3812 = vunpack.c.l.b16 %v3756
        %v3813 = vunpack.c.h.b16 %v3756
        %v3814 = vunpack.c.l.b16 %v3757
        %v3815 = vunpack.c.h.b16 %v3757
        %v3816 = vunpack.c.l.b16 %v3758
        %v3817 = vunpack.c.h.b16 %v3758
        %v3818 = vunpack.c.l.b16 %v3759
        %v3819 = vunpack.c.h.b16 %v3759
        %v3820 = vunpack.c.l.b16 %v3760
        %v3821 = vunpack.c.h.b16 %v3760
        %v3822 = vunpack.c.l.b16 %v3761
        %v3823 = vunpack.c.h.b16 %v3761
        %v3824 = vunpack.c.l.b16 %v3762
        %v3825 = vunpack.c.h.b16 %v3762
        %v3826 = vunpack.c.l.b16 %v3763
        %v3827 = vunpack.c.h.b16 %v3763
        %v3828 = vunpack.c.l.b16 %v3764
        %v3829 = vunpack.c.h.b16 %v3764
        %v3830 = vunpack.c.l.b16 %v3765
        %v3831 = vunpack.c.h.b16 %v3765
        %v3832 = vunpack.c.l.b16 %v3766
        %v3833 = vunpack.c.h.b16 %v3766
        %v3834 = vunpack.c.l.b16 %v3767
        %v3835 = vunpack.c.h.b16 %v3767
        %v3836 = vunpack.c.l.b16 %v3768
        %v3837 = vunpack.c.h.b16 %v3768
        %v3838 = vunpack.c.l.b16 %v3769
        %v3839 = vunpack.c.h.b16 %v3769
        %v3840 = vunpack.c.l.b16 %v3770
        %v3841 = vunpack.c.h.b16 %v3770
        %v3842 = vunpack.c.l.b16 %v3771
        %v3843 = vunpack.c.h.b16 %v3771
        %v3844 = vpack.c.b16 %v3796, %v3796
        %v3845 = vpack.c.b16 %v3797, %v3797
        %v3846 = vpack.c.b16 %v3798, %v3798
        %v3847 = vpack.c.b16 %v3799, %v3799
        %v3848 = vpack.c.b16 %v3800, %v3800
        %v3849 = vpack.c.b16 %v3801, %v3801
        %v3850 = vpack.c.b16 %v3802, %v3802
        %v3851 = vpack.c.b16 %v3803, %v3803
        %v3852 = vpack.c.b16 %v3804, %v3804
        %v3853 = vpack.c.b16 %v3805, %v3805
        %v3854 = vpack.c.b16 %v3806, %v3806
        %v3855 = vpack.c.b16 %v3807, %v3807
        %v3856 = vpack.c.b16 %v3808, %v3808
        %v3857 = vpack.c.b16 %v3809, %v3809
        %v3858 = vpack.c.b16 %v3810, %v3810
        %v3859 = vpack.c.b16 %v3811, %v3811
        %v3860 = vpack.c.b16 %v3812, %v3812
        %v3861 = vpack.c.b16 %v3813, %v3813
        %v3862 = vpack.c.b16 %v3814, %v3814
        %v3863 = vpack.c.b16 %v3815, %v3815
        %v3864 = vpack.c.b16 %v3816, %v3816
        %v3865 = vpack.c.b16 %v3817, %v3817
        %v3866 = vpack.c.b16 %v3818, %v3818
        %v3867 = vpack.c.b16 %v3819, %v3819
        %v3868 = vpack.c.b16 %v3820, %v3820
        %v3869 = vpack.c.b16 %v3821, %v3821
        %v3870 = vpack.c.b16 %v3822, %v3822
        %v3871 = vpack.c.b16 %v3823, %v3823
        %v3872 = vpack.c.b16 %v3824, %v3824
        %v3873 = vpack.c.b16 %v3825, %v3825
        %v3874 = vpack.c.b16 %v3826, %v3826
        %v3875 = vpack.c.b16 %v3827, %v3827
        %v3876 = vpack.c.b16 %v3828, %v3828
        %v3877 = vpack.c.b16 %v3829, %v3829
        %v3878 = vpack.c.b16 %v3830, %v3830
        %v3879 = vpack.c.b16 %v3831, %v3831
        %v3880 = vpack.c.b16 %v3832, %v3832
        %v3881 = vpack.c.b16 %v3833, %v3833
        %v3882 = vpack.c.b16 %v3834, %v3834
        %v3883 = vpack.c.b16 %v3835, %v3835
        %v3884 = vpack.c.b16 %v3836, %v3836
        %v3885 = vpack.c.b16 %v3837, %v3837
        %v3886 = vpack.c.b16 %v3838, %v3838
        %v3887 = vpack.c.b16 %v3839, %v3839
        %v3888 = vpack.c.b16 %v3840, %v3840
        %v3889 = vpack.c.b16 %v3841, %v3841
        %v3890 = vpack.c.b16 %v3842, %v3842
        %v3891 = vpack.c.b16 %v3843, %v3843
        %3940 = vst.msk [vmem:[#allocation2 + $0x10] sm:$0xf] %vm371, %v3844
        %3941 = vst.msk [vmem:[#allocation2 + $0x14] sm:$0xf] %vm371, %v3845
        %3942 = vst.msk [vmem:[#allocation2 + $0x18] sm:$0xf] %vm371, %v3846
        %3943 = vst.msk [vmem:[#allocation2 + $0x1c] sm:$0xf] %vm371, %v3847
        %3944 = vst.msk [vmem:[#allocation2 + $0x20] sm:$0xf] %vm371, %v3848
        %3945 = vst.msk [vmem:[#allocation2 + $0x24] sm:$0xf] %vm371, %v3849
        %3946 = vst.msk [vmem:[#allocation2 + $0x28] sm:$0xf] %vm371, %v3850
        %3947 = vst.msk [vmem:[#allocation2 + $0x2c] sm:$0xf] %vm371, %v3851
        %3948 = vst.msk [vmem:[#allocation2 + $0x30] sm:$0xf] %vm371, %v3852
        %3949 = vst.msk [vmem:[#allocation2 + $0x34] sm:$0xf] %vm371, %v3853
        %3950 = vst.msk [vmem:[#allocation2 + $0x38] sm:$0xf] %vm371, %v3854
        %3951 = vst.msk [vmem:[#allocation2 + $0x3c] sm:$0xf] %vm371, %v3855
        %3952 = vst.msk [vmem:[#allocation2 + $0x40] sm:$0xf] %vm371, %v3856
        %3953 = vst.msk [vmem:[#allocation2 + $0x44] sm:$0xf] %vm371, %v3857
        %3954 = vst.msk [vmem:[#allocation2 + $0x48] sm:$0xf] %vm371, %v3858
        %3955 = vst.msk [vmem:[#allocation2 + $0x4c] sm:$0xf] %vm371, %v3859
        %3956 = vst.msk [vmem:[#allocation2 + $0x50] sm:$0xf] %vm371, %v3860
        %3957 = vst.msk [vmem:[#allocation2 + $0x54] sm:$0xf] %vm371, %v3861
        %3958 = vst.msk [vmem:[#allocation2 + $0x58] sm:$0xf] %vm371, %v3862
        %3959 = vst.msk [vmem:[#allocation2 + $0x5c] sm:$0xf] %vm371, %v3863
        %3960 = vst.msk [vmem:[#allocation2 + $0x60] sm:$0xf] %vm371, %v3864
        %3961 = vst.msk [vmem:[#allocation2 + $0x64] sm:$0xf] %vm371, %v3865
        %3962 = vst.msk [vmem:[#allocation2 + $0x68] sm:$0xf] %vm371, %v3866
        %3963 = vst.msk [vmem:[#allocation2 + $0x6c] sm:$0xf] %vm371, %v3867
        %3964 = vst.msk [vmem:[#allocation2 + $0x70] sm:$0xf] %vm371, %v3868
        %3965 = vst.msk [vmem:[#allocation2 + $0x74] sm:$0xf] %vm371, %v3869
        %3966 = vst.msk [vmem:[#allocation2 + $0x78] sm:$0xf] %vm371, %v3870
        %3967 = vst.msk [vmem:[#allocation2 + $0x7c] sm:$0xf] %vm371, %v3871
        %3968 = vst.msk [vmem:[#allocation2 + $0x80] sm:$0xf] %vm371, %v3872
        %3969 = vst.msk [vmem:[#allocation2 + $0x84] sm:$0xf] %vm371, %v3873
        %3970 = vst.msk [vmem:[#allocation2 + $0x88] sm:$0xf] %vm371, %v3874
        %3971 = vst.msk [vmem:[#allocation2 + $0x8c] sm:$0xf] %vm371, %v3875
        %3972 = vst.msk [vmem:[#allocation2 + $0x90] sm:$0xf] %vm371, %v3876
        %3973 = vst.msk [vmem:[#allocation2 + $0x94] sm:$0xf] %vm371, %v3877
        %3974 = vst.msk [vmem:[#allocation2 + $0x98] sm:$0xf] %vm371, %v3878
        %3975 = vst.msk [vmem:[#allocation2 + $0x9c] sm:$0xf] %vm371, %v3879
        %3976 = vst.msk [vmem:[#allocation2 + $0xa0] sm:$0xf] %vm371, %v3880
        %3977 = vst.msk [vmem:[#allocation2 + $0xa4] sm:$0xf] %vm371, %v3881
        %3978 = vst.msk [vmem:[#allocation2 + $0xa8] sm:$0xf] %vm371, %v3882
        %3979 = vst.msk [vmem:[#allocation2 + $0xac] sm:$0xf] %vm371, %v3883
        %3980 = vst.msk [vmem:[#allocation2 + $0xb0] sm:$0xf] %vm371, %v3884
        %3981 = vst.msk [vmem:[#allocation2 + $0xb4] sm:$0xf] %vm371, %v3885
        %3982 = vst.msk [vmem:[#allocation2 + $0xb8] sm:$0xf] %vm371, %v3886
        %3983 = vst.msk [vmem:[#allocation2 + $0xbc] sm:$0xf] %vm371, %v3887
        %3984 = vst.msk [vmem:[#allocation2 + $0xc0] sm:$0xf] %vm371, %v3888
        %3985 = vst.msk [vmem:[#allocation2 + $0xc4] sm:$0xf] %vm371, %v3889
        %3986 = vst.msk [vmem:[#allocation2 + $0xc8] sm:$0xf] %vm371, %v3890
        %3987 = vst.msk [vmem:[#allocation2 + $0xcc] sm:$0xf] %vm371, %v3891
        %v3988 = vld [vmem:[#allocation2] sm:$0x8]
        %v3989 = vld [vmem:[#allocation2 + $0x4] sm:$0xf]
        %v3990 = vld [vmem:[#allocation2 + $0x8] sm:$0xf]
        %v3991 = vld [vmem:[#allocation2 + $0xc] sm:$0xf]
        %v3992 = vld [vmem:[#allocation2 + $0x10] sm:$0xf]
        %v3993 = vld [vmem:[#allocation2 + $0x14] sm:$0xf]
        %v3994 = vld [vmem:[#allocation2 + $0x18] sm:$0xf]
        %v3995 = vld [vmem:[#allocation2 + $0x1c] sm:$0xf]
        %v3996 = vld [vmem:[#allocation2 + $0x20] sm:$0xf]
        %v3997 = vld [vmem:[#allocation2 + $0x24] sm:$0xf]
        %v3998 = vld [vmem:[#allocation2 + $0x28] sm:$0xf]
        %v3999 = vld [vmem:[#allocation2 + $0x2c] sm:$0xf]
        %v4000 = vld [vmem:[#allocation2 + $0x30] sm:$0xf]
        %v4001 = vld [vmem:[#allocation2 + $0x34] sm:$0xf]
        %v4002 = vld [vmem:[#allocation2 + $0x38] sm:$0xf]
        %v4003 = vld [vmem:[#allocation2 + $0x3c] sm:$0xf]
        %v4004 = vld [vmem:[#allocation2 + $0x40] sm:$0xf]
        %v4005 = vld [vmem:[#allocation2 + $0x44] sm:$0xf]
        %v4006 = vld [vmem:[#allocation2 + $0x48] sm:$0xf]
        %v4007 = vld [vmem:[#allocation2 + $0x4c] sm:$0xf]
        %v4008 = vld [vmem:[#allocation2 + $0x50] sm:$0xf]
        %v4009 = vld [vmem:[#allocation2 + $0x54] sm:$0xf]
        %v4010 = vld [vmem:[#allocation2 + $0x58] sm:$0xf]
        %v4011 = vld [vmem:[#allocation2 + $0x5c] sm:$0xf]
        %v4012 = vld [vmem:[#allocation2 + $0x60] sm:$0xf]
        %v4013 = vld [vmem:[#allocation2 + $0x64] sm:$0xf]
        %v4014 = vld [vmem:[#allocation2 + $0x68] sm:$0xf]
        %v4015 = vld [vmem:[#allocation2 + $0x6c] sm:$0xf]
        %v4016 = vld [vmem:[#allocation2 + $0x70] sm:$0xf]
        %v4017 = vld [vmem:[#allocation2 + $0x74] sm:$0xf]
        %v4018 = vld [vmem:[#allocation2 + $0x78] sm:$0xf]
        %v4019 = vld [vmem:[#allocation2 + $0x7c] sm:$0xf]
        %v4020 = vld [vmem:[#allocation2 + $0x80] sm:$0xf]
        %v4021 = vld [vmem:[#allocation2 + $0x84] sm:$0xf]
        %v4022 = vld [vmem:[#allocation2 + $0x88] sm:$0xf]
        %v4023 = vld [vmem:[#allocation2 + $0x8c] sm:$0xf]
        %v4024 = vld [vmem:[#allocation2 + $0x90] sm:$0xf]
        %v4025 = vld [vmem:[#allocation2 + $0x94] sm:$0xf]
        %v4026 = vld [vmem:[#allocation2 + $0x98] sm:$0xf]
        %v4027 = vld [vmem:[#allocation2 + $0x9c] sm:$0xf]
        %v4028 = vld [vmem:[#allocation2 + $0xa0] sm:$0xf]
        %v4029 = vld [vmem:[#allocation2 + $0xa4] sm:$0xf]
        %v4030 = vld [vmem:[#allocation2 + $0xa8] sm:$0xf]
        %v4031 = vld [vmem:[#allocation2 + $0xac] sm:$0xf]
        %v4032 = vld [vmem:[#allocation2 + $0xb0] sm:$0xf]
        %v4033 = vld [vmem:[#allocation2 + $0xb4] sm:$0xf]
        %v4034 = vld [vmem:[#allocation2 + $0xb8] sm:$0xf]
        %v4035 = vld [vmem:[#allocation2 + $0xbc] sm:$0xf]
        %v4036 = vld [vmem:[#allocation2 + $0xc0] sm:$0xf]
        %v4037 = vld [vmem:[#allocation2 + $0xc4] sm:$0xf]
        %v4038 = vld [vmem:[#allocation2 + $0xc8] sm:$0xf]
        %v4039 = vld [vmem:[#allocation2 + $0xcc] sm:$0xf]
        %v4040 = vld [vmem:[#allocation2 + $0xd0] sm:$0xf]
        %v4041 = vld [vmem:[#allocation2 + $0xd4] sm:$0xf]
        %v4042 = vld [vmem:[#allocation2 + $0xd8] sm:$0xf]
        %v4043 = vld [vmem:[#allocation2 + $0xdc] sm:$0x1]
        %v4099 = vunpack.c.l.b16 %v3988
        %v4100 = vunpack.c.l.b16 %v3989
        %v4101 = vunpack.c.l.b16 %v3990
        %v4102 = vunpack.c.l.b16 %v3991
        %v4103 = vunpack.c.l.b16 %v3992
        %v4104 = vunpack.c.l.b16 %v3993
        %v4105 = vunpack.c.l.b16 %v3994
        %v4106 = vunpack.c.l.b16 %v3995
        %v4107 = vunpack.c.l.b16 %v3996
        %v4108 = vunpack.c.l.b16 %v3997
        %v4109 = vunpack.c.l.b16 %v3998
        %v4110 = vunpack.c.l.b16 %v3999
        %v4111 = vunpack.c.l.b16 %v4000
        %v4112 = vunpack.c.l.b16 %v4001
        %v4113 = vunpack.c.l.b16 %v4002
        %v4114 = vunpack.c.l.b16 %v4003
        %v4115 = vunpack.c.l.b16 %v4004
        %v4116 = vunpack.c.l.b16 %v4005
        %v4117 = vunpack.c.l.b16 %v4006
        %v4118 = vunpack.c.l.b16 %v4007
        %v4119 = vunpack.c.l.b16 %v4008
        %v4120 = vunpack.c.l.b16 %v4009
        %v4121 = vunpack.c.l.b16 %v4010
        %v4122 = vunpack.c.l.b16 %v4011
        %v4123 = vunpack.c.l.b16 %v4012
        %v4124 = vunpack.c.l.b16 %v4013
        %v4125 = vunpack.c.l.b16 %v4014
        %v4126 = vunpack.c.l.b16 %v4015
        %v4127 = vunpack.c.l.b16 %v4016
        %v4128 = vunpack.c.l.b16 %v4017
        %v4129 = vunpack.c.l.b16 %v4018
        %v4130 = vunpack.c.l.b16 %v4019
        %v4131 = vunpack.c.l.b16 %v4020
        %v4132 = vunpack.c.l.b16 %v4021
        %v4133 = vunpack.c.l.b16 %v4022
        %v4134 = vunpack.c.l.b16 %v4023
        %v4135 = vunpack.c.l.b16 %v4024
        %v4136 = vunpack.c.l.b16 %v4025
        %v4137 = vunpack.c.l.b16 %v4026
        %v4138 = vunpack.c.l.b16 %v4027
        %v4139 = vunpack.c.l.b16 %v4028
        %v4140 = vunpack.c.l.b16 %v4029
        %v4141 = vunpack.c.l.b16 %v4030
        %v4142 = vunpack.c.l.b16 %v4031
        %v4143 = vunpack.c.l.b16 %v4032
        %v4144 = vunpack.c.l.b16 %v4033
        %v4145 = vunpack.c.l.b16 %v4034
        %v4146 = vunpack.c.l.b16 %v4035
        %v4147 = vunpack.c.l.b16 %v4036
        %v4148 = vunpack.c.l.b16 %v4037
        %v4149 = vunpack.c.l.b16 %v4038
        %v4150 = vunpack.c.l.b16 %v4039
        %v4151 = vunpack.c.l.b16 %v4040
        %v4152 = vunpack.c.l.b16 %v4041
        %v4153 = vunpack.c.l.b16 %v4042
        %v4154 = vpack.c.b16 %v4100, %v4099
        %v4155 = vpack.c.b16 %v4102, %v4101
        %v4156 = vpack.c.b16 %v4104, %v4103
        %v4157 = vpack.c.b16 %v4106, %v4105
        %v4158 = vpack.c.b16 %v4108, %v4107
        %v4159 = vpack.c.b16 %v4110, %v4109
        %v4160 = vpack.c.b16 %v4112, %v4111
        %v4161 = vpack.c.b16 %v4114, %v4113
        %v4162 = vpack.c.b16 %v4116, %v4115
        %v4163 = vpack.c.b16 %v4118, %v4117
        %v4164 = vpack.c.b16 %v4120, %v4119
        %v4165 = vpack.c.b16 %v4122, %v4121
        %v4166 = vpack.c.b16 %v4124, %v4123
        %v4167 = vpack.c.b16 %v4126, %v4125
        %v4168 = vpack.c.b16 %v4128, %v4127
        %v4169 = vpack.c.b16 %v4130, %v4129
        %v4170 = vpack.c.b16 %v4132, %v4131
        %v4171 = vpack.c.b16 %v4134, %v4133
        %v4172 = vpack.c.b16 %v4136, %v4135
        %v4173 = vpack.c.b16 %v4138, %v4137
        %v4174 = vpack.c.b16 %v4140, %v4139
        %v4175 = vpack.c.b16 %v4142, %v4141
        %v4176 = vpack.c.b16 %v4144, %v4143
        %v4177 = vpack.c.b16 %v4146, %v4145
        %v4178 = vpack.c.b16 %v4148, %v4147
        %v4179 = vpack.c.b16 %v4150, %v4149
        %v4180 = vpack.c.b16 %v4152, %v4151
        %v4181 = vpack.c.b16 %v4153, %v4153
        %v4182 = vpack.c.b16 %v4101, %v4100
        %v4183 = vpack.c.b16 %v4103, %v4102
        %v4184 = vpack.c.b16 %v4105, %v4104
        %v4185 = vpack.c.b16 %v4107, %v4106
        %v4186 = vpack.c.b16 %v4109, %v4108
        %v4187 = vpack.c.b16 %v4111, %v4110
        %v4188 = vpack.c.b16 %v4113, %v4112
        %v4189 = vpack.c.b16 %v4115, %v4114
        %v4190 = vpack.c.b16 %v4117, %v4116
        %v4191 = vpack.c.b16 %v4119, %v4118
        %v4192 = vpack.c.b16 %v4121, %v4120
        %v4193 = vpack.c.b16 %v4123, %v4122
        %v4194 = vpack.c.b16 %v4125, %v4124
        %v4195 = vpack.c.b16 %v4127, %v4126
        %v4196 = vpack.c.b16 %v4129, %v4128
        %v4197 = vpack.c.b16 %v4131, %v4130
        %v4198 = vpack.c.b16 %v4133, %v4132
        %v4199 = vpack.c.b16 %v4135, %v4134
        %v4200 = vpack.c.b16 %v4137, %v4136
        %v4201 = vpack.c.b16 %v4139, %v4138
        %v4202 = vpack.c.b16 %v4141, %v4140
        %v4203 = vpack.c.b16 %v4143, %v4142
        %v4204 = vpack.c.b16 %v4145, %v4144
        %v4205 = vpack.c.b16 %v4147, %v4146
        %v4206 = vpack.c.b16 %v4149, %v4148
        %v4207 = vpack.c.b16 %v4151, %v4150
        %v4208 = vpack.c.b16 %v4153, %v4152
        %v4210 = vshrl.u32 %v4182, 16
        %v4212 = vrot.slane %v4210, 4
        %v4213 = vshll.u32 %v4182, 16
        %v4215 = vrot.slane %v4213, 5
        %v4216 = vor.u32 %v4212, %v4215
        %v4218 = vshrl.u32 %v4183, 16
        %v4220 = vrot.slane %v4218, 4
        %v4221 = vshll.u32 %v4183, 16
        %v4223 = vrot.slane %v4221, 5
        %v4224 = vor.u32 %v4220, %v4223
        %v4225 = vsel %vm1679, %v4216, %v4224
        %v4227 = vshrl.u32 %v4184, 16
        %v4229 = vrot.slane %v4227, 4
        %v4230 = vshll.u32 %v4184, 16
        %v4232 = vrot.slane %v4230, 5
        %v4233 = vor.u32 %v4229, %v4232
        %v4234 = vsel %vm1679, %v4224, %v4233
        %v4236 = vshrl.u32 %v4185, 16
        %v4238 = vrot.slane %v4236, 4
        %v4239 = vshll.u32 %v4185, 16
        %v4241 = vrot.slane %v4239, 5
        %v4242 = vor.u32 %v4238, %v4241
        %v4243 = vsel %vm1679, %v4233, %v4242
        %v4245 = vshrl.u32 %v4186, 16
        %v4247 = vrot.slane %v4245, 4
        %v4248 = vshll.u32 %v4186, 16
        %v4250 = vrot.slane %v4248, 5
        %v4251 = vor.u32 %v4247, %v4250
        %v4252 = vsel %vm1679, %v4242, %v4251
        %v4254 = vshrl.u32 %v4187, 16
        %v4256 = vrot.slane %v4254, 4
        %v4257 = vshll.u32 %v4187, 16
        %v4259 = vrot.slane %v4257, 5
        %v4260 = vor.u32 %v4256, %v4259
        %v4261 = vsel %vm1679, %v4251, %v4260
        %v4263 = vshrl.u32 %v4188, 16
        %v4265 = vrot.slane %v4263, 4
        %v4266 = vshll.u32 %v4188, 16
        %v4268 = vrot.slane %v4266, 5
        %v4269 = vor.u32 %v4265, %v4268
        %v4270 = vsel %vm1679, %v4260, %v4269
        %v4272 = vshrl.u32 %v4189, 16
        %v4274 = vrot.slane %v4272, 4
        %v4275 = vshll.u32 %v4189, 16
        %v4277 = vrot.slane %v4275, 5
        %v4278 = vor.u32 %v4274, %v4277
        %v4279 = vsel %vm1679, %v4269, %v4278
        %v4281 = vshrl.u32 %v4190, 16
        %v4283 = vrot.slane %v4281, 4
        %v4284 = vshll.u32 %v4190, 16
        %v4286 = vrot.slane %v4284, 5
        %v4287 = vor.u32 %v4283, %v4286
        %v4288 = vsel %vm1679, %v4278, %v4287
        %v4290 = vshrl.u32 %v4191, 16
        %v4292 = vrot.slane %v4290, 4
        %v4293 = vshll.u32 %v4191, 16
        %v4295 = vrot.slane %v4293, 5
        %v4296 = vor.u32 %v4292, %v4295
        %v4297 = vsel %vm1679, %v4287, %v4296
        %v4299 = vshrl.u32 %v4192, 16
        %v4301 = vrot.slane %v4299, 4
        %v4302 = vshll.u32 %v4192, 16
        %v4304 = vrot.slane %v4302, 5
        %v4305 = vor.u32 %v4301, %v4304
        %v4306 = vsel %vm1679, %v4296, %v4305
        %v4308 = vshrl.u32 %v4193, 16
        %v4310 = vrot.slane %v4308, 4
        %v4311 = vshll.u32 %v4193, 16
        %v4313 = vrot.slane %v4311, 5
        %v4314 = vor.u32 %v4310, %v4313
        %v4315 = vsel %vm1679, %v4305, %v4314
        %v4317 = vshrl.u32 %v4194, 16
        %v4319 = vrot.slane %v4317, 4
        %v4320 = vshll.u32 %v4194, 16
        %v4322 = vrot.slane %v4320, 5
        %v4323 = vor.u32 %v4319, %v4322
        %v4324 = vsel %vm1679, %v4314, %v4323
        %v4326 = vshrl.u32 %v4195, 16
        %v4328 = vrot.slane %v4326, 4
        %v4329 = vshll.u32 %v4195, 16
        %v4331 = vrot.slane %v4329, 5
        %v4332 = vor.u32 %v4328, %v4331
        %v4333 = vsel %vm1679, %v4323, %v4332
        %v4335 = vshrl.u32 %v4196, 16
        %v4337 = vrot.slane %v4335, 4
        %v4338 = vshll.u32 %v4196, 16
        %v4340 = vrot.slane %v4338, 5
        %v4341 = vor.u32 %v4337, %v4340
        %v4342 = vsel %vm1679, %v4332, %v4341
        %v4344 = vshrl.u32 %v4197, 16
        %v4346 = vrot.slane %v4344, 4
        %v4347 = vshll.u32 %v4197, 16
        %v4349 = vrot.slane %v4347, 5
        %v4350 = vor.u32 %v4346, %v4349
        %v4351 = vsel %vm1679, %v4341, %v4350
        %v4353 = vshrl.u32 %v4198, 16
        %v4355 = vrot.slane %v4353, 4
        %v4356 = vshll.u32 %v4198, 16
        %v4358 = vrot.slane %v4356, 5
        %v4359 = vor.u32 %v4355, %v4358
        %v4360 = vsel %vm1679, %v4350, %v4359
        %v4362 = vshrl.u32 %v4199, 16
        %v4364 = vrot.slane %v4362, 4
        %v4365 = vshll.u32 %v4199, 16
        %v4367 = vrot.slane %v4365, 5
        %v4368 = vor.u32 %v4364, %v4367
        %v4369 = vsel %vm1679, %v4359, %v4368
        %v4371 = vshrl.u32 %v4200, 16
        %v4373 = vrot.slane %v4371, 4
        %v4374 = vshll.u32 %v4200, 16
        %v4376 = vrot.slane %v4374, 5
        %v4377 = vor.u32 %v4373, %v4376
        %v4378 = vsel %vm1679, %v4368, %v4377
        %v4380 = vshrl.u32 %v4201, 16
        %v4382 = vrot.slane %v4380, 4
        %v4383 = vshll.u32 %v4201, 16
        %v4385 = vrot.slane %v4383, 5
        %v4386 = vor.u32 %v4382, %v4385
        %v4387 = vsel %vm1679, %v4377, %v4386
        %v4389 = vshrl.u32 %v4202, 16
        %v4391 = vrot.slane %v4389, 4
        %v4392 = vshll.u32 %v4202, 16
        %v4394 = vrot.slane %v4392, 5
        %v4395 = vor.u32 %v4391, %v4394
        %v4396 = vsel %vm1679, %v4386, %v4395
        %v4398 = vshrl.u32 %v4203, 16
        %v4400 = vrot.slane %v4398, 4
        %v4401 = vshll.u32 %v4203, 16
        %v4403 = vrot.slane %v4401, 5
        %v4404 = vor.u32 %v4400, %v4403
        %v4405 = vsel %vm1679, %v4395, %v4404
        %v4407 = vshrl.u32 %v4204, 16
        %v4409 = vrot.slane %v4407, 4
        %v4410 = vshll.u32 %v4204, 16
        %v4412 = vrot.slane %v4410, 5
        %v4413 = vor.u32 %v4409, %v4412
        %v4414 = vsel %vm1679, %v4404, %v4413
        %v4416 = vshrl.u32 %v4205, 16
        %v4418 = vrot.slane %v4416, 4
        %v4419 = vshll.u32 %v4205, 16
        %v4421 = vrot.slane %v4419, 5
        %v4422 = vor.u32 %v4418, %v4421
        %v4423 = vsel %vm1679, %v4413, %v4422
        %v4425 = vshrl.u32 %v4206, 16
        %v4427 = vrot.slane %v4425, 4
        %v4428 = vshll.u32 %v4206, 16
        %v4430 = vrot.slane %v4428, 5
        %v4431 = vor.u32 %v4427, %v4430
        %v4432 = vsel %vm1679, %v4422, %v4431
        %v4434 = vshrl.u32 %v4207, 16
        %v4436 = vrot.slane %v4434, 4
        %v4437 = vshll.u32 %v4207, 16
        %v4439 = vrot.slane %v4437, 5
        %v4440 = vor.u32 %v4436, %v4439
        %v4441 = vsel %vm1679, %v4431, %v4440
        %v4443 = vshrl.u32 %v4208, 16
        %v4445 = vrot.slane %v4443, 4
        %v4446 = vshll.u32 %v4208, 16
        %v4448 = vrot.slane %v4446, 5
        %v4449 = vor.u32 %v4445, %v4448
        %v4450 = vsel %vm1679, %v4440, %v4449
        %4451 = vrot.lane.b32.xlu0 %v4216, 64
        %v4452 = vpop.permute.xlu0 %4451
        %4453 = vrot.lane.b32.xlu0 %v4225, 64
        %v4454 = vpop.permute.xlu0 %4453
        %4455 = vrot.lane.b32.xlu0 %v4234, 64
        %v4456 = vpop.permute.xlu0 %4455
        %4457 = vrot.lane.b32.xlu0 %v4243, 64
        %v4458 = vpop.permute.xlu0 %4457
        %4459 = vrot.lane.b32.xlu0 %v4252, 64
        %v4460 = vpop.permute.xlu0 %4459
        %4461 = vrot.lane.b32.xlu0 %v4261, 64
        %v4462 = vpop.permute.xlu0 %4461
        %4463 = vrot.lane.b32.xlu0 %v4270, 64
        %v4464 = vpop.permute.xlu0 %4463
        %4465 = vrot.lane.b32.xlu0 %v4279, 64
        %v4466 = vpop.permute.xlu0 %4465
        %4467 = vrot.lane.b32.xlu0 %v4288, 64
        %v4468 = vpop.permute.xlu0 %4467
        %4469 = vrot.lane.b32.xlu0 %v4297, 64
        %v4470 = vpop.permute.xlu0 %4469
        %4471 = vrot.lane.b32.xlu0 %v4306, 64
        %v4472 = vpop.permute.xlu0 %4471
        %4473 = vrot.lane.b32.xlu0 %v4315, 64
        %v4474 = vpop.permute.xlu0 %4473
        %4475 = vrot.lane.b32.xlu0 %v4324, 64
        %v4476 = vpop.permute.xlu0 %4475
        %4477 = vrot.lane.b32.xlu0 %v4333, 64
        %v4478 = vpop.permute.xlu0 %4477
        %4479 = vrot.lane.b32.xlu0 %v4342, 64
        %v4480 = vpop.permute.xlu0 %4479
        %4481 = vrot.lane.b32.xlu0 %v4351, 64
        %v4482 = vpop.permute.xlu0 %4481
        %4483 = vrot.lane.b32.xlu0 %v4360, 64
        %v4484 = vpop.permute.xlu0 %4483
        %4485 = vrot.lane.b32.xlu0 %v4369, 64
        %v4486 = vpop.permute.xlu0 %4485
        %4487 = vrot.lane.b32.xlu0 %v4378, 64
        %v4488 = vpop.permute.xlu0 %4487
        %4489 = vrot.lane.b32.xlu0 %v4387, 64
        %v4490 = vpop.permute.xlu0 %4489
        %4491 = vrot.lane.b32.xlu0 %v4396, 64
        %v4492 = vpop.permute.xlu0 %4491
        %4493 = vrot.lane.b32.xlu0 %v4405, 64
        %v4494 = vpop.permute.xlu0 %4493
        %4495 = vrot.lane.b32.xlu0 %v4414, 64
        %v4496 = vpop.permute.xlu0 %4495
        %4497 = vrot.lane.b32.xlu0 %v4423, 64
        %v4498 = vpop.permute.xlu0 %4497
        %4499 = vrot.lane.b32.xlu0 %v4432, 64
        %v4500 = vpop.permute.xlu0 %4499
        %4501 = vrot.lane.b32.xlu0 %v4441, 64
        %v4502 = vpop.permute.xlu0 %4501
        %4503 = vrot.lane.b32.xlu0 %v4450, 64
        %v4504 = vpop.permute.xlu0 %4503
        %4505 = vrot.lane.b32.xlu0 %v4449, 64
        %v4506 = vpop.permute.xlu0 %4505
        %v4508 = vunpack.c.l.b16 %v4043
        %v4509 = vpack.c.b16 %v4508, %v4508
        %v4510 = vrot.slane %v4182, 5
        %v4511 = vrot.slane %v4183, 5
        %v4512 = vsel %vm1981, %v4510, %v4511
        %v4513 = vrot.slane %v4184, 5
        %v4514 = vsel %vm1981, %v4511, %v4513
        %v4515 = vrot.slane %v4185, 5
        %v4516 = vsel %vm1981, %v4513, %v4515
        %v4517 = vrot.slane %v4186, 5
        %v4518 = vsel %vm1981, %v4515, %v4517
        %v4519 = vrot.slane %v4187, 5
        %v4520 = vsel %vm1981, %v4517, %v4519
        %v4521 = vrot.slane %v4188, 5
        %v4522 = vsel %vm1981, %v4519, %v4521
        %v4523 = vrot.slane %v4189, 5
        %v4524 = vsel %vm1981, %v4521, %v4523
        %v4525 = vrot.slane %v4190, 5
        %v4526 = vsel %vm1981, %v4523, %v4525
        %v4527 = vrot.slane %v4191, 5
        %v4528 = vsel %vm1981, %v4525, %v4527
        %v4529 = vrot.slane %v4192, 5
        %v4530 = vsel %vm1981, %v4527, %v4529
        %v4531 = vrot.slane %v4193, 5
        %v4532 = vsel %vm1981, %v4529, %v4531
        %v4533 = vrot.slane %v4194, 5
        %v4534 = vsel %vm1981, %v4531, %v4533
        %v4535 = vrot.slane %v4195, 5
        %v4536 = vsel %vm1981, %v4533, %v4535
        %v4537 = vrot.slane %v4196, 5
        %v4538 = vsel %vm1981, %v4535, %v4537
        %v4539 = vrot.slane %v4197, 5
        %v4540 = vsel %vm1981, %v4537, %v4539
        %v4541 = vrot.slane %v4198, 5
        %v4542 = vsel %vm1981, %v4539, %v4541
        %v4543 = vrot.slane %v4199, 5
        %v4544 = vsel %vm1981, %v4541, %v4543
        %v4545 = vrot.slane %v4200, 5
        %v4546 = vsel %vm1981, %v4543, %v4545
        %v4547 = vrot.slane %v4201, 5
        %v4548 = vsel %vm1981, %v4545, %v4547
        %v4549 = vrot.slane %v4202, 5
        %v4550 = vsel %vm1981, %v4547, %v4549
        %v4551 = vrot.slane %v4203, 5
        %v4552 = vsel %vm1981, %v4549, %v4551
        %v4553 = vrot.slane %v4204, 5
        %v4554 = vsel %vm1981, %v4551, %v4553
        %v4555 = vrot.slane %v4205, 5
        %v4556 = vsel %vm1981, %v4553, %v4555
        %v4557 = vrot.slane %v4206, 5
        %v4558 = vsel %vm1981, %v4555, %v4557
        %v4559 = vrot.slane %v4207, 5
        %v4560 = vsel %vm1981, %v4557, %v4559
        %v4561 = vrot.slane %v4208, 5
        %v4562 = vsel %vm1981, %v4559, %v4561
        %v4563 = vrot.slane %v4509, 5
        %v4564 = vsel %vm1981, %v4561, %v4563
        %vm4565 = vcmask 523264
        %v4568 = vsel %vm4565, %v4154, %v4452
        %v4571 = vsel %vm4565, %v4155, %v4454
        %v4574 = vsel %vm4565, %v4156, %v4456
        %v4577 = vsel %vm4565, %v4157, %v4458
        %v4580 = vsel %vm4565, %v4158, %v4460
        %v4583 = vsel %vm4565, %v4159, %v4462
        %v4586 = vsel %vm4565, %v4160, %v4464
        %v4589 = vsel %vm4565, %v4161, %v4466
        %v4592 = vsel %vm4565, %v4162, %v4468
        %v4595 = vsel %vm4565, %v4163, %v4470
        %v4598 = vsel %vm4565, %v4164, %v4472
        %v4601 = vsel %vm4565, %v4165, %v4474
        %v4604 = vsel %vm4565, %v4166, %v4476
        %v4607 = vsel %vm4565, %v4167, %v4478
        %v4610 = vsel %vm4565, %v4168, %v4480
        %v4613 = vsel %vm4565, %v4169, %v4482
        %v4616 = vsel %vm4565, %v4170, %v4484
        %v4619 = vsel %vm4565, %v4171, %v4486
        %v4622 = vsel %vm4565, %v4172, %v4488
        %v4625 = vsel %vm4565, %v4173, %v4490
        %v4628 = vsel %vm4565, %v4174, %v4492
        %v4631 = vsel %vm4565, %v4175, %v4494
        %v4634 = vsel %vm4565, %v4176, %v4496
        %v4637 = vsel %vm4565, %v4177, %v4498
        %v4640 = vsel %vm4565, %v4178, %v4500
        %v4643 = vsel %vm4565, %v4179, %v4502
        %v4646 = vsel %vm4565, %v4180, %v4504
        %v4649 = vsel %vm4565, %v4181, %v4506
        %v4650 = vld [vmem:[%s4] sm:$0xf]
        %v4651 = vld [vmem:[%s4 + $0x4] sm:$0xf]
        %v4652 = vld [vmem:[%s4 + $0x8] sm:$0xf]
        %v4653 = vld [vmem:[%s4 + $0xc] sm:$0xf]
        %v4654 = vld [vmem:[%s4 + $0x10] sm:$0xf]
        %v4655 = vld [vmem:[%s4 + $0x14] sm:$0xf]
        %v4656 = vld [vmem:[%s4 + $0x18] sm:$0xf]
        %v4657 = vld [vmem:[%s4 + $0x1c] sm:$0xf]
        %v4658 = vld [vmem:[%s4 + $0x20] sm:$0xf]
        %v4659 = vld [vmem:[%s4 + $0x24] sm:$0xf]
        %v4660 = vld [vmem:[%s4 + $0x28] sm:$0xf]
        %v4661 = vld [vmem:[%s4 + $0x2c] sm:$0xf]
        %v4662 = vld [vmem:[%s4 + $0x30] sm:$0xf]
        %v4663 = vld [vmem:[%s4 + $0x34] sm:$0xf]
        %v4664 = vld [vmem:[%s4 + $0x38] sm:$0xf]
        %v4665 = vld [vmem:[%s4 + $0x3c] sm:$0xf]
        %v4666 = vld [vmem:[%s4 + $0x40] sm:$0xf]
        %v4667 = vld [vmem:[%s4 + $0x44] sm:$0xf]
        %v4668 = vld [vmem:[%s4 + $0x48] sm:$0xf]
        %v4669 = vld [vmem:[%s4 + $0x4c] sm:$0xf]
        %v4670 = vld [vmem:[%s4 + $0x50] sm:$0xf]
        %v4671 = vld [vmem:[%s4 + $0x54] sm:$0xf]
        %v4672 = vld [vmem:[%s4 + $0x58] sm:$0xf]
        %v4673 = vld [vmem:[%s4 + $0x5c] sm:$0xf]
        %s4674 = scalar_lea.vmem %s4, 96
        %v4675 = vld [vmem:[%s4674] sm:$0xf]
        %v4676 = vld [vmem:[%s4674 + $0x4] sm:$0xf]
        %v4677 = vld [vmem:[%s4674 + $0x8] sm:$0xf]
        %v4678 = vld [vmem:[%s4674 + $0xc] sm:$0xf]
        %v4679 = vld [vmem:[%s4674 + $0x10] sm:$0xf]
        %v4680 = vld [vmem:[%s4674 + $0x14] sm:$0xf]
        %v4681 = vld [vmem:[%s4674 + $0x18] sm:$0xf]
        %v4682 = vld [vmem:[%s4674 + $0x1c] sm:$0xf]
        %v4683 = vld [vmem:[%s4674 + $0x20] sm:$0xf]
        %v4684 = vld [vmem:[%s4674 + $0x24] sm:$0xf]
        %v4685 = vld [vmem:[%s4674 + $0x28] sm:$0xf]
        %v4686 = vld [vmem:[%s4674 + $0x2c] sm:$0xf]
        %v4687 = vld [vmem:[%s4674 + $0x30] sm:$0xf]
        %v4688 = vld [vmem:[%s4674 + $0x34] sm:$0xf]
        %v4689 = vld [vmem:[%s4674 + $0x38] sm:$0xf]
        %v4690 = vld [vmem:[%s4674 + $0x3c] sm:$0xf]
        %v4691 = vld [vmem:[%s4674 + $0x40] sm:$0xf]
        %v4692 = vld [vmem:[%s4674 + $0x44] sm:$0xf]
        %v4693 = vld [vmem:[%s4674 + $0x48] sm:$0xf]
        %v4694 = vld [vmem:[%s4674 + $0x4c] sm:$0xf]
        %v4695 = vld [vmem:[%s4674 + $0x50] sm:$0xf]
        %v4696 = vld [vmem:[%s4674 + $0x54] sm:$0xf]
        %v4697 = vld [vmem:[%s4674 + $0x58] sm:$0xf]
        %v4698 = vld [vmem:[%s4674 + $0x5c] sm:$0xf]
        %v4699 = vshrl.u32 %v4571, 16
        %v4701 = vrot.slane %v4699, 7
        %v4702 = vshrl.u32 %v4574, 16
        %v4704 = vrot.slane %v4702, 7
        %v4705 = vshll.u32 %v4574, 16
        %v4707 = vor.u32 %v4704, %v4705
        %v4708 = vsel %vm2240, %v4701, %v4707
        %v4710 = vshrl.u32 %v4512, 16
        %v4712 = vrot.slane %v4710, 7
        %v4714 = vshrl.u32 %v4514, 16
        %v4716 = vrot.slane %v4714, 7
        %v4717 = vshll.u32 %v4514, 16
        %v4719 = vor.u32 %v4716, %v4717
        %v4720 = vsel %vm2240, %v4712, %v4719
        %v4721 = vshrl.u32 %v4577, 16
        %v4723 = vrot.slane %v4721, 7
        %v4724 = vshll.u32 %v4577, 16
        %v4726 = vor.u32 %v4723, %v4724
        %v4727 = vsel %vm2240, %v4704, %v4726
        %v4729 = vshrl.u32 %v4516, 16
        %v4731 = vrot.slane %v4729, 7
        %v4732 = vshll.u32 %v4516, 16
        %v4734 = vor.u32 %v4731, %v4732
        %v4735 = vsel %vm2240, %v4716, %v4734
        %v4736 = vshrl.u32 %v4580, 16
        %v4738 = vrot.slane %v4736, 7
        %v4739 = vshll.u32 %v4580, 16
        %v4741 = vor.u32 %v4738, %v4739
        %v4742 = vsel %vm2240, %v4723, %v4741
        %v4744 = vshrl.u32 %v4518, 16
        %v4746 = vrot.slane %v4744, 7
        %v4747 = vshll.u32 %v4518, 16
        %v4749 = vor.u32 %v4746, %v4747
        %v4750 = vsel %vm2240, %v4731, %v4749
        %v4751 = vshrl.u32 %v4583, 16
        %v4753 = vrot.slane %v4751, 7
        %v4754 = vshll.u32 %v4583, 16
        %v4756 = vor.u32 %v4753, %v4754
        %v4757 = vsel %vm2240, %v4738, %v4756
        %v4759 = vshrl.u32 %v4520, 16
        %v4761 = vrot.slane %v4759, 7
        %v4762 = vshll.u32 %v4520, 16
        %v4764 = vor.u32 %v4761, %v4762
        %v4765 = vsel %vm2240, %v4746, %v4764
        %v4766 = vshrl.u32 %v4586, 16
        %v4768 = vrot.slane %v4766, 7
        %v4769 = vshll.u32 %v4586, 16
        %v4771 = vor.u32 %v4768, %v4769
        %v4772 = vsel %vm2240, %v4753, %v4771
        %v4774 = vshrl.u32 %v4522, 16
        %v4776 = vrot.slane %v4774, 7
        %v4777 = vshll.u32 %v4522, 16
        %v4779 = vor.u32 %v4776, %v4777
        %v4780 = vsel %vm2240, %v4761, %v4779
        %v4781 = vshrl.u32 %v4589, 16
        %v4783 = vrot.slane %v4781, 7
        %v4784 = vshll.u32 %v4589, 16
        %v4786 = vor.u32 %v4783, %v4784
        %v4787 = vsel %vm2240, %v4768, %v4786
        %v4789 = vshrl.u32 %v4524, 16
        %v4791 = vrot.slane %v4789, 7
        %v4792 = vshll.u32 %v4524, 16
        %v4794 = vor.u32 %v4791, %v4792
        %v4795 = vsel %vm2240, %v4776, %v4794
        %v4796 = vshrl.u32 %v4592, 16
        %v4798 = vrot.slane %v4796, 7
        %v4799 = vshll.u32 %v4592, 16
        %v4801 = vor.u32 %v4798, %v4799
        %v4802 = vsel %vm2240, %v4783, %v4801
        %v4804 = vshrl.u32 %v4526, 16
        %v4806 = vrot.slane %v4804, 7
        %v4807 = vshll.u32 %v4526, 16
        %v4809 = vor.u32 %v4806, %v4807
        %v4810 = vsel %vm2240, %v4791, %v4809
        %v4811 = vshrl.u32 %v4595, 16
        %v4813 = vrot.slane %v4811, 7
        %v4814 = vshll.u32 %v4595, 16
        %v4816 = vor.u32 %v4813, %v4814
        %v4817 = vsel %vm2240, %v4798, %v4816
        %v4819 = vshrl.u32 %v4528, 16
        %v4821 = vrot.slane %v4819, 7
        %v4822 = vshll.u32 %v4528, 16
        %v4824 = vor.u32 %v4821, %v4822
        %v4825 = vsel %vm2240, %v4806, %v4824
        %v4826 = vshrl.u32 %v4598, 16
        %v4828 = vrot.slane %v4826, 7
        %v4829 = vshll.u32 %v4598, 16
        %v4831 = vor.u32 %v4828, %v4829
        %v4832 = vsel %vm2240, %v4813, %v4831
        %v4834 = vshrl.u32 %v4530, 16
        %v4836 = vrot.slane %v4834, 7
        %v4837 = vshll.u32 %v4530, 16
        %v4839 = vor.u32 %v4836, %v4837
        %v4840 = vsel %vm2240, %v4821, %v4839
        %v4841 = vshrl.u32 %v4601, 16
        %v4843 = vrot.slane %v4841, 7
        %v4844 = vshll.u32 %v4601, 16
        %v4846 = vor.u32 %v4843, %v4844
        %v4847 = vsel %vm2240, %v4828, %v4846
        %v4849 = vshrl.u32 %v4532, 16
        %v4851 = vrot.slane %v4849, 7
        %v4852 = vshll.u32 %v4532, 16
        %v4854 = vor.u32 %v4851, %v4852
        %v4855 = vsel %vm2240, %v4836, %v4854
        %v4856 = vshrl.u32 %v4604, 16
        %v4858 = vrot.slane %v4856, 7
        %v4859 = vshll.u32 %v4604, 16
        %v4861 = vor.u32 %v4858, %v4859
        %v4862 = vsel %vm2240, %v4843, %v4861
        %v4864 = vshrl.u32 %v4534, 16
        %v4866 = vrot.slane %v4864, 7
        %v4867 = vshll.u32 %v4534, 16
        %v4869 = vor.u32 %v4866, %v4867
        %v4870 = vsel %vm2240, %v4851, %v4869
        %v4871 = vshrl.u32 %v4607, 16
        %v4873 = vrot.slane %v4871, 7
        %v4874 = vshll.u32 %v4607, 16
        %v4876 = vor.u32 %v4873, %v4874
        %v4877 = vsel %vm2240, %v4858, %v4876
        %v4879 = vshrl.u32 %v4536, 16
        %v4881 = vrot.slane %v4879, 7
        %v4882 = vshll.u32 %v4536, 16
        %v4884 = vor.u32 %v4881, %v4882
        %v4885 = vsel %vm2240, %v4866, %v4884
        %v4886 = vshrl.u32 %v4610, 16
        %v4888 = vrot.slane %v4886, 7
        %v4889 = vshll.u32 %v4610, 16
        %v4891 = vor.u32 %v4888, %v4889
        %v4892 = vsel %vm2240, %v4873, %v4891
        %v4894 = vshrl.u32 %v4538, 16
        %v4896 = vrot.slane %v4894, 7
        %v4897 = vshll.u32 %v4538, 16
        %v4899 = vor.u32 %v4896, %v4897
        %v4900 = vsel %vm2240, %v4881, %v4899
        %v4901 = vshrl.u32 %v4613, 16
        %v4903 = vrot.slane %v4901, 7
        %v4904 = vshll.u32 %v4613, 16
        %v4906 = vor.u32 %v4903, %v4904
        %v4907 = vsel %vm2240, %v4888, %v4906
        %v4909 = vshrl.u32 %v4540, 16
        %v4911 = vrot.slane %v4909, 7
        %v4912 = vshll.u32 %v4540, 16
        %v4914 = vor.u32 %v4911, %v4912
        %v4915 = vsel %vm2240, %v4896, %v4914
        %v4916 = vshrl.u32 %v4616, 16
        %v4918 = vrot.slane %v4916, 7
        %v4919 = vshll.u32 %v4616, 16
        %v4921 = vor.u32 %v4918, %v4919
        %v4922 = vsel %vm2240, %v4903, %v4921
        %v4924 = vshrl.u32 %v4542, 16
        %v4926 = vrot.slane %v4924, 7
        %v4927 = vshll.u32 %v4542, 16
        %v4929 = vor.u32 %v4926, %v4927
        %v4930 = vsel %vm2240, %v4911, %v4929
        %v4931 = vshrl.u32 %v4619, 16
        %v4933 = vrot.slane %v4931, 7
        %v4934 = vshll.u32 %v4619, 16
        %v4936 = vor.u32 %v4933, %v4934
        %v4937 = vsel %vm2240, %v4918, %v4936
        %v4939 = vshrl.u32 %v4544, 16
        %v4941 = vrot.slane %v4939, 7
        %v4942 = vshll.u32 %v4544, 16
        %v4944 = vor.u32 %v4941, %v4942
        %v4945 = vsel %vm2240, %v4926, %v4944
        %v4946 = vshrl.u32 %v4622, 16
        %v4948 = vrot.slane %v4946, 7
        %v4949 = vshll.u32 %v4622, 16
        %v4951 = vor.u32 %v4948, %v4949
        %v4952 = vsel %vm2240, %v4933, %v4951
        %v4954 = vshrl.u32 %v4546, 16
        %v4956 = vrot.slane %v4954, 7
        %v4957 = vshll.u32 %v4546, 16
        %v4959 = vor.u32 %v4956, %v4957
        %v4960 = vsel %vm2240, %v4941, %v4959
        %v4961 = vshrl.u32 %v4625, 16
        %v4963 = vrot.slane %v4961, 7
        %v4964 = vshll.u32 %v4625, 16
        %v4966 = vor.u32 %v4963, %v4964
        %v4967 = vsel %vm2240, %v4948, %v4966
        %v4969 = vshrl.u32 %v4548, 16
        %v4971 = vrot.slane %v4969, 7
        %v4972 = vshll.u32 %v4548, 16
        %v4974 = vor.u32 %v4971, %v4972
        %v4975 = vsel %vm2240, %v4956, %v4974
        %v4976 = vshrl.u32 %v4628, 16
        %v4978 = vrot.slane %v4976, 7
        %v4979 = vshll.u32 %v4628, 16
        %v4981 = vor.u32 %v4978, %v4979
        %v4982 = vsel %vm2240, %v4963, %v4981
        %v4984 = vshrl.u32 %v4550, 16
        %v4986 = vrot.slane %v4984, 7
        %v4987 = vshll.u32 %v4550, 16
        %v4989 = vor.u32 %v4986, %v4987
        %v4990 = vsel %vm2240, %v4971, %v4989
        %v4991 = vshrl.u32 %v4631, 16
        %v4993 = vrot.slane %v4991, 7
        %v4994 = vshll.u32 %v4631, 16
        %v4996 = vor.u32 %v4993, %v4994
        %v4997 = vsel %vm2240, %v4978, %v4996
        %v4999 = vshrl.u32 %v4552, 16
        %v5001 = vrot.slane %v4999, 7
        %v5002 = vshll.u32 %v4552, 16
        %v5004 = vor.u32 %v5001, %v5002
        %v5005 = vsel %vm2240, %v4986, %v5004
        %v5006 = vshrl.u32 %v4634, 16
        %v5008 = vrot.slane %v5006, 7
        %v5009 = vshll.u32 %v4634, 16
        %v5011 = vor.u32 %v5008, %v5009
        %v5012 = vsel %vm2240, %v4993, %v5011
        %v5014 = vshrl.u32 %v4554, 16
        %v5016 = vrot.slane %v5014, 7
        %v5017 = vshll.u32 %v4554, 16
        %v5019 = vor.u32 %v5016, %v5017
        %v5020 = vsel %vm2240, %v5001, %v5019
        %v5021 = vshrl.u32 %v4637, 16
        %v5023 = vrot.slane %v5021, 7
        %v5024 = vshll.u32 %v4637, 16
        %v5026 = vor.u32 %v5023, %v5024
        %v5027 = vsel %vm2240, %v5008, %v5026
        %v5029 = vshrl.u32 %v4556, 16
        %v5031 = vrot.slane %v5029, 7
        %v5032 = vshll.u32 %v4556, 16
        %v5034 = vor.u32 %v5031, %v5032
        %v5035 = vsel %vm2240, %v5016, %v5034
        %v5036 = vshrl.u32 %v4640, 16
        %v5038 = vrot.slane %v5036, 7
        %v5039 = vshll.u32 %v4640, 16
        %v5041 = vor.u32 %v5038, %v5039
        %v5042 = vsel %vm2240, %v5023, %v5041
        %v5044 = vshrl.u32 %v4558, 16
        %v5046 = vrot.slane %v5044, 7
        %v5047 = vshll.u32 %v4558, 16
        %v5049 = vor.u32 %v5046, %v5047
        %v5050 = vsel %vm2240, %v5031, %v5049
        %v5051 = vshrl.u32 %v4643, 16
        %v5053 = vrot.slane %v5051, 7
        %v5054 = vshll.u32 %v4643, 16
        %v5056 = vor.u32 %v5053, %v5054
        %v5057 = vsel %vm2240, %v5038, %v5056
        %v5059 = vshrl.u32 %v4560, 16
        %v5061 = vrot.slane %v5059, 7
        %v5062 = vshll.u32 %v4560, 16
        %v5064 = vor.u32 %v5061, %v5062
        %v5065 = vsel %vm2240, %v5046, %v5064
        %v5114 = vunpack.c.l.b16 %v4675
        %v5115 = vunpack.c.l.b16 %v4676
        %v5116 = vunpack.c.l.b16 %v4677
        %v5117 = vunpack.c.l.b16 %v4678
        %v5118 = vunpack.c.l.b16 %v4679
        %v5119 = vunpack.c.l.b16 %v4680
        %v5120 = vunpack.c.l.b16 %v4681
        %v5121 = vunpack.c.l.b16 %v4682
        %v5122 = vunpack.c.l.b16 %v4683
        %v5123 = vunpack.c.l.b16 %v4684
        %v5124 = vunpack.c.l.b16 %v4685
        %v5125 = vunpack.c.l.b16 %v4686
        %v5126 = vunpack.c.l.b16 %v4687
        %v5127 = vunpack.c.l.b16 %v4688
        %v5128 = vunpack.c.l.b16 %v4689
        %v5129 = vunpack.c.l.b16 %v4690
        %v5130 = vunpack.c.l.b16 %v4691
        %v5131 = vunpack.c.l.b16 %v4692
        %v5132 = vunpack.c.l.b16 %v4693
        %v5133 = vunpack.c.l.b16 %v4694
        %v5134 = vunpack.c.l.b16 %v4695
        %v5135 = vunpack.c.l.b16 %v4696
        %v5136 = vunpack.c.l.b16 %v4697
        %v5137 = vunpack.c.l.b16 %v4698
        %v5138 = vpack.c.b16 %v5115, %v5114
        %v5139 = vpack.c.b16 %v5117, %v5116
        %v5140 = vpack.c.b16 %v5119, %v5118
        %v5141 = vpack.c.b16 %v5121, %v5120
        %v5142 = vpack.c.b16 %v5123, %v5122
        %v5143 = vpack.c.b16 %v5125, %v5124
        %v5144 = vpack.c.b16 %v5127, %v5126
        %v5145 = vpack.c.b16 %v5129, %v5128
        %v5146 = vpack.c.b16 %v5131, %v5130
        %v5147 = vpack.c.b16 %v5133, %v5132
        %v5148 = vpack.c.b16 %v5135, %v5134
        %v5149 = vpack.c.b16 %v5137, %v5136
        %v5163 = vsel %vm4565, %v4720, 0
        %v5166 = vsel %vm4565, %v4735, 0
        %v5169 = vsel %vm4565, %v4750, 0
        %v5172 = vsel %vm4565, %v4765, 0
        %v5175 = vsel %vm4565, %v4780, 0
        %v5178 = vsel %vm4565, %v4795, 0
        %v5181 = vsel %vm4565, %v4810, 0
        %v5184 = vsel %vm4565, %v4825, 0
        %v5187 = vsel %vm4565, %v4840, 0
        %v5190 = vsel %vm4565, %v4855, 0
        %v5193 = vsel %vm4565, %v4870, 0
        %v5196 = vsel %vm4565, %v4885, 0
        %v5199 = vsel %vm4565, %v4900, 0
        %v5202 = vsel %vm4565, %v4915, 0
        %v5205 = vsel %vm4565, %v4930, 0
        %v5208 = vsel %vm4565, %v4945, 0
        %v5211 = vsel %vm4565, %v4960, 0
        %v5214 = vsel %vm4565, %v4975, 0
        %v5217 = vsel %vm4565, %v4990, 0
        %v5220 = vsel %vm4565, %v5005, 0
        %v5223 = vsel %vm4565, %v5020, 0
        %v5226 = vsel %vm4565, %v5035, 0
        %v5229 = vsel %vm4565, %v5050, 0
        %v5232 = vsel %vm4565, %v5065, 0
        %5234 = vmatprep.subr.bf16.mxu0 0
        %5235 = vmatpush1.bf16.msra.mxu0 %v5145
        %5236 = vmatprep.subr.bf16.mxu0 0
        %5237 = vmatpush1.bf16.msra.mxu0 %v5144
        %5238 = vmatprep.subr.bf16.mxu0 0
        %5239 = vmatpush1.bf16.msra.mxu0 %v5143
        %5240 = vmatprep.subr.bf16.mxu0 0
        %5241 = vmatpush1.bf16.msra.mxu0 %v5142
        %5242 = vmatprep.subr.bf16.mxu0 0
        %5243 = vmatpush1.bf16.msra.mxu0 %v5141
        %5244 = vmatprep.subr.bf16.mxu0 0
        %5245 = vmatpush1.bf16.msra.mxu0 %v5140
        %5246 = vmatprep.subr.bf16.mxu0 0
        %5247 = vmatpush1.bf16.msra.mxu0 %v5139
        %5248 = vmatprep.subr.bf16.mxu0 0
        %5249 = vmatpush1.bf16.msra.mxu0 %v5138
        %5250 = vmatprep.subr.bf16.mxu0 0
        %5251 = vmatpush2.bf16.msra.mxu0 0
        %5252 = vmatprep.subr.bf16.mxu0 0
        %5253 = vmatpush2.bf16.msra.mxu0 0
        %5254 = vmatprep.subr.bf16.mxu0 0
        %5255 = vmatpush2.bf16.msra.mxu0 0
        %5256 = vmatprep.subr.bf16.mxu0 0
        %5257 = vmatpush2.bf16.msra.mxu0 0
        %5258 = vmatprep.subr.bf16.mxu0 0
        %5259 = vmatpush2.bf16.msra.mxu0 %v5149
        %5260 = vmatprep.subr.bf16.mxu0 0
        %5261 = vmatpush2.bf16.msra.mxu0 %v5148
        %5262 = vmatprep.subr.bf16.mxu0 0
        %5263 = vmatpush2.bf16.msra.mxu0 %v5147
        %5264 = vmatprep.subr.bf16.mxu0 0
        %5265 = vmatpush2.bf16.msra.mxu0 %v5146
        %5266 = vmatprep.mubr.bf16.mxu0 %v5163
        %5267 = vmatmul.mubr.bf16.gmra.mxu0 %v4708
        %v5268 = vpop.f32.mrf.mxu0
        %v5269 = vadd.f32 0.0, %v5268
        %v5270 = vpop.f32.mrf.mxu0
        %v5271 = vpop.f32.mrf.mxu0
        %v5272 = vadd.f32 0.0, %v5271
        %v5273 = vpop.f32.mrf.mxu0
        %5274 = vmatprep.mubr.bf16.mxu0 %v5166
        %5275 = vmatmul.mubr.bf16.gmra.mxu0 %v4727
        %v5276 = vpop.f32.mrf.mxu0
        %v5277 = vadd.f32 0.0, %v5276
        %v5278 = vpop.f32.mrf.mxu0
        %v5279 = vpop.f32.mrf.mxu0
        %v5280 = vadd.f32 0.0, %v5279
        %v5281 = vpop.f32.mrf.mxu0
        %5282 = vmatprep.mubr.bf16.mxu0 %v5169
        %5283 = vmatmul.mubr.bf16.gmra.mxu0 %v4742
        %v5284 = vpop.f32.mrf.mxu0
        %v5285 = vadd.f32 0.0, %v5284
        %v5286 = vpop.f32.mrf.mxu0
        %v5287 = vpop.f32.mrf.mxu0
        %v5288 = vadd.f32 0.0, %v5287
        %v5289 = vpop.f32.mrf.mxu0
        %5290 = vmatprep.mubr.bf16.mxu0 %v5172
        %5291 = vmatmul.mubr.bf16.gmra.mxu0 %v4757
        %v5292 = vpop.f32.mrf.mxu0
        %v5293 = vadd.f32 0.0, %v5292
        %v5294 = vpop.f32.mrf.mxu0
        %v5295 = vpop.f32.mrf.mxu0
        %v5296 = vadd.f32 0.0, %v5295
        %v5297 = vpop.f32.mrf.mxu0
        %5298 = vmatprep.mubr.bf16.mxu0 %v5175
        %5299 = vmatmul.mubr.bf16.gmra.mxu0 %v4772
        %v5300 = vpop.f32.mrf.mxu0
        %v5301 = vadd.f32 0.0, %v5300
        %v5302 = vpop.f32.mrf.mxu0
        %v5303 = vpop.f32.mrf.mxu0
        %v5304 = vadd.f32 0.0, %v5303
        %v5305 = vpop.f32.mrf.mxu0
        %5306 = vmatprep.mubr.bf16.mxu0 %v5178
        %5307 = vmatmul.mubr.bf16.gmra.mxu0 %v4787
        %v5308 = vpop.f32.mrf.mxu0
        %v5309 = vadd.f32 0.0, %v5308
        %v5310 = vpop.f32.mrf.mxu0
        %v5311 = vpop.f32.mrf.mxu0
        %v5312 = vadd.f32 0.0, %v5311
        %v5313 = vpop.f32.mrf.mxu0
        %5314 = vmatprep.mubr.bf16.mxu0 %v5181
        %5315 = vmatmul.mubr.bf16.gmra.mxu0 %v4802
        %v5316 = vpop.f32.mrf.mxu0
        %v5317 = vadd.f32 0.0, %v5316
        %v5318 = vpop.f32.mrf.mxu0
        %v5319 = vpop.f32.mrf.mxu0
        %v5320 = vadd.f32 0.0, %v5319
        %v5321 = vpop.f32.mrf.mxu0
        %5322 = vmatprep.mubr.bf16.mxu0 %v5184
        %5323 = vmatmul.mubr.bf16.gmra.mxu0 %v4817
        %v5324 = vpop.f32.mrf.mxu0
        %v5325 = vadd.f32 0.0, %v5324
        %v5326 = vpop.f32.mrf.mxu0
        %v5327 = vpop.f32.mrf.mxu0
        %v5328 = vadd.f32 0.0, %v5327
        %v5329 = vpop.f32.mrf.mxu0
        %5330 = vmatprep.mubr.bf16.mxu0 %v5187
        %5331 = vmatmul.mubr.bf16.gmra.mxu0 %v4832
        %v5332 = vpop.f32.mrf.mxu0
        %v5333 = vadd.f32 0.0, %v5332
        %v5334 = vpop.f32.mrf.mxu0
        %v5335 = vpop.f32.mrf.mxu0
        %v5336 = vadd.f32 0.0, %v5335
        %v5337 = vpop.f32.mrf.mxu0
        %5338 = vmatprep.mubr.bf16.mxu0 %v5190
        %5339 = vmatmul.mubr.bf16.gmra.mxu0 %v4847
        %v5340 = vpop.f32.mrf.mxu0
        %v5341 = vadd.f32 0.0, %v5340
        %v5342 = vpop.f32.mrf.mxu0
        %v5343 = vpop.f32.mrf.mxu0
        %v5344 = vadd.f32 0.0, %v5343
        %v5345 = vpop.f32.mrf.mxu0
        %5346 = vmatprep.mubr.bf16.mxu0 %v5193
        %5347 = vmatmul.mubr.bf16.gmra.mxu0 %v4862
        %v5348 = vpop.f32.mrf.mxu0
        %v5349 = vadd.f32 0.0, %v5348
        %v5350 = vpop.f32.mrf.mxu0
        %v5351 = vpop.f32.mrf.mxu0
        %v5352 = vadd.f32 0.0, %v5351
        %v5353 = vpop.f32.mrf.mxu0
        %5354 = vmatprep.mubr.bf16.mxu0 %v5196
        %5355 = vmatmul.mubr.bf16.gmra.mxu0 %v4877
        %v5356 = vpop.f32.mrf.mxu0
        %v5357 = vadd.f32 0.0, %v5356
        %v5358 = vpop.f32.mrf.mxu0
        %v5359 = vpop.f32.mrf.mxu0
        %v5360 = vadd.f32 0.0, %v5359
        %v5361 = vpop.f32.mrf.mxu0
        %5362 = vmatprep.mubr.bf16.mxu0 %v5199
        %5363 = vmatmul.mubr.bf16.gmra.mxu0 %v4892
        %v5364 = vpop.f32.mrf.mxu0
        %v5365 = vadd.f32 0.0, %v5364
        %v5366 = vpop.f32.mrf.mxu0
        %v5367 = vpop.f32.mrf.mxu0
        %v5368 = vadd.f32 0.0, %v5367
        %v5369 = vpop.f32.mrf.mxu0
        %5370 = vmatprep.mubr.bf16.mxu0 %v5202
        %5371 = vmatmul.mubr.bf16.gmra.mxu0 %v4907
        %v5372 = vpop.f32.mrf.mxu0
        %v5373 = vadd.f32 0.0, %v5372
        %v5374 = vpop.f32.mrf.mxu0
        %v5375 = vpop.f32.mrf.mxu0
        %v5376 = vadd.f32 0.0, %v5375
        %v5377 = vpop.f32.mrf.mxu0
        %5378 = vmatprep.mubr.bf16.mxu0 %v5205
        %5379 = vmatmul.mubr.bf16.gmra.mxu0 %v4922
        %v5380 = vpop.f32.mrf.mxu0
        %v5381 = vadd.f32 0.0, %v5380
        %v5382 = vpop.f32.mrf.mxu0
        %v5383 = vpop.f32.mrf.mxu0
        %v5384 = vadd.f32 0.0, %v5383
        %v5385 = vpop.f32.mrf.mxu0
        %5386 = vmatprep.mubr.bf16.mxu0 %v5208
        %5387 = vmatmul.mubr.bf16.gmra.mxu0 %v4937
        %v5388 = vpop.f32.mrf.mxu0
        %v5389 = vadd.f32 0.0, %v5388
        %v5390 = vpop.f32.mrf.mxu0
        %v5391 = vpop.f32.mrf.mxu0
        %v5392 = vadd.f32 0.0, %v5391
        %v5393 = vpop.f32.mrf.mxu0
        %5394 = vmatprep.mubr.bf16.mxu0 %v5211
        %5395 = vmatmul.mubr.bf16.gmra.mxu0 %v4952
        %v5396 = vpop.f32.mrf.mxu0
        %v5397 = vadd.f32 0.0, %v5396
        %v5398 = vpop.f32.mrf.mxu0
        %v5399 = vpop.f32.mrf.mxu0
        %v5400 = vadd.f32 0.0, %v5399
        %v5401 = vpop.f32.mrf.mxu0
        %5402 = vmatprep.mubr.bf16.mxu0 %v5214
        %5403 = vmatmul.mubr.bf16.gmra.mxu0 %v4967
        %v5404 = vpop.f32.mrf.mxu0
        %v5405 = vadd.f32 0.0, %v5404
        %v5406 = vpop.f32.mrf.mxu0
        %v5407 = vpop.f32.mrf.mxu0
        %v5408 = vadd.f32 0.0, %v5407
        %v5409 = vpop.f32.mrf.mxu0
        %5410 = vmatprep.mubr.bf16.mxu0 %v5217
        %5411 = vmatmul.mubr.bf16.gmra.mxu0 %v4982
        %v5412 = vpop.f32.mrf.mxu0
        %v5413 = vadd.f32 0.0, %v5412
        %v5414 = vpop.f32.mrf.mxu0
        %v5415 = vpop.f32.mrf.mxu0
        %v5416 = vadd.f32 0.0, %v5415
        %v5417 = vpop.f32.mrf.mxu0
        %5418 = vmatprep.mubr.bf16.mxu0 %v5220
        %5419 = vmatmul.mubr.bf16.gmra.mxu0 %v4997
        %v5420 = vpop.f32.mrf.mxu0
        %v5421 = vadd.f32 0.0, %v5420
        %v5422 = vpop.f32.mrf.mxu0
        %v5423 = vpop.f32.mrf.mxu0
        %v5424 = vadd.f32 0.0, %v5423
        %v5425 = vpop.f32.mrf.mxu0
        %5426 = vmatprep.mubr.bf16.mxu0 %v5223
        %5427 = vmatmul.mubr.bf16.gmra.mxu0 %v5012
        %v5428 = vpop.f32.mrf.mxu0
        %v5429 = vadd.f32 0.0, %v5428
        %v5430 = vpop.f32.mrf.mxu0
        %v5431 = vpop.f32.mrf.mxu0
        %v5432 = vadd.f32 0.0, %v5431
        %v5433 = vpop.f32.mrf.mxu0
        %5434 = vmatprep.mubr.bf16.mxu0 %v5226
        %5435 = vmatmul.mubr.bf16.gmra.mxu0 %v5027
        %v5436 = vpop.f32.mrf.mxu0
        %v5437 = vadd.f32 0.0, %v5436
        %v5438 = vpop.f32.mrf.mxu0
        %v5439 = vpop.f32.mrf.mxu0
        %v5440 = vadd.f32 0.0, %v5439
        %v5441 = vpop.f32.mrf.mxu0
        %5442 = vmatprep.mubr.bf16.mxu0 %v5229
        %5443 = vmatmul.mubr.bf16.gmra.mxu0 %v5042
        %v5444 = vpop.f32.mrf.mxu0
        %v5445 = vadd.f32 0.0, %v5444
        %v5446 = vpop.f32.mrf.mxu0
        %v5447 = vpop.f32.mrf.mxu0
        %v5448 = vadd.f32 0.0, %v5447
        %v5449 = vpop.f32.mrf.mxu0
        %5450 = vmatprep.mubr.bf16.mxu0 %v5232
        %5451 = vmatmul.mubr.bf16.gmra.mxu0 %v5057
        %v5452 = vpop.f32.mrf.mxu0
        %v5453 = vadd.f32 0.0, %v5452
        %v5454 = vpop.f32.mrf.mxu0
        %v5455 = vpop.f32.mrf.mxu0
        %v5456 = vadd.f32 0.0, %v5455
        %v5457 = vpop.f32.mrf.mxu0
        %5458 = vdwg.mxu0
        %v5459 = vshrl.u32 %v4568, 16
        %v5461 = vrot.slane %v5459, 3
        %v5462 = vshll.u32 %v4568, 16
        %v5464 = vrot.slane %v5462, 4
        %v5465 = vor.u32 %v5461, %v5464
        %v5466 = vrot.slane %v4699, 3
        %v5467 = vshll.u32 %v4571, 16
        %v5469 = vrot.slane %v5467, 4
        %v5470 = vor.u32 %v5466, %v5469
        %v5471 = vsel %vm2722, %v5465, %v5470
        %v5473 = vshrl.u32 %v4510, 16
        %v5475 = vrot.slane %v5473, 3
        %v5476 = vshll.u32 %v4510, 16
        %v5478 = vrot.slane %v5476, 4
        %v5479 = vor.u32 %v5475, %v5478
        %v5480 = vrot.slane %v4710, 3
        %v5481 = vshll.u32 %v4512, 16
        %v5483 = vrot.slane %v5481, 4
        %v5484 = vor.u32 %v5480, %v5483
        %v5485 = vsel %vm2722, %v5479, %v5484
        %v5486 = vrot.slane %v4702, 3
        %v5487 = vrot.slane %v4705, 4
        %v5488 = vor.u32 %v5486, %v5487
        %v5489 = vsel %vm2722, %v5470, %v5488
        %v5490 = vrot.slane %v4714, 3
        %v5491 = vrot.slane %v4717, 4
        %v5492 = vor.u32 %v5490, %v5491
        %v5493 = vsel %vm2722, %v5484, %v5492
        %v5494 = vrot.slane %v4721, 3
        %v5495 = vrot.slane %v4724, 4
        %v5496 = vor.u32 %v5494, %v5495
        %v5497 = vsel %vm2722, %v5488, %v5496
        %v5498 = vrot.slane %v4729, 3
        %v5499 = vrot.slane %v4732, 4
        %v5500 = vor.u32 %v5498, %v5499
        %v5501 = vsel %vm2722, %v5492, %v5500
        %v5502 = vrot.slane %v4736, 3
        %v5503 = vrot.slane %v4739, 4
        %v5504 = vor.u32 %v5502, %v5503
        %v5505 = vsel %vm2722, %v5496, %v5504
        %v5506 = vrot.slane %v4744, 3
        %v5507 = vrot.slane %v4747, 4
        %v5508 = vor.u32 %v5506, %v5507
        %v5509 = vsel %vm2722, %v5500, %v5508
        %v5510 = vrot.slane %v4751, 3
        %v5511 = vrot.slane %v4754, 4
        %v5512 = vor.u32 %v5510, %v5511
        %v5513 = vsel %vm2722, %v5504, %v5512
        %v5514 = vrot.slane %v4759, 3
        %v5515 = vrot.slane %v4762, 4
        %v5516 = vor.u32 %v5514, %v5515
        %v5517 = vsel %vm2722, %v5508, %v5516
        %v5518 = vrot.slane %v4766, 3
        %v5519 = vrot.slane %v4769, 4
        %v5520 = vor.u32 %v5518, %v5519
        %v5521 = vsel %vm2722, %v5512, %v5520
        %v5522 = vrot.slane %v4774, 3
        %v5523 = vrot.slane %v4777, 4
        %v5524 = vor.u32 %v5522, %v5523
        %v5525 = vsel %vm2722, %v5516, %v5524
        %v5526 = vrot.slane %v4781, 3
        %v5527 = vrot.slane %v4784, 4
        %v5528 = vor.u32 %v5526, %v5527
        %v5529 = vsel %vm2722, %v5520, %v5528
        %v5530 = vrot.slane %v4789, 3
        %v5531 = vrot.slane %v4792, 4
        %v5532 = vor.u32 %v5530, %v5531
        %v5533 = vsel %vm2722, %v5524, %v5532
        %v5534 = vrot.slane %v4796, 3
        %v5535 = vrot.slane %v4799, 4
        %v5536 = vor.u32 %v5534, %v5535
        %v5537 = vsel %vm2722, %v5528, %v5536
        %v5538 = vrot.slane %v4804, 3
        %v5539 = vrot.slane %v4807, 4
        %v5540 = vor.u32 %v5538, %v5539
        %v5541 = vsel %vm2722, %v5532, %v5540
        %v5542 = vrot.slane %v4811, 3
        %v5543 = vrot.slane %v4814, 4
        %v5544 = vor.u32 %v5542, %v5543
        %v5545 = vsel %vm2722, %v5536, %v5544
        %v5546 = vrot.slane %v4819, 3
        %v5547 = vrot.slane %v4822, 4
        %v5548 = vor.u32 %v5546, %v5547
        %v5549 = vsel %vm2722, %v5540, %v5548
        %v5550 = vrot.slane %v4826, 3
        %v5551 = vrot.slane %v4829, 4
        %v5552 = vor.u32 %v5550, %v5551
        %v5553 = vsel %vm2722, %v5544, %v5552
        %v5554 = vrot.slane %v4834, 3
        %v5555 = vrot.slane %v4837, 4
        %v5556 = vor.u32 %v5554, %v5555
        %v5557 = vsel %vm2722, %v5548, %v5556
        %v5558 = vrot.slane %v4841, 3
        %v5559 = vrot.slane %v4844, 4
        %v5560 = vor.u32 %v5558, %v5559
        %v5561 = vsel %vm2722, %v5552, %v5560
        %v5562 = vrot.slane %v4849, 3
        %v5563 = vrot.slane %v4852, 4
        %v5564 = vor.u32 %v5562, %v5563
        %v5565 = vsel %vm2722, %v5556, %v5564
        %v5566 = vrot.slane %v4856, 3
        %v5567 = vrot.slane %v4859, 4
        %v5568 = vor.u32 %v5566, %v5567
        %v5569 = vsel %vm2722, %v5560, %v5568
        %v5570 = vrot.slane %v4864, 3
        %v5571 = vrot.slane %v4867, 4
        %v5572 = vor.u32 %v5570, %v5571
        %v5573 = vsel %vm2722, %v5564, %v5572
        %v5574 = vrot.slane %v4871, 3
        %v5575 = vrot.slane %v4874, 4
        %v5576 = vor.u32 %v5574, %v5575
        %v5577 = vsel %vm2722, %v5568, %v5576
        %v5578 = vrot.slane %v4879, 3
        %v5579 = vrot.slane %v4882, 4
        %v5580 = vor.u32 %v5578, %v5579
        %v5581 = vsel %vm2722, %v5572, %v5580
        %v5582 = vrot.slane %v4886, 3
        %v5583 = vrot.slane %v4889, 4
        %v5584 = vor.u32 %v5582, %v5583
        %v5585 = vsel %vm2722, %v5576, %v5584
        %v5586 = vrot.slane %v4894, 3
        %v5587 = vrot.slane %v4897, 4
        %v5588 = vor.u32 %v5586, %v5587
        %v5589 = vsel %vm2722, %v5580, %v5588
        %v5590 = vrot.slane %v4901, 3
        %v5591 = vrot.slane %v4904, 4
        %v5592 = vor.u32 %v5590, %v5591
        %v5593 = vsel %vm2722, %v5584, %v5592
        %v5594 = vrot.slane %v4909, 3
        %v5595 = vrot.slane %v4912, 4
        %v5596 = vor.u32 %v5594, %v5595
        %v5597 = vsel %vm2722, %v5588, %v5596
        %v5598 = vrot.slane %v4916, 3
        %v5599 = vrot.slane %v4919, 4
        %v5600 = vor.u32 %v5598, %v5599
        %v5601 = vsel %vm2722, %v5592, %v5600
        %v5602 = vrot.slane %v4924, 3
        %v5603 = vrot.slane %v4927, 4
        %v5604 = vor.u32 %v5602, %v5603
        %v5605 = vsel %vm2722, %v5596, %v5604
        %v5606 = vrot.slane %v4931, 3
        %v5607 = vrot.slane %v4934, 4
        %v5608 = vor.u32 %v5606, %v5607
        %v5609 = vsel %vm2722, %v5600, %v5608
        %v5610 = vrot.slane %v4939, 3
        %v5611 = vrot.slane %v4942, 4
        %v5612 = vor.u32 %v5610, %v5611
        %v5613 = vsel %vm2722, %v5604, %v5612
        %v5614 = vrot.slane %v4946, 3
        %v5615 = vrot.slane %v4949, 4
        %v5616 = vor.u32 %v5614, %v5615
        %v5617 = vsel %vm2722, %v5608, %v5616
        %v5618 = vrot.slane %v4954, 3
        %v5619 = vrot.slane %v4957, 4
        %v5620 = vor.u32 %v5618, %v5619
        %v5621 = vsel %vm2722, %v5612, %v5620
        %v5622 = vrot.slane %v4961, 3
        %v5623 = vrot.slane %v4964, 4
        %v5624 = vor.u32 %v5622, %v5623
        %v5625 = vsel %vm2722, %v5616, %v5624
        %v5626 = vrot.slane %v4969, 3
        %v5627 = vrot.slane %v4972, 4
        %v5628 = vor.u32 %v5626, %v5627
        %v5629 = vsel %vm2722, %v5620, %v5628
        %v5630 = vrot.slane %v4976, 3
        %v5631 = vrot.slane %v4979, 4
        %v5632 = vor.u32 %v5630, %v5631
        %v5633 = vsel %vm2722, %v5624, %v5632
        %v5634 = vrot.slane %v4984, 3
        %v5635 = vrot.slane %v4987, 4
        %v5636 = vor.u32 %v5634, %v5635
        %v5637 = vsel %vm2722, %v5628, %v5636
        %v5638 = vrot.slane %v4991, 3
        %v5639 = vrot.slane %v4994, 4
        %v5640 = vor.u32 %v5638, %v5639
        %v5641 = vsel %vm2722, %v5632, %v5640
        %v5642 = vrot.slane %v4999, 3
        %v5643 = vrot.slane %v5002, 4
        %v5644 = vor.u32 %v5642, %v5643
        %v5645 = vsel %vm2722, %v5636, %v5644
        %v5646 = vrot.slane %v5006, 3
        %v5647 = vrot.slane %v5009, 4
        %v5648 = vor.u32 %v5646, %v5647
        %v5649 = vsel %vm2722, %v5640, %v5648
        %v5650 = vrot.slane %v5014, 3
        %v5651 = vrot.slane %v5017, 4
        %v5652 = vor.u32 %v5650, %v5651
        %v5653 = vsel %vm2722, %v5644, %v5652
        %v5654 = vrot.slane %v5021, 3
        %v5655 = vrot.slane %v5024, 4
        %v5656 = vor.u32 %v5654, %v5655
        %v5657 = vsel %vm2722, %v5648, %v5656
        %v5658 = vrot.slane %v5029, 3
        %v5659 = vrot.slane %v5032, 4
        %v5660 = vor.u32 %v5658, %v5659
        %v5661 = vsel %vm2722, %v5652, %v5660
        %v5662 = vrot.slane %v5036, 3
        %v5663 = vrot.slane %v5039, 4
        %v5664 = vor.u32 %v5662, %v5663
        %v5665 = vsel %vm2722, %v5656, %v5664
        %v5666 = vrot.slane %v5044, 3
        %v5667 = vrot.slane %v5047, 4
        %v5668 = vor.u32 %v5666, %v5667
        %v5669 = vsel %vm2722, %v5660, %v5668
        %v5718 = vunpack.c.l.b16 %v4650
        %v5719 = vunpack.c.l.b16 %v4651
        %v5720 = vunpack.c.l.b16 %v4652
        %v5721 = vunpack.c.l.b16 %v4653
        %v5722 = vunpack.c.l.b16 %v4654
        %v5723 = vunpack.c.l.b16 %v4655
        %v5724 = vunpack.c.l.b16 %v4656
        %v5725 = vunpack.c.l.b16 %v4657
        %v5726 = vunpack.c.l.b16 %v4658
        %v5727 = vunpack.c.l.b16 %v4659
        %v5728 = vunpack.c.l.b16 %v4660
        %v5729 = vunpack.c.l.b16 %v4661
        %v5730 = vunpack.c.l.b16 %v4662
        %v5731 = vunpack.c.l.b16 %v4663
        %v5732 = vunpack.c.l.b16 %v4664
        %v5733 = vunpack.c.l.b16 %v4665
        %v5734 = vunpack.c.l.b16 %v4666
        %v5735 = vunpack.c.l.b16 %v4667
        %v5736 = vunpack.c.l.b16 %v4668
        %v5737 = vunpack.c.l.b16 %v4669
        %v5738 = vunpack.c.l.b16 %v4670
        %v5739 = vunpack.c.l.b16 %v4671
        %v5740 = vunpack.c.l.b16 %v4672
        %v5741 = vunpack.c.l.b16 %v4673
        %v5742 = vpack.c.b16 %v5719, %v5718
        %v5743 = vpack.c.b16 %v5721, %v5720
        %v5744 = vpack.c.b16 %v5723, %v5722
        %v5745 = vpack.c.b16 %v5725, %v5724
        %v5746 = vpack.c.b16 %v5727, %v5726
        %v5747 = vpack.c.b16 %v5729, %v5728
        %v5748 = vpack.c.b16 %v5731, %v5730
        %v5749 = vpack.c.b16 %v5733, %v5732
        %v5750 = vpack.c.b16 %v5735, %v5734
        %v5751 = vpack.c.b16 %v5737, %v5736
        %v5752 = vpack.c.b16 %v5739, %v5738
        %v5753 = vpack.c.b16 %v5741, %v5740
        %v5767 = vsel %vm4565, %v5485, 0
        %v5770 = vsel %vm4565, %v5493, 0
        %v5773 = vsel %vm4565, %v5501, 0
        %v5776 = vsel %vm4565, %v5509, 0
        %v5779 = vsel %vm4565, %v5517, 0
        %v5782 = vsel %vm4565, %v5525, 0
        %v5785 = vsel %vm4565, %v5533, 0
        %v5788 = vsel %vm4565, %v5541, 0
        %v5791 = vsel %vm4565, %v5549, 0
        %v5794 = vsel %vm4565, %v5557, 0
        %v5797 = vsel %vm4565, %v5565, 0
        %v5800 = vsel %vm4565, %v5573, 0
        %v5803 = vsel %vm4565, %v5581, 0
        %v5806 = vsel %vm4565, %v5589, 0
        %v5809 = vsel %vm4565, %v5597, 0
        %v5812 = vsel %vm4565, %v5605, 0
        %v5815 = vsel %vm4565, %v5613, 0
        %v5818 = vsel %vm4565, %v5621, 0
        %v5821 = vsel %vm4565, %v5629, 0
        %v5824 = vsel %vm4565, %v5637, 0
        %v5827 = vsel %vm4565, %v5645, 0
        %v5830 = vsel %vm4565, %v5653, 0
        %v5833 = vsel %vm4565, %v5661, 0
        %v5836 = vsel %vm4565, %v5669, 0
        %5838 = vmatprep.subr.bf16.mxu0 0
        %5839 = vmatpush1.bf16.msra.mxu0 %v5749
        %5840 = vmatprep.subr.bf16.mxu0 0
        %5841 = vmatpush1.bf16.msra.mxu0 %v5748
        %5842 = vmatprep.subr.bf16.mxu0 0
        %5843 = vmatpush1.bf16.msra.mxu0 %v5747
        %5844 = vmatprep.subr.bf16.mxu0 0
        %5845 = vmatpush1.bf16.msra.mxu0 %v5746
        %5846 = vmatprep.subr.bf16.mxu0 0
        %5847 = vmatpush1.bf16.msra.mxu0 %v5745
        %5848 = vmatprep.subr.bf16.mxu0 0
        %5849 = vmatpush1.bf16.msra.mxu0 %v5744
        %5850 = vmatprep.subr.bf16.mxu0 0
        %5851 = vmatpush1.bf16.msra.mxu0 %v5743
        %5852 = vmatprep.subr.bf16.mxu0 0
        %5853 = vmatpush1.bf16.msra.mxu0 %v5742
        %5854 = vmatprep.subr.bf16.mxu0 0
        %5855 = vmatpush2.bf16.msra.mxu0 0
        %5856 = vmatprep.subr.bf16.mxu0 0
        %5857 = vmatpush2.bf16.msra.mxu0 0
        %5858 = vmatprep.subr.bf16.mxu0 0
        %5859 = vmatpush2.bf16.msra.mxu0 0
        %5860 = vmatprep.subr.bf16.mxu0 0
        %5861 = vmatpush2.bf16.msra.mxu0 0
        %5862 = vmatprep.subr.bf16.mxu0 0
        %5863 = vmatpush2.bf16.msra.mxu0 %v5753
        %5864 = vmatprep.subr.bf16.mxu0 0
        %5865 = vmatpush2.bf16.msra.mxu0 %v5752
        %5866 = vmatprep.subr.bf16.mxu0 0
        %5867 = vmatpush2.bf16.msra.mxu0 %v5751
        %5868 = vmatprep.subr.bf16.mxu0 0
        %5869 = vmatpush2.bf16.msra.mxu0 %v5750
        %5870 = vmatprep.mubr.bf16.mxu0 %v5767
        %5871 = vmatmul.mubr.bf16.gmra.mxu0 %v5471
        %v5872 = vpop.f32.mrf.mxu0
        %v5873 = vadd.f32 %v5269, %v5872
        %v5874 = vpop.f32.mrf.mxu0
        %v5875 = vpop.f32.mrf.mxu0
        %v5876 = vadd.f32 %v5272, %v5875
        %v5877 = vpop.f32.mrf.mxu0
        %5878 = vmatprep.mubr.bf16.mxu0 %v5770
        %5879 = vmatmul.mubr.bf16.gmra.mxu0 %v5489
        %v5880 = vpop.f32.mrf.mxu0
        %v5881 = vadd.f32 %v5277, %v5880
        %v5882 = vpop.f32.mrf.mxu0
        %v5883 = vpop.f32.mrf.mxu0
        %v5884 = vadd.f32 %v5280, %v5883
        %v5885 = vpop.f32.mrf.mxu0
        %5886 = vmatprep.mubr.bf16.mxu0 %v5773
        %5887 = vmatmul.mubr.bf16.gmra.mxu0 %v5497
        %v5888 = vpop.f32.mrf.mxu0
        %v5889 = vadd.f32 %v5285, %v5888
        %v5890 = vpop.f32.mrf.mxu0
        %v5891 = vpop.f32.mrf.mxu0
        %v5892 = vadd.f32 %v5288, %v5891
        %v5893 = vpop.f32.mrf.mxu0
        %5894 = vmatprep.mubr.bf16.mxu0 %v5776
        %5895 = vmatmul.mubr.bf16.gmra.mxu0 %v5505
        %v5896 = vpop.f32.mrf.mxu0
        %v5897 = vadd.f32 %v5293, %v5896
        %v5898 = vpop.f32.mrf.mxu0
        %v5899 = vpop.f32.mrf.mxu0
        %v5900 = vadd.f32 %v5296, %v5899
        %v5901 = vpop.f32.mrf.mxu0
        %5902 = vmatprep.mubr.bf16.mxu0 %v5779
        %5903 = vmatmul.mubr.bf16.gmra.mxu0 %v5513
        %v5904 = vpop.f32.mrf.mxu0
        %v5905 = vadd.f32 %v5301, %v5904
        %v5906 = vpop.f32.mrf.mxu0
        %v5907 = vpop.f32.mrf.mxu0
        %v5908 = vadd.f32 %v5304, %v5907
        %v5909 = vpop.f32.mrf.mxu0
        %5910 = vmatprep.mubr.bf16.mxu0 %v5782
        %5911 = vmatmul.mubr.bf16.gmra.mxu0 %v5521
        %v5912 = vpop.f32.mrf.mxu0
        %v5913 = vadd.f32 %v5309, %v5912
        %v5914 = vpop.f32.mrf.mxu0
        %v5915 = vpop.f32.mrf.mxu0
        %v5916 = vadd.f32 %v5312, %v5915
        %v5917 = vpop.f32.mrf.mxu0
        %5918 = vmatprep.mubr.bf16.mxu0 %v5785
        %5919 = vmatmul.mubr.bf16.gmra.mxu0 %v5529
        %v5920 = vpop.f32.mrf.mxu0
        %v5921 = vadd.f32 %v5317, %v5920
        %v5922 = vpop.f32.mrf.mxu0
        %v5923 = vpop.f32.mrf.mxu0
        %v5924 = vadd.f32 %v5320, %v5923
        %v5925 = vpop.f32.mrf.mxu0
        %5926 = vmatprep.mubr.bf16.mxu0 %v5788
        %5927 = vmatmul.mubr.bf16.gmra.mxu0 %v5537
        %v5928 = vpop.f32.mrf.mxu0
        %v5929 = vadd.f32 %v5325, %v5928
        %v5930 = vpop.f32.mrf.mxu0
        %v5931 = vpop.f32.mrf.mxu0
        %v5932 = vadd.f32 %v5328, %v5931
        %v5933 = vpop.f32.mrf.mxu0
        %5934 = vmatprep.mubr.bf16.mxu0 %v5791
        %5935 = vmatmul.mubr.bf16.gmra.mxu0 %v5545
        %v5936 = vpop.f32.mrf.mxu0
        %v5937 = vadd.f32 %v5333, %v5936
        %v5938 = vpop.f32.mrf.mxu0
        %v5939 = vpop.f32.mrf.mxu0
        %v5940 = vadd.f32 %v5336, %v5939
        %v5941 = vpop.f32.mrf.mxu0
        %5942 = vmatprep.mubr.bf16.mxu0 %v5794
        %5943 = vmatmul.mubr.bf16.gmra.mxu0 %v5553
        %v5944 = vpop.f32.mrf.mxu0
        %v5945 = vadd.f32 %v5341, %v5944
        %v5946 = vpop.f32.mrf.mxu0
        %v5947 = vpop.f32.mrf.mxu0
        %v5948 = vadd.f32 %v5344, %v5947
        %v5949 = vpop.f32.mrf.mxu0
        %5950 = vmatprep.mubr.bf16.mxu0 %v5797
        %5951 = vmatmul.mubr.bf16.gmra.mxu0 %v5561
        %v5952 = vpop.f32.mrf.mxu0
        %v5953 = vadd.f32 %v5349, %v5952
        %v5954 = vpop.f32.mrf.mxu0
        %v5955 = vpop.f32.mrf.mxu0
        %v5956 = vadd.f32 %v5352, %v5955
        %v5957 = vpop.f32.mrf.mxu0
        %5958 = vmatprep.mubr.bf16.mxu0 %v5800
        %5959 = vmatmul.mubr.bf16.gmra.mxu0 %v5569
        %v5960 = vpop.f32.mrf.mxu0
        %v5961 = vadd.f32 %v5357, %v5960
        %v5962 = vpop.f32.mrf.mxu0
        %v5963 = vpop.f32.mrf.mxu0
        %v5964 = vadd.f32 %v5360, %v5963
        %v5965 = vpop.f32.mrf.mxu0
        %5966 = vmatprep.mubr.bf16.mxu0 %v5803
        %5967 = vmatmul.mubr.bf16.gmra.mxu0 %v5577
        %v5968 = vpop.f32.mrf.mxu0
        %v5969 = vadd.f32 %v5365, %v5968
        %v5970 = vpop.f32.mrf.mxu0
        %v5971 = vpop.f32.mrf.mxu0
        %v5972 = vadd.f32 %v5368, %v5971
        %v5973 = vpop.f32.mrf.mxu0
        %5974 = vmatprep.mubr.bf16.mxu0 %v5806
        %5975 = vmatmul.mubr.bf16.gmra.mxu0 %v5585
        %v5976 = vpop.f32.mrf.mxu0
        %v5977 = vadd.f32 %v5373, %v5976
        %v5978 = vpop.f32.mrf.mxu0
        %v5979 = vpop.f32.mrf.mxu0
        %v5980 = vadd.f32 %v5376, %v5979
        %v5981 = vpop.f32.mrf.mxu0
        %5982 = vmatprep.mubr.bf16.mxu0 %v5809
        %5983 = vmatmul.mubr.bf16.gmra.mxu0 %v5593
        %v5984 = vpop.f32.mrf.mxu0
        %v5985 = vadd.f32 %v5381, %v5984
        %v5986 = vpop.f32.mrf.mxu0
        %v5987 = vpop.f32.mrf.mxu0
        %v5988 = vadd.f32 %v5384, %v5987
        %v5989 = vpop.f32.mrf.mxu0
        %5990 = vmatprep.mubr.bf16.mxu0 %v5812
        %5991 = vmatmul.mubr.bf16.gmra.mxu0 %v5601
        %v5992 = vpop.f32.mrf.mxu0
        %v5993 = vadd.f32 %v5389, %v5992
        %v5994 = vpop.f32.mrf.mxu0
        %v5995 = vpop.f32.mrf.mxu0
        %v5996 = vadd.f32 %v5392, %v5995
        %v5997 = vpop.f32.mrf.mxu0
        %5998 = vmatprep.mubr.bf16.mxu0 %v5815
        %5999 = vmatmul.mubr.bf16.gmra.mxu0 %v5609
        %v6000 = vpop.f32.mrf.mxu0
        %v6001 = vadd.f32 %v5397, %v6000
        %v6002 = vpop.f32.mrf.mxu0
        %v6003 = vpop.f32.mrf.mxu0
        %v6004 = vadd.f32 %v5400, %v6003
        %v6005 = vpop.f32.mrf.mxu0
        %6006 = vmatprep.mubr.bf16.mxu0 %v5818
        %6007 = vmatmul.mubr.bf16.gmra.mxu0 %v5617
        %v6008 = vpop.f32.mrf.mxu0
        %v6009 = vadd.f32 %v5405, %v6008
        %v6010 = vpop.f32.mrf.mxu0
        %v6011 = vpop.f32.mrf.mxu0
        %v6012 = vadd.f32 %v5408, %v6011
        %v6013 = vpop.f32.mrf.mxu0
        %6014 = vmatprep.mubr.bf16.mxu0 %v5821
        %6015 = vmatmul.mubr.bf16.gmra.mxu0 %v5625
        %v6016 = vpop.f32.mrf.mxu0
        %v6017 = vadd.f32 %v5413, %v6016
        %v6018 = vpop.f32.mrf.mxu0
        %v6019 = vpop.f32.mrf.mxu0
        %v6020 = vadd.f32 %v5416, %v6019
        %v6021 = vpop.f32.mrf.mxu0
        %6022 = vmatprep.mubr.bf16.mxu0 %v5824
        %6023 = vmatmul.mubr.bf16.gmra.mxu0 %v5633
        %v6024 = vpop.f32.mrf.mxu0
        %v6025 = vadd.f32 %v5421, %v6024
        %v6026 = vpop.f32.mrf.mxu0
        %v6027 = vpop.f32.mrf.mxu0
        %v6028 = vadd.f32 %v5424, %v6027
        %v6029 = vpop.f32.mrf.mxu0
        %6030 = vmatprep.mubr.bf16.mxu0 %v5827
        %6031 = vmatmul.mubr.bf16.gmra.mxu0 %v5641
        %v6032 = vpop.f32.mrf.mxu0
        %v6033 = vadd.f32 %v5429, %v6032
        %v6034 = vpop.f32.mrf.mxu0
        %v6035 = vpop.f32.mrf.mxu0
        %v6036 = vadd.f32 %v5432, %v6035
        %v6037 = vpop.f32.mrf.mxu0
        %6038 = vmatprep.mubr.bf16.mxu0 %v5830
        %6039 = vmatmul.mubr.bf16.gmra.mxu0 %v5649
        %v6040 = vpop.f32.mrf.mxu0
        %v6041 = vadd.f32 %v5437, %v6040
        %v6042 = vpop.f32.mrf.mxu0
        %v6043 = vpop.f32.mrf.mxu0
        %v6044 = vadd.f32 %v5440, %v6043
        %v6045 = vpop.f32.mrf.mxu0
        %6046 = vmatprep.mubr.bf16.mxu0 %v5833
        %6047 = vmatmul.mubr.bf16.gmra.mxu0 %v5657
        %v6048 = vpop.f32.mrf.mxu0
        %v6049 = vadd.f32 %v5445, %v6048
        %v6050 = vpop.f32.mrf.mxu0
        %v6051 = vpop.f32.mrf.mxu0
        %v6052 = vadd.f32 %v5448, %v6051
        %v6053 = vpop.f32.mrf.mxu0
        %6054 = vmatprep.mubr.bf16.mxu0 %v5836
        %6055 = vmatmul.mubr.bf16.gmra.mxu0 %v5665
        %v6056 = vpop.f32.mrf.mxu0
        %v6057 = vadd.f32 %v5453, %v6056
        %v6058 = vpop.f32.mrf.mxu0
        %v6059 = vpop.f32.mrf.mxu0
        %v6060 = vadd.f32 %v5456, %v6059
        %v6061 = vpop.f32.mrf.mxu0
        %6062 = vdwg.mxu0
        %s6063 = scalar_lea.vmem %s4, 192
        %v6064 = vld [vmem:[%s6063] sm:$0xf]
        %v6065 = vld [vmem:[%s6063 + $0x4] sm:$0xf]
        %v6066 = vld [vmem:[%s6063 + $0x8] sm:$0xf]
        %v6067 = vld [vmem:[%s6063 + $0xc] sm:$0xf]
        %v6068 = vld [vmem:[%s6063 + $0x10] sm:$0xf]
        %v6069 = vld [vmem:[%s6063 + $0x14] sm:$0xf]
        %v6070 = vld [vmem:[%s6063 + $0x18] sm:$0xf]
        %v6071 = vld [vmem:[%s6063 + $0x1c] sm:$0xf]
        %v6072 = vld [vmem:[%s6063 + $0x20] sm:$0xf]
        %v6073 = vld [vmem:[%s6063 + $0x24] sm:$0xf]
        %v6074 = vld [vmem:[%s6063 + $0x28] sm:$0xf]
        %v6075 = vld [vmem:[%s6063 + $0x2c] sm:$0xf]
        %v6076 = vld [vmem:[%s6063 + $0x30] sm:$0xf]
        %v6077 = vld [vmem:[%s6063 + $0x34] sm:$0xf]
        %v6078 = vld [vmem:[%s6063 + $0x38] sm:$0xf]
        %v6079 = vld [vmem:[%s6063 + $0x3c] sm:$0xf]
        %v6080 = vld [vmem:[%s6063 + $0x40] sm:$0xf]
        %v6081 = vld [vmem:[%s6063 + $0x44] sm:$0xf]
        %v6082 = vld [vmem:[%s6063 + $0x48] sm:$0xf]
        %v6083 = vld [vmem:[%s6063 + $0x4c] sm:$0xf]
        %v6084 = vld [vmem:[%s6063 + $0x50] sm:$0xf]
        %v6085 = vld [vmem:[%s6063 + $0x54] sm:$0xf]
        %v6086 = vld [vmem:[%s6063 + $0x58] sm:$0xf]
        %v6087 = vld [vmem:[%s6063 + $0x5c] sm:$0xf]
        %v6088 = vrot.slane %v5051, 3
        %v6089 = vrot.slane %v5054, 4
        %v6090 = vor.u32 %v6088, %v6089
        %v6091 = vsel %vm2722, %v5664, %v6090
        %v6092 = vrot.slane %v5059, 3
        %v6093 = vrot.slane %v5062, 4
        %v6094 = vor.u32 %v6092, %v6093
        %v6095 = vsel %vm2722, %v5668, %v6094
        %v6096 = vshrl.u32 %v4646, 16
        %v6098 = vrot.slane %v6096, 3
        %v6099 = vshll.u32 %v4646, 16
        %v6101 = vrot.slane %v6099, 4
        %v6102 = vor.u32 %v6098, %v6101
        %v6103 = vsel %vm2722, %v6090, %v6102
        %v6105 = vshrl.u32 %v4562, 16
        %v6107 = vrot.slane %v6105, 3
        %v6108 = vshll.u32 %v4562, 16
        %v6110 = vrot.slane %v6108, 4
        %v6111 = vor.u32 %v6107, %v6110
        %v6112 = vsel %vm2722, %v6094, %v6111
        %v6113 = vshrl.u32 %v4649, 16
        %v6115 = vrot.slane %v6113, 3
        %v6116 = vshll.u32 %v4649, 16
        %v6118 = vrot.slane %v6116, 4
        %v6119 = vor.u32 %v6115, %v6118
        %v6120 = vsel %vm2722, %v6102, %v6119
        %v6122 = vshrl.u32 %v4564, 16
        %v6124 = vrot.slane %v6122, 3
        %v6125 = vshll.u32 %v4564, 16
        %v6127 = vrot.slane %v6125, 4
        %v6128 = vor.u32 %v6124, %v6127
        %v6129 = vsel %vm2722, %v6111, %v6128
        %v6157 = vunpack.c.l.b16 %v6064
        %v6158 = vunpack.c.l.b16 %v6065
        %v6159 = vunpack.c.l.b16 %v6066
        %v6160 = vunpack.c.l.b16 %v6067
        %v6161 = vunpack.c.l.b16 %v6068
        %v6162 = vunpack.c.l.b16 %v6069
        %v6163 = vunpack.c.l.b16 %v6070
        %v6164 = vunpack.c.l.b16 %v6071
        %v6165 = vunpack.c.l.b16 %v6072
        %v6166 = vunpack.c.l.b16 %v6073
        %v6167 = vunpack.c.l.b16 %v6074
        %v6168 = vunpack.c.l.b16 %v6075
        %v6169 = vunpack.c.l.b16 %v6076
        %v6170 = vunpack.c.l.b16 %v6077
        %v6171 = vunpack.c.l.b16 %v6078
        %v6172 = vunpack.c.l.b16 %v6079
        %v6173 = vunpack.c.l.b16 %v6080
        %v6174 = vunpack.c.l.b16 %v6081
        %v6175 = vunpack.c.l.b16 %v6082
        %v6176 = vunpack.c.l.b16 %v6083
        %v6177 = vunpack.c.l.b16 %v6084
        %v6178 = vunpack.c.l.b16 %v6085
        %v6179 = vunpack.c.l.b16 %v6086
        %v6180 = vunpack.c.l.b16 %v6087
        %v6181 = vpack.c.b16 %v6158, %v6157
        %v6182 = vpack.c.b16 %v6160, %v6159
        %v6183 = vpack.c.b16 %v6162, %v6161
        %v6184 = vpack.c.b16 %v6164, %v6163
        %v6185 = vpack.c.b16 %v6166, %v6165
        %v6186 = vpack.c.b16 %v6168, %v6167
        %v6187 = vpack.c.b16 %v6170, %v6169
        %v6188 = vpack.c.b16 %v6172, %v6171
        %v6189 = vpack.c.b16 %v6174, %v6173
        %v6190 = vpack.c.b16 %v6176, %v6175
        %v6191 = vpack.c.b16 %v6178, %v6177
        %v6192 = vpack.c.b16 %v6180, %v6179
        %v6206 = vsel %vm4565, %v6095, 0
        %v6209 = vsel %vm4565, %v6112, 0
        %v6212 = vsel %vm4565, %v6129, 0
        %6214 = vmatprep.subr.bf16.mxu0 0
        %6215 = vmatpush1.bf16.msra.mxu0 %v6188
        %6216 = vmatprep.subr.bf16.mxu0 0
        %6217 = vmatpush1.bf16.msra.mxu0 %v6187
        %6218 = vmatprep.subr.bf16.mxu0 0
        %6219 = vmatpush1.bf16.msra.mxu0 %v6186
        %6220 = vmatprep.subr.bf16.mxu0 0
        %6221 = vmatpush1.bf16.msra.mxu0 %v6185
        %6222 = vmatprep.subr.bf16.mxu0 0
        %6223 = vmatpush1.bf16.msra.mxu0 %v6184
        %6224 = vmatprep.subr.bf16.mxu0 0
        %6225 = vmatpush1.bf16.msra.mxu0 %v6183
        %6226 = vmatprep.subr.bf16.mxu0 0
        %6227 = vmatpush1.bf16.msra.mxu0 %v6182
        %6228 = vmatprep.subr.bf16.mxu0 0
        %6229 = vmatpush1.bf16.msra.mxu0 %v6181
        %6230 = vmatprep.subr.bf16.mxu0 0
        %6231 = vmatpush2.bf16.msra.mxu0 0
        %6232 = vmatprep.subr.bf16.mxu0 0
        %6233 = vmatpush2.bf16.msra.mxu0 0
        %6234 = vmatprep.subr.bf16.mxu0 0
        %6235 = vmatpush2.bf16.msra.mxu0 0
        %6236 = vmatprep.subr.bf16.mxu0 0
        %6237 = vmatpush2.bf16.msra.mxu0 0
        %6238 = vmatprep.subr.bf16.mxu0 0
        %6239 = vmatpush2.bf16.msra.mxu0 %v6192
        %6240 = vmatprep.subr.bf16.mxu0 0
        %6241 = vmatpush2.bf16.msra.mxu0 %v6191
        %6242 = vmatprep.subr.bf16.mxu0 0
        %6243 = vmatpush2.bf16.msra.mxu0 %v6190
        %6244 = vmatprep.subr.bf16.mxu0 0
        %6245 = vmatpush2.bf16.msra.mxu0 %v6189
        %6246 = vmatprep.mubr.bf16.mxu0 %v5776
        %6247 = vmatmul.mubr.bf16.gmra.mxu0 %v5505
        %v6248 = vpop.f32.mrf.mxu0
        %v6249 = vadd.f32 0.0, %v6248
        %v6250 = vpop.f32.mrf.mxu0
        %v6251 = vpop.f32.mrf.mxu0
        %v6252 = vadd.f32 0.0, %v6251
        %v6253 = vpop.f32.mrf.mxu0
        %6254 = vmatprep.mubr.bf16.mxu0 %v5779
        %6255 = vmatmul.mubr.bf16.gmra.mxu0 %v5513
        %v6256 = vpop.f32.mrf.mxu0
        %v6257 = vadd.f32 0.0, %v6256
        %v6258 = vpop.f32.mrf.mxu0
        %v6259 = vpop.f32.mrf.mxu0
        %v6260 = vadd.f32 0.0, %v6259
        %v6261 = vpop.f32.mrf.mxu0
        %6262 = vmatprep.mubr.bf16.mxu0 %v5782
        %6263 = vmatmul.mubr.bf16.gmra.mxu0 %v5521
        %v6264 = vpop.f32.mrf.mxu0
        %v6265 = vadd.f32 0.0, %v6264
        %v6266 = vpop.f32.mrf.mxu0
        %v6267 = vpop.f32.mrf.mxu0
        %v6268 = vadd.f32 0.0, %v6267
        %v6269 = vpop.f32.mrf.mxu0
        %6270 = vmatprep.mubr.bf16.mxu0 %v5785
        %6271 = vmatmul.mubr.bf16.gmra.mxu0 %v5529
        %v6272 = vpop.f32.mrf.mxu0
        %v6273 = vadd.f32 0.0, %v6272
        %v6274 = vpop.f32.mrf.mxu0
        %v6275 = vpop.f32.mrf.mxu0
        %v6276 = vadd.f32 0.0, %v6275
        %v6277 = vpop.f32.mrf.mxu0
        %6278 = vmatprep.mubr.bf16.mxu0 %v5788
        %6279 = vmatmul.mubr.bf16.gmra.mxu0 %v5537
        %v6280 = vpop.f32.mrf.mxu0
        %v6281 = vadd.f32 0.0, %v6280
        %v6282 = vpop.f32.mrf.mxu0
        %v6283 = vpop.f32.mrf.mxu0
        %v6284 = vadd.f32 0.0, %v6283
        %v6285 = vpop.f32.mrf.mxu0
        %6286 = vmatprep.mubr.bf16.mxu0 %v5791
        %6287 = vmatmul.mubr.bf16.gmra.mxu0 %v5545
        %v6288 = vpop.f32.mrf.mxu0
        %v6289 = vadd.f32 0.0, %v6288
        %v6290 = vpop.f32.mrf.mxu0
        %v6291 = vpop.f32.mrf.mxu0
        %v6292 = vadd.f32 0.0, %v6291
        %v6293 = vpop.f32.mrf.mxu0
        %6294 = vmatprep.mubr.bf16.mxu0 %v5794
        %6295 = vmatmul.mubr.bf16.gmra.mxu0 %v5553
        %v6296 = vpop.f32.mrf.mxu0
        %v6297 = vadd.f32 0.0, %v6296
        %v6298 = vpop.f32.mrf.mxu0
        %v6299 = vpop.f32.mrf.mxu0
        %v6300 = vadd.f32 0.0, %v6299
        %v6301 = vpop.f32.mrf.mxu0
        %6302 = vmatprep.mubr.bf16.mxu0 %v5797
        %6303 = vmatmul.mubr.bf16.gmra.mxu0 %v5561
        %v6304 = vpop.f32.mrf.mxu0
        %v6305 = vadd.f32 0.0, %v6304
        %v6306 = vpop.f32.mrf.mxu0
        %v6307 = vpop.f32.mrf.mxu0
        %v6308 = vadd.f32 0.0, %v6307
        %v6309 = vpop.f32.mrf.mxu0
        %6310 = vmatprep.mubr.bf16.mxu0 %v5800
        %6311 = vmatmul.mubr.bf16.gmra.mxu0 %v5569
        %v6312 = vpop.f32.mrf.mxu0
        %v6313 = vadd.f32 0.0, %v6312
        %v6314 = vpop.f32.mrf.mxu0
        %v6315 = vpop.f32.mrf.mxu0
        %v6316 = vadd.f32 0.0, %v6315
        %v6317 = vpop.f32.mrf.mxu0
        %6318 = vmatprep.mubr.bf16.mxu0 %v5803
        %6319 = vmatmul.mubr.bf16.gmra.mxu0 %v5577
        %v6320 = vpop.f32.mrf.mxu0
        %v6321 = vadd.f32 0.0, %v6320
        %v6322 = vpop.f32.mrf.mxu0
        %v6323 = vpop.f32.mrf.mxu0
        %v6324 = vadd.f32 0.0, %v6323
        %v6325 = vpop.f32.mrf.mxu0
        %6326 = vmatprep.mubr.bf16.mxu0 %v5806
        %6327 = vmatmul.mubr.bf16.gmra.mxu0 %v5585
        %v6328 = vpop.f32.mrf.mxu0
        %v6329 = vadd.f32 0.0, %v6328
        %v6330 = vpop.f32.mrf.mxu0
        %v6331 = vpop.f32.mrf.mxu0
        %v6332 = vadd.f32 0.0, %v6331
        %v6333 = vpop.f32.mrf.mxu0
        %6334 = vmatprep.mubr.bf16.mxu0 %v5809
        %6335 = vmatmul.mubr.bf16.gmra.mxu0 %v5593
        %v6336 = vpop.f32.mrf.mxu0
        %v6337 = vadd.f32 0.0, %v6336
        %v6338 = vpop.f32.mrf.mxu0
        %v6339 = vpop.f32.mrf.mxu0
        %v6340 = vadd.f32 0.0, %v6339
        %v6341 = vpop.f32.mrf.mxu0
        %6342 = vmatprep.mubr.bf16.mxu0 %v5812
        %6343 = vmatmul.mubr.bf16.gmra.mxu0 %v5601
        %v6344 = vpop.f32.mrf.mxu0
        %v6345 = vadd.f32 0.0, %v6344
        %v6346 = vpop.f32.mrf.mxu0
        %v6347 = vpop.f32.mrf.mxu0
        %v6348 = vadd.f32 0.0, %v6347
        %v6349 = vpop.f32.mrf.mxu0
        %6350 = vmatprep.mubr.bf16.mxu0 %v5815
        %6351 = vmatmul.mubr.bf16.gmra.mxu0 %v5609
        %v6352 = vpop.f32.mrf.mxu0
        %v6353 = vadd.f32 0.0, %v6352
        %v6354 = vpop.f32.mrf.mxu0
        %v6355 = vpop.f32.mrf.mxu0
        %v6356 = vadd.f32 0.0, %v6355
        %v6357 = vpop.f32.mrf.mxu0
        %6358 = vmatprep.mubr.bf16.mxu0 %v5818
        %6359 = vmatmul.mubr.bf16.gmra.mxu0 %v5617
        %v6360 = vpop.f32.mrf.mxu0
        %v6361 = vadd.f32 0.0, %v6360
        %v6362 = vpop.f32.mrf.mxu0
        %v6363 = vpop.f32.mrf.mxu0
        %v6364 = vadd.f32 0.0, %v6363
        %v6365 = vpop.f32.mrf.mxu0
        %6366 = vmatprep.mubr.bf16.mxu0 %v5821
        %6367 = vmatmul.mubr.bf16.gmra.mxu0 %v5625
        %v6368 = vpop.f32.mrf.mxu0
        %v6369 = vadd.f32 0.0, %v6368
        %v6370 = vpop.f32.mrf.mxu0
        %v6371 = vpop.f32.mrf.mxu0
        %v6372 = vadd.f32 0.0, %v6371
        %v6373 = vpop.f32.mrf.mxu0
        %6374 = vmatprep.mubr.bf16.mxu0 %v5824
        %6375 = vmatmul.mubr.bf16.gmra.mxu0 %v5633
        %v6376 = vpop.f32.mrf.mxu0
        %v6377 = vadd.f32 0.0, %v6376
        %v6378 = vpop.f32.mrf.mxu0
        %v6379 = vpop.f32.mrf.mxu0
        %v6380 = vadd.f32 0.0, %v6379
        %v6381 = vpop.f32.mrf.mxu0
        %6382 = vmatprep.mubr.bf16.mxu0 %v5827
        %6383 = vmatmul.mubr.bf16.gmra.mxu0 %v5641
        %v6384 = vpop.f32.mrf.mxu0
        %v6385 = vadd.f32 0.0, %v6384
        %v6386 = vpop.f32.mrf.mxu0
        %v6387 = vpop.f32.mrf.mxu0
        %v6388 = vadd.f32 0.0, %v6387
        %v6389 = vpop.f32.mrf.mxu0
        %6390 = vmatprep.mubr.bf16.mxu0 %v5830
        %6391 = vmatmul.mubr.bf16.gmra.mxu0 %v5649
        %v6392 = vpop.f32.mrf.mxu0
        %v6393 = vadd.f32 0.0, %v6392
        %v6394 = vpop.f32.mrf.mxu0
        %v6395 = vpop.f32.mrf.mxu0
        %v6396 = vadd.f32 0.0, %v6395
        %v6397 = vpop.f32.mrf.mxu0
        %6398 = vmatprep.mubr.bf16.mxu0 %v5833
        %6399 = vmatmul.mubr.bf16.gmra.mxu0 %v5657
        %v6400 = vpop.f32.mrf.mxu0
        %v6401 = vadd.f32 0.0, %v6400
        %v6402 = vpop.f32.mrf.mxu0
        %v6403 = vpop.f32.mrf.mxu0
        %v6404 = vadd.f32 0.0, %v6403
        %v6405 = vpop.f32.mrf.mxu0
        %6406 = vmatprep.mubr.bf16.mxu0 %v5836
        %6407 = vmatmul.mubr.bf16.gmra.mxu0 %v5665
        %v6408 = vpop.f32.mrf.mxu0
        %v6409 = vadd.f32 0.0, %v6408
        %v6410 = vpop.f32.mrf.mxu0
        %v6411 = vpop.f32.mrf.mxu0
        %v6412 = vadd.f32 0.0, %v6411
        %v6413 = vpop.f32.mrf.mxu0
        %6414 = vmatprep.mubr.bf16.mxu0 %v6206
        %6415 = vmatmul.mubr.bf16.gmra.mxu0 %v6091
        %v6416 = vpop.f32.mrf.mxu0
        %v6417 = vadd.f32 0.0, %v6416
        %v6418 = vpop.f32.mrf.mxu0
        %v6419 = vpop.f32.mrf.mxu0
        %v6420 = vadd.f32 0.0, %v6419
        %v6421 = vpop.f32.mrf.mxu0
        %6422 = vmatprep.mubr.bf16.mxu0 %v6209
        %6423 = vmatmul.mubr.bf16.gmra.mxu0 %v6103
        %v6424 = vpop.f32.mrf.mxu0
        %v6425 = vadd.f32 0.0, %v6424
        %v6426 = vpop.f32.mrf.mxu0
        %v6427 = vpop.f32.mrf.mxu0
        %v6428 = vadd.f32 0.0, %v6427
        %v6429 = vpop.f32.mrf.mxu0
        %6430 = vmatprep.mubr.bf16.mxu0 %v6212
        %6431 = vmatmul.mubr.bf16.gmra.mxu0 %v6120
        %v6432 = vpop.f32.mrf.mxu0
        %v6433 = vadd.f32 0.0, %v6432
        %v6434 = vpop.f32.mrf.mxu0
        %v6435 = vpop.f32.mrf.mxu0
        %v6436 = vadd.f32 0.0, %v6435
        %v6437 = vpop.f32.mrf.mxu0
        %6438 = vdwg.mxu0
        %v6439 = vadd.f32 %v5873, %v6249
        %v6440 = vadd.f32 %v5876, %v6252
        %v6441 = vadd.f32 %v5881, %v6257
        %v6442 = vadd.f32 %v5884, %v6260
        %v6443 = vadd.f32 %v5889, %v6265
        %v6444 = vadd.f32 %v5892, %v6268
        %v6445 = vadd.f32 %v5897, %v6273
        %v6446 = vadd.f32 %v5900, %v6276
        %v6447 = vadd.f32 %v5905, %v6281
        %v6448 = vadd.f32 %v5908, %v6284
        %v6449 = vadd.f32 %v5913, %v6289
        %v6450 = vadd.f32 %v5916, %v6292
        %v6451 = vadd.f32 %v5921, %v6297
        %v6452 = vadd.f32 %v5924, %v6300
        %v6453 = vadd.f32 %v5929, %v6305
        %v6454 = vadd.f32 %v5932, %v6308
        %v6455 = vadd.f32 %v5937, %v6313
        %v6456 = vadd.f32 %v5940, %v6316
        %v6457 = vadd.f32 %v5945, %v6321
        %v6458 = vadd.f32 %v5948, %v6324
        %v6459 = vadd.f32 %v5953, %v6329
        %v6460 = vadd.f32 %v5956, %v6332
        %v6461 = vadd.f32 %v5961, %v6337
        %v6462 = vadd.f32 %v5964, %v6340
        %v6463 = vadd.f32 %v5969, %v6345
        %v6464 = vadd.f32 %v5972, %v6348
        %v6465 = vadd.f32 %v5977, %v6353
        %v6466 = vadd.f32 %v5980, %v6356
        %v6467 = vadd.f32 %v5985, %v6361
        %v6468 = vadd.f32 %v5988, %v6364
        %v6469 = vadd.f32 %v5993, %v6369
        %v6470 = vadd.f32 %v5996, %v6372
        %v6471 = vadd.f32 %v6001, %v6377
        %v6472 = vadd.f32 %v6004, %v6380
        %v6473 = vadd.f32 %v6009, %v6385
        %v6474 = vadd.f32 %v6012, %v6388
        %v6475 = vadd.f32 %v6017, %v6393
        %v6476 = vadd.f32 %v6020, %v6396
        %v6477 = vadd.f32 %v6025, %v6401
        %v6478 = vadd.f32 %v6028, %v6404
        %v6479 = vadd.f32 %v6033, %v6409
        %v6480 = vadd.f32 %v6036, %v6412
        %v6481 = vadd.f32 %v6041, %v6417
        %v6482 = vadd.f32 %v6044, %v6420
        %v6483 = vadd.f32 %v6049, %v6425
        %v6484 = vadd.f32 %v6052, %v6428
        %v6485 = vadd.f32 %v6057, %v6433
        %v6486 = vadd.f32 %v6060, %v6436
        %v6487 = vld [vmem:[%s5] sm:$0x1]
        %v6489 = vlaneseq
        %v6490 = vshrl.u32 %v6489, 7
        %v6491 = vsub.s32 0, %v6490
        %v6492 = vrot.slane %v6487, %v6491
        %v6494 = vmul.f32 %v6439, %v6492
        %v6495 = vmul.f32 %v6440, %v6492
        %v6496 = vmul.f32 %v6441, %v6492
        %v6497 = vmul.f32 %v6442, %v6492
        %v6498 = vmul.f32 %v6443, %v6492
        %v6499 = vmul.f32 %v6444, %v6492
        %v6500 = vmul.f32 %v6445, %v6492
        %v6501 = vmul.f32 %v6446, %v6492
        %v6502 = vmul.f32 %v6447, %v6492
        %v6503 = vmul.f32 %v6448, %v6492
        %v6504 = vmul.f32 %v6449, %v6492
        %v6505 = vmul.f32 %v6450, %v6492
        %v6506 = vmul.f32 %v6451, %v6492
        %v6507 = vmul.f32 %v6452, %v6492
        %v6508 = vmul.f32 %v6453, %v6492
        %v6509 = vmul.f32 %v6454, %v6492
        %v6510 = vmul.f32 %v6455, %v6492
        %v6511 = vmul.f32 %v6456, %v6492
        %v6512 = vmul.f32 %v6457, %v6492
        %v6513 = vmul.f32 %v6458, %v6492
        %v6514 = vmul.f32 %v6459, %v6492
        %v6515 = vmul.f32 %v6460, %v6492
        %v6516 = vmul.f32 %v6461, %v6492
        %v6517 = vmul.f32 %v6462, %v6492
        %v6518 = vmul.f32 %v6463, %v6492
        %v6519 = vmul.f32 %v6464, %v6492
        %v6520 = vmul.f32 %v6465, %v6492
        %v6521 = vmul.f32 %v6466, %v6492
        %v6522 = vmul.f32 %v6467, %v6492
        %v6523 = vmul.f32 %v6468, %v6492
        %v6524 = vmul.f32 %v6469, %v6492
        %v6525 = vmul.f32 %v6470, %v6492
        %v6526 = vmul.f32 %v6471, %v6492
        %v6527 = vmul.f32 %v6472, %v6492
        %v6528 = vmul.f32 %v6473, %v6492
        %v6529 = vmul.f32 %v6474, %v6492
        %v6530 = vmul.f32 %v6475, %v6492
        %v6531 = vmul.f32 %v6476, %v6492
        %v6532 = vmul.f32 %v6477, %v6492
        %v6533 = vmul.f32 %v6478, %v6492
        %v6534 = vmul.f32 %v6479, %v6492
        %v6535 = vmul.f32 %v6480, %v6492
        %v6536 = vmul.f32 %v6481, %v6492
        %v6537 = vmul.f32 %v6482, %v6492
        %v6538 = vmul.f32 %v6483, %v6492
        %v6539 = vmul.f32 %v6484, %v6492
        %v6540 = vmul.f32 %v6485, %v6492
        %v6541 = vmul.f32 %v6486, %v6492
        %v6542 = vld [vmem:[%s6] sm:$0x1]
        %v6544 = vlaneseq
        %v6545 = vshrl.u32 %v6544, 7
        %v6546 = vsub.s32 0, %v6545
        %v6547 = vrot.slane %v6542, %v6546
        %v6549 = vadd.f32 %v6494, %v6547
        %v6550 = vadd.f32 %v6495, %v6547
        %v6551 = vadd.f32 %v6496, %v6547
        %v6552 = vadd.f32 %v6497, %v6547
        %v6553 = vadd.f32 %v6498, %v6547
        %v6554 = vadd.f32 %v6499, %v6547
        %v6555 = vadd.f32 %v6500, %v6547
        %v6556 = vadd.f32 %v6501, %v6547
        %v6557 = vadd.f32 %v6502, %v6547
        %v6558 = vadd.f32 %v6503, %v6547
        %v6559 = vadd.f32 %v6504, %v6547
        %v6560 = vadd.f32 %v6505, %v6547
        %v6561 = vadd.f32 %v6506, %v6547
        %v6562 = vadd.f32 %v6507, %v6547
        %v6563 = vadd.f32 %v6508, %v6547
        %v6564 = vadd.f32 %v6509, %v6547
        %v6565 = vadd.f32 %v6510, %v6547
        %v6566 = vadd.f32 %v6511, %v6547
        %v6567 = vadd.f32 %v6512, %v6547
        %v6568 = vadd.f32 %v6513, %v6547
        %v6569 = vadd.f32 %v6514, %v6547
        %v6570 = vadd.f32 %v6515, %v6547
        %v6571 = vadd.f32 %v6516, %v6547
        %v6572 = vadd.f32 %v6517, %v6547
        %v6573 = vadd.f32 %v6518, %v6547
        %v6574 = vadd.f32 %v6519, %v6547
        %v6575 = vadd.f32 %v6520, %v6547
        %v6576 = vadd.f32 %v6521, %v6547
        %v6577 = vadd.f32 %v6522, %v6547
        %v6578 = vadd.f32 %v6523, %v6547
        %v6579 = vadd.f32 %v6524, %v6547
        %v6580 = vadd.f32 %v6525, %v6547
        %v6581 = vadd.f32 %v6526, %v6547
        %v6582 = vadd.f32 %v6527, %v6547
        %v6583 = vadd.f32 %v6528, %v6547
        %v6584 = vadd.f32 %v6529, %v6547
        %v6585 = vadd.f32 %v6530, %v6547
        %v6586 = vadd.f32 %v6531, %v6547
        %v6587 = vadd.f32 %v6532, %v6547
        %v6588 = vadd.f32 %v6533, %v6547
        %v6589 = vadd.f32 %v6534, %v6547
        %v6590 = vadd.f32 %v6535, %v6547
        %v6591 = vadd.f32 %v6536, %v6547
        %v6592 = vadd.f32 %v6537, %v6547
        %v6593 = vadd.f32 %v6538, %v6547
        %v6594 = vadd.f32 %v6539, %v6547
        %v6595 = vadd.f32 %v6540, %v6547
        %v6596 = vadd.f32 %v6541, %v6547
        %v6597 = vmax.f32 %v6549, 0.0
        %v6598 = vmax.f32 %v6550, 0.0
        %v6599 = vmax.f32 %v6551, 0.0
        %v6600 = vmax.f32 %v6552, 0.0
        %v6601 = vmax.f32 %v6553, 0.0
        %v6602 = vmax.f32 %v6554, 0.0
        %v6603 = vmax.f32 %v6555, 0.0
        %v6604 = vmax.f32 %v6556, 0.0
        %v6605 = vmax.f32 %v6557, 0.0
        %v6606 = vmax.f32 %v6558, 0.0
        %v6607 = vmax.f32 %v6559, 0.0
        %v6608 = vmax.f32 %v6560, 0.0
        %v6609 = vmax.f32 %v6561, 0.0
        %v6610 = vmax.f32 %v6562, 0.0
        %v6611 = vmax.f32 %v6563, 0.0
        %v6612 = vmax.f32 %v6564, 0.0
        %v6613 = vmax.f32 %v6565, 0.0
        %v6614 = vmax.f32 %v6566, 0.0
        %v6615 = vmax.f32 %v6567, 0.0
        %v6616 = vmax.f32 %v6568, 0.0
        %v6617 = vmax.f32 %v6569, 0.0
        %v6618 = vmax.f32 %v6570, 0.0
        %v6619 = vmax.f32 %v6571, 0.0
        %v6620 = vmax.f32 %v6572, 0.0
        %v6621 = vmax.f32 %v6573, 0.0
        %v6622 = vmax.f32 %v6574, 0.0
        %v6623 = vmax.f32 %v6575, 0.0
        %v6624 = vmax.f32 %v6576, 0.0
        %v6625 = vmax.f32 %v6577, 0.0
        %v6626 = vmax.f32 %v6578, 0.0
        %v6627 = vmax.f32 %v6579, 0.0
        %v6628 = vmax.f32 %v6580, 0.0
        %v6629 = vmax.f32 %v6581, 0.0
        %v6630 = vmax.f32 %v6582, 0.0
        %v6631 = vmax.f32 %v6583, 0.0
        %v6632 = vmax.f32 %v6584, 0.0
        %v6633 = vmax.f32 %v6585, 0.0
        %v6634 = vmax.f32 %v6586, 0.0
        %v6635 = vmax.f32 %v6587, 0.0
        %v6636 = vmax.f32 %v6588, 0.0
        %v6637 = vmax.f32 %v6589, 0.0
        %v6638 = vmax.f32 %v6590, 0.0
        %v6639 = vmax.f32 %v6591, 0.0
        %v6640 = vmax.f32 %v6592, 0.0
        %v6641 = vmax.f32 %v6593, 0.0
        %v6642 = vmax.f32 %v6594, 0.0
        %v6643 = vmax.f32 %v6595, 0.0
        %v6644 = vmax.f32 %v6596, 0.0
        %v6645 = vpack.c.bf16 %v6598, %v6597
        %v6646 = vpack.c.bf16 %v6600, %v6599
        %v6647 = vpack.c.bf16 %v6602, %v6601
        %v6648 = vpack.c.bf16 %v6604, %v6603
        %v6649 = vpack.c.bf16 %v6606, %v6605
        %v6650 = vpack.c.bf16 %v6608, %v6607
        %v6651 = vpack.c.bf16 %v6610, %v6609
        %v6652 = vpack.c.bf16 %v6612, %v6611
        %v6653 = vpack.c.bf16 %v6614, %v6613
        %v6654 = vpack.c.bf16 %v6616, %v6615
        %v6655 = vpack.c.bf16 %v6618, %v6617
        %v6656 = vpack.c.bf16 %v6620, %v6619
        %v6657 = vpack.c.bf16 %v6622, %v6621
        %v6658 = vpack.c.bf16 %v6624, %v6623
        %v6659 = vpack.c.bf16 %v6626, %v6625
        %v6660 = vpack.c.bf16 %v6628, %v6627
        %v6661 = vpack.c.bf16 %v6630, %v6629
        %v6662 = vpack.c.bf16 %v6632, %v6631
        %v6663 = vpack.c.bf16 %v6634, %v6633
        %v6664 = vpack.c.bf16 %v6636, %v6635
        %v6665 = vpack.c.bf16 %v6638, %v6637
        %v6666 = vpack.c.bf16 %v6640, %v6639
        %v6667 = vpack.c.bf16 %v6642, %v6641
        %v6668 = vpack.c.bf16 %v6644, %v6643
        %v6693 = vunpack.c.l.b16 %v6645
        %v6694 = vunpack.c.h.b16 %v6645
        %v6695 = vunpack.c.h.b16 %v6646
        %v6696 = vunpack.c.l.b16 %v6647
        %v6697 = vunpack.c.l.b16 %v6648
        %v6698 = vunpack.c.h.b16 %v6648
        %v6699 = vunpack.c.h.b16 %v6649
        %v6700 = vunpack.c.l.b16 %v6650
        %v6701 = vunpack.c.l.b16 %v6651
        %v6702 = vunpack.c.h.b16 %v6651
        %v6703 = vunpack.c.h.b16 %v6652
        %v6704 = vunpack.c.l.b16 %v6653
        %v6705 = vunpack.c.l.b16 %v6654
        %v6706 = vunpack.c.h.b16 %v6654
        %v6707 = vunpack.c.h.b16 %v6655
        %v6708 = vunpack.c.l.b16 %v6656
        %v6709 = vunpack.c.l.b16 %v6657
        %v6710 = vunpack.c.h.b16 %v6657
        %v6711 = vunpack.c.h.b16 %v6658
        %v6712 = vunpack.c.l.b16 %v6659
        %v6713 = vunpack.c.l.b16 %v6660
        %v6714 = vunpack.c.h.b16 %v6660
        %v6715 = vunpack.c.h.b16 %v6661
        %v6716 = vunpack.c.l.b16 %v6662
        %v6717 = vunpack.c.l.b16 %v6663
        %v6718 = vunpack.c.h.b16 %v6663
        %v6719 = vunpack.c.h.b16 %v6664
        %v6720 = vunpack.c.l.b16 %v6665
        %v6721 = vunpack.c.l.b16 %v6666
        %v6722 = vunpack.c.h.b16 %v6666
        %v6723 = vunpack.c.h.b16 %v6667
        %v6724 = vunpack.c.l.b16 %v6668
        %v6725 = vpack.c.b16 %v6693, %v6693
        %v6726 = vpack.c.b16 %v6694, %v6694
        %v6727 = vpack.c.b16 %v6695, %v6695
        %v6728 = vpack.c.b16 %v6696, %v6696
        %v6729 = vpack.c.b16 %v6697, %v6697
        %v6730 = vpack.c.b16 %v6698, %v6698
        %v6731 = vpack.c.b16 %v6699, %v6699
        %v6732 = vpack.c.b16 %v6700, %v6700
        %v6733 = vpack.c.b16 %v6701, %v6701
        %v6734 = vpack.c.b16 %v6702, %v6702
        %v6735 = vpack.c.b16 %v6703, %v6703
        %v6736 = vpack.c.b16 %v6704, %v6704
        %v6737 = vpack.c.b16 %v6705, %v6705
        %v6738 = vpack.c.b16 %v6706, %v6706
        %v6739 = vpack.c.b16 %v6707, %v6707
        %v6740 = vpack.c.b16 %v6708, %v6708
        %v6741 = vpack.c.b16 %v6709, %v6709
        %v6742 = vpack.c.b16 %v6710, %v6710
        %v6743 = vpack.c.b16 %v6711, %v6711
        %v6744 = vpack.c.b16 %v6712, %v6712
        %v6745 = vpack.c.b16 %v6713, %v6713
        %v6746 = vpack.c.b16 %v6714, %v6714
        %v6747 = vpack.c.b16 %v6715, %v6715
        %v6748 = vpack.c.b16 %v6716, %v6716
        %v6749 = vpack.c.b16 %v6717, %v6717
        %v6750 = vpack.c.b16 %v6718, %v6718
        %v6751 = vpack.c.b16 %v6719, %v6719
        %v6752 = vpack.c.b16 %v6720, %v6720
        %v6753 = vpack.c.b16 %v6721, %v6721
        %v6754 = vpack.c.b16 %v6722, %v6722
        %v6755 = vpack.c.b16 %v6723, %v6723
        %v6756 = vpack.c.b16 %v6724, %v6724
        %6789 = vst.msk [vmem:[%s357] sm:$0xf] %vm371, %v6725
        %6790 = vst.msk [vmem:[%s357 + $0x4] sm:$0xf] %vm371, %v6726
        %6791 = vst.msk [vmem:[%s357 + $0x8] sm:$0xf] %vm371, %v6727
        %6792 = vst.msk [vmem:[%s357 + $0xc] sm:$0xf] %vm371, %v6728
        %6793 = vst.msk [vmem:[%s357 + $0x10] sm:$0xf] %vm371, %v6729
        %6794 = vst.msk [vmem:[%s357 + $0x14] sm:$0xf] %vm371, %v6730
        %6795 = vst.msk [vmem:[%s357 + $0x18] sm:$0xf] %vm371, %v6731
        %6796 = vst.msk [vmem:[%s357 + $0x1c] sm:$0xf] %vm371, %v6732
        %6797 = vst.msk [vmem:[%s357 + $0x20] sm:$0xf] %vm371, %v6733
        %6798 = vst.msk [vmem:[%s357 + $0x24] sm:$0xf] %vm371, %v6734
        %6799 = vst.msk [vmem:[%s357 + $0x28] sm:$0xf] %vm371, %v6735
        %6800 = vst.msk [vmem:[%s357 + $0x2c] sm:$0xf] %vm371, %v6736
        %6801 = vst.msk [vmem:[%s357 + $0x30] sm:$0xf] %vm371, %v6737
        %6802 = vst.msk [vmem:[%s357 + $0x34] sm:$0xf] %vm371, %v6738
        %6803 = vst.msk [vmem:[%s357 + $0x38] sm:$0xf] %vm371, %v6739
        %6804 = vst.msk [vmem:[%s357 + $0x3c] sm:$0xf] %vm371, %v6740
        %6805 = vst.msk [vmem:[%s357 + $0x40] sm:$0xf] %vm371, %v6741
        %6806 = vst.msk [vmem:[%s357 + $0x44] sm:$0xf] %vm371, %v6742
        %6807 = vst.msk [vmem:[%s357 + $0x48] sm:$0xf] %vm371, %v6743
        %6808 = vst.msk [vmem:[%s357 + $0x4c] sm:$0xf] %vm371, %v6744
        %6809 = vst.msk [vmem:[%s357 + $0x50] sm:$0xf] %vm371, %v6745
        %6810 = vst.msk [vmem:[%s357 + $0x54] sm:$0xf] %vm371, %v6746
        %6811 = vst.msk [vmem:[%s357 + $0x58] sm:$0xf] %vm371, %v6747
        %6812 = vst.msk [vmem:[%s357 + $0x5c] sm:$0xf] %vm371, %v6748
        %6813 = vst.msk [vmem:[%s357 + $0x60] sm:$0xf] %vm371, %v6749
        %6814 = vst.msk [vmem:[%s357 + $0x64] sm:$0xf] %vm371, %v6750
        %6815 = vst.msk [vmem:[%s357 + $0x68] sm:$0xf] %vm371, %v6751
        %6816 = vst.msk [vmem:[%s357 + $0x6c] sm:$0xf] %vm371, %v6752
        %6817 = vst.msk [vmem:[%s357 + $0x70] sm:$0xf] %vm371, %v6753
        %6818 = vst.msk [vmem:[%s357 + $0x74] sm:$0xf] %vm371, %v6754
        %6819 = vst.msk [vmem:[%s357 + $0x78] sm:$0xf] %vm371, %v6755
        %6820 = vst.msk [vmem:[%s357 + $0x7c] sm:$0xf] %vm371, %v6756
        %v6821 = vld [vmem:[%s7] sm:$0x1]
        %v6822 = vunpack.c.l.bf16 %v6725
        %v6823 = vunpack.c.l.bf16 %v6726
        %v6824 = vunpack.c.l.bf16 %v6727
        %v6825 = vunpack.c.l.bf16 %v6728
        %v6826 = vunpack.c.l.bf16 %v6729
        %v6827 = vunpack.c.l.bf16 %v6730
        %v6828 = vunpack.c.l.bf16 %v6731
        %v6829 = vunpack.c.l.bf16 %v6732
        %v6830 = vunpack.c.l.bf16 %v6733
        %v6831 = vunpack.c.l.bf16 %v6734
        %v6832 = vunpack.c.l.bf16 %v6735
        %v6833 = vunpack.c.l.bf16 %v6736
        %v6834 = vunpack.c.l.bf16 %v6737
        %v6835 = vunpack.c.l.bf16 %v6738
        %v6836 = vunpack.c.l.bf16 %v6739
        %v6837 = vunpack.c.l.bf16 %v6740
        %v6838 = vunpack.c.l.bf16 %v6741
        %v6839 = vunpack.c.l.bf16 %v6742
        %v6840 = vunpack.c.l.bf16 %v6743
        %v6841 = vunpack.c.l.bf16 %v6744
        %v6842 = vunpack.c.l.bf16 %v6745
        %v6843 = vunpack.c.l.bf16 %v6746
        %v6844 = vunpack.c.l.bf16 %v6747
        %v6845 = vunpack.c.l.bf16 %v6748
        %v6846 = vunpack.c.l.bf16 %v6749
        %v6847 = vunpack.c.l.bf16 %v6750
        %v6848 = vunpack.c.l.bf16 %v6751
        %v6849 = vunpack.c.l.bf16 %v6752
        %v6850 = vunpack.c.l.bf16 %v6753
        %v6851 = vunpack.c.l.bf16 %v6754
        %v6852 = vunpack.c.l.bf16 %v6755
        %v6853 = vunpack.c.l.bf16 %v6756
        %v6855 = vlaneseq
        %v6856 = vshrl.u32 %v6855, 7
        %v6857 = vsub.s32 0, %v6856
        %v6858 = vrot.slane %v6821, %v6857
        %v6860 = vmul.f32 %v6822, %v6858
        %v6861 = vmul.f32 %v6823, %v6858
        %v6862 = vmul.f32 %v6824, %v6858
        %v6863 = vmul.f32 %v6825, %v6858
        %v6864 = vmul.f32 %v6826, %v6858
        %v6865 = vmul.f32 %v6827, %v6858
        %v6866 = vmul.f32 %v6828, %v6858
        %v6867 = vmul.f32 %v6829, %v6858
        %v6868 = vmul.f32 %v6830, %v6858
        %v6869 = vmul.f32 %v6831, %v6858
        %v6870 = vmul.f32 %v6832, %v6858
        %v6871 = vmul.f32 %v6833, %v6858
        %v6872 = vmul.f32 %v6834, %v6858
        %v6873 = vmul.f32 %v6835, %v6858
        %v6874 = vmul.f32 %v6836, %v6858
        %v6875 = vmul.f32 %v6837, %v6858
        %v6876 = vmul.f32 %v6838, %v6858
        %v6877 = vmul.f32 %v6839, %v6858
        %v6878 = vmul.f32 %v6840, %v6858
        %v6879 = vmul.f32 %v6841, %v6858
        %v6880 = vmul.f32 %v6842, %v6858
        %v6881 = vmul.f32 %v6843, %v6858
        %v6882 = vmul.f32 %v6844, %v6858
        %v6883 = vmul.f32 %v6845, %v6858
        %v6884 = vmul.f32 %v6846, %v6858
        %v6885 = vmul.f32 %v6847, %v6858
        %v6886 = vmul.f32 %v6848, %v6858
        %v6887 = vmul.f32 %v6849, %v6858
        %v6888 = vmul.f32 %v6850, %v6858
        %v6889 = vmul.f32 %v6851, %v6858
        %v6890 = vmul.f32 %v6852, %v6858
        %v6891 = vmul.f32 %v6853, %v6858
        %v6892 = vsel %vm4565, %v6860, 0.0
        %6893 = vadd.xlane.f32.xlu0 %v6892
        %v6894 = vpop.xlane.xlu0 %6893
        %v6895 = vsel %vm4565, %v6861, 0.0
        %6896 = vadd.xlane.f32.xlu0 %v6895
        %v6897 = vpop.xlane.xlu0 %6896
        %v6898 = vsel %vm4565, %v6862, 0.0
        %6899 = vadd.xlane.f32.xlu0 %v6898
        %v6900 = vpop.xlane.xlu0 %6899
        %v6901 = vsel %vm4565, %v6863, 0.0
        %6902 = vadd.xlane.f32.xlu0 %v6901
        %v6903 = vpop.xlane.xlu0 %6902
        %v6904 = vsel %vm4565, %v6864, 0.0
        %6905 = vadd.xlane.f32.xlu0 %v6904
        %v6906 = vpop.xlane.xlu0 %6905
        %v6907 = vsel %vm4565, %v6865, 0.0
        %6908 = vadd.xlane.f32.xlu0 %v6907
        %v6909 = vpop.xlane.xlu0 %6908
        %v6910 = vsel %vm4565, %v6866, 0.0
        %6911 = vadd.xlane.f32.xlu0 %v6910
        %v6912 = vpop.xlane.xlu0 %6911
        %v6913 = vsel %vm4565, %v6867, 0.0
        %6914 = vadd.xlane.f32.xlu0 %v6913
        %v6915 = vpop.xlane.xlu0 %6914
        %v6916 = vsel %vm4565, %v6868, 0.0
        %6917 = vadd.xlane.f32.xlu0 %v6916
        %v6918 = vpop.xlane.xlu0 %6917
        %v6919 = vsel %vm4565, %v6869, 0.0
        %6920 = vadd.xlane.f32.xlu0 %v6919
        %v6921 = vpop.xlane.xlu0 %6920
        %v6922 = vsel %vm4565, %v6870, 0.0
        %6923 = vadd.xlane.f32.xlu0 %v6922
        %v6924 = vpop.xlane.xlu0 %6923
        %v6925 = vsel %vm4565, %v6871, 0.0
        %6926 = vadd.xlane.f32.xlu0 %v6925
        %v6927 = vpop.xlane.xlu0 %6926
        %v6928 = vsel %vm4565, %v6872, 0.0
        %6929 = vadd.xlane.f32.xlu0 %v6928
        %v6930 = vpop.xlane.xlu0 %6929
        %v6931 = vsel %vm4565, %v6873, 0.0
        %6932 = vadd.xlane.f32.xlu0 %v6931
        %v6933 = vpop.xlane.xlu0 %6932
        %v6934 = vsel %vm4565, %v6874, 0.0
        %6935 = vadd.xlane.f32.xlu0 %v6934
        %v6936 = vpop.xlane.xlu0 %6935
        %v6937 = vsel %vm4565, %v6875, 0.0
        %6938 = vadd.xlane.f32.xlu0 %v6937
        %v6939 = vpop.xlane.xlu0 %6938
        %v6940 = vsel %vm4565, %v6876, 0.0
        %6941 = vadd.xlane.f32.xlu0 %v6940
        %v6942 = vpop.xlane.xlu0 %6941
        %v6943 = vsel %vm4565, %v6877, 0.0
        %6944 = vadd.xlane.f32.xlu0 %v6943
        %v6945 = vpop.xlane.xlu0 %6944
        %v6946 = vsel %vm4565, %v6878, 0.0
        %6947 = vadd.xlane.f32.xlu0 %v6946
        %v6948 = vpop.xlane.xlu0 %6947
        %v6949 = vsel %vm4565, %v6879, 0.0
        %6950 = vadd.xlane.f32.xlu0 %v6949
        %v6951 = vpop.xlane.xlu0 %6950
        %v6952 = vsel %vm4565, %v6880, 0.0
        %6953 = vadd.xlane.f32.xlu0 %v6952
        %v6954 = vpop.xlane.xlu0 %6953
        %v6955 = vsel %vm4565, %v6881, 0.0
        %6956 = vadd.xlane.f32.xlu0 %v6955
        %v6957 = vpop.xlane.xlu0 %6956
        %v6958 = vsel %vm4565, %v6882, 0.0
        %6959 = vadd.xlane.f32.xlu0 %v6958
        %v6960 = vpop.xlane.xlu0 %6959
        %v6961 = vsel %vm4565, %v6883, 0.0
        %6962 = vadd.xlane.f32.xlu0 %v6961
        %v6963 = vpop.xlane.xlu0 %6962
        %v6964 = vsel %vm4565, %v6884, 0.0
        %6965 = vadd.xlane.f32.xlu0 %v6964
        %v6966 = vpop.xlane.xlu0 %6965
        %v6967 = vsel %vm4565, %v6885, 0.0
        %6968 = vadd.xlane.f32.xlu0 %v6967
        %v6969 = vpop.xlane.xlu0 %6968
        %v6970 = vsel %vm4565, %v6886, 0.0
        %6971 = vadd.xlane.f32.xlu0 %v6970
        %v6972 = vpop.xlane.xlu0 %6971
        %v6973 = vsel %vm4565, %v6887, 0.0
        %6974 = vadd.xlane.f32.xlu0 %v6973
        %v6975 = vpop.xlane.xlu0 %6974
        %v6976 = vsel %vm4565, %v6888, 0.0
        %6977 = vadd.xlane.f32.xlu0 %v6976
        %v6978 = vpop.xlane.xlu0 %6977
        %v6979 = vsel %vm4565, %v6889, 0.0
        %6980 = vadd.xlane.f32.xlu0 %v6979
        %v6981 = vpop.xlane.xlu0 %6980
        %v6982 = vsel %vm4565, %v6890, 0.0
        %6983 = vadd.xlane.f32.xlu0 %v6982
        %v6984 = vpop.xlane.xlu0 %6983
        %v6985 = vsel %vm4565, %v6891, 0.0
        %6986 = vadd.xlane.f32.xlu0 %v6985
        %v6987 = vpop.xlane.xlu0 %6986
        %s6988 = sld [smem:[#allocation3]]
        %v6989 = vstv %s6988
        %v6990 = vadd.f32 %v6894, %v6989
        %v6991 = vadd.f32 %v6897, %v6989
        %v6992 = vadd.f32 %v6900, %v6989
        %v6993 = vadd.f32 %v6903, %v6989
        %v6994 = vadd.f32 %v6906, %v6989
        %v6995 = vadd.f32 %v6909, %v6989
        %v6996 = vadd.f32 %v6912, %v6989
        %v6997 = vadd.f32 %v6915, %v6989
        %v6998 = vadd.f32 %v6918, %v6989
        %v6999 = vadd.f32 %v6921, %v6989
        %v7000 = vadd.f32 %v6924, %v6989
        %v7001 = vadd.f32 %v6927, %v6989
        %v7002 = vadd.f32 %v6930, %v6989
        %v7003 = vadd.f32 %v6933, %v6989
        %v7004 = vadd.f32 %v6936, %v6989
        %v7005 = vadd.f32 %v6939, %v6989
        %v7006 = vadd.f32 %v6942, %v6989
        %v7007 = vadd.f32 %v6945, %v6989
        %v7008 = vadd.f32 %v6948, %v6989
        %v7009 = vadd.f32 %v6951, %v6989
        %v7010 = vadd.f32 %v6954, %v6989
        %v7011 = vadd.f32 %v6957, %v6989
        %v7012 = vadd.f32 %v6960, %v6989
        %v7013 = vadd.f32 %v6963, %v6989
        %v7014 = vadd.f32 %v6966, %v6989
        %v7015 = vadd.f32 %v6969, %v6989
        %v7016 = vadd.f32 %v6972, %v6989
        %v7017 = vadd.f32 %v6975, %v6989
        %v7018 = vadd.f32 %v6978, %v6989
        %v7019 = vadd.f32 %v6981, %v6989
        %v7020 = vadd.f32 %v6984, %v6989
        %v7021 = vadd.f32 %v6987, %v6989
        %v7022 = vmax.f32 %v6990, 0.0
        %v7023 = vmax.f32 %v6991, 0.0
        %v7024 = vmax.f32 %v6992, 0.0
        %v7025 = vmax.f32 %v6993, 0.0
        %v7026 = vmax.f32 %v6994, 0.0
        %v7027 = vmax.f32 %v6995, 0.0
        %v7028 = vmax.f32 %v6996, 0.0
        %v7029 = vmax.f32 %v6997, 0.0
        %v7030 = vmax.f32 %v6998, 0.0
        %v7031 = vmax.f32 %v6999, 0.0
        %v7032 = vmax.f32 %v7000, 0.0
        %v7033 = vmax.f32 %v7001, 0.0
        %v7034 = vmax.f32 %v7002, 0.0
        %v7035 = vmax.f32 %v7003, 0.0
        %v7036 = vmax.f32 %v7004, 0.0
        %v7037 = vmax.f32 %v7005, 0.0
        %v7038 = vmax.f32 %v7006, 0.0
        %v7039 = vmax.f32 %v7007, 0.0
        %v7040 = vmax.f32 %v7008, 0.0
        %v7041 = vmax.f32 %v7009, 0.0
        %v7042 = vmax.f32 %v7010, 0.0
        %v7043 = vmax.f32 %v7011, 0.0
        %v7044 = vmax.f32 %v7012, 0.0
        %v7045 = vmax.f32 %v7013, 0.0
        %v7046 = vmax.f32 %v7014, 0.0
        %v7047 = vmax.f32 %v7015, 0.0
        %v7048 = vmax.f32 %v7016, 0.0
        %v7049 = vmax.f32 %v7017, 0.0
        %v7050 = vmax.f32 %v7018, 0.0
        %v7051 = vmax.f32 %v7019, 0.0
        %v7052 = vmax.f32 %v7020, 0.0
        %v7053 = vmax.f32 %v7021, 0.0
        %v7054 = vxor.u32 %v7022, 2147483648
        %v7055 = vxor.u32 %v7023, 2147483648
        %v7056 = vxor.u32 %v7024, 2147483648
        %v7057 = vxor.u32 %v7025, 2147483648
        %v7058 = vxor.u32 %v7026, 2147483648
        %v7059 = vxor.u32 %v7027, 2147483648
        %v7060 = vxor.u32 %v7028, 2147483648
        %v7061 = vxor.u32 %v7029, 2147483648
        %v7062 = vxor.u32 %v7030, 2147483648
        %v7063 = vxor.u32 %v7031, 2147483648
        %v7064 = vxor.u32 %v7032, 2147483648
        %v7065 = vxor.u32 %v7033, 2147483648
        %v7066 = vxor.u32 %v7034, 2147483648
        %v7067 = vxor.u32 %v7035, 2147483648
        %v7068 = vxor.u32 %v7036, 2147483648
        %v7069 = vxor.u32 %v7037, 2147483648
        %v7070 = vxor.u32 %v7038, 2147483648
        %v7071 = vxor.u32 %v7039, 2147483648
        %v7072 = vxor.u32 %v7040, 2147483648
        %v7073 = vxor.u32 %v7041, 2147483648
        %v7074 = vxor.u32 %v7042, 2147483648
        %v7075 = vxor.u32 %v7043, 2147483648
        %v7076 = vxor.u32 %v7044, 2147483648
        %v7077 = vxor.u32 %v7045, 2147483648
        %v7078 = vxor.u32 %v7046, 2147483648
        %v7079 = vxor.u32 %v7047, 2147483648
        %v7080 = vxor.u32 %v7048, 2147483648
        %v7081 = vxor.u32 %v7049, 2147483648
        %v7082 = vxor.u32 %v7050, 2147483648
        %v7083 = vxor.u32 %v7051, 2147483648
        %v7084 = vxor.u32 %v7052, 2147483648
        %v7085 = vxor.u32 %v7053, 2147483648
        %v7086 = vmul.f32 %v7054, 1.442695
        %v7087 = vpow.pop %v7086
        %v7088 = vmul.f32 %v7055, 1.442695
        %v7089 = vpow.pop %v7088
        %v7090 = vmul.f32 %v7056, 1.442695
        %v7091 = vpow.pop %v7090
        %v7092 = vmul.f32 %v7057, 1.442695
        %v7093 = vpow.pop %v7092
        %v7094 = vmul.f32 %v7058, 1.442695
        %v7095 = vpow.pop %v7094
        %v7096 = vmul.f32 %v7059, 1.442695
        %v7097 = vpow.pop %v7096
        %v7098 = vmul.f32 %v7060, 1.442695
        %v7099 = vpow.pop %v7098
        %v7100 = vmul.f32 %v7061, 1.442695
        %v7101 = vpow.pop %v7100
        %v7102 = vmul.f32 %v7062, 1.442695
        %v7103 = vpow.pop %v7102
        %v7104 = vmul.f32 %v7063, 1.442695
        %v7105 = vpow.pop %v7104
        %v7106 = vmul.f32 %v7064, 1.442695
        %v7107 = vpow.pop %v7106
        %v7108 = vmul.f32 %v7065, 1.442695
        %v7109 = vpow.pop %v7108
        %v7110 = vmul.f32 %v7066, 1.442695
        %v7111 = vpow.pop %v7110
        %v7112 = vmul.f32 %v7067, 1.442695
        %v7113 = vpow.pop %v7112
        %v7114 = vmul.f32 %v7068, 1.442695
        %v7115 = vpow.pop %v7114
        %v7116 = vmul.f32 %v7069, 1.442695
        %v7117 = vpow.pop %v7116
        %v7118 = vmul.f32 %v7070, 1.442695
        %v7119 = vpow.pop %v7118
        %v7120 = vmul.f32 %v7071, 1.442695
        %v7121 = vpow.pop %v7120
        %v7122 = vmul.f32 %v7072, 1.442695
        %v7123 = vpow.pop %v7122
        %v7124 = vmul.f32 %v7073, 1.442695
        %v7125 = vpow.pop %v7124
        %v7126 = vmul.f32 %v7074, 1.442695
        %v7127 = vpow.pop %v7126
        %v7128 = vmul.f32 %v7075, 1.442695
        %v7129 = vpow.pop %v7128
        %v7130 = vmul.f32 %v7076, 1.442695
        %v7131 = vpow.pop %v7130
        %v7132 = vmul.f32 %v7077, 1.442695
        %v7133 = vpow.pop %v7132
        %v7134 = vmul.f32 %v7078, 1.442695
        %v7135 = vpow.pop %v7134
        %v7136 = vmul.f32 %v7079, 1.442695
        %v7137 = vpow.pop %v7136
        %v7138 = vmul.f32 %v7080, 1.442695
        %v7139 = vpow.pop %v7138
        %v7140 = vmul.f32 %v7081, 1.442695
        %v7141 = vpow.pop %v7140
        %v7142 = vmul.f32 %v7082, 1.442695
        %v7143 = vpow.pop %v7142
        %v7144 = vmul.f32 %v7083, 1.442695
        %v7145 = vpow.pop %v7144
        %v7146 = vmul.f32 %v7084, 1.442695
        %v7147 = vpow.pop %v7146
        %v7148 = vmul.f32 %v7085, 1.442695
        %v7149 = vpow.pop %v7148
        %v7150 = vadd.f32 %v7087, 1.0
        %v7151 = vadd.f32 %v7089, 1.0
        %v7152 = vadd.f32 %v7091, 1.0
        %v7153 = vadd.f32 %v7093, 1.0
        %v7154 = vadd.f32 %v7095, 1.0
        %v7155 = vadd.f32 %v7097, 1.0
        %v7156 = vadd.f32 %v7099, 1.0
        %v7157 = vadd.f32 %v7101, 1.0
        %v7158 = vadd.f32 %v7103, 1.0
        %v7159 = vadd.f32 %v7105, 1.0
        %v7160 = vadd.f32 %v7107, 1.0
        %v7161 = vadd.f32 %v7109, 1.0
        %v7162 = vadd.f32 %v7111, 1.0
        %v7163 = vadd.f32 %v7113, 1.0
        %v7164 = vadd.f32 %v7115, 1.0
        %v7165 = vadd.f32 %v7117, 1.0
        %v7166 = vadd.f32 %v7119, 1.0
        %v7167 = vadd.f32 %v7121, 1.0
        %v7168 = vadd.f32 %v7123, 1.0
        %v7169 = vadd.f32 %v7125, 1.0
        %v7170 = vadd.f32 %v7127, 1.0
        %v7171 = vadd.f32 %v7129, 1.0
        %v7172 = vadd.f32 %v7131, 1.0
        %v7173 = vadd.f32 %v7133, 1.0
        %v7174 = vadd.f32 %v7135, 1.0
        %v7175 = vadd.f32 %v7137, 1.0
        %v7176 = vadd.f32 %v7139, 1.0
        %v7177 = vadd.f32 %v7141, 1.0
        %v7178 = vadd.f32 %v7143, 1.0
        %v7179 = vadd.f32 %v7145, 1.0
        %v7180 = vadd.f32 %v7147, 1.0
        %v7181 = vadd.f32 %v7149, 1.0
        %v7182 = vrcp.pop %v7150
        %v7183 = vmul.f32 1.0, %v7182
        %v7184 = vrcp.pop %v7151
        %v7185 = vmul.f32 1.0, %v7184
        %v7186 = vrcp.pop %v7152
        %v7187 = vmul.f32 1.0, %v7186
        %v7188 = vrcp.pop %v7153
        %v7189 = vmul.f32 1.0, %v7188
        %v7190 = vrcp.pop %v7154
        %v7191 = vmul.f32 1.0, %v7190
        %v7192 = vrcp.pop %v7155
        %v7193 = vmul.f32 1.0, %v7192
        %v7194 = vrcp.pop %v7156
        %v7195 = vmul.f32 1.0, %v7194
        %v7196 = vrcp.pop %v7157
        %v7197 = vmul.f32 1.0, %v7196
        %v7198 = vrcp.pop %v7158
        %v7199 = vmul.f32 1.0, %v7198
        %v7200 = vrcp.pop %v7159
        %v7201 = vmul.f32 1.0, %v7200
        %v7202 = vrcp.pop %v7160
        %v7203 = vmul.f32 1.0, %v7202
        %v7204 = vrcp.pop %v7161
        %v7205 = vmul.f32 1.0, %v7204
        %v7206 = vrcp.pop %v7162
        %v7207 = vmul.f32 1.0, %v7206
        %v7208 = vrcp.pop %v7163
        %v7209 = vmul.f32 1.0, %v7208
        %v7210 = vrcp.pop %v7164
        %v7211 = vmul.f32 1.0, %v7210
        %v7212 = vrcp.pop %v7165
        %v7213 = vmul.f32 1.0, %v7212
        %v7214 = vrcp.pop %v7166
        %v7215 = vmul.f32 1.0, %v7214
        %v7216 = vrcp.pop %v7167
        %v7217 = vmul.f32 1.0, %v7216
        %v7218 = vrcp.pop %v7168
        %v7219 = vmul.f32 1.0, %v7218
        %v7220 = vrcp.pop %v7169
        %v7221 = vmul.f32 1.0, %v7220
        %v7222 = vrcp.pop %v7170
        %v7223 = vmul.f32 1.0, %v7222
        %v7224 = vrcp.pop %v7171
        %v7225 = vmul.f32 1.0, %v7224
        %v7226 = vrcp.pop %v7172
        %v7227 = vmul.f32 1.0, %v7226
        %v7228 = vrcp.pop %v7173
        %v7229 = vmul.f32 1.0, %v7228
        %v7230 = vrcp.pop %v7174
        %v7231 = vmul.f32 1.0, %v7230
        %v7232 = vrcp.pop %v7175
        %v7233 = vmul.f32 1.0, %v7232
        %v7234 = vrcp.pop %v7176
        %v7235 = vmul.f32 1.0, %v7234
        %v7236 = vrcp.pop %v7177
        %v7237 = vmul.f32 1.0, %v7236
        %v7238 = vrcp.pop %v7178
        %v7239 = vmul.f32 1.0, %v7238
        %v7240 = vrcp.pop %v7179
        %v7241 = vmul.f32 1.0, %v7240
        %v7242 = vrcp.pop %v7180
        %v7243 = vmul.f32 1.0, %v7242
        %v7244 = vrcp.pop %v7181
        %v7245 = vmul.f32 1.0, %v7244
        %v7278 = vlaneseq
        %v7279 = vand.u32 %v7278, 127
        %v7280 = vlaneseq
        %v7281 = vshrl.u32 %v7280, 7
        %v7282 = vsub.s32 %v7279, %v7281
        %v7283 = vrot.slane %v7183, %v7282
        %v7284 = vadd.s32 %v7279, 4294967288
        %v7285 = vlaneseq
        %v7286 = vshrl.u32 %v7285, 7
        %v7287 = vsub.s32 %v7284, %v7286
        %v7288 = vrot.slane %v7185, %v7287
        %vm7289 = vcmask 130112
        %v7290 = vsel %vm7289, %v7288, %v7283
        %v7291 = vlaneseq
        %v7292 = vshrl.u32 %v7291, 7
        %v7293 = vsub.s32 %v7279, %v7292
        %v7294 = vrot.slane %v7187, %v7293
        %v7295 = vlaneseq
        %v7296 = vshrl.u32 %v7295, 7
        %v7297 = vsub.s32 %v7284, %v7296
        %v7298 = vrot.slane %v7189, %v7297
        %v7299 = vsel %vm7289, %v7298, %v7294
        %v7300 = vlaneseq
        %v7301 = vshrl.u32 %v7300, 7
        %v7302 = vsub.s32 %v7279, %v7301
        %v7303 = vrot.slane %v7191, %v7302
        %v7304 = vlaneseq
        %v7305 = vshrl.u32 %v7304, 7
        %v7306 = vsub.s32 %v7284, %v7305
        %v7307 = vrot.slane %v7193, %v7306
        %v7308 = vsel %vm7289, %v7307, %v7303
        %v7309 = vlaneseq
        %v7310 = vshrl.u32 %v7309, 7
        %v7311 = vsub.s32 %v7279, %v7310
        %v7312 = vrot.slane %v7195, %v7311
        %v7313 = vlaneseq
        %v7314 = vshrl.u32 %v7313, 7
        %v7315 = vsub.s32 %v7284, %v7314
        %v7316 = vrot.slane %v7197, %v7315
        %v7317 = vsel %vm7289, %v7316, %v7312
        %v7318 = vlaneseq
        %v7319 = vshrl.u32 %v7318, 7
        %v7320 = vsub.s32 %v7279, %v7319
        %v7321 = vrot.slane %v7199, %v7320
        %v7322 = vlaneseq
        %v7323 = vshrl.u32 %v7322, 7
        %v7324 = vsub.s32 %v7284, %v7323
        %v7325 = vrot.slane %v7201, %v7324
        %v7326 = vsel %vm7289, %v7325, %v7321
        %v7327 = vlaneseq
        %v7328 = vshrl.u32 %v7327, 7
        %v7329 = vsub.s32 %v7279, %v7328
        %v7330 = vrot.slane %v7203, %v7329
        %v7331 = vlaneseq
        %v7332 = vshrl.u32 %v7331, 7
        %v7333 = vsub.s32 %v7284, %v7332
        %v7334 = vrot.slane %v7205, %v7333
        %v7335 = vsel %vm7289, %v7334, %v7330
        %v7336 = vlaneseq
        %v7337 = vshrl.u32 %v7336, 7
        %v7338 = vsub.s32 %v7279, %v7337
        %v7339 = vrot.slane %v7207, %v7338
        %v7340 = vlaneseq
        %v7341 = vshrl.u32 %v7340, 7
        %v7342 = vsub.s32 %v7284, %v7341
        %v7343 = vrot.slane %v7209, %v7342
        %v7344 = vsel %vm7289, %v7343, %v7339
        %v7345 = vlaneseq
        %v7346 = vshrl.u32 %v7345, 7
        %v7347 = vsub.s32 %v7279, %v7346
        %v7348 = vrot.slane %v7211, %v7347
        %v7349 = vlaneseq
        %v7350 = vshrl.u32 %v7349, 7
        %v7351 = vsub.s32 %v7284, %v7350
        %v7352 = vrot.slane %v7213, %v7351
        %v7353 = vsel %vm7289, %v7352, %v7348
        %v7354 = vlaneseq
        %v7355 = vshrl.u32 %v7354, 7
        %v7356 = vsub.s32 %v7279, %v7355
        %v7357 = vrot.slane %v7215, %v7356
        %v7358 = vlaneseq
        %v7359 = vshrl.u32 %v7358, 7
        %v7360 = vsub.s32 %v7284, %v7359
        %v7361 = vrot.slane %v7217, %v7360
        %v7362 = vsel %vm7289, %v7361, %v7357
        %v7363 = vlaneseq
        %v7364 = vshrl.u32 %v7363, 7
        %v7365 = vsub.s32 %v7279, %v7364
        %v7366 = vrot.slane %v7219, %v7365
        %v7367 = vlaneseq
        %v7368 = vshrl.u32 %v7367, 7
        %v7369 = vsub.s32 %v7284, %v7368
        %v7370 = vrot.slane %v7221, %v7369
        %v7371 = vsel %vm7289, %v7370, %v7366
        %v7372 = vlaneseq
        %v7373 = vshrl.u32 %v7372, 7
        %v7374 = vsub.s32 %v7279, %v7373
        %v7375 = vrot.slane %v7223, %v7374
        %v7376 = vlaneseq
        %v7377 = vshrl.u32 %v7376, 7
        %v7378 = vsub.s32 %v7284, %v7377
        %v7379 = vrot.slane %v7225, %v7378
        %v7380 = vsel %vm7289, %v7379, %v7375
        %v7381 = vlaneseq
        %v7382 = vshrl.u32 %v7381, 7
        %v7383 = vsub.s32 %v7279, %v7382
        %v7384 = vrot.slane %v7227, %v7383
        %v7385 = vlaneseq
        %v7386 = vshrl.u32 %v7385, 7
        %v7387 = vsub.s32 %v7284, %v7386
        %v7388 = vrot.slane %v7229, %v7387
        %v7389 = vsel %vm7289, %v7388, %v7384
        %v7390 = vlaneseq
        %v7391 = vshrl.u32 %v7390, 7
        %v7392 = vsub.s32 %v7279, %v7391
        %v7393 = vrot.slane %v7231, %v7392
        %v7394 = vlaneseq
        %v7395 = vshrl.u32 %v7394, 7
        %v7396 = vsub.s32 %v7284, %v7395
        %v7397 = vrot.slane %v7233, %v7396
        %v7398 = vsel %vm7289, %v7397, %v7393
        %v7399 = vlaneseq
        %v7400 = vshrl.u32 %v7399, 7
        %v7401 = vsub.s32 %v7279, %v7400
        %v7402 = vrot.slane %v7235, %v7401
        %v7403 = vlaneseq
        %v7404 = vshrl.u32 %v7403, 7
        %v7405 = vsub.s32 %v7284, %v7404
        %v7406 = vrot.slane %v7237, %v7405
        %v7407 = vsel %vm7289, %v7406, %v7402
        %v7408 = vlaneseq
        %v7409 = vshrl.u32 %v7408, 7
        %v7410 = vsub.s32 %v7279, %v7409
        %v7411 = vrot.slane %v7239, %v7410
        %v7412 = vlaneseq
        %v7413 = vshrl.u32 %v7412, 7
        %v7414 = vsub.s32 %v7284, %v7413
        %v7415 = vrot.slane %v7241, %v7414
        %v7416 = vsel %vm7289, %v7415, %v7411
        %v7417 = vlaneseq
        %v7418 = vshrl.u32 %v7417, 7
        %v7419 = vsub.s32 %v7279, %v7418
        %v7420 = vrot.slane %v7243, %v7419
        %v7421 = vlaneseq
        %v7422 = vshrl.u32 %v7421, 7
        %v7423 = vsub.s32 %v7284, %v7422
        %v7424 = vrot.slane %v7245, %v7423
        %v7425 = vsel %vm7289, %v7424, %v7420
        %vm7426 = vcmask 1041409
        %v7427 = vsel %vm7426, %v7299, %v7290
        %vm7428 = vcmask 1042434
        %v7429 = vsel %vm7428, %v7308, %v7427
        %vm7430 = vcmask 1043459
        %v7431 = vsel %vm7430, %v7317, %v7429
        %vm7432 = vcmask 1044484
        %v7433 = vsel %vm7432, %v7326, %v7431
        %vm7434 = vcmask 1045509
        %v7435 = vsel %vm7434, %v7335, %v7433
        %vm7436 = vcmask 1046534
        %v7437 = vsel %vm7436, %v7344, %v7435
        %vm7438 = vcmask 1047559
        %v7439 = vsel %vm7438, %v7353, %v7437
        %v7440 = vsel %vm7426, %v7371, %v7362
        %v7441 = vsel %vm7428, %v7380, %v7440
        %v7442 = vsel %vm7430, %v7389, %v7441
        %v7443 = vsel %vm7432, %v7398, %v7442
        %v7444 = vsel %vm7434, %v7407, %v7443
        %v7445 = vsel %vm7436, %v7416, %v7444
        %v7446 = vsel %vm7438, %v7425, %v7445
        %vm7449 = vcmask 130048
        %7450 = vst.msk [vmem:[%s364] sm:$0xff] %vm7449, %v7439
        %7451 = vst.msk [vmem:[%s364 + $0x8] sm:$0xff] %vm7449, %v7446
        %s7452 = sand.u32 %s231, 1
        %s7453 = scalar_lea.sflag [#allocation5], %s7452
        %s7454 = sand.u32 %s231, 1
        %s7455 = smul.addr %s7454, 128
        %s7456 = scalar_lea.vmem [#allocation4], %s7455
        %s7457 = sand.u32 %s257, 1
        %s7458 = scalar_lea.sflag [#allocation7], %s7457
        %s7459 = sand.u32 %s257, 1
        %s7460 = smul.addr %s7459, 16
        %s7461 = scalar_lea.vmem [#allocation6], %s7460
        // Predicated region
        $region57: #{tpu_custom_call.1} parent=55 // pred_check
          %p7462 = pneg %p241
        $region58: #{tpu_custom_call.1} parent=55 // pred_check_branch
          %7464 = sbr.rel (%p7462) target = $region60
        $region59: #{tpu_custom_call.1} parent=55 // pred_region
          %s7466 = ssub.s32 2048, 2048
          %7467 = vsyncadd %s7453, %s7466
          %s7468 = smul.addr %s29, 32
          %s7469 = smul.addr %s7468, 64
          %s7470 = scalar_lea.hbm %s9, %s7469
          %s7471 = sshll.u32 %s7456, 4
          %s7472 = int_to_ptr.vmem [resolvable:$true] %s7471
          %7477 = dma.vmem_to_hbm [thread:$0]  %s7472, 2048, %s7470, %s7453, 64, 64, 4
        $region60: #{tpu_custom_call.1} parent=55 // pred_fallthru
          _
        // Predicated region
        $region61: #{tpu_custom_call.1} parent=55 // pred_check
          %p7478 = pneg %p267
        $region62: #{tpu_custom_call.1} parent=55 // pred_check_branch
          %7480 = sbr.rel (%p7478) target = $region64
        $region63: #{tpu_custom_call.1} parent=55 // pred_region
          %s7482 = ssub.s32 256, 256
          %7483 = vsyncadd %s7458, %s7482
          %s7484 = smul.addr %s29, 2
          %s7485 = smul.addr %s7484, 128
          %s7486 = scalar_lea.hbm %s10, %s7485
          %s7487 = sshll.u32 %s7461, 4
          %s7488 = int_to_ptr.vmem [resolvable:$true] %s7487
          %7493 = dma.vmem_to_hbm [thread:$0]  %s7488, 256, %s7486, %s7458, 128, 128, 8
        $region64: #{tpu_custom_call.1} parent=55 // pred_fallthru
          _
      $region56: #{tpu_custom_call.1} parent=5 // pred_fallthru
        _
      %p7494 = scmp.le.s32.totalorder 2, %s24
      // Predicated region
      $region65: #{tpu_custom_call.1} parent=5 // pred_check
        %p7495 = pneg %p7494
      $region66: #{tpu_custom_call.1} parent=5 // pred_check_branch
        %7497 = sbr.rel (%p7495) target = $region68
      $region67: #{tpu_custom_call.1} parent=5 // pred_region
        %s7498 = ssub.s32 %s24, 2
        // Predicated region
        $region69: #{tpu_custom_call.1} parent=67 // pred_check
          %p7499 = pneg %p247
        $region70: #{tpu_custom_call.1} parent=67 // pred_check_branch
          %7501 = sbr.rel (%p7499) target = $region72
        $region71: #{tpu_custom_call.1} parent=67 // pred_region
          %s7502 = sand.u32 %s232, 1
          %s7503 = scalar_lea.sflag [#allocation5], %s7502
          %s7504 = sand.u32 %s232, 1
          %s7505 = smul.addr %s7504, 128
          %s7506 = scalar_lea.vmem [#allocation4], %s7505
          %7507 = dma.done %s7503, 2048
        $region72: #{tpu_custom_call.1} parent=67 // pred_fallthru
          _
        // Predicated region
        $region73: #{tpu_custom_call.1} parent=67 // pred_check
          %p7508 = pneg %p273
        $region74: #{tpu_custom_call.1} parent=67 // pred_check_branch
          %7510 = sbr.rel (%p7508) target = $region76
        $region75: #{tpu_custom_call.1} parent=67 // pred_region
          %s7511 = sand.u32 %s258, 1
          %s7512 = scalar_lea.sflag [#allocation7], %s7511
          %s7513 = sand.u32 %s258, 1
          %s7514 = smul.addr %s7513, 16
          %s7515 = scalar_lea.vmem [#allocation6], %s7514
          %7516 = dma.done %s7512, 256
        $region76: #{tpu_custom_call.1} parent=67 // pred_fallthru
          _
      $region68: #{tpu_custom_call.1} parent=5 // pred_fallthru
        _
    $region6: #{tpu_custom_call.1} parent=1 // loop_footer
      %s28 = sadd.s32 1, %s24
    $region7: #{tpu_custom_call.1} parent=1 // loop_footer_branch
      %23 = sbr.rel target = $region3
    $region8: #{tpu_custom_call.1} parent=1 // loop_exit
      _
    %7517 = vsyncpa [#allocation5], 1
    %s7518 = scalar_lea.sflag [#allocation5], 1
    %7519 = vsyncpa %s7518, 1
    %7520 = vsyncpa [#allocation7], 1
    %s7521 = scalar_lea.sflag [#allocation7], 1
    %7522 = vsyncpa %s7521, 1

</llo_original>
